<compile_context>
chip_gen: v6e
topology: v6e:2x2x1
jax: 0.10.0
libtpu: 0.0.40
codegen_flags: <defaults>
</compile_context>

<pallas_src>
import functools

import jax
import jax.numpy as jnp
from jax import lax
from jax.experimental import pallas as pl
from jax.experimental.pallas import tpu as pltpu

EPS = 1e-5  # PyTorch BatchNorm2d default eps


def _round_up(x, m):
    return (x + m - 1) // m * m


# ---------------------------- Pallas kernel ----------------------------

def _basicblock_kernel(x_ref, w1_ref, w2_ref, w3_ref, w4_ref,
                       s1_ref, b1_ref, s2_ref, b2_ref,
                       s3_ref, b3_ref, s4_ref, b4_ref,
                       o_ref, o1s_ref, acc_ref, *, H, W, Wp, Cmid):
    """Fused BasicBlock1 forward for one batch element (NHWC, eval-mode BN).

    x_ref   : (1, H*W, Cin) f32
    w1..w4  : bf16 weights; w2 is (9*Cmid, Cmid), taps ordered ky*3+kx
    s*/b*   : (1, C) folded BN scale/shift (conv bias folded into shift), f32
    o_ref   : (1, H*W, Cout) f32
    o1s_ref : (H+2, Wp, Cmid) f32 scratch -- zero-padded conv1 output
    acc_ref : ((H+2)*Wp, Cmid) f32 scratch -- conv2 accumulator
    """
    R = (H + 2) * Wp

    xb = x_ref[0].astype(jnp.bfloat16)                              # (H*W, Cin)

    # ---- conv1 (1x1) + bn1 + relu -> zero-padded VMEM scratch ----
    o1 = jnp.dot(xb, w1_ref[...], preferred_element_type=jnp.float32)
    o1 = jnp.maximum(o1 * s1_ref[...] + b1_ref[...], 0.0)           # (H*W, Cmid)
    o1s_ref[...] = jnp.zeros((H + 2, Wp, Cmid), jnp.float32)        # halo + right pad
    o1s_ref[1:H + 1, :W, :] = o1.reshape(H, W, Cmid)

    # ---- conv2 (3x3, pad 1): 9 shifted matmuls over the flattened padded image.
    # The (ky,kx) spatial shift becomes a cyclic sublane roll by -(ky*Wp + kx - 1);
    # wrap-around always lands in zero pad rows/columns, so no masking is needed.
    full2d = o1s_ref[...].reshape(R, Cmid).astype(jnp.bfloat16)
    for ky in range(3):
        for kx in range(3):
            tap = ky * 3 + kx
            w_tap = w2_ref[tap * Cmid:(tap + 1) * Cmid, :]
            t = jnp.dot(full2d, w_tap, preferred_element_type=jnp.float32)
            off = ky * Wp + kx - 1
            shift = (-off) % R
            if shift:
                t = pltpu.roll(t, shift=shift, axis=0)
            if tap == 0:
                acc_ref[...] = t
            else:
                acc_ref[...] += t

    # compact padded (H+2, Wp) -> (H, W), then bn2 + relu
    o2 = acc_ref[...].reshape(H + 2, Wp, Cmid)[:H, :W, :].reshape(H * W, Cmid)
    o2 = jnp.maximum(o2 * s2_ref[...] + b2_ref[...], 0.0)

    # ---- conv3 (1x1) + bn3 ----
    y = jnp.dot(o2.astype(jnp.bfloat16), w3_ref[...],
                preferred_element_type=jnp.float32)
    y = y * s3_ref[...] + b3_ref[...]

    # ---- identity path: conv4 (1x1) + bn4 + relu (computed last: low live range) ----
    idn = jnp.dot(x_ref[0].astype(jnp.bfloat16), w4_ref[...],
                  preferred_element_type=jnp.float32)
    idn = jnp.maximum(idn * s4_ref[...] + b4_ref[...], 0.0)

    # ---- residual add + relu ----
    o_ref[0] = jnp.maximum(y + idn, 0.0).astype(o_ref.dtype)


# ---------------------------- Wrapper ----------------------------

def _fold_bn(gamma, beta, mean, var, conv_bias):
    scale = gamma / jnp.sqrt(var + EPS)
    shift = (conv_bias - mean) * scale + beta
    return (scale.reshape(1, -1).astype(jnp.float32),
            shift.reshape(1, -1).astype(jnp.float32))


def basicblock_forward(x_nhwc, p):
    """BasicBlock1 forward; x is NHWC (PyTorch NCHW -> transpose(0,2,3,1))."""
    N, H, W, Cin = x_nhwc.shape
    Cmid = p["w1"].shape[1]
    Cout = p["w3"].shape[1]
    Wp = _round_up(W + 2, 8)   # sublane-aligned padded width for the conv2 scratch

    s1, b1 = _fold_bn(p["bn1_gamma"], p["bn1_beta"], p["bn1_mean"], p["bn1_var"], p["b1c"])
    s2, b2 = _fold_bn(p["bn2_gamma"], p["bn2_beta"], p["bn2_mean"], p["bn2_var"], p["b2c"])
    s3, b3 = _fold_bn(p["bn3_gamma"], p["bn3_beta"], p["bn3_mean"], p["bn3_var"], p["b3c"])
    s4, b4 = _fold_bn(p["bn4_gamma"], p["bn4_beta"], p["bn4_mean"], p["bn4_var"], p["b4c"])

    # bf16 weights feed the MXU; accumulation stays f32 inside the kernel.
    w1 = p["w1"].astype(jnp.bfloat16)
    w2 = p["w2"].astype(jnp.bfloat16)
    w3 = p["w3"].astype(jnp.bfloat16)
    w4 = p["w4"].astype(jnp.bfloat16)

    x2d = x_nhwc.reshape(N, H * W, Cin)
    kernel = functools.partial(_basicblock_kernel, H=H, W=W, Wp=Wp, Cmid=Cmid)
    rep = lambda n: (0, 0)     # weights / BN vectors: same block every grid step

    # TODO(synk): for large H (e.g. 56) add a row-tile grid axis with halo handling
    #             and a K grid axis for large Cin to bound per-step VMEM on v7x.
    out = pl.pallas_call(
        kernel,
        out_shape=jax.ShapeDtypeStruct((N, H * W, Cout), jnp.float32),
        grid=(N,),
        in_specs=[
            pl.BlockSpec((1, H * W, Cin), lambda n: (n, 0, 0)),   # x
            pl.BlockSpec((Cin, Cmid), rep),                       # w1
            pl.BlockSpec((9 * Cmid, Cmid), rep),                  # w2 (taps stacked)
            pl.BlockSpec((Cmid, Cout), rep),                      # w3
            pl.BlockSpec((Cin, Cout), rep),                       # w4
            pl.BlockSpec((1, Cmid), rep), pl.BlockSpec((1, Cmid), rep),   # s1,b1
            pl.BlockSpec((1, Cmid), rep), pl.BlockSpec((1, Cmid), rep),   # s2,b2
            pl.BlockSpec((1, Cout), rep), pl.BlockSpec((1, Cout), rep),   # s3,b3
            pl.BlockSpec((1, Cout), rep), pl.BlockSpec((1, Cout), rep),   # s4,b4
        ],
        out_specs=pl.BlockSpec((1, H * W, Cout), lambda n: (n, 0, 0)),
        scratch_shapes=[
            pltpu.VMEM((H + 2, Wp, Cmid), jnp.float32),      # padded conv1 output
            pltpu.VMEM(((H + 2) * Wp, Cmid), jnp.float32),   # conv2 accumulator
        ],
        compiler_params=pltpu.CompilerParams(
            dimension_semantics=("parallel",)),
    )(x2d, w1, w2, w3, w4, s1, b1, s2, b2, s3, b3, s4, b4)
    return out.reshape(N, H, W, Cout)


# ---------------------------- Pure-JAX reference ----------------------------

def _bn_ref(y, g, b, m, v):
    return (y - m) / jnp.sqrt(v + EPS) * g + b


def _conv_bf16(x, w, padding):
    # Mirror the kernel's precision: bf16 operands, f32 accumulation.
    return lax.conv_general_dilated(
        x.astype(jnp.bfloat16), w.astype(jnp.bfloat16), (1, 1), padding,
        dimension_numbers=("NHWC", "HWIO", "NHWC"),
        preferred_element_type=jnp.float32)


def basicblock_ref(x, p):
    Cin = x.shape[-1]
    Cmid = p["w1"].shape[1]
    Cout = p["w3"].shape[1]
    w1 = p["w1"].reshape(1, 1, Cin, Cmid)
    w2 = p["w2"].reshape(3, 3, Cmid, Cmid)       # tap-major == HWIO
    w3 = p["w3"].reshape(1, 1, Cmid, Cout)
    w4 = p["w4"].reshape(1, 1, Cin, Cout)

    idn = _conv_bf16(x, w4, "VALID") + p["b4c"]
    idn = jax.nn.relu(_bn_ref(idn, p["bn4_gamma"], p["bn4_beta"], p["bn4_mean"], p["bn4_var"]))

    y = _conv_bf16(x, w1, "VALID") + p["b1c"]
    y = jax.nn.relu(_bn_ref(y, p["bn1_gamma"], p["bn1_beta"], p["bn1_mean"], p["bn1_var"]))
    y = _conv_bf16(y, w2, "SAME") + p["b2c"]
    y = jax.nn.relu(_bn_ref(y, p["bn2_gamma"], p["bn2_beta"], p["bn2_mean"], p["bn2_var"]))
    y = _conv_bf16(y, w3, "VALID") + p["b3c"]
    y = _bn_ref(y, p["bn3_gamma"], p["bn3_beta"], p["bn3_mean"], p["bn3_var"])
    return jax.nn.relu(y + idn)


# ---------------------------- Main ----------------------------

if __name__ == "__main__":
    # BasicBlock1(inplanes=64, outplanes=256) as used in the model (basiclayer2/4),
    # mid channels hard-wired to 64; small spatial/batch, lane-dense output (256).
    N, H, W = 2, 16, 16
    inplanes, midplanes, outplanes = 64, 64, 256

    key = jax.random.PRNGKey(0)
    ks = jax.random.split(key, 14)
    x = jax.random.normal(ks[0], (N, H, W, inplanes), jnp.float32)

    def bn_params(k, c):
        k1, k2, k3, k4 = jax.random.split(k, 4)
        return dict(
            gamma=jax.random.uniform(k1, (c,), jnp.float32, 0.5, 1.5),
            beta=0.1 * jax.random.normal(k2, (c,), jnp.float32),
            mean=0.1 * jax.random.normal(k3, (c,), jnp.float32),
            var=jax.random.uniform(k4, (c,), jnp.float32, 0.5, 1.5),
        )

    params = {
        # conv1: torch (64, Cin, 1, 1) -> (Cin, 64)
        "w1": 0.05 * jax.random.normal(ks[1], (inplanes, midplanes), jnp.float32),
        # conv2: torch (64, 64, 3, 3) -> (9*64, 64), taps in ky*3+kx order
        "w2": 0.05 * jax.random.normal(ks[2], (9 * midplanes, midplanes), jnp.float32),
        # conv3: torch (Cout, 64, 1, 1) -> (64, Cout)
        "w3": 0.05 * jax.random.normal(ks[3], (midplanes, outplanes), jnp.float32),
        # conv4 (identity projection): torch (Cout, Cin, 1, 1) -> (Cin, Cout)
        "w4": 0.05 * jax.random.normal(ks[4], (inplanes, outplanes), jnp.float32),
        # conv biases (nn.Conv2d default bias=True in BasicBlock1)
        "b1c": 0.05 * jax.random.normal(ks[5], (midplanes,), jnp.float32),
        "b2c": 0.05 * jax.random.normal(ks[6], (midplanes,), jnp.float32),
        "b3c": 0.05 * jax.random.normal(ks[7], (outplanes,), jnp.float32),
        "b4c": 0.05 * jax.random.normal(ks[8], (outplanes,), jnp.float32),
    }
    # BatchNorm params (inference / eval mode: running stats).
    # TODO(synk): training-mode BatchNorm (batch statistics) not implemented.
    for name, k, c in (("bn1", ks[9], midplanes), ("bn2", ks[10], midplanes),
                       ("bn3", ks[11], outplanes), ("bn4", ks[12], outplanes)):
        for pname, val in bn_params(k, c).items():
            params[f"{name}_{pname}"] = val

    out = jax.block_until_ready(basicblock_forward(x, params))
    ref = jax.block_until_ready(basicblock_ref(x, params))

    assert out.shape == (N, H, W, outplanes), out.shape
    max_err = float(jnp.max(jnp.abs(out - ref)))
    assert jnp.allclose(out, ref, atol=1e-2, rtol=1e-2), max_err
    print("KERNEL_OK")
</pallas_src>

<mosaic_0001>
module attributes {stable_mosaic.version = 11 : i64} {
  func.func @_basicblock_kernel(%arg0: i32, %arg1: memref<1x256x64xf32, #tpu.memory_space<vmem>>, %arg2: memref<64x64xbf16, #tpu.memory_space<vmem>>, %arg3: memref<576x64xbf16, #tpu.memory_space<vmem>>, %arg4: memref<64x256xbf16, #tpu.memory_space<vmem>>, %arg5: memref<64x256xbf16, #tpu.memory_space<vmem>>, %arg6: memref<1x64xf32, #tpu.memory_space<vmem>>, %arg7: memref<1x64xf32, #tpu.memory_space<vmem>>, %arg8: memref<1x64xf32, #tpu.memory_space<vmem>>, %arg9: memref<1x64xf32, #tpu.memory_space<vmem>>, %arg10: memref<1x256xf32, #tpu.memory_space<vmem>>, %arg11: memref<1x256xf32, #tpu.memory_space<vmem>>, %arg12: memref<1x256xf32, #tpu.memory_space<vmem>>, %arg13: memref<1x256xf32, #tpu.memory_space<vmem>>, %arg14: memref<1x256x256xf32, #tpu.memory_space<vmem>>, %arg15: memref<18x24x64xf32, #tpu.memory_space<vmem>>, %arg16: memref<432x64xf32, #tpu.memory_space<vmem>>) attributes {dimension_semantics = [#tpu.dimension_semantics<parallel>], iteration_bounds = array<i64: 2>, scalar_prefetch = 0 : i64, scratch_operands = 2 : i64, tpu.core_type = #tpu.core_type<tc>, window_params = [{transform_indices = @transform_0, window_bounds = array<i64: 1, 256, 64>}, {pipeline_mode = #tpu.pipeline_mode<synchronous>, transform_indices = @transform_1, window_bounds = array<i64: 64, 64>}, {pipeline_mode = #tpu.pipeline_mode<synchronous>, transform_indices = @transform_2, window_bounds = array<i64: 576, 64>}, {pipeline_mode = #tpu.pipeline_mode<synchronous>, transform_indices = @transform_3, window_bounds = array<i64: 64, 256>}, {pipeline_mode = #tpu.pipeline_mode<synchronous>, transform_indices = @transform_4, window_bounds = array<i64: 64, 256>}, {pipeline_mode = #tpu.pipeline_mode<synchronous>, transform_indices = @transform_5, window_bounds = array<i64: 1, 64>}, {pipeline_mode = #tpu.pipeline_mode<synchronous>, transform_indices = @transform_6, window_bounds = array<i64: 1, 64>}, {pipeline_mode = #tpu.pipeline_mode<synchronous>, transform_indices = @transform_7, window_bounds = array<i64: 1, 64>}, {pipeline_mode = #tpu.pipeline_mode<synchronous>, transform_indices = @transform_8, window_bounds = array<i64: 1, 64>}, {pipeline_mode = #tpu.pipeline_mode<synchronous>, transform_indices = @transform_9, window_bounds = array<i64: 1, 256>}, {pipeline_mode = #tpu.pipeline_mode<synchronous>, transform_indices = @transform_10, window_bounds = array<i64: 1, 256>}, {pipeline_mode = #tpu.pipeline_mode<synchronous>, transform_indices = @transform_11, window_bounds = array<i64: 1, 256>}, {pipeline_mode = #tpu.pipeline_mode<synchronous>, transform_indices = @transform_12, window_bounds = array<i64: 1, 256>}, {transform_indices = @transform_13, window_bounds = array<i64: 1, 256, 256>}]} {
    %c0 = arith.constant 0 : index
    %c0_0 = arith.constant 0 : index
    %c0_1 = arith.constant 0 : index
    %0 = vector.load %arg1[%c0, %c0_0, %c0_1] : memref<1x256x64xf32, #tpu.memory_space<vmem>>, vector<1x256x64xf32>
    %1 = vector.shape_cast %0 : vector<1x256x64xf32> to vector<256x64xf32>
    %2 = arith.truncf %1 : vector<256x64xf32> to vector<256x64xbf16>
    %c0_2 = arith.constant 0 : index
    %c0_3 = arith.constant 0 : index
    %3 = vector.load %arg2[%c0_2, %c0_3] : memref<64x64xbf16, #tpu.memory_space<vmem>>, vector<64x64xbf16>
    %cst = arith.constant dense<0.000000e+00> : vector<256x64xf32>
    %4 = tpu.matmul %2, %3, %cst {dimension_numbers = #tpu.dot_dimension_numbers<[1], [0], [0], [1], [0, 0, 1, 1], [], []>} : vector<256x64xbf16>, vector<64x64xbf16>, vector<256x64xf32> -> vector<256x64xf32>
    %c0_4 = arith.constant 0 : index
    %c0_5 = arith.constant 0 : index
    %5 = vector.load %arg6[%c0_4, %c0_5] : memref<1x64xf32, #tpu.memory_space<vmem>>, vector<1x64xf32>
    %6 = vector.broadcast %5 : vector<1x64xf32> to vector<256x64xf32>
    %7 = arith.mulf %4, %6 : vector<256x64xf32>
    %c0_6 = arith.constant 0 : index
    %c0_7 = arith.constant 0 : index
    %8 = vector.load %arg7[%c0_6, %c0_7] : memref<1x64xf32, #tpu.memory_space<vmem>>, vector<1x64xf32>
    %9 = vector.broadcast %8 : vector<1x64xf32> to vector<256x64xf32>
    %10 = arith.addf %7, %9 : vector<256x64xf32>
    %cst_8 = arith.constant 0.000000e+00 : f32
    %11 = vector.broadcast %cst_8 : f32 to vector<256x64xf32>
    %12 = arith.maximumf %10, %11 : vector<256x64xf32>
    %cst_9 = arith.constant 0.000000e+00 : f32
    %13 = vector.broadcast %cst_9 : f32 to vector<18x24x64xf32>
    %c0_10 = arith.constant 0 : index
    %c0_11 = arith.constant 0 : index
    %c0_12 = arith.constant 0 : index
    %14 = vector.load %arg15[%c0_10, %c0_11, %c0_12] : memref<18x24x64xf32, #tpu.memory_space<vmem>>, vector<18x24x64xf32>
    tpu.vector_store %arg15[%c0_10, %c0_11, %c0_12], %13 {strides = array<i32>} : memref<18x24x64xf32, #tpu.memory_space<vmem>>, vector<18x24x64xf32>,
    %15 = vector.shape_cast %12 : vector<256x64xf32> to vector<16x16x64xf32>
    %c1 = arith.constant 1 : index
    %c0_13 = arith.constant 0 : index
    %c0_14 = arith.constant 0 : index
    %16 = vector.load %arg15[%c1, %c0_13, %c0_14] : memref<18x24x64xf32, #tpu.memory_space<vmem>>, vector<16x16x64xf32>
    tpu.vector_store %arg15[%c1, %c0_13, %c0_14], %15 {strides = array<i32>} : memref<18x24x64xf32, #tpu.memory_space<vmem>>, vector<16x16x64xf32>,
    %c0_15 = arith.constant 0 : index
    %c0_16 = arith.constant 0 : index
    %c0_17 = arith.constant 0 : index
    %17 = vector.load %arg15[%c0_15, %c0_16, %c0_17] : memref<18x24x64xf32, #tpu.memory_space<vmem>>, vector<18x24x64xf32>
    %18 = vector.shape_cast %17 : vector<18x24x64xf32> to vector<432x64xf32>
    %19 = arith.truncf %18 : vector<432x64xf32> to vector<432x64xbf16>
    %c0_18 = arith.constant 0 : index
    %c0_19 = arith.constant 0 : index
    %20 = vector.load %arg3[%c0_18, %c0_19] : memref<576x64xbf16, #tpu.memory_space<vmem>>, vector<64x64xbf16>
    %cst_20 = arith.constant dense<0.000000e+00> : vector<432x64xf32>
    %21 = tpu.matmul %19, %20, %cst_20 {dimension_numbers = #tpu.dot_dimension_numbers<[1], [0], [0], [1], [0, 0, 1, 1], [], []>} : vector<432x64xbf16>, vector<64x64xbf16>, vector<432x64xf32> -> vector<432x64xf32>
    %c1_i32 = arith.constant 1 : i32
    %22 = tpu.dynamic_rotate %21 by %c1_i32 dim 0 : vector<432x64xf32>, i32 -> vector<432x64xf32>
    %c0_21 = arith.constant 0 : index
    %c0_22 = arith.constant 0 : index
    %23 = vector.load %arg16[%c0_21, %c0_22] : memref<432x64xf32, #tpu.memory_space<vmem>>, vector<432x64xf32>
    tpu.vector_store %arg16[%c0_21, %c0_22], %22 {strides = array<i32>} : memref<432x64xf32, #tpu.memory_space<vmem>>, vector<432x64xf32>,
    %c64 = arith.constant 64 : index
    %c0_23 = arith.constant 0 : index
    %24 = vector.load %arg3[%c64, %c0_23] : memref<576x64xbf16, #tpu.memory_space<vmem>>, vector<64x64xbf16>
    %cst_24 = arith.constant dense<0.000000e+00> : vector<432x64xf32>
    %25 = tpu.matmul %19, %24, %cst_24 {dimension_numbers = #tpu.dot_dimension_numbers<[1], [0], [0], [1], [0, 0, 1, 1], [], []>} : vector<432x64xbf16>, vector<64x64xbf16>, vector<432x64xf32> -> vector<432x64xf32>
    %c0_25 = arith.constant 0 : index
    %c0_26 = arith.constant 0 : index
    %26 = vector.load %arg16[%c0_25, %c0_26] : memref<432x64xf32, #tpu.memory_space<vmem>>, vector<432x64xf32>
    %27 = arith.addf %26, %25 : vector<432x64xf32>
    %c0_27 = arith.constant 0 : index
    %c0_28 = arith.constant 0 : index
    %28 = vector.load %arg16[%c0_27, %c0_28] : memref<432x64xf32, #tpu.memory_space<vmem>>, vector<432x64xf32>
    tpu.vector_store %arg16[%c0_27, %c0_28], %27 {strides = array<i32>} : memref<432x64xf32, #tpu.memory_space<vmem>>, vector<432x64xf32>,
    %c128 = arith.constant 128 : index
    %c0_29 = arith.constant 0 : index
    %29 = vector.load %arg3[%c128, %c0_29] : memref<576x64xbf16, #tpu.memory_space<vmem>>, vector<64x64xbf16>
    %cst_30 = arith.constant dense<0.000000e+00> : vector<432x64xf32>
    %30 = tpu.matmul %19, %29, %cst_30 {dimension_numbers = #tpu.dot_dimension_numbers<[1], [0], [0], [1], [0, 0, 1, 1], [], []>} : vector<432x64xbf16>, vector<64x64xbf16>, vector<432x64xf32> -> vector<432x64xf32>
    %c431_i32 = arith.constant 431 : i32
    %31 = tpu.dynamic_rotate %30 by %c431_i32 dim 0 : vector<432x64xf32>, i32 -> vector<432x64xf32>
    %c0_31 = arith.constant 0 : index
    %c0_32 = arith.constant 0 : index
    %32 = vector.load %arg16[%c0_31, %c0_32] : memref<432x64xf32, #tpu.memory_space<vmem>>, vector<432x64xf32>
    %33 = arith.addf %32, %31 : vector<432x64xf32>
    %c0_33 = arith.constant 0 : index
    %c0_34 = arith.constant 0 : index
    %34 = vector.load %arg16[%c0_33, %c0_34] : memref<432x64xf32, #tpu.memory_space<vmem>>, vector<432x64xf32>
    tpu.vector_store %arg16[%c0_33, %c0_34], %33 {strides = array<i32>} : memref<432x64xf32, #tpu.memory_space<vmem>>, vector<432x64xf32>,
    %c192 = arith.constant 192 : index
    %c0_35 = arith.constant 0 : index
    %35 = vector.load %arg3[%c192, %c0_35] : memref<576x64xbf16, #tpu.memory_space<vmem>>, vector<64x64xbf16>
    %cst_36 = arith.constant dense<0.000000e+00> : vector<432x64xf32>
    %36 = tpu.matmul %19, %35, %cst_36 {dimension_numbers = #tpu.dot_dimension_numbers<[1], [0], [0], [1], [0, 0, 1, 1], [], []>} : vector<432x64xbf16>, vector<64x64xbf16>, vector<432x64xf32> -> vector<432x64xf32>
    %c409_i32 = arith.constant 409 : i32
    %37 = tpu.dynamic_rotate %36 by %c409_i32 dim 0 : vector<432x64xf32>, i32 -> vector<432x64xf32>
    %c0_37 = arith.constant 0 : index
    %c0_38 = arith.constant 0 : index
    %38 = vector.load %arg16[%c0_37, %c0_38] : memref<432x64xf32, #tpu.memory_space<vmem>>, vector<432x64xf32>
    %39 = arith.addf %38, %37 : vector<432x64xf32>
    %c0_39 = arith.constant 0 : index
    %c0_40 = arith.constant 0 : index
    %40 = vector.load %arg16[%c0_39, %c0_40] : memref<432x64xf32, #tpu.memory_space<vmem>>, vector<432x64xf32>
    tpu.vector_store %arg16[%c0_39, %c0_40], %39 {strides = array<i32>} : memref<432x64xf32, #tpu.memory_space<vmem>>, vector<432x64xf32>,
    %c256 = arith.constant 256 : index
    %c0_41 = arith.constant 0 : index
    %41 = vector.load %arg3[%c256, %c0_41] : memref<576x64xbf16, #tpu.memory_space<vmem>>, vector<64x64xbf16>
    %cst_42 = arith.constant dense<0.000000e+00> : vector<432x64xf32>
    %42 = tpu.matmul %19, %41, %cst_42 {dimension_numbers = #tpu.dot_dimension_numbers<[1], [0], [0], [1], [0, 0, 1, 1], [], []>} : vector<432x64xbf16>, vector<64x64xbf16>, vector<432x64xf32> -> vector<432x64xf32>
    %c408_i32 = arith.constant 408 : i32
    %43 = tpu.dynamic_rotate %42 by %c408_i32 dim 0 : vector<432x64xf32>, i32 -> vector<432x64xf32>
    %c0_43 = arith.constant 0 : index
    %c0_44 = arith.constant 0 : index
    %44 = vector.load %arg16[%c0_43, %c0_44] : memref<432x64xf32, #tpu.memory_space<vmem>>, vector<432x64xf32>
    %45 = arith.addf %44, %43 : vector<432x64xf32>
    %c0_45 = arith.constant 0 : index
    %c0_46 = arith.constant 0 : index
    %46 = vector.load %arg16[%c0_45, %c0_46] : memref<432x64xf32, #tpu.memory_space<vmem>>, vector<432x64xf32>
    tpu.vector_store %arg16[%c0_45, %c0_46], %45 {strides = array<i32>} : memref<432x64xf32, #tpu.memory_space<vmem>>, vector<432x64xf32>,
    %c320 = arith.constant 320 : index
    %c0_47 = arith.constant 0 : index
    %47 = vector.load %arg3[%c320, %c0_47] : memref<576x64xbf16, #tpu.memory_space<vmem>>, vector<64x64xbf16>
    %cst_48 = arith.constant dense<0.000000e+00> : vector<432x64xf32>
    %48 = tpu.matmul %19, %47, %cst_48 {dimension_numbers = #tpu.dot_dimension_numbers<[1], [0], [0], [1], [0, 0, 1, 1], [], []>} : vector<432x64xbf16>, vector<64x64xbf16>, vector<432x64xf32> -> vector<432x64xf32>
    %c407_i32 = arith.constant 407 : i32
    %49 = tpu.dynamic_rotate %48 by %c407_i32 dim 0 : vector<432x64xf32>, i32 -> vector<432x64xf32>
    %c0_49 = arith.constant 0 : index
    %c0_50 = arith.constant 0 : index
    %50 = vector.load %arg16[%c0_49, %c0_50] : memref<432x64xf32, #tpu.memory_space<vmem>>, vector<432x64xf32>
    %51 = arith.addf %50, %49 : vector<432x64xf32>
    %c0_51 = arith.constant 0 : index
    %c0_52 = arith.constant 0 : index
    %52 = vector.load %arg16[%c0_51, %c0_52] : memref<432x64xf32, #tpu.memory_space<vmem>>, vector<432x64xf32>
    tpu.vector_store %arg16[%c0_51, %c0_52], %51 {strides = array<i32>} : memref<432x64xf32, #tpu.memory_space<vmem>>, vector<432x64xf32>,
    %c384 = arith.constant 384 : index
    %c0_53 = arith.constant 0 : index
    %53 = vector.load %arg3[%c384, %c0_53] : memref<576x64xbf16, #tpu.memory_space<vmem>>, vector<64x64xbf16>
    %cst_54 = arith.constant dense<0.000000e+00> : vector<432x64xf32>
    %54 = tpu.matmul %19, %53, %cst_54 {dimension_numbers = #tpu.dot_dimension_numbers<[1], [0], [0], [1], [0, 0, 1, 1], [], []>} : vector<432x64xbf16>, vector<64x64xbf16>, vector<432x64xf32> -> vector<432x64xf32>
    %c385_i32 = arith.constant 385 : i32
    %55 = tpu.dynamic_rotate %54 by %c385_i32 dim 0 : vector<432x64xf32>, i32 -> vector<432x64xf32>
    %c0_55 = arith.constant 0 : index
    %c0_56 = arith.constant 0 : index
    %56 = vector.load %arg16[%c0_55, %c0_56] : memref<432x64xf32, #tpu.memory_space<vmem>>, vector<432x64xf32>
    %57 = arith.addf %56, %55 : vector<432x64xf32>
    %c0_57 = arith.constant 0 : index
    %c0_58 = arith.constant 0 : index
    %58 = vector.load %arg16[%c0_57, %c0_58] : memref<432x64xf32, #tpu.memory_space<vmem>>, vector<432x64xf32>
    tpu.vector_store %arg16[%c0_57, %c0_58], %57 {strides = array<i32>} : memref<432x64xf32, #tpu.memory_space<vmem>>, vector<432x64xf32>,
    %c448 = arith.constant 448 : index
    %c0_59 = arith.constant 0 : index
    %59 = vector.load %arg3[%c448, %c0_59] : memref<576x64xbf16, #tpu.memory_space<vmem>>, vector<64x64xbf16>
    %cst_60 = arith.constant dense<0.000000e+00> : vector<432x64xf32>
    %60 = tpu.matmul %19, %59, %cst_60 {dimension_numbers = #tpu.dot_dimension_numbers<[1], [0], [0], [1], [0, 0, 1, 1], [], []>} : vector<432x64xbf16>, vector<64x64xbf16>, vector<432x64xf32> -> vector<432x64xf32>
    %c384_i32 = arith.constant 384 : i32
    %61 = tpu.dynamic_rotate %60 by %c384_i32 dim 0 : vector<432x64xf32>, i32 -> vector<432x64xf32>
    %c0_61 = arith.constant 0 : index
    %c0_62 = arith.constant 0 : index
    %62 = vector.load %arg16[%c0_61, %c0_62] : memref<432x64xf32, #tpu.memory_space<vmem>>, vector<432x64xf32>
    %63 = arith.addf %62, %61 : vector<432x64xf32>
    %c0_63 = arith.constant 0 : index
    %c0_64 = arith.constant 0 : index
    %64 = vector.load %arg16[%c0_63, %c0_64] : memref<432x64xf32, #tpu.memory_space<vmem>>, vector<432x64xf32>
    tpu.vector_store %arg16[%c0_63, %c0_64], %63 {strides = array<i32>} : memref<432x64xf32, #tpu.memory_space<vmem>>, vector<432x64xf32>,
    %c512 = arith.constant 512 : index
    %c0_65 = arith.constant 0 : index
    %65 = vector.load %arg3[%c512, %c0_65] : memref<576x64xbf16, #tpu.memory_space<vmem>>, vector<64x64xbf16>
    %cst_66 = arith.constant dense<0.000000e+00> : vector<432x64xf32>
    %66 = tpu.matmul %19, %65, %cst_66 {dimension_numbers = #tpu.dot_dimension_numbers<[1], [0], [0], [1], [0, 0, 1, 1], [], []>} : vector<432x64xbf16>, vector<64x64xbf16>, vector<432x64xf32> -> vector<432x64xf32>
    %c383_i32 = arith.constant 383 : i32
    %67 = tpu.dynamic_rotate %66 by %c383_i32 dim 0 : vector<432x64xf32>, i32 -> vector<432x64xf32>
    %c0_67 = arith.constant 0 : index
    %c0_68 = arith.constant 0 : index
    %68 = vector.load %arg16[%c0_67, %c0_68] : memref<432x64xf32, #tpu.memory_space<vmem>>, vector<432x64xf32>
    %69 = arith.addf %68, %67 : vector<432x64xf32>
    %c0_69 = arith.constant 0 : index
    %c0_70 = arith.constant 0 : index
    %70 = vector.load %arg16[%c0_69, %c0_70] : memref<432x64xf32, #tpu.memory_space<vmem>>, vector<432x64xf32>
    tpu.vector_store %arg16[%c0_69, %c0_70], %69 {strides = array<i32>} : memref<432x64xf32, #tpu.memory_space<vmem>>, vector<432x64xf32>,
    %c0_71 = arith.constant 0 : index
    %c0_72 = arith.constant 0 : index
    %71 = vector.load %arg16[%c0_71, %c0_72] : memref<432x64xf32, #tpu.memory_space<vmem>>, vector<432x64xf32>
    %72 = vector.shape_cast %71 : vector<432x64xf32> to vector<18x24x64xf32>
    %73 = vector.extract_strided_slice %72 {offsets = [0, 0, 0], sizes = [16, 16, 64], strides = [1, 1, 1]} : vector<18x24x64xf32> to vector<16x16x64xf32>
    %74 = vector.shape_cast %73 : vector<16x16x64xf32> to vector<256x64xf32>
    %c0_73 = arith.constant 0 : index
    %c0_74 = arith.constant 0 : index
    %75 = vector.load %arg8[%c0_73, %c0_74] : memref<1x64xf32, #tpu.memory_space<vmem>>, vector<1x64xf32>
    %76 = vector.broadcast %75 : vector<1x64xf32> to vector<256x64xf32>
    %77 = arith.mulf %74, %76 : vector<256x64xf32>
    %c0_75 = arith.constant 0 : index
    %c0_76 = arith.constant 0 : index
    %78 = vector.load %arg9[%c0_75, %c0_76] : memref<1x64xf32, #tpu.memory_space<vmem>>, vector<1x64xf32>
    %79 = vector.broadcast %78 : vector<1x64xf32> to vector<256x64xf32>
    %80 = arith.addf %77, %79 : vector<256x64xf32>
    %cst_77 = arith.constant 0.000000e+00 : f32
    %81 = vector.broadcast %cst_77 : f32 to vector<256x64xf32>
    %82 = arith.maximumf %80, %81 : vector<256x64xf32>
    %83 = arith.truncf %82 : vector<256x64xf32> to vector<256x64xbf16>
    %c0_78 = arith.constant 0 : index
    %c0_79 = arith.constant 0 : index
    %84 = vector.load %arg4[%c0_78, %c0_79] : memref<64x256xbf16, #tpu.memory_space<vmem>>, vector<64x256xbf16>
    %cst_80 = arith.constant dense<0.000000e+00> : vector<256x256xf32>
    %85 = tpu.matmul %83, %84, %cst_80 {dimension_numbers = #tpu.dot_dimension_numbers<[1], [0], [0], [1], [0, 0, 1, 1], [], []>} : vector<256x64xbf16>, vector<64x256xbf16>, vector<256x256xf32> -> vector<256x256xf32>
    %c0_81 = arith.constant 0 : index
    %c0_82 = arith.constant 0 : index
    %86 = vector.load %arg10[%c0_81, %c0_82] : memref<1x256xf32, #tpu.memory_space<vmem>>, vector<1x256xf32>
    %87 = vector.broadcast %86 : vector<1x256xf32> to vector<256x256xf32>
    %88 = arith.mulf %85, %87 : vector<256x256xf32>
    %c0_83 = arith.constant 0 : index
    %c0_84 = arith.constant 0 : index
    %89 = vector.load %arg11[%c0_83, %c0_84] : memref<1x256xf32, #tpu.memory_space<vmem>>, vector<1x256xf32>
    %90 = vector.broadcast %89 : vector<1x256xf32> to vector<256x256xf32>
    %91 = arith.addf %88, %90 : vector<256x256xf32>
    %c0_85 = arith.constant 0 : index
    %c0_86 = arith.constant 0 : index
    %c0_87 = arith.constant 0 : index
    %92 = vector.load %arg1[%c0_85, %c0_86, %c0_87] : memref<1x256x64xf32, #tpu.memory_space<vmem>>, vector<1x256x64xf32>
    %93 = vector.shape_cast %92 : vector<1x256x64xf32> to vector<256x64xf32>
    %94 = arith.truncf %93 : vector<256x64xf32> to vector<256x64xbf16>
    %c0_88 = arith.constant 0 : index
    %c0_89 = arith.constant 0 : index
    %95 = vector.load %arg5[%c0_88, %c0_89] : memref<64x256xbf16, #tpu.memory_space<vmem>>, vector<64x256xbf16>
    %cst_90 = arith.constant dense<0.000000e+00> : vector<256x256xf32>
    %96 = tpu.matmul %94, %95, %cst_90 {dimension_numbers = #tpu.dot_dimension_numbers<[1], [0], [0], [1], [0, 0, 1, 1], [], []>} : vector<256x64xbf16>, vector<64x256xbf16>, vector<256x256xf32> -> vector<256x256xf32>
    %c0_91 = arith.constant 0 : index
    %c0_92 = arith.constant 0 : index
    %97 = vector.load %arg12[%c0_91, %c0_92] : memref<1x256xf32, #tpu.memory_space<vmem>>, vector<1x256xf32>
    %98 = vector.broadcast %97 : vector<1x256xf32> to vector<256x256xf32>
    %99 = arith.mulf %96, %98 : vector<256x256xf32>
    %c0_93 = arith.constant 0 : index
    %c0_94 = arith.constant 0 : index
    %100 = vector.load %arg13[%c0_93, %c0_94] : memref<1x256xf32, #tpu.memory_space<vmem>>, vector<1x256xf32>
    %101 = vector.broadcast %100 : vector<1x256xf32> to vector<256x256xf32>
    %102 = arith.addf %99, %101 : vector<256x256xf32>
    %cst_95 = arith.constant 0.000000e+00 : f32
    %103 = vector.broadcast %cst_95 : f32 to vector<256x256xf32>
    %104 = arith.maximumf %102, %103 : vector<256x256xf32>
    %105 = arith.addf %91, %104 : vector<256x256xf32>
    %cst_96 = arith.constant 0.000000e+00 : f32
    %106 = vector.broadcast %cst_96 : f32 to vector<256x256xf32>
    %107 = arith.maximumf %105, %106 : vector<256x256xf32>
    %c0_97 = arith.constant 0 : index
    %c0_98 = arith.constant 0 : index
    %c0_99 = arith.constant 0 : index
    %108 = vector.load %arg14[%c0_97, %c0_98, %c0_99] : memref<1x256x256xf32, #tpu.memory_space<vmem>>, vector<1x256x256xf32>
    %109 = vector.shape_cast %108 : vector<1x256x256xf32> to vector<256x256xf32>
    %110 = vector.shape_cast %107 : vector<256x256xf32> to vector<1x256x256xf32>
    tpu.vector_store %arg14[%c0_97, %c0_98, %c0_99], %110 {strides = array<i32>} : memref<1x256x256xf32, #tpu.memory_space<vmem>>, vector<1x256x256xf32>,
    return
  }
  func.func @transform_0(%arg0: i32) -> (i32, i32, i32) {
    %c0_i32 = arith.constant 0 : i32
    %c0_i32_0 = arith.constant 0 : i32
    %c0_i32_1 = arith.constant 0 : i32
    return %arg0, %c0_i32, %c0_i32_0 : i32, i32, i32
  }
  func.func @transform_1(%arg0: i32) -> (i32, i32) {
    %c0_i32 = arith.constant 0 : i32
    %c0_i32_0 = arith.constant 0 : i32
    %c0_i32_1 = arith.constant 0 : i32
    return %c0_i32, %c0_i32_0 : i32, i32
  }
  func.func @transform_2(%arg0: i32) -> (i32, i32) {
    %c0_i32 = arith.constant 0 : i32
    %c0_i32_0 = arith.constant 0 : i32
    %c0_i32_1 = arith.constant 0 : i32
    return %c0_i32, %c0_i32_0 : i32, i32
  }
  func.func @transform_3(%arg0: i32) -> (i32, i32) {
    %c0_i32 = arith.constant 0 : i32
    %c0_i32_0 = arith.constant 0 : i32
    %c0_i32_1 = arith.constant 0 : i32
    return %c0_i32, %c0_i32_0 : i32, i32
  }
  func.func @transform_4(%arg0: i32) -> (i32, i32) {
    %c0_i32 = arith.constant 0 : i32
    %c0_i32_0 = arith.constant 0 : i32
    %c0_i32_1 = arith.constant 0 : i32
    return %c0_i32, %c0_i32_0 : i32, i32
  }
  func.func @transform_5(%arg0: i32) -> (i32, i32) {
    %c0_i32 = arith.constant 0 : i32
    %c0_i32_0 = arith.constant 0 : i32
    %c0_i32_1 = arith.constant 0 : i32
    return %c0_i32, %c0_i32_0 : i32, i32
  }
  func.func @transform_6(%arg0: i32) -> (i32, i32) {
    %c0_i32 = arith.constant 0 : i32
    %c0_i32_0 = arith.constant 0 : i32
    %c0_i32_1 = arith.constant 0 : i32
    return %c0_i32, %c0_i32_0 : i32, i32
  }
  func.func @transform_7(%arg0: i32) -> (i32, i32) {
    %c0_i32 = arith.constant 0 : i32
    %c0_i32_0 = arith.constant 0 : i32
    %c0_i32_1 = arith.constant 0 : i32
    return %c0_i32, %c0_i32_0 : i32, i32
  }
  func.func @transform_8(%arg0: i32) -> (i32, i32) {
    %c0_i32 = arith.constant 0 : i32
    %c0_i32_0 = arith.constant 0 : i32
    %c0_i32_1 = arith.constant 0 : i32
    return %c0_i32, %c0_i32_0 : i32, i32
  }
  func.func @transform_9(%arg0: i32) -> (i32, i32) {
    %c0_i32 = arith.constant 0 : i32
    %c0_i32_0 = arith.constant 0 : i32
    %c0_i32_1 = arith.constant 0 : i32
    return %c0_i32, %c0_i32_0 : i32, i32
  }
  func.func @transform_10(%arg0: i32) -> (i32, i32) {
    %c0_i32 = arith.constant 0 : i32
    %c0_i32_0 = arith.constant 0 : i32
    %c0_i32_1 = arith.constant 0 : i32
    return %c0_i32, %c0_i32_0 : i32, i32
  }
  func.func @transform_11(%arg0: i32) -> (i32, i32) {
    %c0_i32 = arith.constant 0 : i32
    %c0_i32_0 = arith.constant 0 : i32
    %c0_i32_1 = arith.constant 0 : i32
    return %c0_i32, %c0_i32_0 : i32, i32
  }
  func.func @transform_12(%arg0: i32) -> (i32, i32) {
    %c0_i32 = arith.constant 0 : i32
    %c0_i32_0 = arith.constant 0 : i32
    %c0_i32_1 = arith.constant 0 : i32
    return %c0_i32, %c0_i32_0 : i32, i32
  }
  func.func @transform_13(%arg0: i32) -> (i32, i32, i32) {
    %c0_i32 = arith.constant 0 : i32
    %c0_i32_0 = arith.constant 0 : i32
    %c0_i32_1 = arith.constant 0 : i32
    return %arg0, %c0_i32, %c0_i32_0 : i32, i32, i32
  }
}

</mosaic_0001>

<llo_original>
// kernel: tpu_custom_call.1
$region0: #{tpu_custom_call.1}
  #allocation0 [shape = 'u32[]', space=smem, size = 0x4, offset = 0x4, fixed_abs, tag = 'smem constant byte address 0x4 - core index']
  #allocation1 [shape = 'u32[144,128]{1,0:T(1,128)}', space=vmem, size = 0x12000, scoped, tag = 'internal scratch']
  #allocation2 [shape = 'f32[18,24,64]{2,1,0:T(8,128)}', space=vmem, size = 0x36000, scoped, tag = 'scratch operand']
  #allocation3 [shape = 'f32[432,64]{1,0:T(8,128)}', space=vmem, size = 0x36000, scoped, tag = 'scratch operand']
  %s0 = inlined_call_operand.vmem [shape: f32[2,256,64], index: 0, kind: input, shape index: {}]
  %s1 = inlined_call_operand.vmem [shape: bf16[64,64], index: 1, kind: input, shape index: {}]
  %s2 = inlined_call_operand.vmem [shape: bf16[576,64], index: 2, kind: input, shape index: {}]
  %s3 = inlined_call_operand.vmem [shape: bf16[64,256], index: 3, kind: input, shape index: {}]
  %s4 = inlined_call_operand.vmem [shape: bf16[64,256], index: 4, kind: input, shape index: {}]
  %s5 = inlined_call_operand.vmem [shape: f32[1,64], index: 5, kind: input, shape index: {}]
  %s6 = inlined_call_operand.vmem [shape: f32[1,64], index: 6, kind: input, shape index: {}]
  %s7 = inlined_call_operand.vmem [shape: f32[1,64], index: 7, kind: input, shape index: {}]
  %s8 = inlined_call_operand.vmem [shape: f32[1,64], index: 8, kind: input, shape index: {}]
  %s9 = inlined_call_operand.vmem [shape: f32[1,256], index: 9, kind: input, shape index: {}]
  %s10 = inlined_call_operand.vmem [shape: f32[1,256], index: 10, kind: input, shape index: {}]
  %s11 = inlined_call_operand.vmem [shape: f32[1,256], index: 11, kind: input, shape index: {}]
  %s12 = inlined_call_operand.vmem [shape: f32[1,256], index: 12, kind: input, shape index: {}]
  %s13 = inlined_call_operand.hbm [shape: f32[2,256,256], index: 13, kind: output, shape index: {}]
  %s14 = sld [smem:[#allocation0]]
  $region85: #{tpu_custom_call.1} parent=0
    _
  %s16 = ssub.s32 1, %s14
  %s17 = scalar_select 0, %s16, %s14
  $region1: #{tpu_custom_call.1} parent=0
    #allocation4 [shape = 'u8[524288]{0}', space=vmem, size = 0x80000, scoped, tag = 'output window, operand 0']
    #allocation5 [shape = 's32[2]{0}', space=sflag, size = 0x8, scoped, tag = 'scoped memory for tpu_custom_call.1']
    %18 = vsyncpa [#allocation5], 0
    %s19 = scalar_lea.sflag [#allocation5], 1
    %20 = vsyncpa %s19, 0
    loop: start=0, step=1, limit=4
    $region2: #{tpu_custom_call.1} parent=1 // loop_pre_header
      _
    $region3: #{tpu_custom_call.1} parent=1 // loop_header
      %s22 = sphi 0, %s26
      %p23 = scmp.ge.s32.totalorder %s22, 4
      %s32 = sphi 0, %s34
      %s35 = sphi 0, %s32
      %s36 = sphi 0, %s35
      %s52 = sphi 0, %s36
      %s56 = sphi 0, %s56
      %s58 = sphi 0, %s56
      %s59 = sphi 0, %s58
      %s73 = sphi 0, %s59
      %s77 = sphi 0, %s77
      %s79 = sphi 0, %s77
      %s80 = sphi 0, %s79
      %s94 = sphi 0, %s80
      %s98 = sphi 0, %s98
      %s100 = sphi 0, %s98
      %s101 = sphi 0, %s100
      %s115 = sphi 0, %s101
      %s119 = sphi 0, %s119
      %s121 = sphi 0, %s119
      %s122 = sphi 0, %s121
      %s136 = sphi 0, %s122
      %s140 = sphi 0, %s140
      %s142 = sphi 0, %s140
      %s143 = sphi 0, %s142
      %s157 = sphi 0, %s143
      %s161 = sphi 0, %s161
      %s163 = sphi 0, %s161
      %s164 = sphi 0, %s163
      %s178 = sphi 0, %s164
      %s182 = sphi 0, %s182
      %s184 = sphi 0, %s182
      %s185 = sphi 0, %s184
      %s199 = sphi 0, %s185
      %s203 = sphi 0, %s203
      %s205 = sphi 0, %s203
      %s206 = sphi 0, %s205
      %s220 = sphi 0, %s206
      %s224 = sphi 0, %s224
      %s226 = sphi 0, %s224
      %s227 = sphi 0, %s226
      %s241 = sphi 0, %s227
      %s245 = sphi 0, %s245
      %s247 = sphi 0, %s245
      %s248 = sphi 0, %s247
      %s262 = sphi 0, %s248
      %s266 = sphi 0, %s266
      %s268 = sphi 0, %s266
      %s269 = sphi 0, %s268
      %s283 = sphi 0, %s269
      %s287 = sphi 0, %s287
      %s289 = sphi 0, %s287
      %s290 = sphi 0, %s289
      %s304 = sphi 0, %s290
      %s310 = sphi 0, %s312
      %s313 = sphi 0, %s310
      %s314 = sphi 0, %s313
      %s330 = sphi 0, %s314
    $region4: #{tpu_custom_call.1} parent=1 // loop_header_branch
      %25 = sbr.rel (%p23) target = $region8
    $region5: #{tpu_custom_call.1} parent=1 // loop_body
      %s27 = ssub.s32 %s22, 1
      %s28 = ssub.s32 %s22, 2
      %s29 = sadd.s32 %s22, 1
      %s30 = ssub.s32 %s22, %s29
      %p31 = scmp.eq.s32.totalorder %s30, 0
      %s33 = sadd.s32 %s32, 1
      %s34 = scalar_select %p31, %s32, %s33
      %p37 = pneg %p31
      %p38 = scmp.eq.s32.totalorder %s22, 1
      %p39 = por %p37, %p38
      %p40 = scmp.ne.s32.totalorder %s32, %s35
      %p41 = scmp.eq.s32.totalorder %s22, 0
      %p42 = por %p40, %p41
      %p43 = scmp.ne.s32.totalorder %s32, %s35
      %p44 = scmp.eq.s32.totalorder %s27, 1
      %p45 = por %p43, %p44
      %p46 = scmp.ne.s32.totalorder %s35, %s36
      %p47 = scmp.eq.s32.totalorder %s27, 0
      %p48 = por %p46, %p47
      %p49 = scmp.ne.s32.totalorder %s35, %s36
      %p50 = scmp.eq.s32.totalorder %s28, 1
      %p51 = por %p49, %p50
      %p53 = scmp.ne.s32.totalorder %s36, %s52
      %p54 = scmp.eq.s32.totalorder %s28, 0
      %p55 = por %p53, %p54
      %s57 = sadd.s32 %s56, 1
      %p60 = scmp.eq.s32.totalorder %s22, 1
      %p61 = scmp.ne.s32.totalorder %s56, %s58
      %p62 = scmp.eq.s32.totalorder %s22, 0
      %p63 = por %p61, %p62
      %p64 = scmp.ne.s32.totalorder %s56, %s58
      %p65 = scmp.eq.s32.totalorder %s27, 1
      %p66 = por %p64, %p65
      %p67 = scmp.ne.s32.totalorder %s58, %s59
      %p68 = scmp.eq.s32.totalorder %s27, 0
      %p69 = por %p67, %p68
      %p70 = scmp.ne.s32.totalorder %s58, %s59
      %p71 = scmp.eq.s32.totalorder %s28, 1
      %p72 = por %p70, %p71
      %p74 = scmp.ne.s32.totalorder %s59, %s73
      %p75 = scmp.eq.s32.totalorder %s28, 0
      %p76 = por %p74, %p75
      %s78 = sadd.s32 %s77, 1
      %p81 = scmp.eq.s32.totalorder %s22, 1
      %p82 = scmp.ne.s32.totalorder %s77, %s79
      %p83 = scmp.eq.s32.totalorder %s22, 0
      %p84 = por %p82, %p83
      %p85 = scmp.ne.s32.totalorder %s77, %s79
      %p86 = scmp.eq.s32.totalorder %s27, 1
      %p87 = por %p85, %p86
      %p88 = scmp.ne.s32.totalorder %s79, %s80
      %p89 = scmp.eq.s32.totalorder %s27, 0
      %p90 = por %p88, %p89
      %p91 = scmp.ne.s32.totalorder %s79, %s80
      %p92 = scmp.eq.s32.totalorder %s28, 1
      %p93 = por %p91, %p92
      %p95 = scmp.ne.s32.totalorder %s80, %s94
      %p96 = scmp.eq.s32.totalorder %s28, 0
      %p97 = por %p95, %p96
      %s99 = sadd.s32 %s98, 1
      %p102 = scmp.eq.s32.totalorder %s22, 1
      %p103 = scmp.ne.s32.totalorder %s98, %s100
      %p104 = scmp.eq.s32.totalorder %s22, 0
      %p105 = por %p103, %p104
      %p106 = scmp.ne.s32.totalorder %s98, %s100
      %p107 = scmp.eq.s32.totalorder %s27, 1
      %p108 = por %p106, %p107
      %p109 = scmp.ne.s32.totalorder %s100, %s101
      %p110 = scmp.eq.s32.totalorder %s27, 0
      %p111 = por %p109, %p110
      %p112 = scmp.ne.s32.totalorder %s100, %s101
      %p113 = scmp.eq.s32.totalorder %s28, 1
      %p114 = por %p112, %p113
      %p116 = scmp.ne.s32.totalorder %s101, %s115
      %p117 = scmp.eq.s32.totalorder %s28, 0
      %p118 = por %p116, %p117
      %s120 = sadd.s32 %s119, 1
      %p123 = scmp.eq.s32.totalorder %s22, 1
      %p124 = scmp.ne.s32.totalorder %s119, %s121
      %p125 = scmp.eq.s32.totalorder %s22, 0
      %p126 = por %p124, %p125
      %p127 = scmp.ne.s32.totalorder %s119, %s121
      %p128 = scmp.eq.s32.totalorder %s27, 1
      %p129 = por %p127, %p128
      %p130 = scmp.ne.s32.totalorder %s121, %s122
      %p131 = scmp.eq.s32.totalorder %s27, 0
      %p132 = por %p130, %p131
      %p133 = scmp.ne.s32.totalorder %s121, %s122
      %p134 = scmp.eq.s32.totalorder %s28, 1
      %p135 = por %p133, %p134
      %p137 = scmp.ne.s32.totalorder %s122, %s136
      %p138 = scmp.eq.s32.totalorder %s28, 0
      %p139 = por %p137, %p138
      %s141 = sadd.s32 %s140, 1
      %p144 = scmp.eq.s32.totalorder %s22, 1
      %p145 = scmp.ne.s32.totalorder %s140, %s142
      %p146 = scmp.eq.s32.totalorder %s22, 0
      %p147 = por %p145, %p146
      %p148 = scmp.ne.s32.totalorder %s140, %s142
      %p149 = scmp.eq.s32.totalorder %s27, 1
      %p150 = por %p148, %p149
      %p151 = scmp.ne.s32.totalorder %s142, %s143
      %p152 = scmp.eq.s32.totalorder %s27, 0
      %p153 = por %p151, %p152
      %p154 = scmp.ne.s32.totalorder %s142, %s143
      %p155 = scmp.eq.s32.totalorder %s28, 1
      %p156 = por %p154, %p155
      %p158 = scmp.ne.s32.totalorder %s143, %s157
      %p159 = scmp.eq.s32.totalorder %s28, 0
      %p160 = por %p158, %p159
      %s162 = sadd.s32 %s161, 1
      %p165 = scmp.eq.s32.totalorder %s22, 1
      %p166 = scmp.ne.s32.totalorder %s161, %s163
      %p167 = scmp.eq.s32.totalorder %s22, 0
      %p168 = por %p166, %p167
      %p169 = scmp.ne.s32.totalorder %s161, %s163
      %p170 = scmp.eq.s32.totalorder %s27, 1
      %p171 = por %p169, %p170
      %p172 = scmp.ne.s32.totalorder %s163, %s164
      %p173 = scmp.eq.s32.totalorder %s27, 0
      %p174 = por %p172, %p173
      %p175 = scmp.ne.s32.totalorder %s163, %s164
      %p176 = scmp.eq.s32.totalorder %s28, 1
      %p177 = por %p175, %p176
      %p179 = scmp.ne.s32.totalorder %s164, %s178
      %p180 = scmp.eq.s32.totalorder %s28, 0
      %p181 = por %p179, %p180
      %s183 = sadd.s32 %s182, 1
      %p186 = scmp.eq.s32.totalorder %s22, 1
      %p187 = scmp.ne.s32.totalorder %s182, %s184
      %p188 = scmp.eq.s32.totalorder %s22, 0
      %p189 = por %p187, %p188
      %p190 = scmp.ne.s32.totalorder %s182, %s184
      %p191 = scmp.eq.s32.totalorder %s27, 1
      %p192 = por %p190, %p191
      %p193 = scmp.ne.s32.totalorder %s184, %s185
      %p194 = scmp.eq.s32.totalorder %s27, 0
      %p195 = por %p193, %p194
      %p196 = scmp.ne.s32.totalorder %s184, %s185
      %p197 = scmp.eq.s32.totalorder %s28, 1
      %p198 = por %p196, %p197
      %p200 = scmp.ne.s32.totalorder %s185, %s199
      %p201 = scmp.eq.s32.totalorder %s28, 0
      %p202 = por %p200, %p201
      %s204 = sadd.s32 %s203, 1
      %p207 = scmp.eq.s32.totalorder %s22, 1
      %p208 = scmp.ne.s32.totalorder %s203, %s205
      %p209 = scmp.eq.s32.totalorder %s22, 0
      %p210 = por %p208, %p209
      %p211 = scmp.ne.s32.totalorder %s203, %s205
      %p212 = scmp.eq.s32.totalorder %s27, 1
      %p213 = por %p211, %p212
      %p214 = scmp.ne.s32.totalorder %s205, %s206
      %p215 = scmp.eq.s32.totalorder %s27, 0
      %p216 = por %p214, %p215
      %p217 = scmp.ne.s32.totalorder %s205, %s206
      %p218 = scmp.eq.s32.totalorder %s28, 1
      %p219 = por %p217, %p218
      %p221 = scmp.ne.s32.totalorder %s206, %s220
      %p222 = scmp.eq.s32.totalorder %s28, 0
      %p223 = por %p221, %p222
      %s225 = sadd.s32 %s224, 1
      %p228 = scmp.eq.s32.totalorder %s22, 1
      %p229 = scmp.ne.s32.totalorder %s224, %s226
      %p230 = scmp.eq.s32.totalorder %s22, 0
      %p231 = por %p229, %p230
      %p232 = scmp.ne.s32.totalorder %s224, %s226
      %p233 = scmp.eq.s32.totalorder %s27, 1
      %p234 = por %p232, %p233
      %p235 = scmp.ne.s32.totalorder %s226, %s227
      %p236 = scmp.eq.s32.totalorder %s27, 0
      %p237 = por %p235, %p236
      %p238 = scmp.ne.s32.totalorder %s226, %s227
      %p239 = scmp.eq.s32.totalorder %s28, 1
      %p240 = por %p238, %p239
      %p242 = scmp.ne.s32.totalorder %s227, %s241
      %p243 = scmp.eq.s32.totalorder %s28, 0
      %p244 = por %p242, %p243
      %s246 = sadd.s32 %s245, 1
      %p249 = scmp.eq.s32.totalorder %s22, 1
      %p250 = scmp.ne.s32.totalorder %s245, %s247
      %p251 = scmp.eq.s32.totalorder %s22, 0
      %p252 = por %p250, %p251
      %p253 = scmp.ne.s32.totalorder %s245, %s247
      %p254 = scmp.eq.s32.totalorder %s27, 1
      %p255 = por %p253, %p254
      %p256 = scmp.ne.s32.totalorder %s247, %s248
      %p257 = scmp.eq.s32.totalorder %s27, 0
      %p258 = por %p256, %p257
      %p259 = scmp.ne.s32.totalorder %s247, %s248
      %p260 = scmp.eq.s32.totalorder %s28, 1
      %p261 = por %p259, %p260
      %p263 = scmp.ne.s32.totalorder %s248, %s262
      %p264 = scmp.eq.s32.totalorder %s28, 0
      %p265 = por %p263, %p264
      %s267 = sadd.s32 %s266, 1
      %p270 = scmp.eq.s32.totalorder %s22, 1
      %p271 = scmp.ne.s32.totalorder %s266, %s268
      %p272 = scmp.eq.s32.totalorder %s22, 0
      %p273 = por %p271, %p272
      %p274 = scmp.ne.s32.totalorder %s266, %s268
      %p275 = scmp.eq.s32.totalorder %s27, 1
      %p276 = por %p274, %p275
      %p277 = scmp.ne.s32.totalorder %s268, %s269
      %p278 = scmp.eq.s32.totalorder %s27, 0
      %p279 = por %p277, %p278
      %p280 = scmp.ne.s32.totalorder %s268, %s269
      %p281 = scmp.eq.s32.totalorder %s28, 1
      %p282 = por %p280, %p281
      %p284 = scmp.ne.s32.totalorder %s269, %s283
      %p285 = scmp.eq.s32.totalorder %s28, 0
      %p286 = por %p284, %p285
      %s288 = sadd.s32 %s287, 1
      %p291 = scmp.eq.s32.totalorder %s22, 1
      %p292 = scmp.ne.s32.totalorder %s287, %s289
      %p293 = scmp.eq.s32.totalorder %s22, 0
      %p294 = por %p292, %p293
      %p295 = scmp.ne.s32.totalorder %s287, %s289
      %p296 = scmp.eq.s32.totalorder %s27, 1
      %p297 = por %p295, %p296
      %p298 = scmp.ne.s32.totalorder %s289, %s290
      %p299 = scmp.eq.s32.totalorder %s27, 0
      %p300 = por %p298, %p299
      %p301 = scmp.ne.s32.totalorder %s289, %s290
      %p302 = scmp.eq.s32.totalorder %s28, 1
      %p303 = por %p301, %p302
      %p305 = scmp.ne.s32.totalorder %s290, %s304
      %p306 = scmp.eq.s32.totalorder %s28, 0
      %p307 = por %p305, %p306
      %s308 = ssub.s32 %s22, %s29
      %p309 = scmp.eq.s32.totalorder %s308, 0
      %s311 = sadd.s32 %s310, 1
      %s312 = scalar_select %p309, %s310, %s311
      %p315 = pneg %p309
      %p316 = scmp.eq.s32.totalorder %s22, 1
      %p317 = por %p315, %p316
      %p318 = scmp.ne.s32.totalorder %s310, %s313
      %p319 = scmp.eq.s32.totalorder %s22, 0
      %p320 = por %p318, %p319
      %p321 = scmp.ne.s32.totalorder %s310, %s313
      %p322 = scmp.eq.s32.totalorder %s27, 1
      %p323 = por %p321, %p322
      %p324 = scmp.ne.s32.totalorder %s313, %s314
      %p325 = scmp.eq.s32.totalorder %s27, 0
      %p326 = por %p324, %p325
      %p327 = scmp.ne.s32.totalorder %s313, %s314
      %p328 = scmp.eq.s32.totalorder %s28, 1
      %p329 = por %p327, %p328
      %p331 = scmp.ne.s32.totalorder %s314, %s330
      %p332 = scmp.eq.s32.totalorder %s28, 0
      %p333 = por %p331, %p332
      %p334 = scmp.le.s32.totalorder 1, %s22
      %p335 = scmp.lt.s32.totalorder %s22, 3
      %p336 = pnand %p334, %p335
      %p337 = pneg %p336
      // Predicated region
      $region9: #{tpu_custom_call.1} parent=5 // pred_check
        _
      $region10: #{tpu_custom_call.1} parent=5 // pred_check_branch
        %339 = sbr.rel (%p336) target = $region12
      $region11: #{tpu_custom_call.1} parent=5 // pred_region
        %s340 = ssub.s32 %s22, 1
        // Predicated region
        $region13: #{tpu_custom_call.1} parent=11 // pred_check
          %p341 = pneg %p69
        $region14: #{tpu_custom_call.1} parent=11 // pred_check_branch
          %343 = sbr.rel (%p341) target = $region16
        $region15: #{tpu_custom_call.1} parent=11 // pred_region
          _
        $region16: #{tpu_custom_call.1} parent=11 // pred_fallthru
          _
        // Predicated region
        $region17: #{tpu_custom_call.1} parent=11 // pred_check
          %p344 = pneg %p90
        $region18: #{tpu_custom_call.1} parent=11 // pred_check_branch
          %346 = sbr.rel (%p344) target = $region20
        $region19: #{tpu_custom_call.1} parent=11 // pred_region
          _
        $region20: #{tpu_custom_call.1} parent=11 // pred_fallthru
          _
        // Predicated region
        $region21: #{tpu_custom_call.1} parent=11 // pred_check
          %p347 = pneg %p111
        $region22: #{tpu_custom_call.1} parent=11 // pred_check_branch
          %349 = sbr.rel (%p347) target = $region24
        $region23: #{tpu_custom_call.1} parent=11 // pred_region
          _
        $region24: #{tpu_custom_call.1} parent=11 // pred_fallthru
          _
        // Predicated region
        $region25: #{tpu_custom_call.1} parent=11 // pred_check
          %p350 = pneg %p132
        $region26: #{tpu_custom_call.1} parent=11 // pred_check_branch
          %352 = sbr.rel (%p350) target = $region28
        $region27: #{tpu_custom_call.1} parent=11 // pred_region
          _
        $region28: #{tpu_custom_call.1} parent=11 // pred_fallthru
          _
        // Predicated region
        $region29: #{tpu_custom_call.1} parent=11 // pred_check
          %p353 = pneg %p153
        $region30: #{tpu_custom_call.1} parent=11 // pred_check_branch
          %355 = sbr.rel (%p353) target = $region32
        $region31: #{tpu_custom_call.1} parent=11 // pred_region
          _
        $region32: #{tpu_custom_call.1} parent=11 // pred_fallthru
          _
        // Predicated region
        $region33: #{tpu_custom_call.1} parent=11 // pred_check
          %p356 = pneg %p174
        $region34: #{tpu_custom_call.1} parent=11 // pred_check_branch
          %358 = sbr.rel (%p356) target = $region36
        $region35: #{tpu_custom_call.1} parent=11 // pred_region
          _
        $region36: #{tpu_custom_call.1} parent=11 // pred_fallthru
          _
        // Predicated region
        $region37: #{tpu_custom_call.1} parent=11 // pred_check
          %p359 = pneg %p195
        $region38: #{tpu_custom_call.1} parent=11 // pred_check_branch
          %361 = sbr.rel (%p359) target = $region40
        $region39: #{tpu_custom_call.1} parent=11 // pred_region
          _
        $region40: #{tpu_custom_call.1} parent=11 // pred_fallthru
          _
        // Predicated region
        $region41: #{tpu_custom_call.1} parent=11 // pred_check
          %p362 = pneg %p216
        $region42: #{tpu_custom_call.1} parent=11 // pred_check_branch
          %364 = sbr.rel (%p362) target = $region44
        $region43: #{tpu_custom_call.1} parent=11 // pred_region
          _
        $region44: #{tpu_custom_call.1} parent=11 // pred_fallthru
          _
        // Predicated region
        $region45: #{tpu_custom_call.1} parent=11 // pred_check
          %p365 = pneg %p237
        $region46: #{tpu_custom_call.1} parent=11 // pred_check_branch
          %367 = sbr.rel (%p365) target = $region48
        $region47: #{tpu_custom_call.1} parent=11 // pred_region
          _
        $region48: #{tpu_custom_call.1} parent=11 // pred_fallthru
          _
        // Predicated region
        $region49: #{tpu_custom_call.1} parent=11 // pred_check
          %p368 = pneg %p258
        $region50: #{tpu_custom_call.1} parent=11 // pred_check_branch
          %370 = sbr.rel (%p368) target = $region52
        $region51: #{tpu_custom_call.1} parent=11 // pred_region
          _
        $region52: #{tpu_custom_call.1} parent=11 // pred_fallthru
          _
        // Predicated region
        $region53: #{tpu_custom_call.1} parent=11 // pred_check
          %p371 = pneg %p279
        $region54: #{tpu_custom_call.1} parent=11 // pred_check_branch
          %373 = sbr.rel (%p371) target = $region56
        $region55: #{tpu_custom_call.1} parent=11 // pred_region
          _
        $region56: #{tpu_custom_call.1} parent=11 // pred_fallthru
          _
        // Predicated region
        $region57: #{tpu_custom_call.1} parent=11 // pred_check
          %p374 = pneg %p300
        $region58: #{tpu_custom_call.1} parent=11 // pred_check_branch
          %376 = sbr.rel (%p374) target = $region60
        $region59: #{tpu_custom_call.1} parent=11 // pred_region
          _
        $region60: #{tpu_custom_call.1} parent=11 // pred_fallthru
          _
      $region12: #{tpu_custom_call.1} parent=5 // pred_fallthru
        _
      %p377 = scmp.lt.s32.totalorder %s22, 2
      // Predicated region
      $region61: #{tpu_custom_call.1} parent=5 // pred_check
        %p378 = pneg %p377
      $region62: #{tpu_custom_call.1} parent=5 // pred_check_branch
        %380 = sbr.rel (%p378) target = $region64
      $region63: #{tpu_custom_call.1} parent=5 // pred_region
        // Predicated region
        $region65: #{tpu_custom_call.1} parent=63 // pred_check
          %p381 = pneg %p42
        $region66: #{tpu_custom_call.1} parent=63 // pred_check_branch
          %383 = sbr.rel (%p381) target = $region68
        $region67: #{tpu_custom_call.1} parent=63 // pred_region
          %p384 = scmp.lt.s32.totalorder %s22, 1
          %s385 = scalar_select %p384, %s22, 1
          %s386 = smul.addr %s385, 32
          %s387 = smul.addr %s386, 8
          %s388 = scalar_lea.vmem %s0, %s387
        $region68: #{tpu_custom_call.1} parent=63 // pred_fallthru
          _
      $region64: #{tpu_custom_call.1} parent=5 // pred_fallthru
        _
      %p389 = scmp.le.s32.totalorder 1, %s22
      %p390 = scmp.lt.s32.totalorder %s22, 3
      %p391 = pnand %p389, %p390
      %p392 = pneg %p391
      // Predicated region
      $region69: #{tpu_custom_call.1} parent=5 // pred_check
        _
      $region70: #{tpu_custom_call.1} parent=5 // pred_check_branch
        %394 = sbr.rel (%p391) target = $region72
      $region71: #{tpu_custom_call.1} parent=5 // pred_region
        %s395 = ssub.s32 %s22, 1
        %p396 = scmp.lt.s32.totalorder %s27, 1
        %s397 = scalar_select %p396, %s27, 1
        %s398 = smul.addr %s397, 32
        %s399 = smul.addr %s398, 8
        %s400 = scalar_lea.vmem %s0, %s399
        %p401 = pneg %p48
        %p402 = pneg %p45
        %p403 = pneg %p69
        %p404 = pneg %p66
        %p405 = pneg %p90
        %p406 = pneg %p87
        %p407 = pneg %p111
        %p408 = pneg %p108
        %p409 = pneg %p132
        %p410 = pneg %p129
        %p411 = pneg %p153
        %p412 = pneg %p150
        %p413 = pneg %p174
        %p414 = pneg %p171
        %p415 = pneg %p195
        %p416 = pneg %p192
        %p417 = pneg %p216
        %p418 = pneg %p213
        %p419 = pneg %p237
        %p420 = pneg %p234
        %p421 = pneg %p258
        %p422 = pneg %p255
        %p423 = pneg %p279
        %p424 = pneg %p276
        %p425 = pneg %p300
        %p426 = pneg %p297
        %p427 = pneg %p326
        %p428 = pneg %p323
        %s429 = sand.u32 %s313, 1
        %s430 = scalar_lea.sflag [#allocation5], %s429
        %s431 = sand.u32 %s313, 1
        %s432 = smul.addr %s431, 512
        %s433 = scalar_lea.vmem [#allocation4], %s432
        %p434 = scmp.lt.s32.totalorder %s27, 1
        %s435 = scalar_select %p434, %s27, 1
        %s436 = smul.addr %s435, 32
        %s437 = smul.addr %s436, 8
        %s438 = scalar_lea.vmem %s0, %s437
        %v440 = vld [vmem:[%s438] sm:$0xff]
        %v441 = vld [vmem:[%s438 + $0x8] sm:$0xff]
        %v442 = vld [vmem:[%s438 + $0x10] sm:$0xff]
        %v443 = vld [vmem:[%s438 + $0x18] sm:$0xff]
        %v444 = vld [vmem:[%s438 + $0x20] sm:$0xff]
        %v445 = vld [vmem:[%s438 + $0x28] sm:$0xff]
        %v446 = vld [vmem:[%s438 + $0x30] sm:$0xff]
        %v447 = vld [vmem:[%s438 + $0x38] sm:$0xff]
        %v448 = vld [vmem:[%s438 + $0x40] sm:$0xff]
        %v449 = vld [vmem:[%s438 + $0x48] sm:$0xff]
        %v450 = vld [vmem:[%s438 + $0x50] sm:$0xff]
        %v451 = vld [vmem:[%s438 + $0x58] sm:$0xff]
        %v452 = vld [vmem:[%s438 + $0x60] sm:$0xff]
        %v453 = vld [vmem:[%s438 + $0x68] sm:$0xff]
        %v454 = vld [vmem:[%s438 + $0x70] sm:$0xff]
        %v455 = vld [vmem:[%s438 + $0x78] sm:$0xff]
        %v456 = vld [vmem:[%s438 + $0x80] sm:$0xff]
        %v457 = vld [vmem:[%s438 + $0x88] sm:$0xff]
        %v458 = vld [vmem:[%s438 + $0x90] sm:$0xff]
        %v459 = vld [vmem:[%s438 + $0x98] sm:$0xff]
        %v460 = vld [vmem:[%s438 + $0xa0] sm:$0xff]
        %v461 = vld [vmem:[%s438 + $0xa8] sm:$0xff]
        %v462 = vld [vmem:[%s438 + $0xb0] sm:$0xff]
        %v463 = vld [vmem:[%s438 + $0xb8] sm:$0xff]
        %v464 = vld [vmem:[%s438 + $0xc0] sm:$0xff]
        %v465 = vld [vmem:[%s438 + $0xc8] sm:$0xff]
        %v466 = vld [vmem:[%s438 + $0xd0] sm:$0xff]
        %v467 = vld [vmem:[%s438 + $0xd8] sm:$0xff]
        %v468 = vld [vmem:[%s438 + $0xe0] sm:$0xff]
        %v469 = vld [vmem:[%s438 + $0xe8] sm:$0xff]
        %v470 = vld [vmem:[%s438 + $0xf0] sm:$0xff]
        %v471 = vld [vmem:[%s438 + $0xf8] sm:$0xff]
        %v472 = vpack.c.bf16 %v441, %v440
        %v473 = vpack.c.bf16 %v443, %v442
        %v474 = vpack.c.bf16 %v445, %v444
        %v475 = vpack.c.bf16 %v447, %v446
        %v476 = vpack.c.bf16 %v449, %v448
        %v477 = vpack.c.bf16 %v451, %v450
        %v478 = vpack.c.bf16 %v453, %v452
        %v479 = vpack.c.bf16 %v455, %v454
        %v480 = vpack.c.bf16 %v457, %v456
        %v481 = vpack.c.bf16 %v459, %v458
        %v482 = vpack.c.bf16 %v461, %v460
        %v483 = vpack.c.bf16 %v463, %v462
        %v484 = vpack.c.bf16 %v465, %v464
        %v485 = vpack.c.bf16 %v467, %v466
        %v486 = vpack.c.bf16 %v469, %v468
        %v487 = vpack.c.bf16 %v471, %v470
        %v488 = vld [vmem:[%s1] sm:$0xf]
        %v489 = vld [vmem:[%s1 + $0x4] sm:$0xf]
        %v490 = vld [vmem:[%s1 + $0x8] sm:$0xf]
        %v491 = vld [vmem:[%s1 + $0xc] sm:$0xf]
        %v492 = vld [vmem:[%s1 + $0x10] sm:$0xf]
        %v493 = vld [vmem:[%s1 + $0x14] sm:$0xf]
        %v494 = vld [vmem:[%s1 + $0x18] sm:$0xf]
        %v495 = vld [vmem:[%s1 + $0x1c] sm:$0xf]
        %v504 = vunpack.c.l.b16 %v488
        %v505 = vunpack.c.l.b16 %v489
        %v506 = vunpack.c.l.b16 %v490
        %v507 = vunpack.c.l.b16 %v491
        %v508 = vunpack.c.l.b16 %v492
        %v509 = vunpack.c.l.b16 %v493
        %v510 = vunpack.c.l.b16 %v494
        %v511 = vunpack.c.l.b16 %v495
        %v512 = vpack.c.b16 %v505, %v504
        %v513 = vpack.c.b16 %v507, %v506
        %v514 = vpack.c.b16 %v509, %v508
        %v515 = vpack.c.b16 %v511, %v510
        %vm520 = vcmask 523264
        %v522 = vsel %vm520, %v472, 0
        %v525 = vsel %vm520, %v473, 0
        %v528 = vsel %vm520, %v474, 0
        %v531 = vsel %vm520, %v475, 0
        %v534 = vsel %vm520, %v476, 0
        %v537 = vsel %vm520, %v477, 0
        %v540 = vsel %vm520, %v478, 0
        %v543 = vsel %vm520, %v479, 0
        %v546 = vsel %vm520, %v480, 0
        %v549 = vsel %vm520, %v481, 0
        %v552 = vsel %vm520, %v482, 0
        %v555 = vsel %vm520, %v483, 0
        %v558 = vsel %vm520, %v484, 0
        %v561 = vsel %vm520, %v485, 0
        %v564 = vsel %vm520, %v486, 0
        %v567 = vsel %vm520, %v487, 0
        %569 = vmatprep.subr.bf16.mxu0 0
        %570 = vmatpush1.bf16.msra.mxu0 0
        %571 = vmatprep.subr.bf16.mxu0 0
        %572 = vmatpush1.bf16.msra.mxu0 0
        %573 = vmatprep.subr.bf16.mxu0 0
        %574 = vmatpush1.bf16.msra.mxu0 0
        %575 = vmatprep.subr.bf16.mxu0 0
        %576 = vmatpush1.bf16.msra.mxu0 0
        %577 = vmatprep.subr.bf16.mxu0 0
        %578 = vmatpush1.bf16.msra.mxu0 %v515
        %579 = vmatprep.subr.bf16.mxu0 0
        %580 = vmatpush1.bf16.msra.mxu0 %v514
        %581 = vmatprep.subr.bf16.mxu0 0
        %582 = vmatpush1.bf16.msra.mxu0 %v513
        %583 = vmatprep.subr.bf16.mxu0 0
        %584 = vmatpush1.bf16.msra.mxu0 %v512
        %585 = vmatprep.subr.bf16.mxu0 0
        %586 = vmatpush2.bf16.msra.mxu0 0
        %587 = vmatprep.subr.bf16.mxu0 0
        %588 = vmatpush2.bf16.msra.mxu0 0
        %589 = vmatprep.subr.bf16.mxu0 0
        %590 = vmatpush2.bf16.msra.mxu0 0
        %591 = vmatprep.subr.bf16.mxu0 0
        %592 = vmatpush2.bf16.msra.mxu0 0
        %593 = vmatprep.subr.bf16.mxu0 0
        %594 = vmatpush2.bf16.msra.mxu0 0
        %595 = vmatprep.subr.bf16.mxu0 0
        %596 = vmatpush2.bf16.msra.mxu0 0
        %597 = vmatprep.subr.bf16.mxu0 0
        %598 = vmatpush2.bf16.msra.mxu0 0
        %599 = vmatprep.subr.bf16.mxu0 0
        %600 = vmatpush2.bf16.msra.mxu0 0
        %601 = vmatprep.mubr.bf16.mxu0 0
        %602 = vmatmul.mubr.bf16.gmra.mxu0 %v522
        %v603 = vpop.f32.mrf.mxu0
        %v604 = vadd.f32 0.0, %v603
        %v605 = vpop.f32.mrf.mxu0
        %v606 = vpop.f32.mrf.mxu0
        %v607 = vadd.f32 0.0, %v606
        %v608 = vpop.f32.mrf.mxu0
        %609 = vmatprep.mubr.bf16.mxu0 0
        %610 = vmatmul.mubr.bf16.gmra.mxu0 %v525
        %v611 = vpop.f32.mrf.mxu0
        %v612 = vadd.f32 0.0, %v611
        %v613 = vpop.f32.mrf.mxu0
        %v614 = vpop.f32.mrf.mxu0
        %v615 = vadd.f32 0.0, %v614
        %v616 = vpop.f32.mrf.mxu0
        %617 = vmatprep.mubr.bf16.mxu0 0
        %618 = vmatmul.mubr.bf16.gmra.mxu0 %v528
        %v619 = vpop.f32.mrf.mxu0
        %v620 = vadd.f32 0.0, %v619
        %v621 = vpop.f32.mrf.mxu0
        %v622 = vpop.f32.mrf.mxu0
        %v623 = vadd.f32 0.0, %v622
        %v624 = vpop.f32.mrf.mxu0
        %625 = vmatprep.mubr.bf16.mxu0 0
        %626 = vmatmul.mubr.bf16.gmra.mxu0 %v531
        %v627 = vpop.f32.mrf.mxu0
        %v628 = vadd.f32 0.0, %v627
        %v629 = vpop.f32.mrf.mxu0
        %v630 = vpop.f32.mrf.mxu0
        %v631 = vadd.f32 0.0, %v630
        %v632 = vpop.f32.mrf.mxu0
        %633 = vmatprep.mubr.bf16.mxu0 0
        %634 = vmatmul.mubr.bf16.gmra.mxu0 %v534
        %v635 = vpop.f32.mrf.mxu0
        %v636 = vadd.f32 0.0, %v635
        %v637 = vpop.f32.mrf.mxu0
        %v638 = vpop.f32.mrf.mxu0
        %v639 = vadd.f32 0.0, %v638
        %v640 = vpop.f32.mrf.mxu0
        %641 = vmatprep.mubr.bf16.mxu0 0
        %642 = vmatmul.mubr.bf16.gmra.mxu0 %v537
        %v643 = vpop.f32.mrf.mxu0
        %v644 = vadd.f32 0.0, %v643
        %v645 = vpop.f32.mrf.mxu0
        %v646 = vpop.f32.mrf.mxu0
        %v647 = vadd.f32 0.0, %v646
        %v648 = vpop.f32.mrf.mxu0
        %649 = vmatprep.mubr.bf16.mxu0 0
        %650 = vmatmul.mubr.bf16.gmra.mxu0 %v540
        %v651 = vpop.f32.mrf.mxu0
        %v652 = vadd.f32 0.0, %v651
        %v653 = vpop.f32.mrf.mxu0
        %v654 = vpop.f32.mrf.mxu0
        %v655 = vadd.f32 0.0, %v654
        %v656 = vpop.f32.mrf.mxu0
        %657 = vmatprep.mubr.bf16.mxu0 0
        %658 = vmatmul.mubr.bf16.gmra.mxu0 %v543
        %v659 = vpop.f32.mrf.mxu0
        %v660 = vadd.f32 0.0, %v659
        %v661 = vpop.f32.mrf.mxu0
        %v662 = vpop.f32.mrf.mxu0
        %v663 = vadd.f32 0.0, %v662
        %v664 = vpop.f32.mrf.mxu0
        %665 = vmatprep.mubr.bf16.mxu0 0
        %666 = vmatmul.mubr.bf16.gmra.mxu0 %v546
        %v667 = vpop.f32.mrf.mxu0
        %v668 = vadd.f32 0.0, %v667
        %v669 = vpop.f32.mrf.mxu0
        %v670 = vpop.f32.mrf.mxu0
        %v671 = vadd.f32 0.0, %v670
        %v672 = vpop.f32.mrf.mxu0
        %673 = vmatprep.mubr.bf16.mxu0 0
        %674 = vmatmul.mubr.bf16.gmra.mxu0 %v549
        %v675 = vpop.f32.mrf.mxu0
        %v676 = vadd.f32 0.0, %v675
        %v677 = vpop.f32.mrf.mxu0
        %v678 = vpop.f32.mrf.mxu0
        %v679 = vadd.f32 0.0, %v678
        %v680 = vpop.f32.mrf.mxu0
        %681 = vmatprep.mubr.bf16.mxu0 0
        %682 = vmatmul.mubr.bf16.gmra.mxu0 %v552
        %v683 = vpop.f32.mrf.mxu0
        %v684 = vadd.f32 0.0, %v683
        %v685 = vpop.f32.mrf.mxu0
        %v686 = vpop.f32.mrf.mxu0
        %v687 = vadd.f32 0.0, %v686
        %v688 = vpop.f32.mrf.mxu0
        %689 = vmatprep.mubr.bf16.mxu0 0
        %690 = vmatmul.mubr.bf16.gmra.mxu0 %v555
        %v691 = vpop.f32.mrf.mxu0
        %v692 = vadd.f32 0.0, %v691
        %v693 = vpop.f32.mrf.mxu0
        %v694 = vpop.f32.mrf.mxu0
        %v695 = vadd.f32 0.0, %v694
        %v696 = vpop.f32.mrf.mxu0
        %697 = vmatprep.mubr.bf16.mxu0 0
        %698 = vmatmul.mubr.bf16.gmra.mxu0 %v558
        %v699 = vpop.f32.mrf.mxu0
        %v700 = vadd.f32 0.0, %v699
        %v701 = vpop.f32.mrf.mxu0
        %v702 = vpop.f32.mrf.mxu0
        %v703 = vadd.f32 0.0, %v702
        %v704 = vpop.f32.mrf.mxu0
        %705 = vmatprep.mubr.bf16.mxu0 0
        %706 = vmatmul.mubr.bf16.gmra.mxu0 %v561
        %v707 = vpop.f32.mrf.mxu0
        %v708 = vadd.f32 0.0, %v707
        %v709 = vpop.f32.mrf.mxu0
        %v710 = vpop.f32.mrf.mxu0
        %v711 = vadd.f32 0.0, %v710
        %v712 = vpop.f32.mrf.mxu0
        %713 = vmatprep.mubr.bf16.mxu0 0
        %714 = vmatmul.mubr.bf16.gmra.mxu0 %v564
        %v715 = vpop.f32.mrf.mxu0
        %v716 = vadd.f32 0.0, %v715
        %v717 = vpop.f32.mrf.mxu0
        %v718 = vpop.f32.mrf.mxu0
        %v719 = vadd.f32 0.0, %v718
        %v720 = vpop.f32.mrf.mxu0
        %721 = vmatprep.mubr.bf16.mxu0 0
        %722 = vmatmul.mubr.bf16.gmra.mxu0 %v567
        %v723 = vpop.f32.mrf.mxu0
        %v724 = vadd.f32 0.0, %v723
        %v725 = vpop.f32.mrf.mxu0
        %v726 = vpop.f32.mrf.mxu0
        %v727 = vadd.f32 0.0, %v726
        %v728 = vpop.f32.mrf.mxu0
        %729 = vdwg.mxu0
        %v730 = vld [vmem:[%s5] sm:$0x1]
        %v732 = vlaneseq
        %v733 = vshrl.u32 %v732, 7
        %v734 = vsub.s32 0, %v733
        %v735 = vrot.slane %v730, %v734
        %v737 = vmul.f32 %v604, %v735
        %v738 = vmul.f32 %v607, %v735
        %v739 = vmul.f32 %v612, %v735
        %v740 = vmul.f32 %v615, %v735
        %v741 = vmul.f32 %v620, %v735
        %v742 = vmul.f32 %v623, %v735
        %v743 = vmul.f32 %v628, %v735
        %v744 = vmul.f32 %v631, %v735
        %v745 = vmul.f32 %v636, %v735
        %v746 = vmul.f32 %v639, %v735
        %v747 = vmul.f32 %v644, %v735
        %v748 = vmul.f32 %v647, %v735
        %v749 = vmul.f32 %v652, %v735
        %v750 = vmul.f32 %v655, %v735
        %v751 = vmul.f32 %v660, %v735
        %v752 = vmul.f32 %v663, %v735
        %v753 = vmul.f32 %v668, %v735
        %v754 = vmul.f32 %v671, %v735
        %v755 = vmul.f32 %v676, %v735
        %v756 = vmul.f32 %v679, %v735
        %v757 = vmul.f32 %v684, %v735
        %v758 = vmul.f32 %v687, %v735
        %v759 = vmul.f32 %v692, %v735
        %v760 = vmul.f32 %v695, %v735
        %v761 = vmul.f32 %v700, %v735
        %v762 = vmul.f32 %v703, %v735
        %v763 = vmul.f32 %v708, %v735
        %v764 = vmul.f32 %v711, %v735
        %v765 = vmul.f32 %v716, %v735
        %v766 = vmul.f32 %v719, %v735
        %v767 = vmul.f32 %v724, %v735
        %v768 = vmul.f32 %v727, %v735
        %v769 = vld [vmem:[%s6] sm:$0x1]
        %v771 = vlaneseq
        %v772 = vshrl.u32 %v771, 7
        %v773 = vsub.s32 0, %v772
        %v774 = vrot.slane %v769, %v773
        %v776 = vadd.f32 %v737, %v774
        %v777 = vadd.f32 %v738, %v774
        %v778 = vadd.f32 %v739, %v774
        %v779 = vadd.f32 %v740, %v774
        %v780 = vadd.f32 %v741, %v774
        %v781 = vadd.f32 %v742, %v774
        %v782 = vadd.f32 %v743, %v774
        %v783 = vadd.f32 %v744, %v774
        %v784 = vadd.f32 %v745, %v774
        %v785 = vadd.f32 %v746, %v774
        %v786 = vadd.f32 %v747, %v774
        %v787 = vadd.f32 %v748, %v774
        %v788 = vadd.f32 %v749, %v774
        %v789 = vadd.f32 %v750, %v774
        %v790 = vadd.f32 %v751, %v774
        %v791 = vadd.f32 %v752, %v774
        %v792 = vadd.f32 %v753, %v774
        %v793 = vadd.f32 %v754, %v774
        %v794 = vadd.f32 %v755, %v774
        %v795 = vadd.f32 %v756, %v774
        %v796 = vadd.f32 %v757, %v774
        %v797 = vadd.f32 %v758, %v774
        %v798 = vadd.f32 %v759, %v774
        %v799 = vadd.f32 %v760, %v774
        %v800 = vadd.f32 %v761, %v774
        %v801 = vadd.f32 %v762, %v774
        %v802 = vadd.f32 %v763, %v774
        %v803 = vadd.f32 %v764, %v774
        %v804 = vadd.f32 %v765, %v774
        %v805 = vadd.f32 %v766, %v774
        %v806 = vadd.f32 %v767, %v774
        %v807 = vadd.f32 %v768, %v774
        %v808 = vmax.f32 %v776, 0.0
        %v809 = vmax.f32 %v777, 0.0
        %v810 = vmax.f32 %v778, 0.0
        %v811 = vmax.f32 %v779, 0.0
        %v812 = vmax.f32 %v780, 0.0
        %v813 = vmax.f32 %v781, 0.0
        %v814 = vmax.f32 %v782, 0.0
        %v815 = vmax.f32 %v783, 0.0
        %v816 = vmax.f32 %v784, 0.0
        %v817 = vmax.f32 %v785, 0.0
        %v818 = vmax.f32 %v786, 0.0
        %v819 = vmax.f32 %v787, 0.0
        %v820 = vmax.f32 %v788, 0.0
        %v821 = vmax.f32 %v789, 0.0
        %v822 = vmax.f32 %v790, 0.0
        %v823 = vmax.f32 %v791, 0.0
        %v824 = vmax.f32 %v792, 0.0
        %v825 = vmax.f32 %v793, 0.0
        %v826 = vmax.f32 %v794, 0.0
        %v827 = vmax.f32 %v795, 0.0
        %v828 = vmax.f32 %v796, 0.0
        %v829 = vmax.f32 %v797, 0.0
        %v830 = vmax.f32 %v798, 0.0
        %v831 = vmax.f32 %v799, 0.0
        %v832 = vmax.f32 %v800, 0.0
        %v833 = vmax.f32 %v801, 0.0
        %v834 = vmax.f32 %v802, 0.0
        %v835 = vmax.f32 %v803, 0.0
        %v836 = vmax.f32 %v804, 0.0
        %v837 = vmax.f32 %v805, 0.0
        %v838 = vmax.f32 %v806, 0.0
        %v839 = vmax.f32 %v807, 0.0
        %840 = vst.msk [vmem:[#allocation2] sm:$0xff] %vm520, 0.0
        %841 = vst.msk [vmem:[#allocation2 + $0x8] sm:$0xff] %vm520, 0.0
        %842 = vst.msk [vmem:[#allocation2 + $0x10] sm:$0xff] %vm520, 0.0
        %843 = vst.msk [vmem:[#allocation2 + $0x18] sm:$0xff] %vm520, 0.0
        %844 = vst.msk [vmem:[#allocation2 + $0x20] sm:$0xff] %vm520, 0.0
        %845 = vst.msk [vmem:[#allocation2 + $0x28] sm:$0xff] %vm520, 0.0
        %846 = vst.msk [vmem:[#allocation2 + $0x30] sm:$0xff] %vm520, 0.0
        %847 = vst.msk [vmem:[#allocation2 + $0x38] sm:$0xff] %vm520, 0.0
        %848 = vst.msk [vmem:[#allocation2 + $0x40] sm:$0xff] %vm520, 0.0
        %849 = vst.msk [vmem:[#allocation2 + $0x48] sm:$0xff] %vm520, 0.0
        %850 = vst.msk [vmem:[#allocation2 + $0x50] sm:$0xff] %vm520, 0.0
        %851 = vst.msk [vmem:[#allocation2 + $0x58] sm:$0xff] %vm520, 0.0
        %852 = vst.msk [vmem:[#allocation2 + $0x60] sm:$0xff] %vm520, 0.0
        %853 = vst.msk [vmem:[#allocation2 + $0x68] sm:$0xff] %vm520, 0.0
        %854 = vst.msk [vmem:[#allocation2 + $0x70] sm:$0xff] %vm520, 0.0
        %855 = vst.msk [vmem:[#allocation2 + $0x78] sm:$0xff] %vm520, 0.0
        %856 = vst.msk [vmem:[#allocation2 + $0x80] sm:$0xff] %vm520, 0.0
        %857 = vst.msk [vmem:[#allocation2 + $0x88] sm:$0xff] %vm520, 0.0
        %858 = vst.msk [vmem:[#allocation2 + $0x90] sm:$0xff] %vm520, 0.0
        %859 = vst.msk [vmem:[#allocation2 + $0x98] sm:$0xff] %vm520, 0.0
        %860 = vst.msk [vmem:[#allocation2 + $0xa0] sm:$0xff] %vm520, 0.0
        %861 = vst.msk [vmem:[#allocation2 + $0xa8] sm:$0xff] %vm520, 0.0
        %862 = vst.msk [vmem:[#allocation2 + $0xb0] sm:$0xff] %vm520, 0.0
        %863 = vst.msk [vmem:[#allocation2 + $0xb8] sm:$0xff] %vm520, 0.0
        %864 = vst.msk [vmem:[#allocation2 + $0xc0] sm:$0xff] %vm520, 0.0
        %865 = vst.msk [vmem:[#allocation2 + $0xc8] sm:$0xff] %vm520, 0.0
        %866 = vst.msk [vmem:[#allocation2 + $0xd0] sm:$0xff] %vm520, 0.0
        %867 = vst.msk [vmem:[#allocation2 + $0xd8] sm:$0xff] %vm520, 0.0
        %868 = vst.msk [vmem:[#allocation2 + $0xe0] sm:$0xff] %vm520, 0.0
        %869 = vst.msk [vmem:[#allocation2 + $0xe8] sm:$0xff] %vm520, 0.0
        %870 = vst.msk [vmem:[#allocation2 + $0xf0] sm:$0xff] %vm520, 0.0
        %871 = vst.msk [vmem:[#allocation2 + $0xf8] sm:$0xff] %vm520, 0.0
        %872 = vst.msk [vmem:[#allocation2 + $0x100] sm:$0xff] %vm520, 0.0
        %873 = vst.msk [vmem:[#allocation2 + $0x108] sm:$0xff] %vm520, 0.0
        %874 = vst.msk [vmem:[#allocation2 + $0x110] sm:$0xff] %vm520, 0.0
        %875 = vst.msk [vmem:[#allocation2 + $0x118] sm:$0xff] %vm520, 0.0
        %876 = vst.msk [vmem:[#allocation2 + $0x120] sm:$0xff] %vm520, 0.0
        %877 = vst.msk [vmem:[#allocation2 + $0x128] sm:$0xff] %vm520, 0.0
        %878 = vst.msk [vmem:[#allocation2 + $0x130] sm:$0xff] %vm520, 0.0
        %879 = vst.msk [vmem:[#allocation2 + $0x138] sm:$0xff] %vm520, 0.0
        %880 = vst.msk [vmem:[#allocation2 + $0x140] sm:$0xff] %vm520, 0.0
        %881 = vst.msk [vmem:[#allocation2 + $0x148] sm:$0xff] %vm520, 0.0
        %882 = vst.msk [vmem:[#allocation2 + $0x150] sm:$0xff] %vm520, 0.0
        %883 = vst.msk [vmem:[#allocation2 + $0x158] sm:$0xff] %vm520, 0.0
        %884 = vst.msk [vmem:[#allocation2 + $0x160] sm:$0xff] %vm520, 0.0
        %885 = vst.msk [vmem:[#allocation2 + $0x168] sm:$0xff] %vm520, 0.0
        %886 = vst.msk [vmem:[#allocation2 + $0x170] sm:$0xff] %vm520, 0.0
        %887 = vst.msk [vmem:[#allocation2 + $0x178] sm:$0xff] %vm520, 0.0
        %888 = vst.msk [vmem:[#allocation2 + $0x180] sm:$0xff] %vm520, 0.0
        %889 = vst.msk [vmem:[#allocation2 + $0x188] sm:$0xff] %vm520, 0.0
        %890 = vst.msk [vmem:[#allocation2 + $0x190] sm:$0xff] %vm520, 0.0
        %891 = vst.msk [vmem:[#allocation2 + $0x198] sm:$0xff] %vm520, 0.0
        %892 = vst.msk [vmem:[#allocation2 + $0x1a0] sm:$0xff] %vm520, 0.0
        %893 = vst.msk [vmem:[#allocation2 + $0x1a8] sm:$0xff] %vm520, 0.0
        %s894 = scalar_lea.vmem [#allocation2], 24
        %895 = vst.msk [vmem:[%s894] sm:$0xff] %vm520, %v808
        %896 = vst.msk [vmem:[%s894 + $0x8] sm:$0xff] %vm520, %v809
        %897 = vst.msk [vmem:[%s894 + $0x18] sm:$0xff] %vm520, %v810
        %898 = vst.msk [vmem:[%s894 + $0x20] sm:$0xff] %vm520, %v811
        %899 = vst.msk [vmem:[%s894 + $0x30] sm:$0xff] %vm520, %v812
        %900 = vst.msk [vmem:[%s894 + $0x38] sm:$0xff] %vm520, %v813
        %901 = vst.msk [vmem:[%s894 + $0x48] sm:$0xff] %vm520, %v814
        %902 = vst.msk [vmem:[%s894 + $0x50] sm:$0xff] %vm520, %v815
        %903 = vst.msk [vmem:[%s894 + $0x60] sm:$0xff] %vm520, %v816
        %904 = vst.msk [vmem:[%s894 + $0x68] sm:$0xff] %vm520, %v817
        %905 = vst.msk [vmem:[%s894 + $0x78] sm:$0xff] %vm520, %v818
        %906 = vst.msk [vmem:[%s894 + $0x80] sm:$0xff] %vm520, %v819
        %907 = vst.msk [vmem:[%s894 + $0x90] sm:$0xff] %vm520, %v820
        %908 = vst.msk [vmem:[%s894 + $0x98] sm:$0xff] %vm520, %v821
        %909 = vst.msk [vmem:[%s894 + $0xa8] sm:$0xff] %vm520, %v822
        %910 = vst.msk [vmem:[%s894 + $0xb0] sm:$0xff] %vm520, %v823
        %911 = vst.msk [vmem:[%s894 + $0xc0] sm:$0xff] %vm520, %v824
        %912 = vst.msk [vmem:[%s894 + $0xc8] sm:$0xff] %vm520, %v825
        %913 = vst.msk [vmem:[%s894 + $0xd8] sm:$0xff] %vm520, %v826
        %914 = vst.msk [vmem:[%s894 + $0xe0] sm:$0xff] %vm520, %v827
        %915 = vst.msk [vmem:[%s894 + $0xf0] sm:$0xff] %vm520, %v828
        %916 = vst.msk [vmem:[%s894 + $0xf8] sm:$0xff] %vm520, %v829
        %917 = vst.msk [vmem:[%s894 + $0x108] sm:$0xff] %vm520, %v830
        %918 = vst.msk [vmem:[%s894 + $0x110] sm:$0xff] %vm520, %v831
        %919 = vst.msk [vmem:[%s894 + $0x120] sm:$0xff] %vm520, %v832
        %920 = vst.msk [vmem:[%s894 + $0x128] sm:$0xff] %vm520, %v833
        %921 = vst.msk [vmem:[%s894 + $0x138] sm:$0xff] %vm520, %v834
        %922 = vst.msk [vmem:[%s894 + $0x140] sm:$0xff] %vm520, %v835
        %923 = vst.msk [vmem:[%s894 + $0x150] sm:$0xff] %vm520, %v836
        %924 = vst.msk [vmem:[%s894 + $0x158] sm:$0xff] %vm520, %v837
        %925 = vst.msk [vmem:[%s894 + $0x168] sm:$0xff] %vm520, %v838
        %926 = vst.msk [vmem:[%s894 + $0x170] sm:$0xff] %vm520, %v839
        %v927 = vld [vmem:[#allocation2] sm:$0xff]
        %v928 = vld [vmem:[#allocation2 + $0x8] sm:$0xff]
        %v929 = vld [vmem:[#allocation2 + $0x10] sm:$0xff]
        %v930 = vld [vmem:[#allocation2 + $0x18] sm:$0xff]
        %v931 = vld [vmem:[#allocation2 + $0x20] sm:$0xff]
        %v932 = vld [vmem:[#allocation2 + $0x28] sm:$0xff]
        %v933 = vld [vmem:[#allocation2 + $0x30] sm:$0xff]
        %v934 = vld [vmem:[#allocation2 + $0x38] sm:$0xff]
        %v935 = vld [vmem:[#allocation2 + $0x40] sm:$0xff]
        %v936 = vld [vmem:[#allocation2 + $0x48] sm:$0xff]
        %v937 = vld [vmem:[#allocation2 + $0x50] sm:$0xff]
        %v938 = vld [vmem:[#allocation2 + $0x58] sm:$0xff]
        %v939 = vld [vmem:[#allocation2 + $0x60] sm:$0xff]
        %v940 = vld [vmem:[#allocation2 + $0x68] sm:$0xff]
        %v941 = vld [vmem:[#allocation2 + $0x70] sm:$0xff]
        %v942 = vld [vmem:[#allocation2 + $0x78] sm:$0xff]
        %v943 = vld [vmem:[#allocation2 + $0x80] sm:$0xff]
        %v944 = vld [vmem:[#allocation2 + $0x88] sm:$0xff]
        %v945 = vld [vmem:[#allocation2 + $0x90] sm:$0xff]
        %v946 = vld [vmem:[#allocation2 + $0x98] sm:$0xff]
        %v947 = vld [vmem:[#allocation2 + $0xa0] sm:$0xff]
        %v948 = vld [vmem:[#allocation2 + $0xa8] sm:$0xff]
        %v949 = vld [vmem:[#allocation2 + $0xb0] sm:$0xff]
        %v950 = vld [vmem:[#allocation2 + $0xb8] sm:$0xff]
        %v951 = vld [vmem:[#allocation2 + $0xc0] sm:$0xff]
        %v952 = vld [vmem:[#allocation2 + $0xc8] sm:$0xff]
        %v953 = vld [vmem:[#allocation2 + $0xd0] sm:$0xff]
        %v954 = vld [vmem:[#allocation2 + $0xd8] sm:$0xff]
        %v955 = vld [vmem:[#allocation2 + $0xe0] sm:$0xff]
        %v956 = vld [vmem:[#allocation2 + $0xe8] sm:$0xff]
        %v957 = vld [vmem:[#allocation2 + $0xf0] sm:$0xff]
        %v958 = vld [vmem:[#allocation2 + $0xf8] sm:$0xff]
        %v959 = vld [vmem:[#allocation2 + $0x100] sm:$0xff]
        %v960 = vld [vmem:[#allocation2 + $0x108] sm:$0xff]
        %v961 = vld [vmem:[#allocation2 + $0x110] sm:$0xff]
        %v962 = vld [vmem:[#allocation2 + $0x118] sm:$0xff]
        %v963 = vld [vmem:[#allocation2 + $0x120] sm:$0xff]
        %v964 = vld [vmem:[#allocation2 + $0x128] sm:$0xff]
        %v965 = vld [vmem:[#allocation2 + $0x130] sm:$0xff]
        %v966 = vld [vmem:[#allocation2 + $0x138] sm:$0xff]
        %v967 = vld [vmem:[#allocation2 + $0x140] sm:$0xff]
        %v968 = vld [vmem:[#allocation2 + $0x148] sm:$0xff]
        %v969 = vld [vmem:[#allocation2 + $0x150] sm:$0xff]
        %v970 = vld [vmem:[#allocation2 + $0x158] sm:$0xff]
        %v971 = vld [vmem:[#allocation2 + $0x160] sm:$0xff]
        %v972 = vld [vmem:[#allocation2 + $0x168] sm:$0xff]
        %v973 = vld [vmem:[#allocation2 + $0x170] sm:$0xff]
        %v974 = vld [vmem:[#allocation2 + $0x178] sm:$0xff]
        %v975 = vld [vmem:[#allocation2 + $0x180] sm:$0xff]
        %v976 = vld [vmem:[#allocation2 + $0x188] sm:$0xff]
        %v977 = vld [vmem:[#allocation2 + $0x190] sm:$0xff]
        %v978 = vld [vmem:[#allocation2 + $0x198] sm:$0xff]
        %v979 = vld [vmem:[#allocation2 + $0x1a0] sm:$0xff]
        %v980 = vld [vmem:[#allocation2 + $0x1a8] sm:$0xff]
        %v981 = vpack.c.bf16 %v928, %v927
        %v982 = vpack.c.bf16 %v930, %v929
        %v983 = vpack.c.bf16 %v932, %v931
        %v984 = vpack.c.bf16 %v934, %v933
        %v985 = vpack.c.bf16 %v936, %v935
        %v986 = vpack.c.bf16 %v938, %v937
        %v987 = vpack.c.bf16 %v940, %v939
        %v988 = vpack.c.bf16 %v942, %v941
        %v989 = vpack.c.bf16 %v944, %v943
        %v990 = vpack.c.bf16 %v946, %v945
        %v991 = vpack.c.bf16 %v948, %v947
        %v992 = vpack.c.bf16 %v950, %v949
        %v993 = vpack.c.bf16 %v952, %v951
        %v994 = vpack.c.bf16 %v954, %v953
        %v995 = vpack.c.bf16 %v956, %v955
        %v996 = vpack.c.bf16 %v958, %v957
        %v997 = vpack.c.bf16 %v960, %v959
        %v998 = vpack.c.bf16 %v962, %v961
        %v999 = vpack.c.bf16 %v964, %v963
        %v1000 = vpack.c.bf16 %v966, %v965
        %v1001 = vpack.c.bf16 %v968, %v967
        %v1002 = vpack.c.bf16 %v970, %v969
        %v1003 = vpack.c.bf16 %v972, %v971
        %v1004 = vpack.c.bf16 %v974, %v973
        %v1005 = vpack.c.bf16 %v976, %v975
        %v1006 = vpack.c.bf16 %v978, %v977
        %v1007 = vpack.c.bf16 %v980, %v979
        %v1008 = vld [vmem:[%s2] sm:$0xf]
        %v1009 = vld [vmem:[%s2 + $0x4] sm:$0xf]
        %v1010 = vld [vmem:[%s2 + $0x8] sm:$0xf]
        %v1011 = vld [vmem:[%s2 + $0xc] sm:$0xf]
        %v1012 = vld [vmem:[%s2 + $0x10] sm:$0xf]
        %v1013 = vld [vmem:[%s2 + $0x14] sm:$0xf]
        %v1014 = vld [vmem:[%s2 + $0x18] sm:$0xf]
        %v1015 = vld [vmem:[%s2 + $0x1c] sm:$0xf]
        %v1024 = vunpack.c.l.b16 %v1008
        %v1025 = vunpack.c.l.b16 %v1009
        %v1026 = vunpack.c.l.b16 %v1010
        %v1027 = vunpack.c.l.b16 %v1011
        %v1028 = vunpack.c.l.b16 %v1012
        %v1029 = vunpack.c.l.b16 %v1013
        %v1030 = vunpack.c.l.b16 %v1014
        %v1031 = vunpack.c.l.b16 %v1015
        %v1032 = vpack.c.b16 %v1025, %v1024
        %v1033 = vpack.c.b16 %v1027, %v1026
        %v1034 = vpack.c.b16 %v1029, %v1028
        %v1035 = vpack.c.b16 %v1031, %v1030
        %v1041 = vsel %vm520, %v981, 0
        %v1044 = vsel %vm520, %v982, 0
        %v1047 = vsel %vm520, %v983, 0
        %v1050 = vsel %vm520, %v984, 0
        %v1053 = vsel %vm520, %v985, 0
        %v1056 = vsel %vm520, %v986, 0
        %v1059 = vsel %vm520, %v987, 0
        %v1062 = vsel %vm520, %v988, 0
        %v1065 = vsel %vm520, %v989, 0
        %v1068 = vsel %vm520, %v990, 0
        %v1071 = vsel %vm520, %v991, 0
        %v1074 = vsel %vm520, %v992, 0
        %v1077 = vsel %vm520, %v993, 0
        %v1080 = vsel %vm520, %v994, 0
        %v1083 = vsel %vm520, %v995, 0
        %v1086 = vsel %vm520, %v996, 0
        %v1089 = vsel %vm520, %v997, 0
        %v1092 = vsel %vm520, %v998, 0
        %v1095 = vsel %vm520, %v999, 0
        %v1098 = vsel %vm520, %v1000, 0
        %v1101 = vsel %vm520, %v1001, 0
        %v1104 = vsel %vm520, %v1002, 0
        %v1107 = vsel %vm520, %v1003, 0
        %v1110 = vsel %vm520, %v1004, 0
        %v1113 = vsel %vm520, %v1005, 0
        %v1116 = vsel %vm520, %v1006, 0
        %v1119 = vsel %vm520, %v1007, 0
        %1121 = vmatprep.subr.bf16.mxu0 0
        %1122 = vmatpush1.bf16.msra.mxu0 0
        %1123 = vmatprep.subr.bf16.mxu0 0
        %1124 = vmatpush1.bf16.msra.mxu0 0
        %1125 = vmatprep.subr.bf16.mxu0 0
        %1126 = vmatpush1.bf16.msra.mxu0 0
        %1127 = vmatprep.subr.bf16.mxu0 0
        %1128 = vmatpush1.bf16.msra.mxu0 0
        %1129 = vmatprep.subr.bf16.mxu0 0
        %1130 = vmatpush1.bf16.msra.mxu0 %v1035
        %1131 = vmatprep.subr.bf16.mxu0 0
        %1132 = vmatpush1.bf16.msra.mxu0 %v1034
        %1133 = vmatprep.subr.bf16.mxu0 0
        %1134 = vmatpush1.bf16.msra.mxu0 %v1033
        %1135 = vmatprep.subr.bf16.mxu0 0
        %1136 = vmatpush1.bf16.msra.mxu0 %v1032
        %1137 = vmatprep.subr.bf16.mxu0 0
        %1138 = vmatpush2.bf16.msra.mxu0 0
        %1139 = vmatprep.subr.bf16.mxu0 0
        %1140 = vmatpush2.bf16.msra.mxu0 0
        %1141 = vmatprep.subr.bf16.mxu0 0
        %1142 = vmatpush2.bf16.msra.mxu0 0
        %1143 = vmatprep.subr.bf16.mxu0 0
        %1144 = vmatpush2.bf16.msra.mxu0 0
        %1145 = vmatprep.subr.bf16.mxu0 0
        %1146 = vmatpush2.bf16.msra.mxu0 0
        %1147 = vmatprep.subr.bf16.mxu0 0
        %1148 = vmatpush2.bf16.msra.mxu0 0
        %1149 = vmatprep.subr.bf16.mxu0 0
        %1150 = vmatpush2.bf16.msra.mxu0 0
        %1151 = vmatprep.subr.bf16.mxu0 0
        %1152 = vmatpush2.bf16.msra.mxu0 0
        %1153 = vmatprep.mubr.bf16.mxu0 0
        %1154 = vmatmul.mubr.bf16.gmra.mxu0 %v1041
        %v1155 = vpop.f32.mrf.mxu0
        %v1156 = vadd.f32 0.0, %v1155
        %v1157 = vpop.f32.mrf.mxu0
        %v1158 = vpop.f32.mrf.mxu0
        %v1159 = vadd.f32 0.0, %v1158
        %v1160 = vpop.f32.mrf.mxu0
        %1161 = vmatprep.mubr.bf16.mxu0 0
        %1162 = vmatmul.mubr.bf16.gmra.mxu0 %v1044
        %v1163 = vpop.f32.mrf.mxu0
        %v1164 = vadd.f32 0.0, %v1163
        %v1165 = vpop.f32.mrf.mxu0
        %v1166 = vpop.f32.mrf.mxu0
        %v1167 = vadd.f32 0.0, %v1166
        %v1168 = vpop.f32.mrf.mxu0
        %1169 = vmatprep.mubr.bf16.mxu0 0
        %1170 = vmatmul.mubr.bf16.gmra.mxu0 %v1047
        %v1171 = vpop.f32.mrf.mxu0
        %v1172 = vadd.f32 0.0, %v1171
        %v1173 = vpop.f32.mrf.mxu0
        %v1174 = vpop.f32.mrf.mxu0
        %v1175 = vadd.f32 0.0, %v1174
        %v1176 = vpop.f32.mrf.mxu0
        %1177 = vmatprep.mubr.bf16.mxu0 0
        %1178 = vmatmul.mubr.bf16.gmra.mxu0 %v1050
        %v1179 = vpop.f32.mrf.mxu0
        %v1180 = vadd.f32 0.0, %v1179
        %v1181 = vpop.f32.mrf.mxu0
        %v1182 = vpop.f32.mrf.mxu0
        %v1183 = vadd.f32 0.0, %v1182
        %v1184 = vpop.f32.mrf.mxu0
        %1185 = vmatprep.mubr.bf16.mxu0 0
        %1186 = vmatmul.mubr.bf16.gmra.mxu0 %v1053
        %v1187 = vpop.f32.mrf.mxu0
        %v1188 = vadd.f32 0.0, %v1187
        %v1189 = vpop.f32.mrf.mxu0
        %v1190 = vpop.f32.mrf.mxu0
        %v1191 = vadd.f32 0.0, %v1190
        %v1192 = vpop.f32.mrf.mxu0
        %1193 = vmatprep.mubr.bf16.mxu0 0
        %1194 = vmatmul.mubr.bf16.gmra.mxu0 %v1056
        %v1195 = vpop.f32.mrf.mxu0
        %v1196 = vadd.f32 0.0, %v1195
        %v1197 = vpop.f32.mrf.mxu0
        %v1198 = vpop.f32.mrf.mxu0
        %v1199 = vadd.f32 0.0, %v1198
        %v1200 = vpop.f32.mrf.mxu0
        %1201 = vmatprep.mubr.bf16.mxu0 0
        %1202 = vmatmul.mubr.bf16.gmra.mxu0 %v1059
        %v1203 = vpop.f32.mrf.mxu0
        %v1204 = vadd.f32 0.0, %v1203
        %v1205 = vpop.f32.mrf.mxu0
        %v1206 = vpop.f32.mrf.mxu0
        %v1207 = vadd.f32 0.0, %v1206
        %v1208 = vpop.f32.mrf.mxu0
        %1209 = vmatprep.mubr.bf16.mxu0 0
        %1210 = vmatmul.mubr.bf16.gmra.mxu0 %v1062
        %v1211 = vpop.f32.mrf.mxu0
        %v1212 = vadd.f32 0.0, %v1211
        %v1213 = vpop.f32.mrf.mxu0
        %v1214 = vpop.f32.mrf.mxu0
        %v1215 = vadd.f32 0.0, %v1214
        %v1216 = vpop.f32.mrf.mxu0
        %1217 = vmatprep.mubr.bf16.mxu0 0
        %1218 = vmatmul.mubr.bf16.gmra.mxu0 %v1065
        %v1219 = vpop.f32.mrf.mxu0
        %v1220 = vadd.f32 0.0, %v1219
        %v1221 = vpop.f32.mrf.mxu0
        %v1222 = vpop.f32.mrf.mxu0
        %v1223 = vadd.f32 0.0, %v1222
        %v1224 = vpop.f32.mrf.mxu0
        %1225 = vmatprep.mubr.bf16.mxu0 0
        %1226 = vmatmul.mubr.bf16.gmra.mxu0 %v1068
        %v1227 = vpop.f32.mrf.mxu0
        %v1228 = vadd.f32 0.0, %v1227
        %v1229 = vpop.f32.mrf.mxu0
        %v1230 = vpop.f32.mrf.mxu0
        %v1231 = vadd.f32 0.0, %v1230
        %v1232 = vpop.f32.mrf.mxu0
        %1233 = vmatprep.mubr.bf16.mxu0 0
        %1234 = vmatmul.mubr.bf16.gmra.mxu0 %v1071
        %v1235 = vpop.f32.mrf.mxu0
        %v1236 = vadd.f32 0.0, %v1235
        %v1237 = vpop.f32.mrf.mxu0
        %v1238 = vpop.f32.mrf.mxu0
        %v1239 = vadd.f32 0.0, %v1238
        %v1240 = vpop.f32.mrf.mxu0
        %1241 = vmatprep.mubr.bf16.mxu0 0
        %1242 = vmatmul.mubr.bf16.gmra.mxu0 %v1074
        %v1243 = vpop.f32.mrf.mxu0
        %v1244 = vadd.f32 0.0, %v1243
        %v1245 = vpop.f32.mrf.mxu0
        %v1246 = vpop.f32.mrf.mxu0
        %v1247 = vadd.f32 0.0, %v1246
        %v1248 = vpop.f32.mrf.mxu0
        %1249 = vmatprep.mubr.bf16.mxu0 0
        %1250 = vmatmul.mubr.bf16.gmra.mxu0 %v1077
        %v1251 = vpop.f32.mrf.mxu0
        %v1252 = vadd.f32 0.0, %v1251
        %v1253 = vpop.f32.mrf.mxu0
        %v1254 = vpop.f32.mrf.mxu0
        %v1255 = vadd.f32 0.0, %v1254
        %v1256 = vpop.f32.mrf.mxu0
        %1257 = vmatprep.mubr.bf16.mxu0 0
        %1258 = vmatmul.mubr.bf16.gmra.mxu0 %v1080
        %v1259 = vpop.f32.mrf.mxu0
        %v1260 = vadd.f32 0.0, %v1259
        %v1261 = vpop.f32.mrf.mxu0
        %v1262 = vpop.f32.mrf.mxu0
        %v1263 = vadd.f32 0.0, %v1262
        %v1264 = vpop.f32.mrf.mxu0
        %1265 = vmatprep.mubr.bf16.mxu0 0
        %1266 = vmatmul.mubr.bf16.gmra.mxu0 %v1083
        %v1267 = vpop.f32.mrf.mxu0
        %v1268 = vadd.f32 0.0, %v1267
        %v1269 = vpop.f32.mrf.mxu0
        %v1270 = vpop.f32.mrf.mxu0
        %v1271 = vadd.f32 0.0, %v1270
        %v1272 = vpop.f32.mrf.mxu0
        %1273 = vmatprep.mubr.bf16.mxu0 0
        %1274 = vmatmul.mubr.bf16.gmra.mxu0 %v1086
        %v1275 = vpop.f32.mrf.mxu0
        %v1276 = vadd.f32 0.0, %v1275
        %v1277 = vpop.f32.mrf.mxu0
        %v1278 = vpop.f32.mrf.mxu0
        %v1279 = vadd.f32 0.0, %v1278
        %v1280 = vpop.f32.mrf.mxu0
        %1281 = vmatprep.mubr.bf16.mxu0 0
        %1282 = vmatmul.mubr.bf16.gmra.mxu0 %v1089
        %v1283 = vpop.f32.mrf.mxu0
        %v1284 = vadd.f32 0.0, %v1283
        %v1285 = vpop.f32.mrf.mxu0
        %v1286 = vpop.f32.mrf.mxu0
        %v1287 = vadd.f32 0.0, %v1286
        %v1288 = vpop.f32.mrf.mxu0
        %1289 = vmatprep.mubr.bf16.mxu0 0
        %1290 = vmatmul.mubr.bf16.gmra.mxu0 %v1092
        %v1291 = vpop.f32.mrf.mxu0
        %v1292 = vadd.f32 0.0, %v1291
        %v1293 = vpop.f32.mrf.mxu0
        %v1294 = vpop.f32.mrf.mxu0
        %v1295 = vadd.f32 0.0, %v1294
        %v1296 = vpop.f32.mrf.mxu0
        %1297 = vmatprep.mubr.bf16.mxu0 0
        %1298 = vmatmul.mubr.bf16.gmra.mxu0 %v1095
        %v1299 = vpop.f32.mrf.mxu0
        %v1300 = vadd.f32 0.0, %v1299
        %v1301 = vpop.f32.mrf.mxu0
        %v1302 = vpop.f32.mrf.mxu0
        %v1303 = vadd.f32 0.0, %v1302
        %v1304 = vpop.f32.mrf.mxu0
        %1305 = vmatprep.mubr.bf16.mxu0 0
        %1306 = vmatmul.mubr.bf16.gmra.mxu0 %v1098
        %v1307 = vpop.f32.mrf.mxu0
        %v1308 = vadd.f32 0.0, %v1307
        %v1309 = vpop.f32.mrf.mxu0
        %v1310 = vpop.f32.mrf.mxu0
        %v1311 = vadd.f32 0.0, %v1310
        %v1312 = vpop.f32.mrf.mxu0
        %1313 = vmatprep.mubr.bf16.mxu0 0
        %1314 = vmatmul.mubr.bf16.gmra.mxu0 %v1101
        %v1315 = vpop.f32.mrf.mxu0
        %v1316 = vadd.f32 0.0, %v1315
        %v1317 = vpop.f32.mrf.mxu0
        %v1318 = vpop.f32.mrf.mxu0
        %v1319 = vadd.f32 0.0, %v1318
        %v1320 = vpop.f32.mrf.mxu0
        %1321 = vmatprep.mubr.bf16.mxu0 0
        %1322 = vmatmul.mubr.bf16.gmra.mxu0 %v1104
        %v1323 = vpop.f32.mrf.mxu0
        %v1324 = vadd.f32 0.0, %v1323
        %v1325 = vpop.f32.mrf.mxu0
        %v1326 = vpop.f32.mrf.mxu0
        %v1327 = vadd.f32 0.0, %v1326
        %v1328 = vpop.f32.mrf.mxu0
        %1329 = vmatprep.mubr.bf16.mxu0 0
        %1330 = vmatmul.mubr.bf16.gmra.mxu0 %v1107
        %v1331 = vpop.f32.mrf.mxu0
        %v1332 = vadd.f32 0.0, %v1331
        %v1333 = vpop.f32.mrf.mxu0
        %v1334 = vpop.f32.mrf.mxu0
        %v1335 = vadd.f32 0.0, %v1334
        %v1336 = vpop.f32.mrf.mxu0
        %1337 = vmatprep.mubr.bf16.mxu0 0
        %1338 = vmatmul.mubr.bf16.gmra.mxu0 %v1110
        %v1339 = vpop.f32.mrf.mxu0
        %v1340 = vadd.f32 0.0, %v1339
        %v1341 = vpop.f32.mrf.mxu0
        %v1342 = vpop.f32.mrf.mxu0
        %v1343 = vadd.f32 0.0, %v1342
        %v1344 = vpop.f32.mrf.mxu0
        %1345 = vmatprep.mubr.bf16.mxu0 0
        %1346 = vmatmul.mubr.bf16.gmra.mxu0 %v1113
        %v1347 = vpop.f32.mrf.mxu0
        %v1348 = vadd.f32 0.0, %v1347
        %v1349 = vpop.f32.mrf.mxu0
        %v1350 = vpop.f32.mrf.mxu0
        %v1351 = vadd.f32 0.0, %v1350
        %v1352 = vpop.f32.mrf.mxu0
        %1353 = vmatprep.mubr.bf16.mxu0 0
        %1354 = vmatmul.mubr.bf16.gmra.mxu0 %v1116
        %v1355 = vpop.f32.mrf.mxu0
        %v1356 = vadd.f32 0.0, %v1355
        %v1357 = vpop.f32.mrf.mxu0
        %v1358 = vpop.f32.mrf.mxu0
        %v1359 = vadd.f32 0.0, %v1358
        %v1360 = vpop.f32.mrf.mxu0
        %1361 = vmatprep.mubr.bf16.mxu0 0
        %1362 = vmatmul.mubr.bf16.gmra.mxu0 %v1119
        %v1363 = vpop.f32.mrf.mxu0
        %v1364 = vadd.f32 0.0, %v1363
        %v1365 = vpop.f32.mrf.mxu0
        %v1366 = vpop.f32.mrf.mxu0
        %v1367 = vadd.f32 0.0, %v1366
        %v1368 = vpop.f32.mrf.mxu0
        %1369 = vdwg.mxu0
        %v1370 = vrot.slane %v1156, 7
        %v1371 = vrot.slane %v1159, 7
        %v1372 = vrot.slane %v1164, 7
        %v1373 = vrot.slane %v1167, 7
        %v1374 = vrot.slane %v1172, 7
        %v1375 = vrot.slane %v1175, 7
        %v1376 = vrot.slane %v1180, 7
        %v1377 = vrot.slane %v1183, 7
        %v1378 = vrot.slane %v1188, 7
        %v1379 = vrot.slane %v1191, 7
        %v1380 = vrot.slane %v1196, 7
        %v1381 = vrot.slane %v1199, 7
        %v1382 = vrot.slane %v1204, 7
        %v1383 = vrot.slane %v1207, 7
        %v1384 = vrot.slane %v1212, 7
        %v1385 = vrot.slane %v1215, 7
        %v1386 = vrot.slane %v1220, 7
        %v1387 = vrot.slane %v1223, 7
        %v1388 = vrot.slane %v1228, 7
        %v1389 = vrot.slane %v1231, 7
        %v1390 = vrot.slane %v1236, 7
        %v1391 = vrot.slane %v1239, 7
        %v1392 = vrot.slane %v1244, 7
        %v1393 = vrot.slane %v1247, 7
        %v1394 = vrot.slane %v1252, 7
        %v1395 = vrot.slane %v1255, 7
        %v1396 = vrot.slane %v1260, 7
        %v1397 = vrot.slane %v1263, 7
        %v1398 = vrot.slane %v1268, 7
        %v1399 = vrot.slane %v1271, 7
        %v1400 = vrot.slane %v1276, 7
        %v1401 = vrot.slane %v1279, 7
        %v1402 = vrot.slane %v1284, 7
        %v1403 = vrot.slane %v1287, 7
        %v1404 = vrot.slane %v1292, 7
        %v1405 = vrot.slane %v1295, 7
        %v1406 = vrot.slane %v1300, 7
        %v1407 = vrot.slane %v1303, 7
        %v1408 = vrot.slane %v1308, 7
        %v1409 = vrot.slane %v1311, 7
        %v1410 = vrot.slane %v1316, 7
        %v1411 = vrot.slane %v1319, 7
        %v1412 = vrot.slane %v1324, 7
        %v1413 = vrot.slane %v1327, 7
        %v1414 = vrot.slane %v1332, 7
        %v1415 = vrot.slane %v1335, 7
        %v1416 = vrot.slane %v1340, 7
        %v1417 = vrot.slane %v1343, 7
        %v1418 = vrot.slane %v1348, 7
        %v1419 = vrot.slane %v1351, 7
        %v1420 = vrot.slane %v1356, 7
        %v1421 = vrot.slane %v1359, 7
        %v1422 = vrot.slane %v1364, 7
        %v1423 = vrot.slane %v1367, 7
        %v1424 = vlaneseq
        %v1425 = vshrl.u32 %v1424, 7
        %vm1426 = vcmp.lt.s32.totalorder %v1425, 1
        %v1427 = vsel %vm1426, %v1422, %v1423
        %v1428 = vsel %vm1426, %v1421, %v1422
        %v1429 = vsel %vm1426, %v1420, %v1421
        %v1430 = vsel %vm1426, %v1419, %v1420
        %v1431 = vsel %vm1426, %v1418, %v1419
        %v1432 = vsel %vm1426, %v1417, %v1418
        %v1433 = vsel %vm1426, %v1416, %v1417
        %v1434 = vsel %vm1426, %v1415, %v1416
        %v1435 = vsel %vm1426, %v1414, %v1415
        %v1436 = vsel %vm1426, %v1413, %v1414
        %v1437 = vsel %vm1426, %v1412, %v1413
        %v1438 = vsel %vm1426, %v1411, %v1412
        %v1439 = vsel %vm1426, %v1410, %v1411
        %v1440 = vsel %vm1426, %v1409, %v1410
        %v1441 = vsel %vm1426, %v1408, %v1409
        %v1442 = vsel %vm1426, %v1407, %v1408
        %v1443 = vsel %vm1426, %v1406, %v1407
        %v1444 = vsel %vm1426, %v1405, %v1406
        %v1445 = vsel %vm1426, %v1404, %v1405
        %v1446 = vsel %vm1426, %v1403, %v1404
        %v1447 = vsel %vm1426, %v1402, %v1403
        %v1448 = vsel %vm1426, %v1401, %v1402
        %v1449 = vsel %vm1426, %v1400, %v1401
        %v1450 = vsel %vm1426, %v1399, %v1400
        %v1451 = vsel %vm1426, %v1398, %v1399
        %v1452 = vsel %vm1426, %v1397, %v1398
        %v1453 = vsel %vm1426, %v1396, %v1397
        %v1454 = vsel %vm1426, %v1395, %v1396
        %v1455 = vsel %vm1426, %v1394, %v1395
        %v1456 = vsel %vm1426, %v1393, %v1394
        %v1457 = vsel %vm1426, %v1392, %v1393
        %v1458 = vsel %vm1426, %v1391, %v1392
        %v1459 = vsel %vm1426, %v1390, %v1391
        %v1460 = vsel %vm1426, %v1389, %v1390
        %v1461 = vsel %vm1426, %v1388, %v1389
        %v1462 = vsel %vm1426, %v1387, %v1388
        %v1463 = vsel %vm1426, %v1386, %v1387
        %v1464 = vsel %vm1426, %v1385, %v1386
        %v1465 = vsel %vm1426, %v1384, %v1385
        %v1466 = vsel %vm1426, %v1383, %v1384
        %v1467 = vsel %vm1426, %v1382, %v1383
        %v1468 = vsel %vm1426, %v1381, %v1382
        %v1469 = vsel %vm1426, %v1380, %v1381
        %v1470 = vsel %vm1426, %v1379, %v1380
        %v1471 = vsel %vm1426, %v1378, %v1379
        %v1472 = vsel %vm1426, %v1377, %v1378
        %v1473 = vsel %vm1426, %v1376, %v1377
        %v1474 = vsel %vm1426, %v1375, %v1376
        %v1475 = vsel %vm1426, %v1374, %v1375
        %v1476 = vsel %vm1426, %v1373, %v1374
        %v1477 = vsel %vm1426, %v1372, %v1373
        %v1478 = vsel %vm1426, %v1371, %v1372
        %v1479 = vsel %vm1426, %v1370, %v1371
        %v1480 = vsel %vm1426, %v1423, %v1370
        %1481 = vst.msk [vmem:[#allocation3] sm:$0xff] %vm520, %v1480
        %1482 = vst.msk [vmem:[#allocation3 + $0x8] sm:$0xff] %vm520, %v1479
        %1483 = vst.msk [vmem:[#allocation3 + $0x10] sm:$0xff] %vm520, %v1478
        %1484 = vst.msk [vmem:[#allocation3 + $0x18] sm:$0xff] %vm520, %v1477
        %1485 = vst.msk [vmem:[#allocation3 + $0x20] sm:$0xff] %vm520, %v1476
        %1486 = vst.msk [vmem:[#allocation3 + $0x28] sm:$0xff] %vm520, %v1475
        %1487 = vst.msk [vmem:[#allocation3 + $0x30] sm:$0xff] %vm520, %v1474
        %1488 = vst.msk [vmem:[#allocation3 + $0x38] sm:$0xff] %vm520, %v1473
        %1489 = vst.msk [vmem:[#allocation3 + $0x40] sm:$0xff] %vm520, %v1472
        %1490 = vst.msk [vmem:[#allocation3 + $0x48] sm:$0xff] %vm520, %v1471
        %1491 = vst.msk [vmem:[#allocation3 + $0x50] sm:$0xff] %vm520, %v1470
        %1492 = vst.msk [vmem:[#allocation3 + $0x58] sm:$0xff] %vm520, %v1469
        %1493 = vst.msk [vmem:[#allocation3 + $0x60] sm:$0xff] %vm520, %v1468
        %1494 = vst.msk [vmem:[#allocation3 + $0x68] sm:$0xff] %vm520, %v1467
        %1495 = vst.msk [vmem:[#allocation3 + $0x70] sm:$0xff] %vm520, %v1466
        %1496 = vst.msk [vmem:[#allocation3 + $0x78] sm:$0xff] %vm520, %v1465
        %1497 = vst.msk [vmem:[#allocation3 + $0x80] sm:$0xff] %vm520, %v1464
        %1498 = vst.msk [vmem:[#allocation3 + $0x88] sm:$0xff] %vm520, %v1463
        %1499 = vst.msk [vmem:[#allocation3 + $0x90] sm:$0xff] %vm520, %v1462
        %1500 = vst.msk [vmem:[#allocation3 + $0x98] sm:$0xff] %vm520, %v1461
        %1501 = vst.msk [vmem:[#allocation3 + $0xa0] sm:$0xff] %vm520, %v1460
        %1502 = vst.msk [vmem:[#allocation3 + $0xa8] sm:$0xff] %vm520, %v1459
        %1503 = vst.msk [vmem:[#allocation3 + $0xb0] sm:$0xff] %vm520, %v1458
        %1504 = vst.msk [vmem:[#allocation3 + $0xb8] sm:$0xff] %vm520, %v1457
        %1505 = vst.msk [vmem:[#allocation3 + $0xc0] sm:$0xff] %vm520, %v1456
        %1506 = vst.msk [vmem:[#allocation3 + $0xc8] sm:$0xff] %vm520, %v1455
        %1507 = vst.msk [vmem:[#allocation3 + $0xd0] sm:$0xff] %vm520, %v1454
        %1508 = vst.msk [vmem:[#allocation3 + $0xd8] sm:$0xff] %vm520, %v1453
        %1509 = vst.msk [vmem:[#allocation3 + $0xe0] sm:$0xff] %vm520, %v1452
        %1510 = vst.msk [vmem:[#allocation3 + $0xe8] sm:$0xff] %vm520, %v1451
        %1511 = vst.msk [vmem:[#allocation3 + $0xf0] sm:$0xff] %vm520, %v1450
        %1512 = vst.msk [vmem:[#allocation3 + $0xf8] sm:$0xff] %vm520, %v1449
        %1513 = vst.msk [vmem:[#allocation3 + $0x100] sm:$0xff] %vm520, %v1448
        %1514 = vst.msk [vmem:[#allocation3 + $0x108] sm:$0xff] %vm520, %v1447
        %1515 = vst.msk [vmem:[#allocation3 + $0x110] sm:$0xff] %vm520, %v1446
        %1516 = vst.msk [vmem:[#allocation3 + $0x118] sm:$0xff] %vm520, %v1445
        %1517 = vst.msk [vmem:[#allocation3 + $0x120] sm:$0xff] %vm520, %v1444
        %1518 = vst.msk [vmem:[#allocation3 + $0x128] sm:$0xff] %vm520, %v1443
        %1519 = vst.msk [vmem:[#allocation3 + $0x130] sm:$0xff] %vm520, %v1442
        %1520 = vst.msk [vmem:[#allocation3 + $0x138] sm:$0xff] %vm520, %v1441
        %1521 = vst.msk [vmem:[#allocation3 + $0x140] sm:$0xff] %vm520, %v1440
        %1522 = vst.msk [vmem:[#allocation3 + $0x148] sm:$0xff] %vm520, %v1439
        %1523 = vst.msk [vmem:[#allocation3 + $0x150] sm:$0xff] %vm520, %v1438
        %1524 = vst.msk [vmem:[#allocation3 + $0x158] sm:$0xff] %vm520, %v1437
        %1525 = vst.msk [vmem:[#allocation3 + $0x160] sm:$0xff] %vm520, %v1436
        %1526 = vst.msk [vmem:[#allocation3 + $0x168] sm:$0xff] %vm520, %v1435
        %1527 = vst.msk [vmem:[#allocation3 + $0x170] sm:$0xff] %vm520, %v1434
        %1528 = vst.msk [vmem:[#allocation3 + $0x178] sm:$0xff] %vm520, %v1433
        %1529 = vst.msk [vmem:[#allocation3 + $0x180] sm:$0xff] %vm520, %v1432
        %1530 = vst.msk [vmem:[#allocation3 + $0x188] sm:$0xff] %vm520, %v1431
        %1531 = vst.msk [vmem:[#allocation3 + $0x190] sm:$0xff] %vm520, %v1430
        %1532 = vst.msk [vmem:[#allocation3 + $0x198] sm:$0xff] %vm520, %v1429
        %1533 = vst.msk [vmem:[#allocation3 + $0x1a0] sm:$0xff] %vm520, %v1428
        %1534 = vst.msk [vmem:[#allocation3 + $0x1a8] sm:$0xff] %vm520, %v1427
        %v1535 = vld [vmem:[%s2 + $0x20] sm:$0xf]
        %v1536 = vld [vmem:[%s2 + $0x24] sm:$0xf]
        %v1537 = vld [vmem:[%s2 + $0x28] sm:$0xf]
        %v1538 = vld [vmem:[%s2 + $0x2c] sm:$0xf]
        %v1539 = vld [vmem:[%s2 + $0x30] sm:$0xf]
        %v1540 = vld [vmem:[%s2 + $0x34] sm:$0xf]
        %v1541 = vld [vmem:[%s2 + $0x38] sm:$0xf]
        %v1542 = vld [vmem:[%s2 + $0x3c] sm:$0xf]
        %v1551 = vunpack.c.l.b16 %v1535
        %v1552 = vunpack.c.l.b16 %v1536
        %v1553 = vunpack.c.l.b16 %v1537
        %v1554 = vunpack.c.l.b16 %v1538
        %v1555 = vunpack.c.l.b16 %v1539
        %v1556 = vunpack.c.l.b16 %v1540
        %v1557 = vunpack.c.l.b16 %v1541
        %v1558 = vunpack.c.l.b16 %v1542
        %v1559 = vpack.c.b16 %v1552, %v1551
        %v1560 = vpack.c.b16 %v1554, %v1553
        %v1561 = vpack.c.b16 %v1556, %v1555
        %v1562 = vpack.c.b16 %v1558, %v1557
        %1567 = vmatprep.subr.bf16.mxu0 0
        %1568 = vmatpush1.bf16.msra.mxu0 0
        %1569 = vmatprep.subr.bf16.mxu0 0
        %1570 = vmatpush1.bf16.msra.mxu0 0
        %1571 = vmatprep.subr.bf16.mxu0 0
        %1572 = vmatpush1.bf16.msra.mxu0 0
        %1573 = vmatprep.subr.bf16.mxu0 0
        %1574 = vmatpush1.bf16.msra.mxu0 0
        %1575 = vmatprep.subr.bf16.mxu0 0
        %1576 = vmatpush1.bf16.msra.mxu0 %v1562
        %1577 = vmatprep.subr.bf16.mxu0 0
        %1578 = vmatpush1.bf16.msra.mxu0 %v1561
        %1579 = vmatprep.subr.bf16.mxu0 0
        %1580 = vmatpush1.bf16.msra.mxu0 %v1560
        %1581 = vmatprep.subr.bf16.mxu0 0
        %1582 = vmatpush1.bf16.msra.mxu0 %v1559
        %1583 = vmatprep.subr.bf16.mxu0 0
        %1584 = vmatpush2.bf16.msra.mxu0 0
        %1585 = vmatprep.subr.bf16.mxu0 0
        %1586 = vmatpush2.bf16.msra.mxu0 0
        %1587 = vmatprep.subr.bf16.mxu0 0
        %1588 = vmatpush2.bf16.msra.mxu0 0
        %1589 = vmatprep.subr.bf16.mxu0 0
        %1590 = vmatpush2.bf16.msra.mxu0 0
        %1591 = vmatprep.subr.bf16.mxu0 0
        %1592 = vmatpush2.bf16.msra.mxu0 0
        %1593 = vmatprep.subr.bf16.mxu0 0
        %1594 = vmatpush2.bf16.msra.mxu0 0
        %1595 = vmatprep.subr.bf16.mxu0 0
        %1596 = vmatpush2.bf16.msra.mxu0 0
        %1597 = vmatprep.subr.bf16.mxu0 0
        %1598 = vmatpush2.bf16.msra.mxu0 0
        %1599 = vmatprep.mubr.bf16.mxu0 0
        %1600 = vmatmul.mubr.bf16.gmra.mxu0 %v1041
        %v1601 = vpop.f32.mrf.mxu0
        %v1602 = vadd.f32 0.0, %v1601
        %v1603 = vpop.f32.mrf.mxu0
        %v1604 = vpop.f32.mrf.mxu0
        %v1605 = vadd.f32 0.0, %v1604
        %v1606 = vpop.f32.mrf.mxu0
        %1607 = vmatprep.mubr.bf16.mxu0 0
        %1608 = vmatmul.mubr.bf16.gmra.mxu0 %v1044
        %v1609 = vpop.f32.mrf.mxu0
        %v1610 = vadd.f32 0.0, %v1609
        %v1611 = vpop.f32.mrf.mxu0
        %v1612 = vpop.f32.mrf.mxu0
        %v1613 = vadd.f32 0.0, %v1612
        %v1614 = vpop.f32.mrf.mxu0
        %1615 = vmatprep.mubr.bf16.mxu0 0
        %1616 = vmatmul.mubr.bf16.gmra.mxu0 %v1047
        %v1617 = vpop.f32.mrf.mxu0
        %v1618 = vadd.f32 0.0, %v1617
        %v1619 = vpop.f32.mrf.mxu0
        %v1620 = vpop.f32.mrf.mxu0
        %v1621 = vadd.f32 0.0, %v1620
        %v1622 = vpop.f32.mrf.mxu0
        %1623 = vmatprep.mubr.bf16.mxu0 0
        %1624 = vmatmul.mubr.bf16.gmra.mxu0 %v1050
        %v1625 = vpop.f32.mrf.mxu0
        %v1626 = vadd.f32 0.0, %v1625
        %v1627 = vpop.f32.mrf.mxu0
        %v1628 = vpop.f32.mrf.mxu0
        %v1629 = vadd.f32 0.0, %v1628
        %v1630 = vpop.f32.mrf.mxu0
        %1631 = vmatprep.mubr.bf16.mxu0 0
        %1632 = vmatmul.mubr.bf16.gmra.mxu0 %v1053
        %v1633 = vpop.f32.mrf.mxu0
        %v1634 = vadd.f32 0.0, %v1633
        %v1635 = vpop.f32.mrf.mxu0
        %v1636 = vpop.f32.mrf.mxu0
        %v1637 = vadd.f32 0.0, %v1636
        %v1638 = vpop.f32.mrf.mxu0
        %1639 = vmatprep.mubr.bf16.mxu0 0
        %1640 = vmatmul.mubr.bf16.gmra.mxu0 %v1056
        %v1641 = vpop.f32.mrf.mxu0
        %v1642 = vadd.f32 0.0, %v1641
        %v1643 = vpop.f32.mrf.mxu0
        %v1644 = vpop.f32.mrf.mxu0
        %v1645 = vadd.f32 0.0, %v1644
        %v1646 = vpop.f32.mrf.mxu0
        %1647 = vmatprep.mubr.bf16.mxu0 0
        %1648 = vmatmul.mubr.bf16.gmra.mxu0 %v1059
        %v1649 = vpop.f32.mrf.mxu0
        %v1650 = vadd.f32 0.0, %v1649
        %v1651 = vpop.f32.mrf.mxu0
        %v1652 = vpop.f32.mrf.mxu0
        %v1653 = vadd.f32 0.0, %v1652
        %v1654 = vpop.f32.mrf.mxu0
        %1655 = vmatprep.mubr.bf16.mxu0 0
        %1656 = vmatmul.mubr.bf16.gmra.mxu0 %v1062
        %v1657 = vpop.f32.mrf.mxu0
        %v1658 = vadd.f32 0.0, %v1657
        %v1659 = vpop.f32.mrf.mxu0
        %v1660 = vpop.f32.mrf.mxu0
        %v1661 = vadd.f32 0.0, %v1660
        %v1662 = vpop.f32.mrf.mxu0
        %1663 = vmatprep.mubr.bf16.mxu0 0
        %1664 = vmatmul.mubr.bf16.gmra.mxu0 %v1065
        %v1665 = vpop.f32.mrf.mxu0
        %v1666 = vadd.f32 0.0, %v1665
        %v1667 = vpop.f32.mrf.mxu0
        %v1668 = vpop.f32.mrf.mxu0
        %v1669 = vadd.f32 0.0, %v1668
        %v1670 = vpop.f32.mrf.mxu0
        %1671 = vmatprep.mubr.bf16.mxu0 0
        %1672 = vmatmul.mubr.bf16.gmra.mxu0 %v1068
        %v1673 = vpop.f32.mrf.mxu0
        %v1674 = vadd.f32 0.0, %v1673
        %v1675 = vpop.f32.mrf.mxu0
        %v1676 = vpop.f32.mrf.mxu0
        %v1677 = vadd.f32 0.0, %v1676
        %v1678 = vpop.f32.mrf.mxu0
        %1679 = vmatprep.mubr.bf16.mxu0 0
        %1680 = vmatmul.mubr.bf16.gmra.mxu0 %v1071
        %v1681 = vpop.f32.mrf.mxu0
        %v1682 = vadd.f32 0.0, %v1681
        %v1683 = vpop.f32.mrf.mxu0
        %v1684 = vpop.f32.mrf.mxu0
        %v1685 = vadd.f32 0.0, %v1684
        %v1686 = vpop.f32.mrf.mxu0
        %1687 = vmatprep.mubr.bf16.mxu0 0
        %1688 = vmatmul.mubr.bf16.gmra.mxu0 %v1074
        %v1689 = vpop.f32.mrf.mxu0
        %v1690 = vadd.f32 0.0, %v1689
        %v1691 = vpop.f32.mrf.mxu0
        %v1692 = vpop.f32.mrf.mxu0
        %v1693 = vadd.f32 0.0, %v1692
        %v1694 = vpop.f32.mrf.mxu0
        %1695 = vmatprep.mubr.bf16.mxu0 0
        %1696 = vmatmul.mubr.bf16.gmra.mxu0 %v1077
        %v1697 = vpop.f32.mrf.mxu0
        %v1698 = vadd.f32 0.0, %v1697
        %v1699 = vpop.f32.mrf.mxu0
        %v1700 = vpop.f32.mrf.mxu0
        %v1701 = vadd.f32 0.0, %v1700
        %v1702 = vpop.f32.mrf.mxu0
        %1703 = vmatprep.mubr.bf16.mxu0 0
        %1704 = vmatmul.mubr.bf16.gmra.mxu0 %v1080
        %v1705 = vpop.f32.mrf.mxu0
        %v1706 = vadd.f32 0.0, %v1705
        %v1707 = vpop.f32.mrf.mxu0
        %v1708 = vpop.f32.mrf.mxu0
        %v1709 = vadd.f32 0.0, %v1708
        %v1710 = vpop.f32.mrf.mxu0
        %1711 = vmatprep.mubr.bf16.mxu0 0
        %1712 = vmatmul.mubr.bf16.gmra.mxu0 %v1083
        %v1713 = vpop.f32.mrf.mxu0
        %v1714 = vadd.f32 0.0, %v1713
        %v1715 = vpop.f32.mrf.mxu0
        %v1716 = vpop.f32.mrf.mxu0
        %v1717 = vadd.f32 0.0, %v1716
        %v1718 = vpop.f32.mrf.mxu0
        %1719 = vmatprep.mubr.bf16.mxu0 0
        %1720 = vmatmul.mubr.bf16.gmra.mxu0 %v1086
        %v1721 = vpop.f32.mrf.mxu0
        %v1722 = vadd.f32 0.0, %v1721
        %v1723 = vpop.f32.mrf.mxu0
        %v1724 = vpop.f32.mrf.mxu0
        %v1725 = vadd.f32 0.0, %v1724
        %v1726 = vpop.f32.mrf.mxu0
        %1727 = vmatprep.mubr.bf16.mxu0 0
        %1728 = vmatmul.mubr.bf16.gmra.mxu0 %v1089
        %v1729 = vpop.f32.mrf.mxu0
        %v1730 = vadd.f32 0.0, %v1729
        %v1731 = vpop.f32.mrf.mxu0
        %v1732 = vpop.f32.mrf.mxu0
        %v1733 = vadd.f32 0.0, %v1732
        %v1734 = vpop.f32.mrf.mxu0
        %1735 = vmatprep.mubr.bf16.mxu0 0
        %1736 = vmatmul.mubr.bf16.gmra.mxu0 %v1092
        %v1737 = vpop.f32.mrf.mxu0
        %v1738 = vadd.f32 0.0, %v1737
        %v1739 = vpop.f32.mrf.mxu0
        %v1740 = vpop.f32.mrf.mxu0
        %v1741 = vadd.f32 0.0, %v1740
        %v1742 = vpop.f32.mrf.mxu0
        %1743 = vmatprep.mubr.bf16.mxu0 0
        %1744 = vmatmul.mubr.bf16.gmra.mxu0 %v1095
        %v1745 = vpop.f32.mrf.mxu0
        %v1746 = vadd.f32 0.0, %v1745
        %v1747 = vpop.f32.mrf.mxu0
        %v1748 = vpop.f32.mrf.mxu0
        %v1749 = vadd.f32 0.0, %v1748
        %v1750 = vpop.f32.mrf.mxu0
        %1751 = vmatprep.mubr.bf16.mxu0 0
        %1752 = vmatmul.mubr.bf16.gmra.mxu0 %v1098
        %v1753 = vpop.f32.mrf.mxu0
        %v1754 = vadd.f32 0.0, %v1753
        %v1755 = vpop.f32.mrf.mxu0
        %v1756 = vpop.f32.mrf.mxu0
        %v1757 = vadd.f32 0.0, %v1756
        %v1758 = vpop.f32.mrf.mxu0
        %1759 = vmatprep.mubr.bf16.mxu0 0
        %1760 = vmatmul.mubr.bf16.gmra.mxu0 %v1101
        %v1761 = vpop.f32.mrf.mxu0
        %v1762 = vadd.f32 0.0, %v1761
        %v1763 = vpop.f32.mrf.mxu0
        %v1764 = vpop.f32.mrf.mxu0
        %v1765 = vadd.f32 0.0, %v1764
        %v1766 = vpop.f32.mrf.mxu0
        %1767 = vmatprep.mubr.bf16.mxu0 0
        %1768 = vmatmul.mubr.bf16.gmra.mxu0 %v1104
        %v1769 = vpop.f32.mrf.mxu0
        %v1770 = vadd.f32 0.0, %v1769
        %v1771 = vpop.f32.mrf.mxu0
        %v1772 = vpop.f32.mrf.mxu0
        %v1773 = vadd.f32 0.0, %v1772
        %v1774 = vpop.f32.mrf.mxu0
        %1775 = vmatprep.mubr.bf16.mxu0 0
        %1776 = vmatmul.mubr.bf16.gmra.mxu0 %v1107
        %v1777 = vpop.f32.mrf.mxu0
        %v1778 = vadd.f32 0.0, %v1777
        %v1779 = vpop.f32.mrf.mxu0
        %v1780 = vpop.f32.mrf.mxu0
        %v1781 = vadd.f32 0.0, %v1780
        %v1782 = vpop.f32.mrf.mxu0
        %1783 = vmatprep.mubr.bf16.mxu0 0
        %1784 = vmatmul.mubr.bf16.gmra.mxu0 %v1110
        %v1785 = vpop.f32.mrf.mxu0
        %v1786 = vadd.f32 0.0, %v1785
        %v1787 = vpop.f32.mrf.mxu0
        %v1788 = vpop.f32.mrf.mxu0
        %v1789 = vadd.f32 0.0, %v1788
        %v1790 = vpop.f32.mrf.mxu0
        %1791 = vmatprep.mubr.bf16.mxu0 0
        %1792 = vmatmul.mubr.bf16.gmra.mxu0 %v1113
        %v1793 = vpop.f32.mrf.mxu0
        %v1794 = vadd.f32 0.0, %v1793
        %v1795 = vpop.f32.mrf.mxu0
        %v1796 = vpop.f32.mrf.mxu0
        %v1797 = vadd.f32 0.0, %v1796
        %v1798 = vpop.f32.mrf.mxu0
        %1799 = vmatprep.mubr.bf16.mxu0 0
        %1800 = vmatmul.mubr.bf16.gmra.mxu0 %v1116
        %v1801 = vpop.f32.mrf.mxu0
        %v1802 = vadd.f32 0.0, %v1801
        %v1803 = vpop.f32.mrf.mxu0
        %v1804 = vpop.f32.mrf.mxu0
        %v1805 = vadd.f32 0.0, %v1804
        %v1806 = vpop.f32.mrf.mxu0
        %1807 = vmatprep.mubr.bf16.mxu0 0
        %1808 = vmatmul.mubr.bf16.gmra.mxu0 %v1119
        %v1809 = vpop.f32.mrf.mxu0
        %v1810 = vadd.f32 0.0, %v1809
        %v1811 = vpop.f32.mrf.mxu0
        %v1812 = vpop.f32.mrf.mxu0
        %v1813 = vadd.f32 0.0, %v1812
        %v1814 = vpop.f32.mrf.mxu0
        %1815 = vdwg.mxu0
        %v1816 = vld [vmem:[#allocation3] sm:$0xff]
        %v1817 = vld [vmem:[#allocation3 + $0x8] sm:$0xff]
        %v1818 = vld [vmem:[#allocation3 + $0x10] sm:$0xff]
        %v1819 = vld [vmem:[#allocation3 + $0x18] sm:$0xff]
        %v1820 = vld [vmem:[#allocation3 + $0x20] sm:$0xff]
        %v1821 = vld [vmem:[#allocation3 + $0x28] sm:$0xff]
        %v1822 = vld [vmem:[#allocation3 + $0x30] sm:$0xff]
        %v1823 = vld [vmem:[#allocation3 + $0x38] sm:$0xff]
        %v1824 = vld [vmem:[#allocation3 + $0x40] sm:$0xff]
        %v1825 = vld [vmem:[#allocation3 + $0x48] sm:$0xff]
        %v1826 = vld [vmem:[#allocation3 + $0x50] sm:$0xff]
        %v1827 = vld [vmem:[#allocation3 + $0x58] sm:$0xff]
        %v1828 = vld [vmem:[#allocation3 + $0x60] sm:$0xff]
        %v1829 = vld [vmem:[#allocation3 + $0x68] sm:$0xff]
        %v1830 = vld [vmem:[#allocation3 + $0x70] sm:$0xff]
        %v1831 = vld [vmem:[#allocation3 + $0x78] sm:$0xff]
        %v1832 = vld [vmem:[#allocation3 + $0x80] sm:$0xff]
        %v1833 = vld [vmem:[#allocation3 + $0x88] sm:$0xff]
        %v1834 = vld [vmem:[#allocation3 + $0x90] sm:$0xff]
        %v1835 = vld [vmem:[#allocation3 + $0x98] sm:$0xff]
        %v1836 = vld [vmem:[#allocation3 + $0xa0] sm:$0xff]
        %v1837 = vld [vmem:[#allocation3 + $0xa8] sm:$0xff]
        %v1838 = vld [vmem:[#allocation3 + $0xb0] sm:$0xff]
        %v1839 = vld [vmem:[#allocation3 + $0xb8] sm:$0xff]
        %v1840 = vld [vmem:[#allocation3 + $0xc0] sm:$0xff]
        %v1841 = vld [vmem:[#allocation3 + $0xc8] sm:$0xff]
        %v1842 = vld [vmem:[#allocation3 + $0xd0] sm:$0xff]
        %v1843 = vld [vmem:[#allocation3 + $0xd8] sm:$0xff]
        %v1844 = vld [vmem:[#allocation3 + $0xe0] sm:$0xff]
        %v1845 = vld [vmem:[#allocation3 + $0xe8] sm:$0xff]
        %v1846 = vld [vmem:[#allocation3 + $0xf0] sm:$0xff]
        %v1847 = vld [vmem:[#allocation3 + $0xf8] sm:$0xff]
        %v1848 = vld [vmem:[#allocation3 + $0x100] sm:$0xff]
        %v1849 = vld [vmem:[#allocation3 + $0x108] sm:$0xff]
        %v1850 = vld [vmem:[#allocation3 + $0x110] sm:$0xff]
        %v1851 = vld [vmem:[#allocation3 + $0x118] sm:$0xff]
        %v1852 = vld [vmem:[#allocation3 + $0x120] sm:$0xff]
        %v1853 = vld [vmem:[#allocation3 + $0x128] sm:$0xff]
        %v1854 = vld [vmem:[#allocation3 + $0x130] sm:$0xff]
        %v1855 = vld [vmem:[#allocation3 + $0x138] sm:$0xff]
        %v1856 = vld [vmem:[#allocation3 + $0x140] sm:$0xff]
        %v1857 = vld [vmem:[#allocation3 + $0x148] sm:$0xff]
        %v1858 = vld [vmem:[#allocation3 + $0x150] sm:$0xff]
        %v1859 = vld [vmem:[#allocation3 + $0x158] sm:$0xff]
        %v1860 = vld [vmem:[#allocation3 + $0x160] sm:$0xff]
        %v1861 = vld [vmem:[#allocation3 + $0x168] sm:$0xff]
        %v1862 = vld [vmem:[#allocation3 + $0x170] sm:$0xff]
        %v1863 = vld [vmem:[#allocation3 + $0x178] sm:$0xff]
        %v1864 = vld [vmem:[#allocation3 + $0x180] sm:$0xff]
        %v1865 = vld [vmem:[#allocation3 + $0x188] sm:$0xff]
        %v1866 = vld [vmem:[#allocation3 + $0x190] sm:$0xff]
        %v1867 = vld [vmem:[#allocation3 + $0x198] sm:$0xff]
        %v1868 = vld [vmem:[#allocation3 + $0x1a0] sm:$0xff]
        %v1869 = vld [vmem:[#allocation3 + $0x1a8] sm:$0xff]
        %v1870 = vadd.f32 %v1816, %v1602
        %v1871 = vadd.f32 %v1817, %v1605
        %v1872 = vadd.f32 %v1818, %v1610
        %v1873 = vadd.f32 %v1819, %v1613
        %v1874 = vadd.f32 %v1820, %v1618
        %v1875 = vadd.f32 %v1821, %v1621
        %v1876 = vadd.f32 %v1822, %v1626
        %v1877 = vadd.f32 %v1823, %v1629
        %v1878 = vadd.f32 %v1824, %v1634
        %v1879 = vadd.f32 %v1825, %v1637
        %v1880 = vadd.f32 %v1826, %v1642
        %v1881 = vadd.f32 %v1827, %v1645
        %v1882 = vadd.f32 %v1828, %v1650
        %v1883 = vadd.f32 %v1829, %v1653
        %v1884 = vadd.f32 %v1830, %v1658
        %v1885 = vadd.f32 %v1831, %v1661
        %v1886 = vadd.f32 %v1832, %v1666
        %v1887 = vadd.f32 %v1833, %v1669
        %v1888 = vadd.f32 %v1834, %v1674
        %v1889 = vadd.f32 %v1835, %v1677
        %v1890 = vadd.f32 %v1836, %v1682
        %v1891 = vadd.f32 %v1837, %v1685
        %v1892 = vadd.f32 %v1838, %v1690
        %v1893 = vadd.f32 %v1839, %v1693
        %v1894 = vadd.f32 %v1840, %v1698
        %v1895 = vadd.f32 %v1841, %v1701
        %v1896 = vadd.f32 %v1842, %v1706
        %v1897 = vadd.f32 %v1843, %v1709
        %v1898 = vadd.f32 %v1844, %v1714
        %v1899 = vadd.f32 %v1845, %v1717
        %v1900 = vadd.f32 %v1846, %v1722
        %v1901 = vadd.f32 %v1847, %v1725
        %v1902 = vadd.f32 %v1848, %v1730
        %v1903 = vadd.f32 %v1849, %v1733
        %v1904 = vadd.f32 %v1850, %v1738
        %v1905 = vadd.f32 %v1851, %v1741
        %v1906 = vadd.f32 %v1852, %v1746
        %v1907 = vadd.f32 %v1853, %v1749
        %v1908 = vadd.f32 %v1854, %v1754
        %v1909 = vadd.f32 %v1855, %v1757
        %v1910 = vadd.f32 %v1856, %v1762
        %v1911 = vadd.f32 %v1857, %v1765
        %v1912 = vadd.f32 %v1858, %v1770
        %v1913 = vadd.f32 %v1859, %v1773
        %v1914 = vadd.f32 %v1860, %v1778
        %v1915 = vadd.f32 %v1861, %v1781
        %v1916 = vadd.f32 %v1862, %v1786
        %v1917 = vadd.f32 %v1863, %v1789
        %v1918 = vadd.f32 %v1864, %v1794
        %v1919 = vadd.f32 %v1865, %v1797
        %v1920 = vadd.f32 %v1866, %v1802
        %v1921 = vadd.f32 %v1867, %v1805
        %v1922 = vadd.f32 %v1868, %v1810
        %v1923 = vadd.f32 %v1869, %v1813
        %1924 = vst.msk [vmem:[#allocation3] sm:$0xff] %vm520, %v1870
        %1925 = vst.msk [vmem:[#allocation3 + $0x8] sm:$0xff] %vm520, %v1871
        %1926 = vst.msk [vmem:[#allocation3 + $0x10] sm:$0xff] %vm520, %v1872
        %1927 = vst.msk [vmem:[#allocation3 + $0x18] sm:$0xff] %vm520, %v1873
        %1928 = vst.msk [vmem:[#allocation3 + $0x20] sm:$0xff] %vm520, %v1874
        %1929 = vst.msk [vmem:[#allocation3 + $0x28] sm:$0xff] %vm520, %v1875
        %1930 = vst.msk [vmem:[#allocation3 + $0x30] sm:$0xff] %vm520, %v1876
        %1931 = vst.msk [vmem:[#allocation3 + $0x38] sm:$0xff] %vm520, %v1877
        %1932 = vst.msk [vmem:[#allocation3 + $0x40] sm:$0xff] %vm520, %v1878
        %1933 = vst.msk [vmem:[#allocation3 + $0x48] sm:$0xff] %vm520, %v1879
        %1934 = vst.msk [vmem:[#allocation3 + $0x50] sm:$0xff] %vm520, %v1880
        %1935 = vst.msk [vmem:[#allocation3 + $0x58] sm:$0xff] %vm520, %v1881
        %1936 = vst.msk [vmem:[#allocation3 + $0x60] sm:$0xff] %vm520, %v1882
        %1937 = vst.msk [vmem:[#allocation3 + $0x68] sm:$0xff] %vm520, %v1883
        %1938 = vst.msk [vmem:[#allocation3 + $0x70] sm:$0xff] %vm520, %v1884
        %1939 = vst.msk [vmem:[#allocation3 + $0x78] sm:$0xff] %vm520, %v1885
        %1940 = vst.msk [vmem:[#allocation3 + $0x80] sm:$0xff] %vm520, %v1886
        %1941 = vst.msk [vmem:[#allocation3 + $0x88] sm:$0xff] %vm520, %v1887
        %1942 = vst.msk [vmem:[#allocation3 + $0x90] sm:$0xff] %vm520, %v1888
        %1943 = vst.msk [vmem:[#allocation3 + $0x98] sm:$0xff] %vm520, %v1889
        %1944 = vst.msk [vmem:[#allocation3 + $0xa0] sm:$0xff] %vm520, %v1890
        %1945 = vst.msk [vmem:[#allocation3 + $0xa8] sm:$0xff] %vm520, %v1891
        %1946 = vst.msk [vmem:[#allocation3 + $0xb0] sm:$0xff] %vm520, %v1892
        %1947 = vst.msk [vmem:[#allocation3 + $0xb8] sm:$0xff] %vm520, %v1893
        %1948 = vst.msk [vmem:[#allocation3 + $0xc0] sm:$0xff] %vm520, %v1894
        %1949 = vst.msk [vmem:[#allocation3 + $0xc8] sm:$0xff] %vm520, %v1895
        %1950 = vst.msk [vmem:[#allocation3 + $0xd0] sm:$0xff] %vm520, %v1896
        %1951 = vst.msk [vmem:[#allocation3 + $0xd8] sm:$0xff] %vm520, %v1897
        %1952 = vst.msk [vmem:[#allocation3 + $0xe0] sm:$0xff] %vm520, %v1898
        %1953 = vst.msk [vmem:[#allocation3 + $0xe8] sm:$0xff] %vm520, %v1899
        %1954 = vst.msk [vmem:[#allocation3 + $0xf0] sm:$0xff] %vm520, %v1900
        %1955 = vst.msk [vmem:[#allocation3 + $0xf8] sm:$0xff] %vm520, %v1901
        %1956 = vst.msk [vmem:[#allocation3 + $0x100] sm:$0xff] %vm520, %v1902
        %1957 = vst.msk [vmem:[#allocation3 + $0x108] sm:$0xff] %vm520, %v1903
        %1958 = vst.msk [vmem:[#allocation3 + $0x110] sm:$0xff] %vm520, %v1904
        %1959 = vst.msk [vmem:[#allocation3 + $0x118] sm:$0xff] %vm520, %v1905
        %1960 = vst.msk [vmem:[#allocation3 + $0x120] sm:$0xff] %vm520, %v1906
        %1961 = vst.msk [vmem:[#allocation3 + $0x128] sm:$0xff] %vm520, %v1907
        %1962 = vst.msk [vmem:[#allocation3 + $0x130] sm:$0xff] %vm520, %v1908
        %1963 = vst.msk [vmem:[#allocation3 + $0x138] sm:$0xff] %vm520, %v1909
        %1964 = vst.msk [vmem:[#allocation3 + $0x140] sm:$0xff] %vm520, %v1910
        %1965 = vst.msk [vmem:[#allocation3 + $0x148] sm:$0xff] %vm520, %v1911
        %1966 = vst.msk [vmem:[#allocation3 + $0x150] sm:$0xff] %vm520, %v1912
        %1967 = vst.msk [vmem:[#allocation3 + $0x158] sm:$0xff] %vm520, %v1913
        %1968 = vst.msk [vmem:[#allocation3 + $0x160] sm:$0xff] %vm520, %v1914
        %1969 = vst.msk [vmem:[#allocation3 + $0x168] sm:$0xff] %vm520, %v1915
        %1970 = vst.msk [vmem:[#allocation3 + $0x170] sm:$0xff] %vm520, %v1916
        %1971 = vst.msk [vmem:[#allocation3 + $0x178] sm:$0xff] %vm520, %v1917
        %1972 = vst.msk [vmem:[#allocation3 + $0x180] sm:$0xff] %vm520, %v1918
        %1973 = vst.msk [vmem:[#allocation3 + $0x188] sm:$0xff] %vm520, %v1919
        %1974 = vst.msk [vmem:[#allocation3 + $0x190] sm:$0xff] %vm520, %v1920
        %1975 = vst.msk [vmem:[#allocation3 + $0x198] sm:$0xff] %vm520, %v1921
        %1976 = vst.msk [vmem:[#allocation3 + $0x1a0] sm:$0xff] %vm520, %v1922
        %1977 = vst.msk [vmem:[#allocation3 + $0x1a8] sm:$0xff] %vm520, %v1923
        %v1978 = vld [vmem:[%s2 + $0x40] sm:$0xf]
        %v1979 = vld [vmem:[%s2 + $0x44] sm:$0xf]
        %v1980 = vld [vmem:[%s2 + $0x48] sm:$0xf]
        %v1981 = vld [vmem:[%s2 + $0x4c] sm:$0xf]
        %v1982 = vld [vmem:[%s2 + $0x50] sm:$0xf]
        %v1983 = vld [vmem:[%s2 + $0x54] sm:$0xf]
        %v1984 = vld [vmem:[%s2 + $0x58] sm:$0xf]
        %v1985 = vld [vmem:[%s2 + $0x5c] sm:$0xf]
        %v1994 = vunpack.c.l.b16 %v1978
        %v1995 = vunpack.c.l.b16 %v1979
        %v1996 = vunpack.c.l.b16 %v1980
        %v1997 = vunpack.c.l.b16 %v1981
        %v1998 = vunpack.c.l.b16 %v1982
        %v1999 = vunpack.c.l.b16 %v1983
        %v2000 = vunpack.c.l.b16 %v1984
        %v2001 = vunpack.c.l.b16 %v1985
        %v2002 = vpack.c.b16 %v1995, %v1994
        %v2003 = vpack.c.b16 %v1997, %v1996
        %v2004 = vpack.c.b16 %v1999, %v1998
        %v2005 = vpack.c.b16 %v2001, %v2000
        %2010 = vmatprep.subr.bf16.mxu0 0
        %2011 = vmatpush1.bf16.msra.mxu0 0
        %2012 = vmatprep.subr.bf16.mxu0 0
        %2013 = vmatpush1.bf16.msra.mxu0 0
        %2014 = vmatprep.subr.bf16.mxu0 0
        %2015 = vmatpush1.bf16.msra.mxu0 0
        %2016 = vmatprep.subr.bf16.mxu0 0
        %2017 = vmatpush1.bf16.msra.mxu0 0
        %2018 = vmatprep.subr.bf16.mxu0 0
        %2019 = vmatpush1.bf16.msra.mxu0 %v2005
        %2020 = vmatprep.subr.bf16.mxu0 0
        %2021 = vmatpush1.bf16.msra.mxu0 %v2004
        %2022 = vmatprep.subr.bf16.mxu0 0
        %2023 = vmatpush1.bf16.msra.mxu0 %v2003
        %2024 = vmatprep.subr.bf16.mxu0 0
        %2025 = vmatpush1.bf16.msra.mxu0 %v2002
        %2026 = vmatprep.subr.bf16.mxu0 0
        %2027 = vmatpush2.bf16.msra.mxu0 0
        %2028 = vmatprep.subr.bf16.mxu0 0
        %2029 = vmatpush2.bf16.msra.mxu0 0
        %2030 = vmatprep.subr.bf16.mxu0 0
        %2031 = vmatpush2.bf16.msra.mxu0 0
        %2032 = vmatprep.subr.bf16.mxu0 0
        %2033 = vmatpush2.bf16.msra.mxu0 0
        %2034 = vmatprep.subr.bf16.mxu0 0
        %2035 = vmatpush2.bf16.msra.mxu0 0
        %2036 = vmatprep.subr.bf16.mxu0 0
        %2037 = vmatpush2.bf16.msra.mxu0 0
        %2038 = vmatprep.subr.bf16.mxu0 0
        %2039 = vmatpush2.bf16.msra.mxu0 0
        %2040 = vmatprep.subr.bf16.mxu0 0
        %2041 = vmatpush2.bf16.msra.mxu0 0
        %2042 = vmatprep.mubr.bf16.mxu0 0
        %2043 = vmatmul.mubr.bf16.gmra.mxu0 %v1041
        %v2044 = vpop.f32.mrf.mxu0
        %v2045 = vadd.f32 0.0, %v2044
        %v2046 = vpop.f32.mrf.mxu0
        %v2047 = vpop.f32.mrf.mxu0
        %v2048 = vadd.f32 0.0, %v2047
        %v2049 = vpop.f32.mrf.mxu0
        %2050 = vmatprep.mubr.bf16.mxu0 0
        %2051 = vmatmul.mubr.bf16.gmra.mxu0 %v1044
        %v2052 = vpop.f32.mrf.mxu0
        %v2053 = vadd.f32 0.0, %v2052
        %v2054 = vpop.f32.mrf.mxu0
        %v2055 = vpop.f32.mrf.mxu0
        %v2056 = vadd.f32 0.0, %v2055
        %v2057 = vpop.f32.mrf.mxu0
        %2058 = vmatprep.mubr.bf16.mxu0 0
        %2059 = vmatmul.mubr.bf16.gmra.mxu0 %v1047
        %v2060 = vpop.f32.mrf.mxu0
        %v2061 = vadd.f32 0.0, %v2060
        %v2062 = vpop.f32.mrf.mxu0
        %v2063 = vpop.f32.mrf.mxu0
        %v2064 = vadd.f32 0.0, %v2063
        %v2065 = vpop.f32.mrf.mxu0
        %2066 = vmatprep.mubr.bf16.mxu0 0
        %2067 = vmatmul.mubr.bf16.gmra.mxu0 %v1050
        %v2068 = vpop.f32.mrf.mxu0
        %v2069 = vadd.f32 0.0, %v2068
        %v2070 = vpop.f32.mrf.mxu0
        %v2071 = vpop.f32.mrf.mxu0
        %v2072 = vadd.f32 0.0, %v2071
        %v2073 = vpop.f32.mrf.mxu0
        %2074 = vmatprep.mubr.bf16.mxu0 0
        %2075 = vmatmul.mubr.bf16.gmra.mxu0 %v1053
        %v2076 = vpop.f32.mrf.mxu0
        %v2077 = vadd.f32 0.0, %v2076
        %v2078 = vpop.f32.mrf.mxu0
        %v2079 = vpop.f32.mrf.mxu0
        %v2080 = vadd.f32 0.0, %v2079
        %v2081 = vpop.f32.mrf.mxu0
        %2082 = vmatprep.mubr.bf16.mxu0 0
        %2083 = vmatmul.mubr.bf16.gmra.mxu0 %v1056
        %v2084 = vpop.f32.mrf.mxu0
        %v2085 = vadd.f32 0.0, %v2084
        %v2086 = vpop.f32.mrf.mxu0
        %v2087 = vpop.f32.mrf.mxu0
        %v2088 = vadd.f32 0.0, %v2087
        %v2089 = vpop.f32.mrf.mxu0
        %2090 = vmatprep.mubr.bf16.mxu0 0
        %2091 = vmatmul.mubr.bf16.gmra.mxu0 %v1059
        %v2092 = vpop.f32.mrf.mxu0
        %v2093 = vadd.f32 0.0, %v2092
        %v2094 = vpop.f32.mrf.mxu0
        %v2095 = vpop.f32.mrf.mxu0
        %v2096 = vadd.f32 0.0, %v2095
        %v2097 = vpop.f32.mrf.mxu0
        %2098 = vmatprep.mubr.bf16.mxu0 0
        %2099 = vmatmul.mubr.bf16.gmra.mxu0 %v1062
        %v2100 = vpop.f32.mrf.mxu0
        %v2101 = vadd.f32 0.0, %v2100
        %v2102 = vpop.f32.mrf.mxu0
        %v2103 = vpop.f32.mrf.mxu0
        %v2104 = vadd.f32 0.0, %v2103
        %v2105 = vpop.f32.mrf.mxu0
        %2106 = vmatprep.mubr.bf16.mxu0 0
        %2107 = vmatmul.mubr.bf16.gmra.mxu0 %v1065
        %v2108 = vpop.f32.mrf.mxu0
        %v2109 = vadd.f32 0.0, %v2108
        %v2110 = vpop.f32.mrf.mxu0
        %v2111 = vpop.f32.mrf.mxu0
        %v2112 = vadd.f32 0.0, %v2111
        %v2113 = vpop.f32.mrf.mxu0
        %2114 = vmatprep.mubr.bf16.mxu0 0
        %2115 = vmatmul.mubr.bf16.gmra.mxu0 %v1068
        %v2116 = vpop.f32.mrf.mxu0
        %v2117 = vadd.f32 0.0, %v2116
        %v2118 = vpop.f32.mrf.mxu0
        %v2119 = vpop.f32.mrf.mxu0
        %v2120 = vadd.f32 0.0, %v2119
        %v2121 = vpop.f32.mrf.mxu0
        %2122 = vmatprep.mubr.bf16.mxu0 0
        %2123 = vmatmul.mubr.bf16.gmra.mxu0 %v1071
        %v2124 = vpop.f32.mrf.mxu0
        %v2125 = vadd.f32 0.0, %v2124
        %v2126 = vpop.f32.mrf.mxu0
        %v2127 = vpop.f32.mrf.mxu0
        %v2128 = vadd.f32 0.0, %v2127
        %v2129 = vpop.f32.mrf.mxu0
        %2130 = vmatprep.mubr.bf16.mxu0 0
        %2131 = vmatmul.mubr.bf16.gmra.mxu0 %v1074
        %v2132 = vpop.f32.mrf.mxu0
        %v2133 = vadd.f32 0.0, %v2132
        %v2134 = vpop.f32.mrf.mxu0
        %v2135 = vpop.f32.mrf.mxu0
        %v2136 = vadd.f32 0.0, %v2135
        %v2137 = vpop.f32.mrf.mxu0
        %2138 = vmatprep.mubr.bf16.mxu0 0
        %2139 = vmatmul.mubr.bf16.gmra.mxu0 %v1077
        %v2140 = vpop.f32.mrf.mxu0
        %v2141 = vadd.f32 0.0, %v2140
        %v2142 = vpop.f32.mrf.mxu0
        %v2143 = vpop.f32.mrf.mxu0
        %v2144 = vadd.f32 0.0, %v2143
        %v2145 = vpop.f32.mrf.mxu0
        %2146 = vmatprep.mubr.bf16.mxu0 0
        %2147 = vmatmul.mubr.bf16.gmra.mxu0 %v1080
        %v2148 = vpop.f32.mrf.mxu0
        %v2149 = vadd.f32 0.0, %v2148
        %v2150 = vpop.f32.mrf.mxu0
        %v2151 = vpop.f32.mrf.mxu0
        %v2152 = vadd.f32 0.0, %v2151
        %v2153 = vpop.f32.mrf.mxu0
        %2154 = vmatprep.mubr.bf16.mxu0 0
        %2155 = vmatmul.mubr.bf16.gmra.mxu0 %v1083
        %v2156 = vpop.f32.mrf.mxu0
        %v2157 = vadd.f32 0.0, %v2156
        %v2158 = vpop.f32.mrf.mxu0
        %v2159 = vpop.f32.mrf.mxu0
        %v2160 = vadd.f32 0.0, %v2159
        %v2161 = vpop.f32.mrf.mxu0
        %2162 = vmatprep.mubr.bf16.mxu0 0
        %2163 = vmatmul.mubr.bf16.gmra.mxu0 %v1086
        %v2164 = vpop.f32.mrf.mxu0
        %v2165 = vadd.f32 0.0, %v2164
        %v2166 = vpop.f32.mrf.mxu0
        %v2167 = vpop.f32.mrf.mxu0
        %v2168 = vadd.f32 0.0, %v2167
        %v2169 = vpop.f32.mrf.mxu0
        %2170 = vmatprep.mubr.bf16.mxu0 0
        %2171 = vmatmul.mubr.bf16.gmra.mxu0 %v1089
        %v2172 = vpop.f32.mrf.mxu0
        %v2173 = vadd.f32 0.0, %v2172
        %v2174 = vpop.f32.mrf.mxu0
        %v2175 = vpop.f32.mrf.mxu0
        %v2176 = vadd.f32 0.0, %v2175
        %v2177 = vpop.f32.mrf.mxu0
        %2178 = vmatprep.mubr.bf16.mxu0 0
        %2179 = vmatmul.mubr.bf16.gmra.mxu0 %v1092
        %v2180 = vpop.f32.mrf.mxu0
        %v2181 = vadd.f32 0.0, %v2180
        %v2182 = vpop.f32.mrf.mxu0
        %v2183 = vpop.f32.mrf.mxu0
        %v2184 = vadd.f32 0.0, %v2183
        %v2185 = vpop.f32.mrf.mxu0
        %2186 = vmatprep.mubr.bf16.mxu0 0
        %2187 = vmatmul.mubr.bf16.gmra.mxu0 %v1095
        %v2188 = vpop.f32.mrf.mxu0
        %v2189 = vadd.f32 0.0, %v2188
        %v2190 = vpop.f32.mrf.mxu0
        %v2191 = vpop.f32.mrf.mxu0
        %v2192 = vadd.f32 0.0, %v2191
        %v2193 = vpop.f32.mrf.mxu0
        %2194 = vmatprep.mubr.bf16.mxu0 0
        %2195 = vmatmul.mubr.bf16.gmra.mxu0 %v1098
        %v2196 = vpop.f32.mrf.mxu0
        %v2197 = vadd.f32 0.0, %v2196
        %v2198 = vpop.f32.mrf.mxu0
        %v2199 = vpop.f32.mrf.mxu0
        %v2200 = vadd.f32 0.0, %v2199
        %v2201 = vpop.f32.mrf.mxu0
        %2202 = vmatprep.mubr.bf16.mxu0 0
        %2203 = vmatmul.mubr.bf16.gmra.mxu0 %v1101
        %v2204 = vpop.f32.mrf.mxu0
        %v2205 = vadd.f32 0.0, %v2204
        %v2206 = vpop.f32.mrf.mxu0
        %v2207 = vpop.f32.mrf.mxu0
        %v2208 = vadd.f32 0.0, %v2207
        %v2209 = vpop.f32.mrf.mxu0
        %2210 = vmatprep.mubr.bf16.mxu0 0
        %2211 = vmatmul.mubr.bf16.gmra.mxu0 %v1104
        %v2212 = vpop.f32.mrf.mxu0
        %v2213 = vadd.f32 0.0, %v2212
        %v2214 = vpop.f32.mrf.mxu0
        %v2215 = vpop.f32.mrf.mxu0
        %v2216 = vadd.f32 0.0, %v2215
        %v2217 = vpop.f32.mrf.mxu0
        %2218 = vmatprep.mubr.bf16.mxu0 0
        %2219 = vmatmul.mubr.bf16.gmra.mxu0 %v1107
        %v2220 = vpop.f32.mrf.mxu0
        %v2221 = vadd.f32 0.0, %v2220
        %v2222 = vpop.f32.mrf.mxu0
        %v2223 = vpop.f32.mrf.mxu0
        %v2224 = vadd.f32 0.0, %v2223
        %v2225 = vpop.f32.mrf.mxu0
        %2226 = vmatprep.mubr.bf16.mxu0 0
        %2227 = vmatmul.mubr.bf16.gmra.mxu0 %v1110
        %v2228 = vpop.f32.mrf.mxu0
        %v2229 = vadd.f32 0.0, %v2228
        %v2230 = vpop.f32.mrf.mxu0
        %v2231 = vpop.f32.mrf.mxu0
        %v2232 = vadd.f32 0.0, %v2231
        %v2233 = vpop.f32.mrf.mxu0
        %2234 = vmatprep.mubr.bf16.mxu0 0
        %2235 = vmatmul.mubr.bf16.gmra.mxu0 %v1113
        %v2236 = vpop.f32.mrf.mxu0
        %v2237 = vadd.f32 0.0, %v2236
        %v2238 = vpop.f32.mrf.mxu0
        %v2239 = vpop.f32.mrf.mxu0
        %v2240 = vadd.f32 0.0, %v2239
        %v2241 = vpop.f32.mrf.mxu0
        %2242 = vmatprep.mubr.bf16.mxu0 0
        %2243 = vmatmul.mubr.bf16.gmra.mxu0 %v1116
        %v2244 = vpop.f32.mrf.mxu0
        %v2245 = vadd.f32 0.0, %v2244
        %v2246 = vpop.f32.mrf.mxu0
        %v2247 = vpop.f32.mrf.mxu0
        %v2248 = vadd.f32 0.0, %v2247
        %v2249 = vpop.f32.mrf.mxu0
        %2250 = vmatprep.mubr.bf16.mxu0 0
        %2251 = vmatmul.mubr.bf16.gmra.mxu0 %v1119
        %v2252 = vpop.f32.mrf.mxu0
        %v2253 = vadd.f32 0.0, %v2252
        %v2254 = vpop.f32.mrf.mxu0
        %v2255 = vpop.f32.mrf.mxu0
        %v2256 = vadd.f32 0.0, %v2255
        %v2257 = vpop.f32.mrf.mxu0
        %2258 = vdwg.mxu0
        %v2259 = vrot.slane %v2045, 1
        %v2260 = vrot.slane %v2048, 1
        %v2261 = vrot.slane %v2053, 1
        %v2262 = vrot.slane %v2056, 1
        %v2263 = vrot.slane %v2061, 1
        %v2264 = vrot.slane %v2064, 1
        %v2265 = vrot.slane %v2069, 1
        %v2266 = vrot.slane %v2072, 1
        %v2267 = vrot.slane %v2077, 1
        %v2268 = vrot.slane %v2080, 1
        %v2269 = vrot.slane %v2085, 1
        %v2270 = vrot.slane %v2088, 1
        %v2271 = vrot.slane %v2093, 1
        %v2272 = vrot.slane %v2096, 1
        %v2273 = vrot.slane %v2101, 1
        %v2274 = vrot.slane %v2104, 1
        %v2275 = vrot.slane %v2109, 1
        %v2276 = vrot.slane %v2112, 1
        %v2277 = vrot.slane %v2117, 1
        %v2278 = vrot.slane %v2120, 1
        %v2279 = vrot.slane %v2125, 1
        %v2280 = vrot.slane %v2128, 1
        %v2281 = vrot.slane %v2133, 1
        %v2282 = vrot.slane %v2136, 1
        %v2283 = vrot.slane %v2141, 1
        %v2284 = vrot.slane %v2144, 1
        %v2285 = vrot.slane %v2149, 1
        %v2286 = vrot.slane %v2152, 1
        %v2287 = vrot.slane %v2157, 1
        %v2288 = vrot.slane %v2160, 1
        %v2289 = vrot.slane %v2165, 1
        %v2290 = vrot.slane %v2168, 1
        %v2291 = vrot.slane %v2173, 1
        %v2292 = vrot.slane %v2176, 1
        %v2293 = vrot.slane %v2181, 1
        %v2294 = vrot.slane %v2184, 1
        %v2295 = vrot.slane %v2189, 1
        %v2296 = vrot.slane %v2192, 1
        %v2297 = vrot.slane %v2197, 1
        %v2298 = vrot.slane %v2200, 1
        %v2299 = vrot.slane %v2205, 1
        %v2300 = vrot.slane %v2208, 1
        %v2301 = vrot.slane %v2213, 1
        %v2302 = vrot.slane %v2216, 1
        %v2303 = vrot.slane %v2221, 1
        %v2304 = vrot.slane %v2224, 1
        %v2305 = vrot.slane %v2229, 1
        %v2306 = vrot.slane %v2232, 1
        %v2307 = vrot.slane %v2237, 1
        %v2308 = vrot.slane %v2240, 1
        %v2309 = vrot.slane %v2245, 1
        %v2310 = vrot.slane %v2248, 1
        %v2311 = vrot.slane %v2253, 1
        %v2312 = vrot.slane %v2256, 1
        %vm2313 = vcmp.lt.s32.totalorder %v1425, 7
        %v2314 = vsel %vm2313, %v2311, %v2312
        %v2315 = vsel %vm2313, %v2310, %v2311
        %v2316 = vsel %vm2313, %v2309, %v2310
        %v2317 = vsel %vm2313, %v2308, %v2309
        %v2318 = vsel %vm2313, %v2307, %v2308
        %v2319 = vsel %vm2313, %v2306, %v2307
        %v2320 = vsel %vm2313, %v2305, %v2306
        %v2321 = vsel %vm2313, %v2304, %v2305
        %v2322 = vsel %vm2313, %v2303, %v2304
        %v2323 = vsel %vm2313, %v2302, %v2303
        %v2324 = vsel %vm2313, %v2301, %v2302
        %v2325 = vsel %vm2313, %v2300, %v2301
        %v2326 = vsel %vm2313, %v2299, %v2300
        %v2327 = vsel %vm2313, %v2298, %v2299
        %v2328 = vsel %vm2313, %v2297, %v2298
        %v2329 = vsel %vm2313, %v2296, %v2297
        %v2330 = vsel %vm2313, %v2295, %v2296
        %v2331 = vsel %vm2313, %v2294, %v2295
        %v2332 = vsel %vm2313, %v2293, %v2294
        %v2333 = vsel %vm2313, %v2292, %v2293
        %v2334 = vsel %vm2313, %v2291, %v2292
        %v2335 = vsel %vm2313, %v2290, %v2291
        %v2336 = vsel %vm2313, %v2289, %v2290
        %v2337 = vsel %vm2313, %v2288, %v2289
        %v2338 = vsel %vm2313, %v2287, %v2288
        %v2339 = vsel %vm2313, %v2286, %v2287
        %v2340 = vsel %vm2313, %v2285, %v2286
        %v2341 = vsel %vm2313, %v2284, %v2285
        %v2342 = vsel %vm2313, %v2283, %v2284
        %v2343 = vsel %vm2313, %v2282, %v2283
        %v2344 = vsel %vm2313, %v2281, %v2282
        %v2345 = vsel %vm2313, %v2280, %v2281
        %v2346 = vsel %vm2313, %v2279, %v2280
        %v2347 = vsel %vm2313, %v2278, %v2279
        %v2348 = vsel %vm2313, %v2277, %v2278
        %v2349 = vsel %vm2313, %v2276, %v2277
        %v2350 = vsel %vm2313, %v2275, %v2276
        %v2351 = vsel %vm2313, %v2274, %v2275
        %v2352 = vsel %vm2313, %v2273, %v2274
        %v2353 = vsel %vm2313, %v2272, %v2273
        %v2354 = vsel %vm2313, %v2271, %v2272
        %v2355 = vsel %vm2313, %v2270, %v2271
        %v2356 = vsel %vm2313, %v2269, %v2270
        %v2357 = vsel %vm2313, %v2268, %v2269
        %v2358 = vsel %vm2313, %v2267, %v2268
        %v2359 = vsel %vm2313, %v2266, %v2267
        %v2360 = vsel %vm2313, %v2265, %v2266
        %v2361 = vsel %vm2313, %v2264, %v2265
        %v2362 = vsel %vm2313, %v2263, %v2264
        %v2363 = vsel %vm2313, %v2262, %v2263
        %v2364 = vsel %vm2313, %v2261, %v2262
        %v2365 = vsel %vm2313, %v2260, %v2261
        %v2366 = vsel %vm2313, %v2259, %v2260
        %v2367 = vsel %vm2313, %v2312, %v2259
        %v2368 = vld [vmem:[#allocation3] sm:$0xff]
        %v2369 = vld [vmem:[#allocation3 + $0x8] sm:$0xff]
        %v2370 = vld [vmem:[#allocation3 + $0x10] sm:$0xff]
        %v2371 = vld [vmem:[#allocation3 + $0x18] sm:$0xff]
        %v2372 = vld [vmem:[#allocation3 + $0x20] sm:$0xff]
        %v2373 = vld [vmem:[#allocation3 + $0x28] sm:$0xff]
        %v2374 = vld [vmem:[#allocation3 + $0x30] sm:$0xff]
        %v2375 = vld [vmem:[#allocation3 + $0x38] sm:$0xff]
        %v2376 = vld [vmem:[#allocation3 + $0x40] sm:$0xff]
        %v2377 = vld [vmem:[#allocation3 + $0x48] sm:$0xff]
        %v2378 = vld [vmem:[#allocation3 + $0x50] sm:$0xff]
        %v2379 = vld [vmem:[#allocation3 + $0x58] sm:$0xff]
        %v2380 = vld [vmem:[#allocation3 + $0x60] sm:$0xff]
        %v2381 = vld [vmem:[#allocation3 + $0x68] sm:$0xff]
        %v2382 = vld [vmem:[#allocation3 + $0x70] sm:$0xff]
        %v2383 = vld [vmem:[#allocation3 + $0x78] sm:$0xff]
        %v2384 = vld [vmem:[#allocation3 + $0x80] sm:$0xff]
        %v2385 = vld [vmem:[#allocation3 + $0x88] sm:$0xff]
        %v2386 = vld [vmem:[#allocation3 + $0x90] sm:$0xff]
        %v2387 = vld [vmem:[#allocation3 + $0x98] sm:$0xff]
        %v2388 = vld [vmem:[#allocation3 + $0xa0] sm:$0xff]
        %v2389 = vld [vmem:[#allocation3 + $0xa8] sm:$0xff]
        %v2390 = vld [vmem:[#allocation3 + $0xb0] sm:$0xff]
        %v2391 = vld [vmem:[#allocation3 + $0xb8] sm:$0xff]
        %v2392 = vld [vmem:[#allocation3 + $0xc0] sm:$0xff]
        %v2393 = vld [vmem:[#allocation3 + $0xc8] sm:$0xff]
        %v2394 = vld [vmem:[#allocation3 + $0xd0] sm:$0xff]
        %v2395 = vld [vmem:[#allocation3 + $0xd8] sm:$0xff]
        %v2396 = vld [vmem:[#allocation3 + $0xe0] sm:$0xff]
        %v2397 = vld [vmem:[#allocation3 + $0xe8] sm:$0xff]
        %v2398 = vld [vmem:[#allocation3 + $0xf0] sm:$0xff]
        %v2399 = vld [vmem:[#allocation3 + $0xf8] sm:$0xff]
        %v2400 = vld [vmem:[#allocation3 + $0x100] sm:$0xff]
        %v2401 = vld [vmem:[#allocation3 + $0x108] sm:$0xff]
        %v2402 = vld [vmem:[#allocation3 + $0x110] sm:$0xff]
        %v2403 = vld [vmem:[#allocation3 + $0x118] sm:$0xff]
        %v2404 = vld [vmem:[#allocation3 + $0x120] sm:$0xff]
        %v2405 = vld [vmem:[#allocation3 + $0x128] sm:$0xff]
        %v2406 = vld [vmem:[#allocation3 + $0x130] sm:$0xff]
        %v2407 = vld [vmem:[#allocation3 + $0x138] sm:$0xff]
        %v2408 = vld [vmem:[#allocation3 + $0x140] sm:$0xff]
        %v2409 = vld [vmem:[#allocation3 + $0x148] sm:$0xff]
        %v2410 = vld [vmem:[#allocation3 + $0x150] sm:$0xff]
        %v2411 = vld [vmem:[#allocation3 + $0x158] sm:$0xff]
        %v2412 = vld [vmem:[#allocation3 + $0x160] sm:$0xff]
        %v2413 = vld [vmem:[#allocation3 + $0x168] sm:$0xff]
        %v2414 = vld [vmem:[#allocation3 + $0x170] sm:$0xff]
        %v2415 = vld [vmem:[#allocation3 + $0x178] sm:$0xff]
        %v2416 = vld [vmem:[#allocation3 + $0x180] sm:$0xff]
        %v2417 = vld [vmem:[#allocation3 + $0x188] sm:$0xff]
        %v2418 = vld [vmem:[#allocation3 + $0x190] sm:$0xff]
        %v2419 = vld [vmem:[#allocation3 + $0x198] sm:$0xff]
        %v2420 = vld [vmem:[#allocation3 + $0x1a0] sm:$0xff]
        %v2421 = vld [vmem:[#allocation3 + $0x1a8] sm:$0xff]
        %v2422 = vadd.f32 %v2368, %v2366
        %v2423 = vadd.f32 %v2369, %v2365
        %v2424 = vadd.f32 %v2370, %v2364
        %v2425 = vadd.f32 %v2371, %v2363
        %v2426 = vadd.f32 %v2372, %v2362
        %v2427 = vadd.f32 %v2373, %v2361
        %v2428 = vadd.f32 %v2374, %v2360
        %v2429 = vadd.f32 %v2375, %v2359
        %v2430 = vadd.f32 %v2376, %v2358
        %v2431 = vadd.f32 %v2377, %v2357
        %v2432 = vadd.f32 %v2378, %v2356
        %v2433 = vadd.f32 %v2379, %v2355
        %v2434 = vadd.f32 %v2380, %v2354
        %v2435 = vadd.f32 %v2381, %v2353
        %v2436 = vadd.f32 %v2382, %v2352
        %v2437 = vadd.f32 %v2383, %v2351
        %v2438 = vadd.f32 %v2384, %v2350
        %v2439 = vadd.f32 %v2385, %v2349
        %v2440 = vadd.f32 %v2386, %v2348
        %v2441 = vadd.f32 %v2387, %v2347
        %v2442 = vadd.f32 %v2388, %v2346
        %v2443 = vadd.f32 %v2389, %v2345
        %v2444 = vadd.f32 %v2390, %v2344
        %v2445 = vadd.f32 %v2391, %v2343
        %v2446 = vadd.f32 %v2392, %v2342
        %v2447 = vadd.f32 %v2393, %v2341
        %v2448 = vadd.f32 %v2394, %v2340
        %v2449 = vadd.f32 %v2395, %v2339
        %v2450 = vadd.f32 %v2396, %v2338
        %v2451 = vadd.f32 %v2397, %v2337
        %v2452 = vadd.f32 %v2398, %v2336
        %v2453 = vadd.f32 %v2399, %v2335
        %v2454 = vadd.f32 %v2400, %v2334
        %v2455 = vadd.f32 %v2401, %v2333
        %v2456 = vadd.f32 %v2402, %v2332
        %v2457 = vadd.f32 %v2403, %v2331
        %v2458 = vadd.f32 %v2404, %v2330
        %v2459 = vadd.f32 %v2405, %v2329
        %v2460 = vadd.f32 %v2406, %v2328
        %v2461 = vadd.f32 %v2407, %v2327
        %v2462 = vadd.f32 %v2408, %v2326
        %v2463 = vadd.f32 %v2409, %v2325
        %v2464 = vadd.f32 %v2410, %v2324
        %v2465 = vadd.f32 %v2411, %v2323
        %v2466 = vadd.f32 %v2412, %v2322
        %v2467 = vadd.f32 %v2413, %v2321
        %v2468 = vadd.f32 %v2414, %v2320
        %v2469 = vadd.f32 %v2415, %v2319
        %v2470 = vadd.f32 %v2416, %v2318
        %v2471 = vadd.f32 %v2417, %v2317
        %v2472 = vadd.f32 %v2418, %v2316
        %v2473 = vadd.f32 %v2419, %v2315
        %v2474 = vadd.f32 %v2420, %v2314
        %v2475 = vadd.f32 %v2421, %v2367
        %2476 = vst.msk [vmem:[#allocation3] sm:$0xff] %vm520, %v2422
        %2477 = vst.msk [vmem:[#allocation3 + $0x8] sm:$0xff] %vm520, %v2423
        %2478 = vst.msk [vmem:[#allocation3 + $0x10] sm:$0xff] %vm520, %v2424
        %2479 = vst.msk [vmem:[#allocation3 + $0x18] sm:$0xff] %vm520, %v2425
        %2480 = vst.msk [vmem:[#allocation3 + $0x20] sm:$0xff] %vm520, %v2426
        %2481 = vst.msk [vmem:[#allocation3 + $0x28] sm:$0xff] %vm520, %v2427
        %2482 = vst.msk [vmem:[#allocation3 + $0x30] sm:$0xff] %vm520, %v2428
        %2483 = vst.msk [vmem:[#allocation3 + $0x38] sm:$0xff] %vm520, %v2429
        %2484 = vst.msk [vmem:[#allocation3 + $0x40] sm:$0xff] %vm520, %v2430
        %2485 = vst.msk [vmem:[#allocation3 + $0x48] sm:$0xff] %vm520, %v2431
        %2486 = vst.msk [vmem:[#allocation3 + $0x50] sm:$0xff] %vm520, %v2432
        %2487 = vst.msk [vmem:[#allocation3 + $0x58] sm:$0xff] %vm520, %v2433
        %2488 = vst.msk [vmem:[#allocation3 + $0x60] sm:$0xff] %vm520, %v2434
        %2489 = vst.msk [vmem:[#allocation3 + $0x68] sm:$0xff] %vm520, %v2435
        %2490 = vst.msk [vmem:[#allocation3 + $0x70] sm:$0xff] %vm520, %v2436
        %2491 = vst.msk [vmem:[#allocation3 + $0x78] sm:$0xff] %vm520, %v2437
        %2492 = vst.msk [vmem:[#allocation3 + $0x80] sm:$0xff] %vm520, %v2438
        %2493 = vst.msk [vmem:[#allocation3 + $0x88] sm:$0xff] %vm520, %v2439
        %2494 = vst.msk [vmem:[#allocation3 + $0x90] sm:$0xff] %vm520, %v2440
        %2495 = vst.msk [vmem:[#allocation3 + $0x98] sm:$0xff] %vm520, %v2441
        %2496 = vst.msk [vmem:[#allocation3 + $0xa0] sm:$0xff] %vm520, %v2442
        %2497 = vst.msk [vmem:[#allocation3 + $0xa8] sm:$0xff] %vm520, %v2443
        %2498 = vst.msk [vmem:[#allocation3 + $0xb0] sm:$0xff] %vm520, %v2444
        %2499 = vst.msk [vmem:[#allocation3 + $0xb8] sm:$0xff] %vm520, %v2445
        %2500 = vst.msk [vmem:[#allocation3 + $0xc0] sm:$0xff] %vm520, %v2446
        %2501 = vst.msk [vmem:[#allocation3 + $0xc8] sm:$0xff] %vm520, %v2447
        %2502 = vst.msk [vmem:[#allocation3 + $0xd0] sm:$0xff] %vm520, %v2448
        %2503 = vst.msk [vmem:[#allocation3 + $0xd8] sm:$0xff] %vm520, %v2449
        %2504 = vst.msk [vmem:[#allocation3 + $0xe0] sm:$0xff] %vm520, %v2450
        %2505 = vst.msk [vmem:[#allocation3 + $0xe8] sm:$0xff] %vm520, %v2451
        %2506 = vst.msk [vmem:[#allocation3 + $0xf0] sm:$0xff] %vm520, %v2452
        %2507 = vst.msk [vmem:[#allocation3 + $0xf8] sm:$0xff] %vm520, %v2453
        %2508 = vst.msk [vmem:[#allocation3 + $0x100] sm:$0xff] %vm520, %v2454
        %2509 = vst.msk [vmem:[#allocation3 + $0x108] sm:$0xff] %vm520, %v2455
        %2510 = vst.msk [vmem:[#allocation3 + $0x110] sm:$0xff] %vm520, %v2456
        %2511 = vst.msk [vmem:[#allocation3 + $0x118] sm:$0xff] %vm520, %v2457
        %2512 = vst.msk [vmem:[#allocation3 + $0x120] sm:$0xff] %vm520, %v2458
        %2513 = vst.msk [vmem:[#allocation3 + $0x128] sm:$0xff] %vm520, %v2459
        %2514 = vst.msk [vmem:[#allocation3 + $0x130] sm:$0xff] %vm520, %v2460
        %2515 = vst.msk [vmem:[#allocation3 + $0x138] sm:$0xff] %vm520, %v2461
        %2516 = vst.msk [vmem:[#allocation3 + $0x140] sm:$0xff] %vm520, %v2462
        %2517 = vst.msk [vmem:[#allocation3 + $0x148] sm:$0xff] %vm520, %v2463
        %2518 = vst.msk [vmem:[#allocation3 + $0x150] sm:$0xff] %vm520, %v2464
        %2519 = vst.msk [vmem:[#allocation3 + $0x158] sm:$0xff] %vm520, %v2465
        %2520 = vst.msk [vmem:[#allocation3 + $0x160] sm:$0xff] %vm520, %v2466
        %2521 = vst.msk [vmem:[#allocation3 + $0x168] sm:$0xff] %vm520, %v2467
        %2522 = vst.msk [vmem:[#allocation3 + $0x170] sm:$0xff] %vm520, %v2468
        %2523 = vst.msk [vmem:[#allocation3 + $0x178] sm:$0xff] %vm520, %v2469
        %2524 = vst.msk [vmem:[#allocation3 + $0x180] sm:$0xff] %vm520, %v2470
        %2525 = vst.msk [vmem:[#allocation3 + $0x188] sm:$0xff] %vm520, %v2471
        %2526 = vst.msk [vmem:[#allocation3 + $0x190] sm:$0xff] %vm520, %v2472
        %2527 = vst.msk [vmem:[#allocation3 + $0x198] sm:$0xff] %vm520, %v2473
        %2528 = vst.msk [vmem:[#allocation3 + $0x1a0] sm:$0xff] %vm520, %v2474
        %2529 = vst.msk [vmem:[#allocation3 + $0x1a8] sm:$0xff] %vm520, %v2475
        %v2530 = vld [vmem:[%s2 + $0x60] sm:$0xf]
        %v2531 = vld [vmem:[%s2 + $0x64] sm:$0xf]
        %v2532 = vld [vmem:[%s2 + $0x68] sm:$0xf]
        %v2533 = vld [vmem:[%s2 + $0x6c] sm:$0xf]
        %v2534 = vld [vmem:[%s2 + $0x70] sm:$0xf]
        %v2535 = vld [vmem:[%s2 + $0x74] sm:$0xf]
        %v2536 = vld [vmem:[%s2 + $0x78] sm:$0xf]
        %v2537 = vld [vmem:[%s2 + $0x7c] sm:$0xf]
        %v2546 = vunpack.c.l.b16 %v2530
        %v2547 = vunpack.c.l.b16 %v2531
        %v2548 = vunpack.c.l.b16 %v2532
        %v2549 = vunpack.c.l.b16 %v2533
        %v2550 = vunpack.c.l.b16 %v2534
        %v2551 = vunpack.c.l.b16 %v2535
        %v2552 = vunpack.c.l.b16 %v2536
        %v2553 = vunpack.c.l.b16 %v2537
        %v2554 = vpack.c.b16 %v2547, %v2546
        %v2555 = vpack.c.b16 %v2549, %v2548
        %v2556 = vpack.c.b16 %v2551, %v2550
        %v2557 = vpack.c.b16 %v2553, %v2552
        %2562 = vmatprep.subr.bf16.mxu0 0
        %2563 = vmatpush1.bf16.msra.mxu0 0
        %2564 = vmatprep.subr.bf16.mxu0 0
        %2565 = vmatpush1.bf16.msra.mxu0 0
        %2566 = vmatprep.subr.bf16.mxu0 0
        %2567 = vmatpush1.bf16.msra.mxu0 0
        %2568 = vmatprep.subr.bf16.mxu0 0
        %2569 = vmatpush1.bf16.msra.mxu0 0
        %2570 = vmatprep.subr.bf16.mxu0 0
        %2571 = vmatpush1.bf16.msra.mxu0 %v2557
        %2572 = vmatprep.subr.bf16.mxu0 0
        %2573 = vmatpush1.bf16.msra.mxu0 %v2556
        %2574 = vmatprep.subr.bf16.mxu0 0
        %2575 = vmatpush1.bf16.msra.mxu0 %v2555
        %2576 = vmatprep.subr.bf16.mxu0 0
        %2577 = vmatpush1.bf16.msra.mxu0 %v2554
        %2578 = vmatprep.subr.bf16.mxu0 0
        %2579 = vmatpush2.bf16.msra.mxu0 0
        %2580 = vmatprep.subr.bf16.mxu0 0
        %2581 = vmatpush2.bf16.msra.mxu0 0
        %2582 = vmatprep.subr.bf16.mxu0 0
        %2583 = vmatpush2.bf16.msra.mxu0 0
        %2584 = vmatprep.subr.bf16.mxu0 0
        %2585 = vmatpush2.bf16.msra.mxu0 0
        %2586 = vmatprep.subr.bf16.mxu0 0
        %2587 = vmatpush2.bf16.msra.mxu0 0
        %2588 = vmatprep.subr.bf16.mxu0 0
        %2589 = vmatpush2.bf16.msra.mxu0 0
        %2590 = vmatprep.subr.bf16.mxu0 0
        %2591 = vmatpush2.bf16.msra.mxu0 0
        %2592 = vmatprep.subr.bf16.mxu0 0
        %2593 = vmatpush2.bf16.msra.mxu0 0
        %2594 = vmatprep.mubr.bf16.mxu0 0
        %2595 = vmatmul.mubr.bf16.gmra.mxu0 %v1041
        %v2596 = vpop.f32.mrf.mxu0
        %v2597 = vadd.f32 0.0, %v2596
        %v2598 = vpop.f32.mrf.mxu0
        %v2599 = vpop.f32.mrf.mxu0
        %v2600 = vadd.f32 0.0, %v2599
        %v2601 = vpop.f32.mrf.mxu0
        %2602 = vmatprep.mubr.bf16.mxu0 0
        %2603 = vmatmul.mubr.bf16.gmra.mxu0 %v1044
        %v2604 = vpop.f32.mrf.mxu0
        %v2605 = vadd.f32 0.0, %v2604
        %v2606 = vpop.f32.mrf.mxu0
        %v2607 = vpop.f32.mrf.mxu0
        %v2608 = vadd.f32 0.0, %v2607
        %v2609 = vpop.f32.mrf.mxu0
        %2610 = vmatprep.mubr.bf16.mxu0 0
        %2611 = vmatmul.mubr.bf16.gmra.mxu0 %v1047
        %v2612 = vpop.f32.mrf.mxu0
        %v2613 = vadd.f32 0.0, %v2612
        %v2614 = vpop.f32.mrf.mxu0
        %v2615 = vpop.f32.mrf.mxu0
        %v2616 = vadd.f32 0.0, %v2615
        %v2617 = vpop.f32.mrf.mxu0
        %2618 = vmatprep.mubr.bf16.mxu0 0
        %2619 = vmatmul.mubr.bf16.gmra.mxu0 %v1050
        %v2620 = vpop.f32.mrf.mxu0
        %v2621 = vadd.f32 0.0, %v2620
        %v2622 = vpop.f32.mrf.mxu0
        %v2623 = vpop.f32.mrf.mxu0
        %v2624 = vadd.f32 0.0, %v2623
        %v2625 = vpop.f32.mrf.mxu0
        %2626 = vmatprep.mubr.bf16.mxu0 0
        %2627 = vmatmul.mubr.bf16.gmra.mxu0 %v1053
        %v2628 = vpop.f32.mrf.mxu0
        %v2629 = vadd.f32 0.0, %v2628
        %v2630 = vpop.f32.mrf.mxu0
        %v2631 = vpop.f32.mrf.mxu0
        %v2632 = vadd.f32 0.0, %v2631
        %v2633 = vpop.f32.mrf.mxu0
        %2634 = vmatprep.mubr.bf16.mxu0 0
        %2635 = vmatmul.mubr.bf16.gmra.mxu0 %v1056
        %v2636 = vpop.f32.mrf.mxu0
        %v2637 = vadd.f32 0.0, %v2636
        %v2638 = vpop.f32.mrf.mxu0
        %v2639 = vpop.f32.mrf.mxu0
        %v2640 = vadd.f32 0.0, %v2639
        %v2641 = vpop.f32.mrf.mxu0
        %2642 = vmatprep.mubr.bf16.mxu0 0
        %2643 = vmatmul.mubr.bf16.gmra.mxu0 %v1059
        %v2644 = vpop.f32.mrf.mxu0
        %v2645 = vadd.f32 0.0, %v2644
        %v2646 = vpop.f32.mrf.mxu0
        %v2647 = vpop.f32.mrf.mxu0
        %v2648 = vadd.f32 0.0, %v2647
        %v2649 = vpop.f32.mrf.mxu0
        %2650 = vmatprep.mubr.bf16.mxu0 0
        %2651 = vmatmul.mubr.bf16.gmra.mxu0 %v1062
        %v2652 = vpop.f32.mrf.mxu0
        %v2653 = vadd.f32 0.0, %v2652
        %v2654 = vpop.f32.mrf.mxu0
        %v2655 = vpop.f32.mrf.mxu0
        %v2656 = vadd.f32 0.0, %v2655
        %v2657 = vpop.f32.mrf.mxu0
        %2658 = vmatprep.mubr.bf16.mxu0 0
        %2659 = vmatmul.mubr.bf16.gmra.mxu0 %v1065
        %v2660 = vpop.f32.mrf.mxu0
        %v2661 = vadd.f32 0.0, %v2660
        %v2662 = vpop.f32.mrf.mxu0
        %v2663 = vpop.f32.mrf.mxu0
        %v2664 = vadd.f32 0.0, %v2663
        %v2665 = vpop.f32.mrf.mxu0
        %2666 = vmatprep.mubr.bf16.mxu0 0
        %2667 = vmatmul.mubr.bf16.gmra.mxu0 %v1068
        %v2668 = vpop.f32.mrf.mxu0
        %v2669 = vadd.f32 0.0, %v2668
        %v2670 = vpop.f32.mrf.mxu0
        %v2671 = vpop.f32.mrf.mxu0
        %v2672 = vadd.f32 0.0, %v2671
        %v2673 = vpop.f32.mrf.mxu0
        %2674 = vmatprep.mubr.bf16.mxu0 0
        %2675 = vmatmul.mubr.bf16.gmra.mxu0 %v1071
        %v2676 = vpop.f32.mrf.mxu0
        %v2677 = vadd.f32 0.0, %v2676
        %v2678 = vpop.f32.mrf.mxu0
        %v2679 = vpop.f32.mrf.mxu0
        %v2680 = vadd.f32 0.0, %v2679
        %v2681 = vpop.f32.mrf.mxu0
        %2682 = vmatprep.mubr.bf16.mxu0 0
        %2683 = vmatmul.mubr.bf16.gmra.mxu0 %v1074
        %v2684 = vpop.f32.mrf.mxu0
        %v2685 = vadd.f32 0.0, %v2684
        %v2686 = vpop.f32.mrf.mxu0
        %v2687 = vpop.f32.mrf.mxu0
        %v2688 = vadd.f32 0.0, %v2687
        %v2689 = vpop.f32.mrf.mxu0
        %2690 = vmatprep.mubr.bf16.mxu0 0
        %2691 = vmatmul.mubr.bf16.gmra.mxu0 %v1077
        %v2692 = vpop.f32.mrf.mxu0
        %v2693 = vadd.f32 0.0, %v2692
        %v2694 = vpop.f32.mrf.mxu0
        %v2695 = vpop.f32.mrf.mxu0
        %v2696 = vadd.f32 0.0, %v2695
        %v2697 = vpop.f32.mrf.mxu0
        %2698 = vmatprep.mubr.bf16.mxu0 0
        %2699 = vmatmul.mubr.bf16.gmra.mxu0 %v1080
        %v2700 = vpop.f32.mrf.mxu0
        %v2701 = vadd.f32 0.0, %v2700
        %v2702 = vpop.f32.mrf.mxu0
        %v2703 = vpop.f32.mrf.mxu0
        %v2704 = vadd.f32 0.0, %v2703
        %v2705 = vpop.f32.mrf.mxu0
        %2706 = vmatprep.mubr.bf16.mxu0 0
        %2707 = vmatmul.mubr.bf16.gmra.mxu0 %v1083
        %v2708 = vpop.f32.mrf.mxu0
        %v2709 = vadd.f32 0.0, %v2708
        %v2710 = vpop.f32.mrf.mxu0
        %v2711 = vpop.f32.mrf.mxu0
        %v2712 = vadd.f32 0.0, %v2711
        %v2713 = vpop.f32.mrf.mxu0
        %2714 = vmatprep.mubr.bf16.mxu0 0
        %2715 = vmatmul.mubr.bf16.gmra.mxu0 %v1086
        %v2716 = vpop.f32.mrf.mxu0
        %v2717 = vadd.f32 0.0, %v2716
        %v2718 = vpop.f32.mrf.mxu0
        %v2719 = vpop.f32.mrf.mxu0
        %v2720 = vadd.f32 0.0, %v2719
        %v2721 = vpop.f32.mrf.mxu0
        %2722 = vmatprep.mubr.bf16.mxu0 0
        %2723 = vmatmul.mubr.bf16.gmra.mxu0 %v1089
        %v2724 = vpop.f32.mrf.mxu0
        %v2725 = vadd.f32 0.0, %v2724
        %v2726 = vpop.f32.mrf.mxu0
        %v2727 = vpop.f32.mrf.mxu0
        %v2728 = vadd.f32 0.0, %v2727
        %v2729 = vpop.f32.mrf.mxu0
        %2730 = vmatprep.mubr.bf16.mxu0 0
        %2731 = vmatmul.mubr.bf16.gmra.mxu0 %v1092
        %v2732 = vpop.f32.mrf.mxu0
        %v2733 = vadd.f32 0.0, %v2732
        %v2734 = vpop.f32.mrf.mxu0
        %v2735 = vpop.f32.mrf.mxu0
        %v2736 = vadd.f32 0.0, %v2735
        %v2737 = vpop.f32.mrf.mxu0
        %2738 = vmatprep.mubr.bf16.mxu0 0
        %2739 = vmatmul.mubr.bf16.gmra.mxu0 %v1095
        %v2740 = vpop.f32.mrf.mxu0
        %v2741 = vadd.f32 0.0, %v2740
        %v2742 = vpop.f32.mrf.mxu0
        %v2743 = vpop.f32.mrf.mxu0
        %v2744 = vadd.f32 0.0, %v2743
        %v2745 = vpop.f32.mrf.mxu0
        %2746 = vmatprep.mubr.bf16.mxu0 0
        %2747 = vmatmul.mubr.bf16.gmra.mxu0 %v1098
        %v2748 = vpop.f32.mrf.mxu0
        %v2749 = vadd.f32 0.0, %v2748
        %v2750 = vpop.f32.mrf.mxu0
        %v2751 = vpop.f32.mrf.mxu0
        %v2752 = vadd.f32 0.0, %v2751
        %v2753 = vpop.f32.mrf.mxu0
        %2754 = vmatprep.mubr.bf16.mxu0 0
        %2755 = vmatmul.mubr.bf16.gmra.mxu0 %v1101
        %v2756 = vpop.f32.mrf.mxu0
        %v2757 = vadd.f32 0.0, %v2756
        %v2758 = vpop.f32.mrf.mxu0
        %v2759 = vpop.f32.mrf.mxu0
        %v2760 = vadd.f32 0.0, %v2759
        %v2761 = vpop.f32.mrf.mxu0
        %2762 = vmatprep.mubr.bf16.mxu0 0
        %2763 = vmatmul.mubr.bf16.gmra.mxu0 %v1104
        %v2764 = vpop.f32.mrf.mxu0
        %v2765 = vadd.f32 0.0, %v2764
        %v2766 = vpop.f32.mrf.mxu0
        %v2767 = vpop.f32.mrf.mxu0
        %v2768 = vadd.f32 0.0, %v2767
        %v2769 = vpop.f32.mrf.mxu0
        %2770 = vmatprep.mubr.bf16.mxu0 0
        %2771 = vmatmul.mubr.bf16.gmra.mxu0 %v1107
        %v2772 = vpop.f32.mrf.mxu0
        %v2773 = vadd.f32 0.0, %v2772
        %v2774 = vpop.f32.mrf.mxu0
        %v2775 = vpop.f32.mrf.mxu0
        %v2776 = vadd.f32 0.0, %v2775
        %v2777 = vpop.f32.mrf.mxu0
        %2778 = vmatprep.mubr.bf16.mxu0 0
        %2779 = vmatmul.mubr.bf16.gmra.mxu0 %v1110
        %v2780 = vpop.f32.mrf.mxu0
        %v2781 = vadd.f32 0.0, %v2780
        %v2782 = vpop.f32.mrf.mxu0
        %v2783 = vpop.f32.mrf.mxu0
        %v2784 = vadd.f32 0.0, %v2783
        %v2785 = vpop.f32.mrf.mxu0
        %2786 = vmatprep.mubr.bf16.mxu0 0
        %2787 = vmatmul.mubr.bf16.gmra.mxu0 %v1113
        %v2788 = vpop.f32.mrf.mxu0
        %v2789 = vadd.f32 0.0, %v2788
        %v2790 = vpop.f32.mrf.mxu0
        %v2791 = vpop.f32.mrf.mxu0
        %v2792 = vadd.f32 0.0, %v2791
        %v2793 = vpop.f32.mrf.mxu0
        %2794 = vmatprep.mubr.bf16.mxu0 0
        %2795 = vmatmul.mubr.bf16.gmra.mxu0 %v1116
        %v2796 = vpop.f32.mrf.mxu0
        %v2797 = vadd.f32 0.0, %v2796
        %v2798 = vpop.f32.mrf.mxu0
        %v2799 = vpop.f32.mrf.mxu0
        %v2800 = vadd.f32 0.0, %v2799
        %v2801 = vpop.f32.mrf.mxu0
        %2802 = vmatprep.mubr.bf16.mxu0 0
        %2803 = vmatmul.mubr.bf16.gmra.mxu0 %v1119
        %v2804 = vpop.f32.mrf.mxu0
        %v2805 = vadd.f32 0.0, %v2804
        %v2806 = vpop.f32.mrf.mxu0
        %v2807 = vpop.f32.mrf.mxu0
        %v2808 = vadd.f32 0.0, %v2807
        %v2809 = vpop.f32.mrf.mxu0
        %2810 = vdwg.mxu0
        %v2811 = vrot.slane %v2597, 7
        %v2812 = vrot.slane %v2600, 7
        %v2813 = vrot.slane %v2605, 7
        %v2814 = vrot.slane %v2608, 7
        %v2815 = vrot.slane %v2613, 7
        %v2816 = vrot.slane %v2616, 7
        %v2817 = vrot.slane %v2621, 7
        %v2818 = vrot.slane %v2624, 7
        %v2819 = vrot.slane %v2629, 7
        %v2820 = vrot.slane %v2632, 7
        %v2821 = vrot.slane %v2637, 7
        %v2822 = vrot.slane %v2640, 7
        %v2823 = vrot.slane %v2645, 7
        %v2824 = vrot.slane %v2648, 7
        %v2825 = vrot.slane %v2653, 7
        %v2826 = vrot.slane %v2656, 7
        %v2827 = vrot.slane %v2661, 7
        %v2828 = vrot.slane %v2664, 7
        %v2829 = vrot.slane %v2669, 7
        %v2830 = vrot.slane %v2672, 7
        %v2831 = vrot.slane %v2677, 7
        %v2832 = vrot.slane %v2680, 7
        %v2833 = vrot.slane %v2685, 7
        %v2834 = vrot.slane %v2688, 7
        %v2835 = vrot.slane %v2693, 7
        %v2836 = vrot.slane %v2696, 7
        %v2837 = vrot.slane %v2701, 7
        %v2838 = vrot.slane %v2704, 7
        %v2839 = vrot.slane %v2709, 7
        %v2840 = vrot.slane %v2712, 7
        %v2841 = vrot.slane %v2717, 7
        %v2842 = vrot.slane %v2720, 7
        %v2843 = vrot.slane %v2725, 7
        %v2844 = vrot.slane %v2728, 7
        %v2845 = vrot.slane %v2733, 7
        %v2846 = vrot.slane %v2736, 7
        %v2847 = vrot.slane %v2741, 7
        %v2848 = vrot.slane %v2744, 7
        %v2849 = vrot.slane %v2749, 7
        %v2850 = vrot.slane %v2752, 7
        %v2851 = vrot.slane %v2757, 7
        %v2852 = vrot.slane %v2760, 7
        %v2853 = vrot.slane %v2765, 7
        %v2854 = vrot.slane %v2768, 7
        %v2855 = vrot.slane %v2773, 7
        %v2856 = vrot.slane %v2776, 7
        %v2857 = vrot.slane %v2781, 7
        %v2858 = vrot.slane %v2784, 7
        %v2859 = vrot.slane %v2789, 7
        %v2860 = vrot.slane %v2792, 7
        %v2861 = vrot.slane %v2797, 7
        %v2862 = vrot.slane %v2800, 7
        %v2863 = vrot.slane %v2805, 7
        %v2864 = vrot.slane %v2808, 7
        %v2865 = vsel %vm1426, %v2863, %v2864
        %v2866 = vsel %vm1426, %v2862, %v2863
        %v2867 = vsel %vm1426, %v2861, %v2862
        %v2868 = vsel %vm1426, %v2860, %v2861
        %v2869 = vsel %vm1426, %v2859, %v2860
        %v2870 = vsel %vm1426, %v2858, %v2859
        %v2871 = vsel %vm1426, %v2857, %v2858
        %v2872 = vsel %vm1426, %v2856, %v2857
        %v2873 = vsel %vm1426, %v2855, %v2856
        %v2874 = vsel %vm1426, %v2854, %v2855
        %v2875 = vsel %vm1426, %v2853, %v2854
        %v2876 = vsel %vm1426, %v2852, %v2853
        %v2877 = vsel %vm1426, %v2851, %v2852
        %v2878 = vsel %vm1426, %v2850, %v2851
        %v2879 = vsel %vm1426, %v2849, %v2850
        %v2880 = vsel %vm1426, %v2848, %v2849
        %v2881 = vsel %vm1426, %v2847, %v2848
        %v2882 = vsel %vm1426, %v2846, %v2847
        %v2883 = vsel %vm1426, %v2845, %v2846
        %v2884 = vsel %vm1426, %v2844, %v2845
        %v2885 = vsel %vm1426, %v2843, %v2844
        %v2886 = vsel %vm1426, %v2842, %v2843
        %v2887 = vsel %vm1426, %v2841, %v2842
        %v2888 = vsel %vm1426, %v2840, %v2841
        %v2889 = vsel %vm1426, %v2839, %v2840
        %v2890 = vsel %vm1426, %v2838, %v2839
        %v2891 = vsel %vm1426, %v2837, %v2838
        %v2892 = vsel %vm1426, %v2836, %v2837
        %v2893 = vsel %vm1426, %v2835, %v2836
        %v2894 = vsel %vm1426, %v2834, %v2835
        %v2895 = vsel %vm1426, %v2833, %v2834
        %v2896 = vsel %vm1426, %v2832, %v2833
        %v2897 = vsel %vm1426, %v2831, %v2832
        %v2898 = vsel %vm1426, %v2830, %v2831
        %v2899 = vsel %vm1426, %v2829, %v2830
        %v2900 = vsel %vm1426, %v2828, %v2829
        %v2901 = vsel %vm1426, %v2827, %v2828
        %v2902 = vsel %vm1426, %v2826, %v2827
        %v2903 = vsel %vm1426, %v2825, %v2826
        %v2904 = vsel %vm1426, %v2824, %v2825
        %v2905 = vsel %vm1426, %v2823, %v2824
        %v2906 = vsel %vm1426, %v2822, %v2823
        %v2907 = vsel %vm1426, %v2821, %v2822
        %v2908 = vsel %vm1426, %v2820, %v2821
        %v2909 = vsel %vm1426, %v2819, %v2820
        %v2910 = vsel %vm1426, %v2818, %v2819
        %v2911 = vsel %vm1426, %v2817, %v2818
        %v2912 = vsel %vm1426, %v2816, %v2817
        %v2913 = vsel %vm1426, %v2815, %v2816
        %v2914 = vsel %vm1426, %v2814, %v2815
        %v2915 = vsel %vm1426, %v2813, %v2814
        %v2916 = vsel %vm1426, %v2812, %v2813
        %v2917 = vsel %vm1426, %v2811, %v2812
        %v2918 = vsel %vm1426, %v2864, %v2811
        %v2919 = vld [vmem:[#allocation3] sm:$0xff]
        %v2920 = vld [vmem:[#allocation3 + $0x8] sm:$0xff]
        %v2921 = vld [vmem:[#allocation3 + $0x10] sm:$0xff]
        %v2922 = vld [vmem:[#allocation3 + $0x18] sm:$0xff]
        %v2923 = vld [vmem:[#allocation3 + $0x20] sm:$0xff]
        %v2924 = vld [vmem:[#allocation3 + $0x28] sm:$0xff]
        %v2925 = vld [vmem:[#allocation3 + $0x30] sm:$0xff]
        %v2926 = vld [vmem:[#allocation3 + $0x38] sm:$0xff]
        %v2927 = vld [vmem:[#allocation3 + $0x40] sm:$0xff]
        %v2928 = vld [vmem:[#allocation3 + $0x48] sm:$0xff]
        %v2929 = vld [vmem:[#allocation3 + $0x50] sm:$0xff]
        %v2930 = vld [vmem:[#allocation3 + $0x58] sm:$0xff]
        %v2931 = vld [vmem:[#allocation3 + $0x60] sm:$0xff]
        %v2932 = vld [vmem:[#allocation3 + $0x68] sm:$0xff]
        %v2933 = vld [vmem:[#allocation3 + $0x70] sm:$0xff]
        %v2934 = vld [vmem:[#allocation3 + $0x78] sm:$0xff]
        %v2935 = vld [vmem:[#allocation3 + $0x80] sm:$0xff]
        %v2936 = vld [vmem:[#allocation3 + $0x88] sm:$0xff]
        %v2937 = vld [vmem:[#allocation3 + $0x90] sm:$0xff]
        %v2938 = vld [vmem:[#allocation3 + $0x98] sm:$0xff]
        %v2939 = vld [vmem:[#allocation3 + $0xa0] sm:$0xff]
        %v2940 = vld [vmem:[#allocation3 + $0xa8] sm:$0xff]
        %v2941 = vld [vmem:[#allocation3 + $0xb0] sm:$0xff]
        %v2942 = vld [vmem:[#allocation3 + $0xb8] sm:$0xff]
        %v2943 = vld [vmem:[#allocation3 + $0xc0] sm:$0xff]
        %v2944 = vld [vmem:[#allocation3 + $0xc8] sm:$0xff]
        %v2945 = vld [vmem:[#allocation3 + $0xd0] sm:$0xff]
        %v2946 = vld [vmem:[#allocation3 + $0xd8] sm:$0xff]
        %v2947 = vld [vmem:[#allocation3 + $0xe0] sm:$0xff]
        %v2948 = vld [vmem:[#allocation3 + $0xe8] sm:$0xff]
        %v2949 = vld [vmem:[#allocation3 + $0xf0] sm:$0xff]
        %v2950 = vld [vmem:[#allocation3 + $0xf8] sm:$0xff]
        %v2951 = vld [vmem:[#allocation3 + $0x100] sm:$0xff]
        %v2952 = vld [vmem:[#allocation3 + $0x108] sm:$0xff]
        %v2953 = vld [vmem:[#allocation3 + $0x110] sm:$0xff]
        %v2954 = vld [vmem:[#allocation3 + $0x118] sm:$0xff]
        %v2955 = vld [vmem:[#allocation3 + $0x120] sm:$0xff]
        %v2956 = vld [vmem:[#allocation3 + $0x128] sm:$0xff]
        %v2957 = vld [vmem:[#allocation3 + $0x130] sm:$0xff]
        %v2958 = vld [vmem:[#allocation3 + $0x138] sm:$0xff]
        %v2959 = vld [vmem:[#allocation3 + $0x140] sm:$0xff]
        %v2960 = vld [vmem:[#allocation3 + $0x148] sm:$0xff]
        %v2961 = vld [vmem:[#allocation3 + $0x150] sm:$0xff]
        %v2962 = vld [vmem:[#allocation3 + $0x158] sm:$0xff]
        %v2963 = vld [vmem:[#allocation3 + $0x160] sm:$0xff]
        %v2964 = vld [vmem:[#allocation3 + $0x168] sm:$0xff]
        %v2965 = vld [vmem:[#allocation3 + $0x170] sm:$0xff]
        %v2966 = vld [vmem:[#allocation3 + $0x178] sm:$0xff]
        %v2967 = vld [vmem:[#allocation3 + $0x180] sm:$0xff]
        %v2968 = vld [vmem:[#allocation3 + $0x188] sm:$0xff]
        %v2969 = vld [vmem:[#allocation3 + $0x190] sm:$0xff]
        %v2970 = vld [vmem:[#allocation3 + $0x198] sm:$0xff]
        %v2971 = vld [vmem:[#allocation3 + $0x1a0] sm:$0xff]
        %v2972 = vld [vmem:[#allocation3 + $0x1a8] sm:$0xff]
        %v2973 = vadd.f32 %v2919, %v2915
        %v2974 = vadd.f32 %v2920, %v2914
        %v2975 = vadd.f32 %v2921, %v2913
        %v2976 = vadd.f32 %v2922, %v2912
        %v2977 = vadd.f32 %v2923, %v2911
        %v2978 = vadd.f32 %v2924, %v2910
        %v2979 = vadd.f32 %v2925, %v2909
        %v2980 = vadd.f32 %v2926, %v2908
        %v2981 = vadd.f32 %v2927, %v2907
        %v2982 = vadd.f32 %v2928, %v2906
        %v2983 = vadd.f32 %v2929, %v2905
        %v2984 = vadd.f32 %v2930, %v2904
        %v2985 = vadd.f32 %v2931, %v2903
        %v2986 = vadd.f32 %v2932, %v2902
        %v2987 = vadd.f32 %v2933, %v2901
        %v2988 = vadd.f32 %v2934, %v2900
        %v2989 = vadd.f32 %v2935, %v2899
        %v2990 = vadd.f32 %v2936, %v2898
        %v2991 = vadd.f32 %v2937, %v2897
        %v2992 = vadd.f32 %v2938, %v2896
        %v2993 = vadd.f32 %v2939, %v2895
        %v2994 = vadd.f32 %v2940, %v2894
        %v2995 = vadd.f32 %v2941, %v2893
        %v2996 = vadd.f32 %v2942, %v2892
        %v2997 = vadd.f32 %v2943, %v2891
        %v2998 = vadd.f32 %v2944, %v2890
        %v2999 = vadd.f32 %v2945, %v2889
        %v3000 = vadd.f32 %v2946, %v2888
        %v3001 = vadd.f32 %v2947, %v2887
        %v3002 = vadd.f32 %v2948, %v2886
        %v3003 = vadd.f32 %v2949, %v2885
        %v3004 = vadd.f32 %v2950, %v2884
        %v3005 = vadd.f32 %v2951, %v2883
        %v3006 = vadd.f32 %v2952, %v2882
        %v3007 = vadd.f32 %v2953, %v2881
        %v3008 = vadd.f32 %v2954, %v2880
        %v3009 = vadd.f32 %v2955, %v2879
        %v3010 = vadd.f32 %v2956, %v2878
        %v3011 = vadd.f32 %v2957, %v2877
        %v3012 = vadd.f32 %v2958, %v2876
        %v3013 = vadd.f32 %v2959, %v2875
        %v3014 = vadd.f32 %v2960, %v2874
        %v3015 = vadd.f32 %v2961, %v2873
        %v3016 = vadd.f32 %v2962, %v2872
        %v3017 = vadd.f32 %v2963, %v2871
        %v3018 = vadd.f32 %v2964, %v2870
        %v3019 = vadd.f32 %v2965, %v2869
        %v3020 = vadd.f32 %v2966, %v2868
        %v3021 = vadd.f32 %v2967, %v2867
        %v3022 = vadd.f32 %v2968, %v2866
        %v3023 = vadd.f32 %v2969, %v2865
        %v3024 = vadd.f32 %v2970, %v2918
        %v3025 = vadd.f32 %v2971, %v2917
        %v3026 = vadd.f32 %v2972, %v2916
        %3027 = vst.msk [vmem:[#allocation3] sm:$0xff] %vm520, %v2973
        %3028 = vst.msk [vmem:[#allocation3 + $0x8] sm:$0xff] %vm520, %v2974
        %3029 = vst.msk [vmem:[#allocation3 + $0x10] sm:$0xff] %vm520, %v2975
        %3030 = vst.msk [vmem:[#allocation3 + $0x18] sm:$0xff] %vm520, %v2976
        %3031 = vst.msk [vmem:[#allocation3 + $0x20] sm:$0xff] %vm520, %v2977
        %3032 = vst.msk [vmem:[#allocation3 + $0x28] sm:$0xff] %vm520, %v2978
        %3033 = vst.msk [vmem:[#allocation3 + $0x30] sm:$0xff] %vm520, %v2979
        %3034 = vst.msk [vmem:[#allocation3 + $0x38] sm:$0xff] %vm520, %v2980
        %3035 = vst.msk [vmem:[#allocation3 + $0x40] sm:$0xff] %vm520, %v2981
        %3036 = vst.msk [vmem:[#allocation3 + $0x48] sm:$0xff] %vm520, %v2982
        %3037 = vst.msk [vmem:[#allocation3 + $0x50] sm:$0xff] %vm520, %v2983
        %3038 = vst.msk [vmem:[#allocation3 + $0x58] sm:$0xff] %vm520, %v2984
        %3039 = vst.msk [vmem:[#allocation3 + $0x60] sm:$0xff] %vm520, %v2985
        %3040 = vst.msk [vmem:[#allocation3 + $0x68] sm:$0xff] %vm520, %v2986
        %3041 = vst.msk [vmem:[#allocation3 + $0x70] sm:$0xff] %vm520, %v2987
        %3042 = vst.msk [vmem:[#allocation3 + $0x78] sm:$0xff] %vm520, %v2988
        %3043 = vst.msk [vmem:[#allocation3 + $0x80] sm:$0xff] %vm520, %v2989
        %3044 = vst.msk [vmem:[#allocation3 + $0x88] sm:$0xff] %vm520, %v2990
        %3045 = vst.msk [vmem:[#allocation3 + $0x90] sm:$0xff] %vm520, %v2991
        %3046 = vst.msk [vmem:[#allocation3 + $0x98] sm:$0xff] %vm520, %v2992
        %3047 = vst.msk [vmem:[#allocation3 + $0xa0] sm:$0xff] %vm520, %v2993
        %3048 = vst.msk [vmem:[#allocation3 + $0xa8] sm:$0xff] %vm520, %v2994
        %3049 = vst.msk [vmem:[#allocation3 + $0xb0] sm:$0xff] %vm520, %v2995
        %3050 = vst.msk [vmem:[#allocation3 + $0xb8] sm:$0xff] %vm520, %v2996
        %3051 = vst.msk [vmem:[#allocation3 + $0xc0] sm:$0xff] %vm520, %v2997
        %3052 = vst.msk [vmem:[#allocation3 + $0xc8] sm:$0xff] %vm520, %v2998
        %3053 = vst.msk [vmem:[#allocation3 + $0xd0] sm:$0xff] %vm520, %v2999
        %3054 = vst.msk [vmem:[#allocation3 + $0xd8] sm:$0xff] %vm520, %v3000
        %3055 = vst.msk [vmem:[#allocation3 + $0xe0] sm:$0xff] %vm520, %v3001
        %3056 = vst.msk [vmem:[#allocation3 + $0xe8] sm:$0xff] %vm520, %v3002
        %3057 = vst.msk [vmem:[#allocation3 + $0xf0] sm:$0xff] %vm520, %v3003
        %3058 = vst.msk [vmem:[#allocation3 + $0xf8] sm:$0xff] %vm520, %v3004
        %3059 = vst.msk [vmem:[#allocation3 + $0x100] sm:$0xff] %vm520, %v3005
        %3060 = vst.msk [vmem:[#allocation3 + $0x108] sm:$0xff] %vm520, %v3006
        %3061 = vst.msk [vmem:[#allocation3 + $0x110] sm:$0xff] %vm520, %v3007
        %3062 = vst.msk [vmem:[#allocation3 + $0x118] sm:$0xff] %vm520, %v3008
        %3063 = vst.msk [vmem:[#allocation3 + $0x120] sm:$0xff] %vm520, %v3009
        %3064 = vst.msk [vmem:[#allocation3 + $0x128] sm:$0xff] %vm520, %v3010
        %3065 = vst.msk [vmem:[#allocation3 + $0x130] sm:$0xff] %vm520, %v3011
        %3066 = vst.msk [vmem:[#allocation3 + $0x138] sm:$0xff] %vm520, %v3012
        %3067 = vst.msk [vmem:[#allocation3 + $0x140] sm:$0xff] %vm520, %v3013
        %3068 = vst.msk [vmem:[#allocation3 + $0x148] sm:$0xff] %vm520, %v3014
        %3069 = vst.msk [vmem:[#allocation3 + $0x150] sm:$0xff] %vm520, %v3015
        %3070 = vst.msk [vmem:[#allocation3 + $0x158] sm:$0xff] %vm520, %v3016
        %3071 = vst.msk [vmem:[#allocation3 + $0x160] sm:$0xff] %vm520, %v3017
        %3072 = vst.msk [vmem:[#allocation3 + $0x168] sm:$0xff] %vm520, %v3018
        %3073 = vst.msk [vmem:[#allocation3 + $0x170] sm:$0xff] %vm520, %v3019
        %3074 = vst.msk [vmem:[#allocation3 + $0x178] sm:$0xff] %vm520, %v3020
        %3075 = vst.msk [vmem:[#allocation3 + $0x180] sm:$0xff] %vm520, %v3021
        %3076 = vst.msk [vmem:[#allocation3 + $0x188] sm:$0xff] %vm520, %v3022
        %3077 = vst.msk [vmem:[#allocation3 + $0x190] sm:$0xff] %vm520, %v3023
        %3078 = vst.msk [vmem:[#allocation3 + $0x198] sm:$0xff] %vm520, %v3024
        %3079 = vst.msk [vmem:[#allocation3 + $0x1a0] sm:$0xff] %vm520, %v3025
        %3080 = vst.msk [vmem:[#allocation3 + $0x1a8] sm:$0xff] %vm520, %v3026
        %v3081 = vld [vmem:[%s2 + $0x80] sm:$0xf]
        %v3082 = vld [vmem:[%s2 + $0x84] sm:$0xf]
        %v3083 = vld [vmem:[%s2 + $0x88] sm:$0xf]
        %v3084 = vld [vmem:[%s2 + $0x8c] sm:$0xf]
        %v3085 = vld [vmem:[%s2 + $0x90] sm:$0xf]
        %v3086 = vld [vmem:[%s2 + $0x94] sm:$0xf]
        %v3087 = vld [vmem:[%s2 + $0x98] sm:$0xf]
        %v3088 = vld [vmem:[%s2 + $0x9c] sm:$0xf]
        %v3097 = vunpack.c.l.b16 %v3081
        %v3098 = vunpack.c.l.b16 %v3082
        %v3099 = vunpack.c.l.b16 %v3083
        %v3100 = vunpack.c.l.b16 %v3084
        %v3101 = vunpack.c.l.b16 %v3085
        %v3102 = vunpack.c.l.b16 %v3086
        %v3103 = vunpack.c.l.b16 %v3087
        %v3104 = vunpack.c.l.b16 %v3088
        %v3105 = vpack.c.b16 %v3098, %v3097
        %v3106 = vpack.c.b16 %v3100, %v3099
        %v3107 = vpack.c.b16 %v3102, %v3101
        %v3108 = vpack.c.b16 %v3104, %v3103
        %3113 = vmatprep.subr.bf16.mxu0 0
        %3114 = vmatpush1.bf16.msra.mxu0 0
        %3115 = vmatprep.subr.bf16.mxu0 0
        %3116 = vmatpush1.bf16.msra.mxu0 0
        %3117 = vmatprep.subr.bf16.mxu0 0
        %3118 = vmatpush1.bf16.msra.mxu0 0
        %3119 = vmatprep.subr.bf16.mxu0 0
        %3120 = vmatpush1.bf16.msra.mxu0 0
        %3121 = vmatprep.subr.bf16.mxu0 0
        %3122 = vmatpush1.bf16.msra.mxu0 %v3108
        %3123 = vmatprep.subr.bf16.mxu0 0
        %3124 = vmatpush1.bf16.msra.mxu0 %v3107
        %3125 = vmatprep.subr.bf16.mxu0 0
        %3126 = vmatpush1.bf16.msra.mxu0 %v3106
        %3127 = vmatprep.subr.bf16.mxu0 0
        %3128 = vmatpush1.bf16.msra.mxu0 %v3105
        %3129 = vmatprep.subr.bf16.mxu0 0
        %3130 = vmatpush2.bf16.msra.mxu0 0
        %3131 = vmatprep.subr.bf16.mxu0 0
        %3132 = vmatpush2.bf16.msra.mxu0 0
        %3133 = vmatprep.subr.bf16.mxu0 0
        %3134 = vmatpush2.bf16.msra.mxu0 0
        %3135 = vmatprep.subr.bf16.mxu0 0
        %3136 = vmatpush2.bf16.msra.mxu0 0
        %3137 = vmatprep.subr.bf16.mxu0 0
        %3138 = vmatpush2.bf16.msra.mxu0 0
        %3139 = vmatprep.subr.bf16.mxu0 0
        %3140 = vmatpush2.bf16.msra.mxu0 0
        %3141 = vmatprep.subr.bf16.mxu0 0
        %3142 = vmatpush2.bf16.msra.mxu0 0
        %3143 = vmatprep.subr.bf16.mxu0 0
        %3144 = vmatpush2.bf16.msra.mxu0 0
        %3145 = vmatprep.mubr.bf16.mxu0 0
        %3146 = vmatmul.mubr.bf16.gmra.mxu0 %v1041
        %v3147 = vpop.f32.mrf.mxu0
        %v3148 = vadd.f32 0.0, %v3147
        %v3149 = vpop.f32.mrf.mxu0
        %v3150 = vpop.f32.mrf.mxu0
        %v3151 = vadd.f32 0.0, %v3150
        %v3152 = vpop.f32.mrf.mxu0
        %3153 = vmatprep.mubr.bf16.mxu0 0
        %3154 = vmatmul.mubr.bf16.gmra.mxu0 %v1044
        %v3155 = vpop.f32.mrf.mxu0
        %v3156 = vadd.f32 0.0, %v3155
        %v3157 = vpop.f32.mrf.mxu0
        %v3158 = vpop.f32.mrf.mxu0
        %v3159 = vadd.f32 0.0, %v3158
        %v3160 = vpop.f32.mrf.mxu0
        %3161 = vmatprep.mubr.bf16.mxu0 0
        %3162 = vmatmul.mubr.bf16.gmra.mxu0 %v1047
        %v3163 = vpop.f32.mrf.mxu0
        %v3164 = vadd.f32 0.0, %v3163
        %v3165 = vpop.f32.mrf.mxu0
        %v3166 = vpop.f32.mrf.mxu0
        %v3167 = vadd.f32 0.0, %v3166
        %v3168 = vpop.f32.mrf.mxu0
        %3169 = vmatprep.mubr.bf16.mxu0 0
        %3170 = vmatmul.mubr.bf16.gmra.mxu0 %v1050
        %v3171 = vpop.f32.mrf.mxu0
        %v3172 = vadd.f32 0.0, %v3171
        %v3173 = vpop.f32.mrf.mxu0
        %v3174 = vpop.f32.mrf.mxu0
        %v3175 = vadd.f32 0.0, %v3174
        %v3176 = vpop.f32.mrf.mxu0
        %3177 = vmatprep.mubr.bf16.mxu0 0
        %3178 = vmatmul.mubr.bf16.gmra.mxu0 %v1053
        %v3179 = vpop.f32.mrf.mxu0
        %v3180 = vadd.f32 0.0, %v3179
        %v3181 = vpop.f32.mrf.mxu0
        %v3182 = vpop.f32.mrf.mxu0
        %v3183 = vadd.f32 0.0, %v3182
        %v3184 = vpop.f32.mrf.mxu0
        %3185 = vmatprep.mubr.bf16.mxu0 0
        %3186 = vmatmul.mubr.bf16.gmra.mxu0 %v1056
        %v3187 = vpop.f32.mrf.mxu0
        %v3188 = vadd.f32 0.0, %v3187
        %v3189 = vpop.f32.mrf.mxu0
        %v3190 = vpop.f32.mrf.mxu0
        %v3191 = vadd.f32 0.0, %v3190
        %v3192 = vpop.f32.mrf.mxu0
        %3193 = vmatprep.mubr.bf16.mxu0 0
        %3194 = vmatmul.mubr.bf16.gmra.mxu0 %v1059
        %v3195 = vpop.f32.mrf.mxu0
        %v3196 = vadd.f32 0.0, %v3195
        %v3197 = vpop.f32.mrf.mxu0
        %v3198 = vpop.f32.mrf.mxu0
        %v3199 = vadd.f32 0.0, %v3198
        %v3200 = vpop.f32.mrf.mxu0
        %3201 = vmatprep.mubr.bf16.mxu0 0
        %3202 = vmatmul.mubr.bf16.gmra.mxu0 %v1062
        %v3203 = vpop.f32.mrf.mxu0
        %v3204 = vadd.f32 0.0, %v3203
        %v3205 = vpop.f32.mrf.mxu0
        %v3206 = vpop.f32.mrf.mxu0
        %v3207 = vadd.f32 0.0, %v3206
        %v3208 = vpop.f32.mrf.mxu0
        %3209 = vmatprep.mubr.bf16.mxu0 0
        %3210 = vmatmul.mubr.bf16.gmra.mxu0 %v1065
        %v3211 = vpop.f32.mrf.mxu0
        %v3212 = vadd.f32 0.0, %v3211
        %v3213 = vpop.f32.mrf.mxu0
        %v3214 = vpop.f32.mrf.mxu0
        %v3215 = vadd.f32 0.0, %v3214
        %v3216 = vpop.f32.mrf.mxu0
        %3217 = vmatprep.mubr.bf16.mxu0 0
        %3218 = vmatmul.mubr.bf16.gmra.mxu0 %v1068
        %v3219 = vpop.f32.mrf.mxu0
        %v3220 = vadd.f32 0.0, %v3219
        %v3221 = vpop.f32.mrf.mxu0
        %v3222 = vpop.f32.mrf.mxu0
        %v3223 = vadd.f32 0.0, %v3222
        %v3224 = vpop.f32.mrf.mxu0
        %3225 = vmatprep.mubr.bf16.mxu0 0
        %3226 = vmatmul.mubr.bf16.gmra.mxu0 %v1071
        %v3227 = vpop.f32.mrf.mxu0
        %v3228 = vadd.f32 0.0, %v3227
        %v3229 = vpop.f32.mrf.mxu0
        %v3230 = vpop.f32.mrf.mxu0
        %v3231 = vadd.f32 0.0, %v3230
        %v3232 = vpop.f32.mrf.mxu0
        %3233 = vmatprep.mubr.bf16.mxu0 0
        %3234 = vmatmul.mubr.bf16.gmra.mxu0 %v1074
        %v3235 = vpop.f32.mrf.mxu0
        %v3236 = vadd.f32 0.0, %v3235
        %v3237 = vpop.f32.mrf.mxu0
        %v3238 = vpop.f32.mrf.mxu0
        %v3239 = vadd.f32 0.0, %v3238
        %v3240 = vpop.f32.mrf.mxu0
        %3241 = vmatprep.mubr.bf16.mxu0 0
        %3242 = vmatmul.mubr.bf16.gmra.mxu0 %v1077
        %v3243 = vpop.f32.mrf.mxu0
        %v3244 = vadd.f32 0.0, %v3243
        %v3245 = vpop.f32.mrf.mxu0
        %v3246 = vpop.f32.mrf.mxu0
        %v3247 = vadd.f32 0.0, %v3246
        %v3248 = vpop.f32.mrf.mxu0
        %3249 = vmatprep.mubr.bf16.mxu0 0
        %3250 = vmatmul.mubr.bf16.gmra.mxu0 %v1080
        %v3251 = vpop.f32.mrf.mxu0
        %v3252 = vadd.f32 0.0, %v3251
        %v3253 = vpop.f32.mrf.mxu0
        %v3254 = vpop.f32.mrf.mxu0
        %v3255 = vadd.f32 0.0, %v3254
        %v3256 = vpop.f32.mrf.mxu0
        %3257 = vmatprep.mubr.bf16.mxu0 0
        %3258 = vmatmul.mubr.bf16.gmra.mxu0 %v1083
        %v3259 = vpop.f32.mrf.mxu0
        %v3260 = vadd.f32 0.0, %v3259
        %v3261 = vpop.f32.mrf.mxu0
        %v3262 = vpop.f32.mrf.mxu0
        %v3263 = vadd.f32 0.0, %v3262
        %v3264 = vpop.f32.mrf.mxu0
        %3265 = vmatprep.mubr.bf16.mxu0 0
        %3266 = vmatmul.mubr.bf16.gmra.mxu0 %v1086
        %v3267 = vpop.f32.mrf.mxu0
        %v3268 = vadd.f32 0.0, %v3267
        %v3269 = vpop.f32.mrf.mxu0
        %v3270 = vpop.f32.mrf.mxu0
        %v3271 = vadd.f32 0.0, %v3270
        %v3272 = vpop.f32.mrf.mxu0
        %3273 = vmatprep.mubr.bf16.mxu0 0
        %3274 = vmatmul.mubr.bf16.gmra.mxu0 %v1089
        %v3275 = vpop.f32.mrf.mxu0
        %v3276 = vadd.f32 0.0, %v3275
        %v3277 = vpop.f32.mrf.mxu0
        %v3278 = vpop.f32.mrf.mxu0
        %v3279 = vadd.f32 0.0, %v3278
        %v3280 = vpop.f32.mrf.mxu0
        %3281 = vmatprep.mubr.bf16.mxu0 0
        %3282 = vmatmul.mubr.bf16.gmra.mxu0 %v1092
        %v3283 = vpop.f32.mrf.mxu0
        %v3284 = vadd.f32 0.0, %v3283
        %v3285 = vpop.f32.mrf.mxu0
        %v3286 = vpop.f32.mrf.mxu0
        %v3287 = vadd.f32 0.0, %v3286
        %v3288 = vpop.f32.mrf.mxu0
        %3289 = vmatprep.mubr.bf16.mxu0 0
        %3290 = vmatmul.mubr.bf16.gmra.mxu0 %v1095
        %v3291 = vpop.f32.mrf.mxu0
        %v3292 = vadd.f32 0.0, %v3291
        %v3293 = vpop.f32.mrf.mxu0
        %v3294 = vpop.f32.mrf.mxu0
        %v3295 = vadd.f32 0.0, %v3294
        %v3296 = vpop.f32.mrf.mxu0
        %3297 = vmatprep.mubr.bf16.mxu0 0
        %3298 = vmatmul.mubr.bf16.gmra.mxu0 %v1098
        %v3299 = vpop.f32.mrf.mxu0
        %v3300 = vadd.f32 0.0, %v3299
        %v3301 = vpop.f32.mrf.mxu0
        %v3302 = vpop.f32.mrf.mxu0
        %v3303 = vadd.f32 0.0, %v3302
        %v3304 = vpop.f32.mrf.mxu0
        %3305 = vmatprep.mubr.bf16.mxu0 0
        %3306 = vmatmul.mubr.bf16.gmra.mxu0 %v1101
        %v3307 = vpop.f32.mrf.mxu0
        %v3308 = vadd.f32 0.0, %v3307
        %v3309 = vpop.f32.mrf.mxu0
        %v3310 = vpop.f32.mrf.mxu0
        %v3311 = vadd.f32 0.0, %v3310
        %v3312 = vpop.f32.mrf.mxu0
        %3313 = vmatprep.mubr.bf16.mxu0 0
        %3314 = vmatmul.mubr.bf16.gmra.mxu0 %v1104
        %v3315 = vpop.f32.mrf.mxu0
        %v3316 = vadd.f32 0.0, %v3315
        %v3317 = vpop.f32.mrf.mxu0
        %v3318 = vpop.f32.mrf.mxu0
        %v3319 = vadd.f32 0.0, %v3318
        %v3320 = vpop.f32.mrf.mxu0
        %3321 = vmatprep.mubr.bf16.mxu0 0
        %3322 = vmatmul.mubr.bf16.gmra.mxu0 %v1107
        %v3323 = vpop.f32.mrf.mxu0
        %v3324 = vadd.f32 0.0, %v3323
        %v3325 = vpop.f32.mrf.mxu0
        %v3326 = vpop.f32.mrf.mxu0
        %v3327 = vadd.f32 0.0, %v3326
        %v3328 = vpop.f32.mrf.mxu0
        %3329 = vmatprep.mubr.bf16.mxu0 0
        %3330 = vmatmul.mubr.bf16.gmra.mxu0 %v1110
        %v3331 = vpop.f32.mrf.mxu0
        %v3332 = vadd.f32 0.0, %v3331
        %v3333 = vpop.f32.mrf.mxu0
        %v3334 = vpop.f32.mrf.mxu0
        %v3335 = vadd.f32 0.0, %v3334
        %v3336 = vpop.f32.mrf.mxu0
        %3337 = vmatprep.mubr.bf16.mxu0 0
        %3338 = vmatmul.mubr.bf16.gmra.mxu0 %v1113
        %v3339 = vpop.f32.mrf.mxu0
        %v3340 = vadd.f32 0.0, %v3339
        %v3341 = vpop.f32.mrf.mxu0
        %v3342 = vpop.f32.mrf.mxu0
        %v3343 = vadd.f32 0.0, %v3342
        %v3344 = vpop.f32.mrf.mxu0
        %3345 = vmatprep.mubr.bf16.mxu0 0
        %3346 = vmatmul.mubr.bf16.gmra.mxu0 %v1116
        %v3347 = vpop.f32.mrf.mxu0
        %v3348 = vadd.f32 0.0, %v3347
        %v3349 = vpop.f32.mrf.mxu0
        %v3350 = vpop.f32.mrf.mxu0
        %v3351 = vadd.f32 0.0, %v3350
        %v3352 = vpop.f32.mrf.mxu0
        %3353 = vmatprep.mubr.bf16.mxu0 0
        %3354 = vmatmul.mubr.bf16.gmra.mxu0 %v1119
        %v3355 = vpop.f32.mrf.mxu0
        %v3356 = vadd.f32 0.0, %v3355
        %v3357 = vpop.f32.mrf.mxu0
        %v3358 = vpop.f32.mrf.mxu0
        %v3359 = vadd.f32 0.0, %v3358
        %v3360 = vpop.f32.mrf.mxu0
        %3361 = vdwg.mxu0
        %v3362 = vld [vmem:[#allocation3] sm:$0xff]
        %v3363 = vld [vmem:[#allocation3 + $0x8] sm:$0xff]
        %v3364 = vld [vmem:[#allocation3 + $0x10] sm:$0xff]
        %v3365 = vld [vmem:[#allocation3 + $0x18] sm:$0xff]
        %v3366 = vld [vmem:[#allocation3 + $0x20] sm:$0xff]
        %v3367 = vld [vmem:[#allocation3 + $0x28] sm:$0xff]
        %v3368 = vld [vmem:[#allocation3 + $0x30] sm:$0xff]
        %v3369 = vld [vmem:[#allocation3 + $0x38] sm:$0xff]
        %v3370 = vld [vmem:[#allocation3 + $0x40] sm:$0xff]
        %v3371 = vld [vmem:[#allocation3 + $0x48] sm:$0xff]
        %v3372 = vld [vmem:[#allocation3 + $0x50] sm:$0xff]
        %v3373 = vld [vmem:[#allocation3 + $0x58] sm:$0xff]
        %v3374 = vld [vmem:[#allocation3 + $0x60] sm:$0xff]
        %v3375 = vld [vmem:[#allocation3 + $0x68] sm:$0xff]
        %v3376 = vld [vmem:[#allocation3 + $0x70] sm:$0xff]
        %v3377 = vld [vmem:[#allocation3 + $0x78] sm:$0xff]
        %v3378 = vld [vmem:[#allocation3 + $0x80] sm:$0xff]
        %v3379 = vld [vmem:[#allocation3 + $0x88] sm:$0xff]
        %v3380 = vld [vmem:[#allocation3 + $0x90] sm:$0xff]
        %v3381 = vld [vmem:[#allocation3 + $0x98] sm:$0xff]
        %v3382 = vld [vmem:[#allocation3 + $0xa0] sm:$0xff]
        %v3383 = vld [vmem:[#allocation3 + $0xa8] sm:$0xff]
        %v3384 = vld [vmem:[#allocation3 + $0xb0] sm:$0xff]
        %v3385 = vld [vmem:[#allocation3 + $0xb8] sm:$0xff]
        %v3386 = vld [vmem:[#allocation3 + $0xc0] sm:$0xff]
        %v3387 = vld [vmem:[#allocation3 + $0xc8] sm:$0xff]
        %v3388 = vld [vmem:[#allocation3 + $0xd0] sm:$0xff]
        %v3389 = vld [vmem:[#allocation3 + $0xd8] sm:$0xff]
        %v3390 = vld [vmem:[#allocation3 + $0xe0] sm:$0xff]
        %v3391 = vld [vmem:[#allocation3 + $0xe8] sm:$0xff]
        %v3392 = vld [vmem:[#allocation3 + $0xf0] sm:$0xff]
        %v3393 = vld [vmem:[#allocation3 + $0xf8] sm:$0xff]
        %v3394 = vld [vmem:[#allocation3 + $0x100] sm:$0xff]
        %v3395 = vld [vmem:[#allocation3 + $0x108] sm:$0xff]
        %v3396 = vld [vmem:[#allocation3 + $0x110] sm:$0xff]
        %v3397 = vld [vmem:[#allocation3 + $0x118] sm:$0xff]
        %v3398 = vld [vmem:[#allocation3 + $0x120] sm:$0xff]
        %v3399 = vld [vmem:[#allocation3 + $0x128] sm:$0xff]
        %v3400 = vld [vmem:[#allocation3 + $0x130] sm:$0xff]
        %v3401 = vld [vmem:[#allocation3 + $0x138] sm:$0xff]
        %v3402 = vld [vmem:[#allocation3 + $0x140] sm:$0xff]
        %v3403 = vld [vmem:[#allocation3 + $0x148] sm:$0xff]
        %v3404 = vld [vmem:[#allocation3 + $0x150] sm:$0xff]
        %v3405 = vld [vmem:[#allocation3 + $0x158] sm:$0xff]
        %v3406 = vld [vmem:[#allocation3 + $0x160] sm:$0xff]
        %v3407 = vld [vmem:[#allocation3 + $0x168] sm:$0xff]
        %v3408 = vld [vmem:[#allocation3 + $0x170] sm:$0xff]
        %v3409 = vld [vmem:[#allocation3 + $0x178] sm:$0xff]
        %v3410 = vld [vmem:[#allocation3 + $0x180] sm:$0xff]
        %v3411 = vld [vmem:[#allocation3 + $0x188] sm:$0xff]
        %v3412 = vld [vmem:[#allocation3 + $0x190] sm:$0xff]
        %v3413 = vld [vmem:[#allocation3 + $0x198] sm:$0xff]
        %v3414 = vld [vmem:[#allocation3 + $0x1a0] sm:$0xff]
        %v3415 = vld [vmem:[#allocation3 + $0x1a8] sm:$0xff]
        %v3416 = vadd.f32 %v3362, %v3159
        %v3417 = vadd.f32 %v3363, %v3164
        %v3418 = vadd.f32 %v3364, %v3167
        %v3419 = vadd.f32 %v3365, %v3172
        %v3420 = vadd.f32 %v3366, %v3175
        %v3421 = vadd.f32 %v3367, %v3180
        %v3422 = vadd.f32 %v3368, %v3183
        %v3423 = vadd.f32 %v3369, %v3188
        %v3424 = vadd.f32 %v3370, %v3191
        %v3425 = vadd.f32 %v3371, %v3196
        %v3426 = vadd.f32 %v3372, %v3199
        %v3427 = vadd.f32 %v3373, %v3204
        %v3428 = vadd.f32 %v3374, %v3207
        %v3429 = vadd.f32 %v3375, %v3212
        %v3430 = vadd.f32 %v3376, %v3215
        %v3431 = vadd.f32 %v3377, %v3220
        %v3432 = vadd.f32 %v3378, %v3223
        %v3433 = vadd.f32 %v3379, %v3228
        %v3434 = vadd.f32 %v3380, %v3231
        %v3435 = vadd.f32 %v3381, %v3236
        %v3436 = vadd.f32 %v3382, %v3239
        %v3437 = vadd.f32 %v3383, %v3244
        %v3438 = vadd.f32 %v3384, %v3247
        %v3439 = vadd.f32 %v3385, %v3252
        %v3440 = vadd.f32 %v3386, %v3255
        %v3441 = vadd.f32 %v3387, %v3260
        %v3442 = vadd.f32 %v3388, %v3263
        %v3443 = vadd.f32 %v3389, %v3268
        %v3444 = vadd.f32 %v3390, %v3271
        %v3445 = vadd.f32 %v3391, %v3276
        %v3446 = vadd.f32 %v3392, %v3279
        %v3447 = vadd.f32 %v3393, %v3284
        %v3448 = vadd.f32 %v3394, %v3287
        %v3449 = vadd.f32 %v3395, %v3292
        %v3450 = vadd.f32 %v3396, %v3295
        %v3451 = vadd.f32 %v3397, %v3300
        %v3452 = vadd.f32 %v3398, %v3303
        %v3453 = vadd.f32 %v3399, %v3308
        %v3454 = vadd.f32 %v3400, %v3311
        %v3455 = vadd.f32 %v3401, %v3316
        %v3456 = vadd.f32 %v3402, %v3319
        %v3457 = vadd.f32 %v3403, %v3324
        %v3458 = vadd.f32 %v3404, %v3327
        %v3459 = vadd.f32 %v3405, %v3332
        %v3460 = vadd.f32 %v3406, %v3335
        %v3461 = vadd.f32 %v3407, %v3340
        %v3462 = vadd.f32 %v3408, %v3343
        %v3463 = vadd.f32 %v3409, %v3348
        %v3464 = vadd.f32 %v3410, %v3351
        %v3465 = vadd.f32 %v3411, %v3356
        %v3466 = vadd.f32 %v3412, %v3359
        %v3467 = vadd.f32 %v3413, %v3148
        %v3468 = vadd.f32 %v3414, %v3151
        %v3469 = vadd.f32 %v3415, %v3156
        %3470 = vst.msk [vmem:[#allocation3] sm:$0xff] %vm520, %v3416
        %3471 = vst.msk [vmem:[#allocation3 + $0x8] sm:$0xff] %vm520, %v3417
        %3472 = vst.msk [vmem:[#allocation3 + $0x10] sm:$0xff] %vm520, %v3418
        %3473 = vst.msk [vmem:[#allocation3 + $0x18] sm:$0xff] %vm520, %v3419
        %3474 = vst.msk [vmem:[#allocation3 + $0x20] sm:$0xff] %vm520, %v3420
        %3475 = vst.msk [vmem:[#allocation3 + $0x28] sm:$0xff] %vm520, %v3421
        %3476 = vst.msk [vmem:[#allocation3 + $0x30] sm:$0xff] %vm520, %v3422
        %3477 = vst.msk [vmem:[#allocation3 + $0x38] sm:$0xff] %vm520, %v3423
        %3478 = vst.msk [vmem:[#allocation3 + $0x40] sm:$0xff] %vm520, %v3424
        %3479 = vst.msk [vmem:[#allocation3 + $0x48] sm:$0xff] %vm520, %v3425
        %3480 = vst.msk [vmem:[#allocation3 + $0x50] sm:$0xff] %vm520, %v3426
        %3481 = vst.msk [vmem:[#allocation3 + $0x58] sm:$0xff] %vm520, %v3427
        %3482 = vst.msk [vmem:[#allocation3 + $0x60] sm:$0xff] %vm520, %v3428
        %3483 = vst.msk [vmem:[#allocation3 + $0x68] sm:$0xff] %vm520, %v3429
        %3484 = vst.msk [vmem:[#allocation3 + $0x70] sm:$0xff] %vm520, %v3430
        %3485 = vst.msk [vmem:[#allocation3 + $0x78] sm:$0xff] %vm520, %v3431
        %3486 = vst.msk [vmem:[#allocation3 + $0x80] sm:$0xff] %vm520, %v3432
        %3487 = vst.msk [vmem:[#allocation3 + $0x88] sm:$0xff] %vm520, %v3433
        %3488 = vst.msk [vmem:[#allocation3 + $0x90] sm:$0xff] %vm520, %v3434
        %3489 = vst.msk [vmem:[#allocation3 + $0x98] sm:$0xff] %vm520, %v3435
        %3490 = vst.msk [vmem:[#allocation3 + $0xa0] sm:$0xff] %vm520, %v3436
        %3491 = vst.msk [vmem:[#allocation3 + $0xa8] sm:$0xff] %vm520, %v3437
        %3492 = vst.msk [vmem:[#allocation3 + $0xb0] sm:$0xff] %vm520, %v3438
        %3493 = vst.msk [vmem:[#allocation3 + $0xb8] sm:$0xff] %vm520, %v3439
        %3494 = vst.msk [vmem:[#allocation3 + $0xc0] sm:$0xff] %vm520, %v3440
        %3495 = vst.msk [vmem:[#allocation3 + $0xc8] sm:$0xff] %vm520, %v3441
        %3496 = vst.msk [vmem:[#allocation3 + $0xd0] sm:$0xff] %vm520, %v3442
        %3497 = vst.msk [vmem:[#allocation3 + $0xd8] sm:$0xff] %vm520, %v3443
        %3498 = vst.msk [vmem:[#allocation3 + $0xe0] sm:$0xff] %vm520, %v3444
        %3499 = vst.msk [vmem:[#allocation3 + $0xe8] sm:$0xff] %vm520, %v3445
        %3500 = vst.msk [vmem:[#allocation3 + $0xf0] sm:$0xff] %vm520, %v3446
        %3501 = vst.msk [vmem:[#allocation3 + $0xf8] sm:$0xff] %vm520, %v3447
        %3502 = vst.msk [vmem:[#allocation3 + $0x100] sm:$0xff] %vm520, %v3448
        %3503 = vst.msk [vmem:[#allocation3 + $0x108] sm:$0xff] %vm520, %v3449
        %3504 = vst.msk [vmem:[#allocation3 + $0x110] sm:$0xff] %vm520, %v3450
        %3505 = vst.msk [vmem:[#allocation3 + $0x118] sm:$0xff] %vm520, %v3451
        %3506 = vst.msk [vmem:[#allocation3 + $0x120] sm:$0xff] %vm520, %v3452
        %3507 = vst.msk [vmem:[#allocation3 + $0x128] sm:$0xff] %vm520, %v3453
        %3508 = vst.msk [vmem:[#allocation3 + $0x130] sm:$0xff] %vm520, %v3454
        %3509 = vst.msk [vmem:[#allocation3 + $0x138] sm:$0xff] %vm520, %v3455
        %3510 = vst.msk [vmem:[#allocation3 + $0x140] sm:$0xff] %vm520, %v3456
        %3511 = vst.msk [vmem:[#allocation3 + $0x148] sm:$0xff] %vm520, %v3457
        %3512 = vst.msk [vmem:[#allocation3 + $0x150] sm:$0xff] %vm520, %v3458
        %3513 = vst.msk [vmem:[#allocation3 + $0x158] sm:$0xff] %vm520, %v3459
        %3514 = vst.msk [vmem:[#allocation3 + $0x160] sm:$0xff] %vm520, %v3460
        %3515 = vst.msk [vmem:[#allocation3 + $0x168] sm:$0xff] %vm520, %v3461
        %3516 = vst.msk [vmem:[#allocation3 + $0x170] sm:$0xff] %vm520, %v3462
        %3517 = vst.msk [vmem:[#allocation3 + $0x178] sm:$0xff] %vm520, %v3463
        %3518 = vst.msk [vmem:[#allocation3 + $0x180] sm:$0xff] %vm520, %v3464
        %3519 = vst.msk [vmem:[#allocation3 + $0x188] sm:$0xff] %vm520, %v3465
        %3520 = vst.msk [vmem:[#allocation3 + $0x190] sm:$0xff] %vm520, %v3466
        %3521 = vst.msk [vmem:[#allocation3 + $0x198] sm:$0xff] %vm520, %v3467
        %3522 = vst.msk [vmem:[#allocation3 + $0x1a0] sm:$0xff] %vm520, %v3468
        %3523 = vst.msk [vmem:[#allocation3 + $0x1a8] sm:$0xff] %vm520, %v3469
        %v3524 = vld [vmem:[%s2 + $0xa0] sm:$0xf]
        %v3525 = vld [vmem:[%s2 + $0xa4] sm:$0xf]
        %v3526 = vld [vmem:[%s2 + $0xa8] sm:$0xf]
        %v3527 = vld [vmem:[%s2 + $0xac] sm:$0xf]
        %v3528 = vld [vmem:[%s2 + $0xb0] sm:$0xf]
        %v3529 = vld [vmem:[%s2 + $0xb4] sm:$0xf]
        %v3530 = vld [vmem:[%s2 + $0xb8] sm:$0xf]
        %v3531 = vld [vmem:[%s2 + $0xbc] sm:$0xf]
        %v3540 = vunpack.c.l.b16 %v3524
        %v3541 = vunpack.c.l.b16 %v3525
        %v3542 = vunpack.c.l.b16 %v3526
        %v3543 = vunpack.c.l.b16 %v3527
        %v3544 = vunpack.c.l.b16 %v3528
        %v3545 = vunpack.c.l.b16 %v3529
        %v3546 = vunpack.c.l.b16 %v3530
        %v3547 = vunpack.c.l.b16 %v3531
        %v3548 = vpack.c.b16 %v3541, %v3540
        %v3549 = vpack.c.b16 %v3543, %v3542
        %v3550 = vpack.c.b16 %v3545, %v3544
        %v3551 = vpack.c.b16 %v3547, %v3546
        %3556 = vmatprep.subr.bf16.mxu0 0
        %3557 = vmatpush1.bf16.msra.mxu0 0
        %3558 = vmatprep.subr.bf16.mxu0 0
        %3559 = vmatpush1.bf16.msra.mxu0 0
        %3560 = vmatprep.subr.bf16.mxu0 0
        %3561 = vmatpush1.bf16.msra.mxu0 0
        %3562 = vmatprep.subr.bf16.mxu0 0
        %3563 = vmatpush1.bf16.msra.mxu0 0
        %3564 = vmatprep.subr.bf16.mxu0 0
        %3565 = vmatpush1.bf16.msra.mxu0 %v3551
        %3566 = vmatprep.subr.bf16.mxu0 0
        %3567 = vmatpush1.bf16.msra.mxu0 %v3550
        %3568 = vmatprep.subr.bf16.mxu0 0
        %3569 = vmatpush1.bf16.msra.mxu0 %v3549
        %3570 = vmatprep.subr.bf16.mxu0 0
        %3571 = vmatpush1.bf16.msra.mxu0 %v3548
        %3572 = vmatprep.subr.bf16.mxu0 0
        %3573 = vmatpush2.bf16.msra.mxu0 0
        %3574 = vmatprep.subr.bf16.mxu0 0
        %3575 = vmatpush2.bf16.msra.mxu0 0
        %3576 = vmatprep.subr.bf16.mxu0 0
        %3577 = vmatpush2.bf16.msra.mxu0 0
        %3578 = vmatprep.subr.bf16.mxu0 0
        %3579 = vmatpush2.bf16.msra.mxu0 0
        %3580 = vmatprep.subr.bf16.mxu0 0
        %3581 = vmatpush2.bf16.msra.mxu0 0
        %3582 = vmatprep.subr.bf16.mxu0 0
        %3583 = vmatpush2.bf16.msra.mxu0 0
        %3584 = vmatprep.subr.bf16.mxu0 0
        %3585 = vmatpush2.bf16.msra.mxu0 0
        %3586 = vmatprep.subr.bf16.mxu0 0
        %3587 = vmatpush2.bf16.msra.mxu0 0
        %3588 = vmatprep.mubr.bf16.mxu0 0
        %3589 = vmatmul.mubr.bf16.gmra.mxu0 %v1041
        %v3590 = vpop.f32.mrf.mxu0
        %v3591 = vadd.f32 0.0, %v3590
        %v3592 = vpop.f32.mrf.mxu0
        %v3593 = vpop.f32.mrf.mxu0
        %v3594 = vadd.f32 0.0, %v3593
        %v3595 = vpop.f32.mrf.mxu0
        %3596 = vmatprep.mubr.bf16.mxu0 0
        %3597 = vmatmul.mubr.bf16.gmra.mxu0 %v1044
        %v3598 = vpop.f32.mrf.mxu0
        %v3599 = vadd.f32 0.0, %v3598
        %v3600 = vpop.f32.mrf.mxu0
        %v3601 = vpop.f32.mrf.mxu0
        %v3602 = vadd.f32 0.0, %v3601
        %v3603 = vpop.f32.mrf.mxu0
        %3604 = vmatprep.mubr.bf16.mxu0 0
        %3605 = vmatmul.mubr.bf16.gmra.mxu0 %v1047
        %v3606 = vpop.f32.mrf.mxu0
        %v3607 = vadd.f32 0.0, %v3606
        %v3608 = vpop.f32.mrf.mxu0
        %v3609 = vpop.f32.mrf.mxu0
        %v3610 = vadd.f32 0.0, %v3609
        %v3611 = vpop.f32.mrf.mxu0
        %3612 = vmatprep.mubr.bf16.mxu0 0
        %3613 = vmatmul.mubr.bf16.gmra.mxu0 %v1050
        %v3614 = vpop.f32.mrf.mxu0
        %v3615 = vadd.f32 0.0, %v3614
        %v3616 = vpop.f32.mrf.mxu0
        %v3617 = vpop.f32.mrf.mxu0
        %v3618 = vadd.f32 0.0, %v3617
        %v3619 = vpop.f32.mrf.mxu0
        %3620 = vmatprep.mubr.bf16.mxu0 0
        %3621 = vmatmul.mubr.bf16.gmra.mxu0 %v1053
        %v3622 = vpop.f32.mrf.mxu0
        %v3623 = vadd.f32 0.0, %v3622
        %v3624 = vpop.f32.mrf.mxu0
        %v3625 = vpop.f32.mrf.mxu0
        %v3626 = vadd.f32 0.0, %v3625
        %v3627 = vpop.f32.mrf.mxu0
        %3628 = vmatprep.mubr.bf16.mxu0 0
        %3629 = vmatmul.mubr.bf16.gmra.mxu0 %v1056
        %v3630 = vpop.f32.mrf.mxu0
        %v3631 = vadd.f32 0.0, %v3630
        %v3632 = vpop.f32.mrf.mxu0
        %v3633 = vpop.f32.mrf.mxu0
        %v3634 = vadd.f32 0.0, %v3633
        %v3635 = vpop.f32.mrf.mxu0
        %3636 = vmatprep.mubr.bf16.mxu0 0
        %3637 = vmatmul.mubr.bf16.gmra.mxu0 %v1059
        %v3638 = vpop.f32.mrf.mxu0
        %v3639 = vadd.f32 0.0, %v3638
        %v3640 = vpop.f32.mrf.mxu0
        %v3641 = vpop.f32.mrf.mxu0
        %v3642 = vadd.f32 0.0, %v3641
        %v3643 = vpop.f32.mrf.mxu0
        %3644 = vmatprep.mubr.bf16.mxu0 0
        %3645 = vmatmul.mubr.bf16.gmra.mxu0 %v1062
        %v3646 = vpop.f32.mrf.mxu0
        %v3647 = vadd.f32 0.0, %v3646
        %v3648 = vpop.f32.mrf.mxu0
        %v3649 = vpop.f32.mrf.mxu0
        %v3650 = vadd.f32 0.0, %v3649
        %v3651 = vpop.f32.mrf.mxu0
        %3652 = vmatprep.mubr.bf16.mxu0 0
        %3653 = vmatmul.mubr.bf16.gmra.mxu0 %v1065
        %v3654 = vpop.f32.mrf.mxu0
        %v3655 = vadd.f32 0.0, %v3654
        %v3656 = vpop.f32.mrf.mxu0
        %v3657 = vpop.f32.mrf.mxu0
        %v3658 = vadd.f32 0.0, %v3657
        %v3659 = vpop.f32.mrf.mxu0
        %3660 = vmatprep.mubr.bf16.mxu0 0
        %3661 = vmatmul.mubr.bf16.gmra.mxu0 %v1068
        %v3662 = vpop.f32.mrf.mxu0
        %v3663 = vadd.f32 0.0, %v3662
        %v3664 = vpop.f32.mrf.mxu0
        %v3665 = vpop.f32.mrf.mxu0
        %v3666 = vadd.f32 0.0, %v3665
        %v3667 = vpop.f32.mrf.mxu0
        %3668 = vmatprep.mubr.bf16.mxu0 0
        %3669 = vmatmul.mubr.bf16.gmra.mxu0 %v1071
        %v3670 = vpop.f32.mrf.mxu0
        %v3671 = vadd.f32 0.0, %v3670
        %v3672 = vpop.f32.mrf.mxu0
        %v3673 = vpop.f32.mrf.mxu0
        %v3674 = vadd.f32 0.0, %v3673
        %v3675 = vpop.f32.mrf.mxu0
        %3676 = vmatprep.mubr.bf16.mxu0 0
        %3677 = vmatmul.mubr.bf16.gmra.mxu0 %v1074
        %v3678 = vpop.f32.mrf.mxu0
        %v3679 = vadd.f32 0.0, %v3678
        %v3680 = vpop.f32.mrf.mxu0
        %v3681 = vpop.f32.mrf.mxu0
        %v3682 = vadd.f32 0.0, %v3681
        %v3683 = vpop.f32.mrf.mxu0
        %3684 = vmatprep.mubr.bf16.mxu0 0
        %3685 = vmatmul.mubr.bf16.gmra.mxu0 %v1077
        %v3686 = vpop.f32.mrf.mxu0
        %v3687 = vadd.f32 0.0, %v3686
        %v3688 = vpop.f32.mrf.mxu0
        %v3689 = vpop.f32.mrf.mxu0
        %v3690 = vadd.f32 0.0, %v3689
        %v3691 = vpop.f32.mrf.mxu0
        %3692 = vmatprep.mubr.bf16.mxu0 0
        %3693 = vmatmul.mubr.bf16.gmra.mxu0 %v1080
        %v3694 = vpop.f32.mrf.mxu0
        %v3695 = vadd.f32 0.0, %v3694
        %v3696 = vpop.f32.mrf.mxu0
        %v3697 = vpop.f32.mrf.mxu0
        %v3698 = vadd.f32 0.0, %v3697
        %v3699 = vpop.f32.mrf.mxu0
        %3700 = vmatprep.mubr.bf16.mxu0 0
        %3701 = vmatmul.mubr.bf16.gmra.mxu0 %v1083
        %v3702 = vpop.f32.mrf.mxu0
        %v3703 = vadd.f32 0.0, %v3702
        %v3704 = vpop.f32.mrf.mxu0
        %v3705 = vpop.f32.mrf.mxu0
        %v3706 = vadd.f32 0.0, %v3705
        %v3707 = vpop.f32.mrf.mxu0
        %3708 = vmatprep.mubr.bf16.mxu0 0
        %3709 = vmatmul.mubr.bf16.gmra.mxu0 %v1086
        %v3710 = vpop.f32.mrf.mxu0
        %v3711 = vadd.f32 0.0, %v3710
        %v3712 = vpop.f32.mrf.mxu0
        %v3713 = vpop.f32.mrf.mxu0
        %v3714 = vadd.f32 0.0, %v3713
        %v3715 = vpop.f32.mrf.mxu0
        %3716 = vmatprep.mubr.bf16.mxu0 0
        %3717 = vmatmul.mubr.bf16.gmra.mxu0 %v1089
        %v3718 = vpop.f32.mrf.mxu0
        %v3719 = vadd.f32 0.0, %v3718
        %v3720 = vpop.f32.mrf.mxu0
        %v3721 = vpop.f32.mrf.mxu0
        %v3722 = vadd.f32 0.0, %v3721
        %v3723 = vpop.f32.mrf.mxu0
        %3724 = vmatprep.mubr.bf16.mxu0 0
        %3725 = vmatmul.mubr.bf16.gmra.mxu0 %v1092
        %v3726 = vpop.f32.mrf.mxu0
        %v3727 = vadd.f32 0.0, %v3726
        %v3728 = vpop.f32.mrf.mxu0
        %v3729 = vpop.f32.mrf.mxu0
        %v3730 = vadd.f32 0.0, %v3729
        %v3731 = vpop.f32.mrf.mxu0
        %3732 = vmatprep.mubr.bf16.mxu0 0
        %3733 = vmatmul.mubr.bf16.gmra.mxu0 %v1095
        %v3734 = vpop.f32.mrf.mxu0
        %v3735 = vadd.f32 0.0, %v3734
        %v3736 = vpop.f32.mrf.mxu0
        %v3737 = vpop.f32.mrf.mxu0
        %v3738 = vadd.f32 0.0, %v3737
        %v3739 = vpop.f32.mrf.mxu0
        %3740 = vmatprep.mubr.bf16.mxu0 0
        %3741 = vmatmul.mubr.bf16.gmra.mxu0 %v1098
        %v3742 = vpop.f32.mrf.mxu0
        %v3743 = vadd.f32 0.0, %v3742
        %v3744 = vpop.f32.mrf.mxu0
        %v3745 = vpop.f32.mrf.mxu0
        %v3746 = vadd.f32 0.0, %v3745
        %v3747 = vpop.f32.mrf.mxu0
        %3748 = vmatprep.mubr.bf16.mxu0 0
        %3749 = vmatmul.mubr.bf16.gmra.mxu0 %v1101
        %v3750 = vpop.f32.mrf.mxu0
        %v3751 = vadd.f32 0.0, %v3750
        %v3752 = vpop.f32.mrf.mxu0
        %v3753 = vpop.f32.mrf.mxu0
        %v3754 = vadd.f32 0.0, %v3753
        %v3755 = vpop.f32.mrf.mxu0
        %3756 = vmatprep.mubr.bf16.mxu0 0
        %3757 = vmatmul.mubr.bf16.gmra.mxu0 %v1104
        %v3758 = vpop.f32.mrf.mxu0
        %v3759 = vadd.f32 0.0, %v3758
        %v3760 = vpop.f32.mrf.mxu0
        %v3761 = vpop.f32.mrf.mxu0
        %v3762 = vadd.f32 0.0, %v3761
        %v3763 = vpop.f32.mrf.mxu0
        %3764 = vmatprep.mubr.bf16.mxu0 0
        %3765 = vmatmul.mubr.bf16.gmra.mxu0 %v1107
        %v3766 = vpop.f32.mrf.mxu0
        %v3767 = vadd.f32 0.0, %v3766
        %v3768 = vpop.f32.mrf.mxu0
        %v3769 = vpop.f32.mrf.mxu0
        %v3770 = vadd.f32 0.0, %v3769
        %v3771 = vpop.f32.mrf.mxu0
        %3772 = vmatprep.mubr.bf16.mxu0 0
        %3773 = vmatmul.mubr.bf16.gmra.mxu0 %v1110
        %v3774 = vpop.f32.mrf.mxu0
        %v3775 = vadd.f32 0.0, %v3774
        %v3776 = vpop.f32.mrf.mxu0
        %v3777 = vpop.f32.mrf.mxu0
        %v3778 = vadd.f32 0.0, %v3777
        %v3779 = vpop.f32.mrf.mxu0
        %3780 = vmatprep.mubr.bf16.mxu0 0
        %3781 = vmatmul.mubr.bf16.gmra.mxu0 %v1113
        %v3782 = vpop.f32.mrf.mxu0
        %v3783 = vadd.f32 0.0, %v3782
        %v3784 = vpop.f32.mrf.mxu0
        %v3785 = vpop.f32.mrf.mxu0
        %v3786 = vadd.f32 0.0, %v3785
        %v3787 = vpop.f32.mrf.mxu0
        %3788 = vmatprep.mubr.bf16.mxu0 0
        %3789 = vmatmul.mubr.bf16.gmra.mxu0 %v1116
        %v3790 = vpop.f32.mrf.mxu0
        %v3791 = vadd.f32 0.0, %v3790
        %v3792 = vpop.f32.mrf.mxu0
        %v3793 = vpop.f32.mrf.mxu0
        %v3794 = vadd.f32 0.0, %v3793
        %v3795 = vpop.f32.mrf.mxu0
        %3796 = vmatprep.mubr.bf16.mxu0 0
        %3797 = vmatmul.mubr.bf16.gmra.mxu0 %v1119
        %v3798 = vpop.f32.mrf.mxu0
        %v3799 = vadd.f32 0.0, %v3798
        %v3800 = vpop.f32.mrf.mxu0
        %v3801 = vpop.f32.mrf.mxu0
        %v3802 = vadd.f32 0.0, %v3801
        %v3803 = vpop.f32.mrf.mxu0
        %3804 = vdwg.mxu0
        %v3805 = vrot.slane %v3591, 1
        %v3806 = vrot.slane %v3594, 1
        %v3807 = vrot.slane %v3599, 1
        %v3808 = vrot.slane %v3602, 1
        %v3809 = vrot.slane %v3607, 1
        %v3810 = vrot.slane %v3610, 1
        %v3811 = vrot.slane %v3615, 1
        %v3812 = vrot.slane %v3618, 1
        %v3813 = vrot.slane %v3623, 1
        %v3814 = vrot.slane %v3626, 1
        %v3815 = vrot.slane %v3631, 1
        %v3816 = vrot.slane %v3634, 1
        %v3817 = vrot.slane %v3639, 1
        %v3818 = vrot.slane %v3642, 1
        %v3819 = vrot.slane %v3647, 1
        %v3820 = vrot.slane %v3650, 1
        %v3821 = vrot.slane %v3655, 1
        %v3822 = vrot.slane %v3658, 1
        %v3823 = vrot.slane %v3663, 1
        %v3824 = vrot.slane %v3666, 1
        %v3825 = vrot.slane %v3671, 1
        %v3826 = vrot.slane %v3674, 1
        %v3827 = vrot.slane %v3679, 1
        %v3828 = vrot.slane %v3682, 1
        %v3829 = vrot.slane %v3687, 1
        %v3830 = vrot.slane %v3690, 1
        %v3831 = vrot.slane %v3695, 1
        %v3832 = vrot.slane %v3698, 1
        %v3833 = vrot.slane %v3703, 1
        %v3834 = vrot.slane %v3706, 1
        %v3835 = vrot.slane %v3711, 1
        %v3836 = vrot.slane %v3714, 1
        %v3837 = vrot.slane %v3719, 1
        %v3838 = vrot.slane %v3722, 1
        %v3839 = vrot.slane %v3727, 1
        %v3840 = vrot.slane %v3730, 1
        %v3841 = vrot.slane %v3735, 1
        %v3842 = vrot.slane %v3738, 1
        %v3843 = vrot.slane %v3743, 1
        %v3844 = vrot.slane %v3746, 1
        %v3845 = vrot.slane %v3751, 1
        %v3846 = vrot.slane %v3754, 1
        %v3847 = vrot.slane %v3759, 1
        %v3848 = vrot.slane %v3762, 1
        %v3849 = vrot.slane %v3767, 1
        %v3850 = vrot.slane %v3770, 1
        %v3851 = vrot.slane %v3775, 1
        %v3852 = vrot.slane %v3778, 1
        %v3853 = vrot.slane %v3783, 1
        %v3854 = vrot.slane %v3786, 1
        %v3855 = vrot.slane %v3791, 1
        %v3856 = vrot.slane %v3794, 1
        %v3857 = vrot.slane %v3799, 1
        %v3858 = vrot.slane %v3802, 1
        %v3859 = vsel %vm2313, %v3857, %v3858
        %v3860 = vsel %vm2313, %v3856, %v3857
        %v3861 = vsel %vm2313, %v3855, %v3856
        %v3862 = vsel %vm2313, %v3854, %v3855
        %v3863 = vsel %vm2313, %v3853, %v3854
        %v3864 = vsel %vm2313, %v3852, %v3853
        %v3865 = vsel %vm2313, %v3851, %v3852
        %v3866 = vsel %vm2313, %v3850, %v3851
        %v3867 = vsel %vm2313, %v3849, %v3850
        %v3868 = vsel %vm2313, %v3848, %v3849
        %v3869 = vsel %vm2313, %v3847, %v3848
        %v3870 = vsel %vm2313, %v3846, %v3847
        %v3871 = vsel %vm2313, %v3845, %v3846
        %v3872 = vsel %vm2313, %v3844, %v3845
        %v3873 = vsel %vm2313, %v3843, %v3844
        %v3874 = vsel %vm2313, %v3842, %v3843
        %v3875 = vsel %vm2313, %v3841, %v3842
        %v3876 = vsel %vm2313, %v3840, %v3841
        %v3877 = vsel %vm2313, %v3839, %v3840
        %v3878 = vsel %vm2313, %v3838, %v3839
        %v3879 = vsel %vm2313, %v3837, %v3838
        %v3880 = vsel %vm2313, %v3836, %v3837
        %v3881 = vsel %vm2313, %v3835, %v3836
        %v3882 = vsel %vm2313, %v3834, %v3835
        %v3883 = vsel %vm2313, %v3833, %v3834
        %v3884 = vsel %vm2313, %v3832, %v3833
        %v3885 = vsel %vm2313, %v3831, %v3832
        %v3886 = vsel %vm2313, %v3830, %v3831
        %v3887 = vsel %vm2313, %v3829, %v3830
        %v3888 = vsel %vm2313, %v3828, %v3829
        %v3889 = vsel %vm2313, %v3827, %v3828
        %v3890 = vsel %vm2313, %v3826, %v3827
        %v3891 = vsel %vm2313, %v3825, %v3826
        %v3892 = vsel %vm2313, %v3824, %v3825
        %v3893 = vsel %vm2313, %v3823, %v3824
        %v3894 = vsel %vm2313, %v3822, %v3823
        %v3895 = vsel %vm2313, %v3821, %v3822
        %v3896 = vsel %vm2313, %v3820, %v3821
        %v3897 = vsel %vm2313, %v3819, %v3820
        %v3898 = vsel %vm2313, %v3818, %v3819
        %v3899 = vsel %vm2313, %v3817, %v3818
        %v3900 = vsel %vm2313, %v3816, %v3817
        %v3901 = vsel %vm2313, %v3815, %v3816
        %v3902 = vsel %vm2313, %v3814, %v3815
        %v3903 = vsel %vm2313, %v3813, %v3814
        %v3904 = vsel %vm2313, %v3812, %v3813
        %v3905 = vsel %vm2313, %v3811, %v3812
        %v3906 = vsel %vm2313, %v3810, %v3811
        %v3907 = vsel %vm2313, %v3809, %v3810
        %v3908 = vsel %vm2313, %v3808, %v3809
        %v3909 = vsel %vm2313, %v3807, %v3808
        %v3910 = vsel %vm2313, %v3806, %v3807
        %v3911 = vsel %vm2313, %v3805, %v3806
        %v3912 = vsel %vm2313, %v3858, %v3805
        %v3913 = vld [vmem:[#allocation3] sm:$0xff]
        %v3914 = vld [vmem:[#allocation3 + $0x8] sm:$0xff]
        %v3915 = vld [vmem:[#allocation3 + $0x10] sm:$0xff]
        %v3916 = vld [vmem:[#allocation3 + $0x18] sm:$0xff]
        %v3917 = vld [vmem:[#allocation3 + $0x20] sm:$0xff]
        %v3918 = vld [vmem:[#allocation3 + $0x28] sm:$0xff]
        %v3919 = vld [vmem:[#allocation3 + $0x30] sm:$0xff]
        %v3920 = vld [vmem:[#allocation3 + $0x38] sm:$0xff]
        %v3921 = vld [vmem:[#allocation3 + $0x40] sm:$0xff]
        %v3922 = vld [vmem:[#allocation3 + $0x48] sm:$0xff]
        %v3923 = vld [vmem:[#allocation3 + $0x50] sm:$0xff]
        %v3924 = vld [vmem:[#allocation3 + $0x58] sm:$0xff]
        %v3925 = vld [vmem:[#allocation3 + $0x60] sm:$0xff]
        %v3926 = vld [vmem:[#allocation3 + $0x68] sm:$0xff]
        %v3927 = vld [vmem:[#allocation3 + $0x70] sm:$0xff]
        %v3928 = vld [vmem:[#allocation3 + $0x78] sm:$0xff]
        %v3929 = vld [vmem:[#allocation3 + $0x80] sm:$0xff]
        %v3930 = vld [vmem:[#allocation3 + $0x88] sm:$0xff]
        %v3931 = vld [vmem:[#allocation3 + $0x90] sm:$0xff]
        %v3932 = vld [vmem:[#allocation3 + $0x98] sm:$0xff]
        %v3933 = vld [vmem:[#allocation3 + $0xa0] sm:$0xff]
        %v3934 = vld [vmem:[#allocation3 + $0xa8] sm:$0xff]
        %v3935 = vld [vmem:[#allocation3 + $0xb0] sm:$0xff]
        %v3936 = vld [vmem:[#allocation3 + $0xb8] sm:$0xff]
        %v3937 = vld [vmem:[#allocation3 + $0xc0] sm:$0xff]
        %v3938 = vld [vmem:[#allocation3 + $0xc8] sm:$0xff]
        %v3939 = vld [vmem:[#allocation3 + $0xd0] sm:$0xff]
        %v3940 = vld [vmem:[#allocation3 + $0xd8] sm:$0xff]
        %v3941 = vld [vmem:[#allocation3 + $0xe0] sm:$0xff]
        %v3942 = vld [vmem:[#allocation3 + $0xe8] sm:$0xff]
        %v3943 = vld [vmem:[#allocation3 + $0xf0] sm:$0xff]
        %v3944 = vld [vmem:[#allocation3 + $0xf8] sm:$0xff]
        %v3945 = vld [vmem:[#allocation3 + $0x100] sm:$0xff]
        %v3946 = vld [vmem:[#allocation3 + $0x108] sm:$0xff]
        %v3947 = vld [vmem:[#allocation3 + $0x110] sm:$0xff]
        %v3948 = vld [vmem:[#allocation3 + $0x118] sm:$0xff]
        %v3949 = vld [vmem:[#allocation3 + $0x120] sm:$0xff]
        %v3950 = vld [vmem:[#allocation3 + $0x128] sm:$0xff]
        %v3951 = vld [vmem:[#allocation3 + $0x130] sm:$0xff]
        %v3952 = vld [vmem:[#allocation3 + $0x138] sm:$0xff]
        %v3953 = vld [vmem:[#allocation3 + $0x140] sm:$0xff]
        %v3954 = vld [vmem:[#allocation3 + $0x148] sm:$0xff]
        %v3955 = vld [vmem:[#allocation3 + $0x150] sm:$0xff]
        %v3956 = vld [vmem:[#allocation3 + $0x158] sm:$0xff]
        %v3957 = vld [vmem:[#allocation3 + $0x160] sm:$0xff]
        %v3958 = vld [vmem:[#allocation3 + $0x168] sm:$0xff]
        %v3959 = vld [vmem:[#allocation3 + $0x170] sm:$0xff]
        %v3960 = vld [vmem:[#allocation3 + $0x178] sm:$0xff]
        %v3961 = vld [vmem:[#allocation3 + $0x180] sm:$0xff]
        %v3962 = vld [vmem:[#allocation3 + $0x188] sm:$0xff]
        %v3963 = vld [vmem:[#allocation3 + $0x190] sm:$0xff]
        %v3964 = vld [vmem:[#allocation3 + $0x198] sm:$0xff]
        %v3965 = vld [vmem:[#allocation3 + $0x1a0] sm:$0xff]
        %v3966 = vld [vmem:[#allocation3 + $0x1a8] sm:$0xff]
        %v3967 = vadd.f32 %v3913, %v3908
        %v3968 = vadd.f32 %v3914, %v3907
        %v3969 = vadd.f32 %v3915, %v3906
        %v3970 = vadd.f32 %v3916, %v3905
        %v3971 = vadd.f32 %v3917, %v3904
        %v3972 = vadd.f32 %v3918, %v3903
        %v3973 = vadd.f32 %v3919, %v3902
        %v3974 = vadd.f32 %v3920, %v3901
        %v3975 = vadd.f32 %v3921, %v3900
        %v3976 = vadd.f32 %v3922, %v3899
        %v3977 = vadd.f32 %v3923, %v3898
        %v3978 = vadd.f32 %v3924, %v3897
        %v3979 = vadd.f32 %v3925, %v3896
        %v3980 = vadd.f32 %v3926, %v3895
        %v3981 = vadd.f32 %v3927, %v3894
        %v3982 = vadd.f32 %v3928, %v3893
        %v3983 = vadd.f32 %v3929, %v3892
        %v3984 = vadd.f32 %v3930, %v3891
        %v3985 = vadd.f32 %v3931, %v3890
        %v3986 = vadd.f32 %v3932, %v3889
        %v3987 = vadd.f32 %v3933, %v3888
        %v3988 = vadd.f32 %v3934, %v3887
        %v3989 = vadd.f32 %v3935, %v3886
        %v3990 = vadd.f32 %v3936, %v3885
        %v3991 = vadd.f32 %v3937, %v3884
        %v3992 = vadd.f32 %v3938, %v3883
        %v3993 = vadd.f32 %v3939, %v3882
        %v3994 = vadd.f32 %v3940, %v3881
        %v3995 = vadd.f32 %v3941, %v3880
        %v3996 = vadd.f32 %v3942, %v3879
        %v3997 = vadd.f32 %v3943, %v3878
        %v3998 = vadd.f32 %v3944, %v3877
        %v3999 = vadd.f32 %v3945, %v3876
        %v4000 = vadd.f32 %v3946, %v3875
        %v4001 = vadd.f32 %v3947, %v3874
        %v4002 = vadd.f32 %v3948, %v3873
        %v4003 = vadd.f32 %v3949, %v3872
        %v4004 = vadd.f32 %v3950, %v3871
        %v4005 = vadd.f32 %v3951, %v3870
        %v4006 = vadd.f32 %v3952, %v3869
        %v4007 = vadd.f32 %v3953, %v3868
        %v4008 = vadd.f32 %v3954, %v3867
        %v4009 = vadd.f32 %v3955, %v3866
        %v4010 = vadd.f32 %v3956, %v3865
        %v4011 = vadd.f32 %v3957, %v3864
        %v4012 = vadd.f32 %v3958, %v3863
        %v4013 = vadd.f32 %v3959, %v3862
        %v4014 = vadd.f32 %v3960, %v3861
        %v4015 = vadd.f32 %v3961, %v3860
        %v4016 = vadd.f32 %v3962, %v3859
        %v4017 = vadd.f32 %v3963, %v3912
        %v4018 = vadd.f32 %v3964, %v3911
        %v4019 = vadd.f32 %v3965, %v3910
        %v4020 = vadd.f32 %v3966, %v3909
        %4021 = vst.msk [vmem:[#allocation3] sm:$0xff] %vm520, %v3967
        %4022 = vst.msk [vmem:[#allocation3 + $0x8] sm:$0xff] %vm520, %v3968
        %4023 = vst.msk [vmem:[#allocation3 + $0x10] sm:$0xff] %vm520, %v3969
        %4024 = vst.msk [vmem:[#allocation3 + $0x18] sm:$0xff] %vm520, %v3970
        %4025 = vst.msk [vmem:[#allocation3 + $0x20] sm:$0xff] %vm520, %v3971
        %4026 = vst.msk [vmem:[#allocation3 + $0x28] sm:$0xff] %vm520, %v3972
        %4027 = vst.msk [vmem:[#allocation3 + $0x30] sm:$0xff] %vm520, %v3973
        %4028 = vst.msk [vmem:[#allocation3 + $0x38] sm:$0xff] %vm520, %v3974
        %4029 = vst.msk [vmem:[#allocation3 + $0x40] sm:$0xff] %vm520, %v3975
        %4030 = vst.msk [vmem:[#allocation3 + $0x48] sm:$0xff] %vm520, %v3976
        %4031 = vst.msk [vmem:[#allocation3 + $0x50] sm:$0xff] %vm520, %v3977
        %4032 = vst.msk [vmem:[#allocation3 + $0x58] sm:$0xff] %vm520, %v3978
        %4033 = vst.msk [vmem:[#allocation3 + $0x60] sm:$0xff] %vm520, %v3979
        %4034 = vst.msk [vmem:[#allocation3 + $0x68] sm:$0xff] %vm520, %v3980
        %4035 = vst.msk [vmem:[#allocation3 + $0x70] sm:$0xff] %vm520, %v3981
        %4036 = vst.msk [vmem:[#allocation3 + $0x78] sm:$0xff] %vm520, %v3982
        %4037 = vst.msk [vmem:[#allocation3 + $0x80] sm:$0xff] %vm520, %v3983
        %4038 = vst.msk [vmem:[#allocation3 + $0x88] sm:$0xff] %vm520, %v3984
        %4039 = vst.msk [vmem:[#allocation3 + $0x90] sm:$0xff] %vm520, %v3985
        %4040 = vst.msk [vmem:[#allocation3 + $0x98] sm:$0xff] %vm520, %v3986
        %4041 = vst.msk [vmem:[#allocation3 + $0xa0] sm:$0xff] %vm520, %v3987
        %4042 = vst.msk [vmem:[#allocation3 + $0xa8] sm:$0xff] %vm520, %v3988
        %4043 = vst.msk [vmem:[#allocation3 + $0xb0] sm:$0xff] %vm520, %v3989
        %4044 = vst.msk [vmem:[#allocation3 + $0xb8] sm:$0xff] %vm520, %v3990
        %4045 = vst.msk [vmem:[#allocation3 + $0xc0] sm:$0xff] %vm520, %v3991
        %4046 = vst.msk [vmem:[#allocation3 + $0xc8] sm:$0xff] %vm520, %v3992
        %4047 = vst.msk [vmem:[#allocation3 + $0xd0] sm:$0xff] %vm520, %v3993
        %4048 = vst.msk [vmem:[#allocation3 + $0xd8] sm:$0xff] %vm520, %v3994
        %4049 = vst.msk [vmem:[#allocation3 + $0xe0] sm:$0xff] %vm520, %v3995
        %4050 = vst.msk [vmem:[#allocation3 + $0xe8] sm:$0xff] %vm520, %v3996
        %4051 = vst.msk [vmem:[#allocation3 + $0xf0] sm:$0xff] %vm520, %v3997
        %4052 = vst.msk [vmem:[#allocation3 + $0xf8] sm:$0xff] %vm520, %v3998
        %4053 = vst.msk [vmem:[#allocation3 + $0x100] sm:$0xff] %vm520, %v3999
        %4054 = vst.msk [vmem:[#allocation3 + $0x108] sm:$0xff] %vm520, %v4000
        %4055 = vst.msk [vmem:[#allocation3 + $0x110] sm:$0xff] %vm520, %v4001
        %4056 = vst.msk [vmem:[#allocation3 + $0x118] sm:$0xff] %vm520, %v4002
        %4057 = vst.msk [vmem:[#allocation3 + $0x120] sm:$0xff] %vm520, %v4003
        %4058 = vst.msk [vmem:[#allocation3 + $0x128] sm:$0xff] %vm520, %v4004
        %4059 = vst.msk [vmem:[#allocation3 + $0x130] sm:$0xff] %vm520, %v4005
        %4060 = vst.msk [vmem:[#allocation3 + $0x138] sm:$0xff] %vm520, %v4006
        %4061 = vst.msk [vmem:[#allocation3 + $0x140] sm:$0xff] %vm520, %v4007
        %4062 = vst.msk [vmem:[#allocation3 + $0x148] sm:$0xff] %vm520, %v4008
        %4063 = vst.msk [vmem:[#allocation3 + $0x150] sm:$0xff] %vm520, %v4009
        %4064 = vst.msk [vmem:[#allocation3 + $0x158] sm:$0xff] %vm520, %v4010
        %4065 = vst.msk [vmem:[#allocation3 + $0x160] sm:$0xff] %vm520, %v4011
        %4066 = vst.msk [vmem:[#allocation3 + $0x168] sm:$0xff] %vm520, %v4012
        %4067 = vst.msk [vmem:[#allocation3 + $0x170] sm:$0xff] %vm520, %v4013
        %4068 = vst.msk [vmem:[#allocation3 + $0x178] sm:$0xff] %vm520, %v4014
        %4069 = vst.msk [vmem:[#allocation3 + $0x180] sm:$0xff] %vm520, %v4015
        %4070 = vst.msk [vmem:[#allocation3 + $0x188] sm:$0xff] %vm520, %v4016
        %4071 = vst.msk [vmem:[#allocation3 + $0x190] sm:$0xff] %vm520, %v4017
        %4072 = vst.msk [vmem:[#allocation3 + $0x198] sm:$0xff] %vm520, %v4018
        %4073 = vst.msk [vmem:[#allocation3 + $0x1a0] sm:$0xff] %vm520, %v4019
        %4074 = vst.msk [vmem:[#allocation3 + $0x1a8] sm:$0xff] %vm520, %v4020
        %v4075 = vld [vmem:[%s2 + $0xc0] sm:$0xf]
        %v4076 = vld [vmem:[%s2 + $0xc4] sm:$0xf]
        %v4077 = vld [vmem:[%s2 + $0xc8] sm:$0xf]
        %v4078 = vld [vmem:[%s2 + $0xcc] sm:$0xf]
        %v4079 = vld [vmem:[%s2 + $0xd0] sm:$0xf]
        %v4080 = vld [vmem:[%s2 + $0xd4] sm:$0xf]
        %v4081 = vld [vmem:[%s2 + $0xd8] sm:$0xf]
        %v4082 = vld [vmem:[%s2 + $0xdc] sm:$0xf]
        %v4091 = vunpack.c.l.b16 %v4075
        %v4092 = vunpack.c.l.b16 %v4076
        %v4093 = vunpack.c.l.b16 %v4077
        %v4094 = vunpack.c.l.b16 %v4078
        %v4095 = vunpack.c.l.b16 %v4079
        %v4096 = vunpack.c.l.b16 %v4080
        %v4097 = vunpack.c.l.b16 %v4081
        %v4098 = vunpack.c.l.b16 %v4082
        %v4099 = vpack.c.b16 %v4092, %v4091
        %v4100 = vpack.c.b16 %v4094, %v4093
        %v4101 = vpack.c.b16 %v4096, %v4095
        %v4102 = vpack.c.b16 %v4098, %v4097
        %4107 = vmatprep.subr.bf16.mxu0 0
        %4108 = vmatpush1.bf16.msra.mxu0 0
        %4109 = vmatprep.subr.bf16.mxu0 0
        %4110 = vmatpush1.bf16.msra.mxu0 0
        %4111 = vmatprep.subr.bf16.mxu0 0
        %4112 = vmatpush1.bf16.msra.mxu0 0
        %4113 = vmatprep.subr.bf16.mxu0 0
        %4114 = vmatpush1.bf16.msra.mxu0 0
        %4115 = vmatprep.subr.bf16.mxu0 0
        %4116 = vmatpush1.bf16.msra.mxu0 %v4102
        %4117 = vmatprep.subr.bf16.mxu0 0
        %4118 = vmatpush1.bf16.msra.mxu0 %v4101
        %4119 = vmatprep.subr.bf16.mxu0 0
        %4120 = vmatpush1.bf16.msra.mxu0 %v4100
        %4121 = vmatprep.subr.bf16.mxu0 0
        %4122 = vmatpush1.bf16.msra.mxu0 %v4099
        %4123 = vmatprep.subr.bf16.mxu0 0
        %4124 = vmatpush2.bf16.msra.mxu0 0
        %4125 = vmatprep.subr.bf16.mxu0 0
        %4126 = vmatpush2.bf16.msra.mxu0 0
        %4127 = vmatprep.subr.bf16.mxu0 0
        %4128 = vmatpush2.bf16.msra.mxu0 0
        %4129 = vmatprep.subr.bf16.mxu0 0
        %4130 = vmatpush2.bf16.msra.mxu0 0
        %4131 = vmatprep.subr.bf16.mxu0 0
        %4132 = vmatpush2.bf16.msra.mxu0 0
        %4133 = vmatprep.subr.bf16.mxu0 0
        %4134 = vmatpush2.bf16.msra.mxu0 0
        %4135 = vmatprep.subr.bf16.mxu0 0
        %4136 = vmatpush2.bf16.msra.mxu0 0
        %4137 = vmatprep.subr.bf16.mxu0 0
        %4138 = vmatpush2.bf16.msra.mxu0 0
        %4139 = vmatprep.mubr.bf16.mxu0 0
        %4140 = vmatmul.mubr.bf16.gmra.mxu0 %v1041
        %v4141 = vpop.f32.mrf.mxu0
        %v4142 = vadd.f32 0.0, %v4141
        %v4143 = vpop.f32.mrf.mxu0
        %v4144 = vpop.f32.mrf.mxu0
        %v4145 = vadd.f32 0.0, %v4144
        %v4146 = vpop.f32.mrf.mxu0
        %4147 = vmatprep.mubr.bf16.mxu0 0
        %4148 = vmatmul.mubr.bf16.gmra.mxu0 %v1044
        %v4149 = vpop.f32.mrf.mxu0
        %v4150 = vadd.f32 0.0, %v4149
        %v4151 = vpop.f32.mrf.mxu0
        %v4152 = vpop.f32.mrf.mxu0
        %v4153 = vadd.f32 0.0, %v4152
        %v4154 = vpop.f32.mrf.mxu0
        %4155 = vmatprep.mubr.bf16.mxu0 0
        %4156 = vmatmul.mubr.bf16.gmra.mxu0 %v1047
        %v4157 = vpop.f32.mrf.mxu0
        %v4158 = vadd.f32 0.0, %v4157
        %v4159 = vpop.f32.mrf.mxu0
        %v4160 = vpop.f32.mrf.mxu0
        %v4161 = vadd.f32 0.0, %v4160
        %v4162 = vpop.f32.mrf.mxu0
        %4163 = vmatprep.mubr.bf16.mxu0 0
        %4164 = vmatmul.mubr.bf16.gmra.mxu0 %v1050
        %v4165 = vpop.f32.mrf.mxu0
        %v4166 = vadd.f32 0.0, %v4165
        %v4167 = vpop.f32.mrf.mxu0
        %v4168 = vpop.f32.mrf.mxu0
        %v4169 = vadd.f32 0.0, %v4168
        %v4170 = vpop.f32.mrf.mxu0
        %4171 = vmatprep.mubr.bf16.mxu0 0
        %4172 = vmatmul.mubr.bf16.gmra.mxu0 %v1053
        %v4173 = vpop.f32.mrf.mxu0
        %v4174 = vadd.f32 0.0, %v4173
        %v4175 = vpop.f32.mrf.mxu0
        %v4176 = vpop.f32.mrf.mxu0
        %v4177 = vadd.f32 0.0, %v4176
        %v4178 = vpop.f32.mrf.mxu0
        %4179 = vmatprep.mubr.bf16.mxu0 0
        %4180 = vmatmul.mubr.bf16.gmra.mxu0 %v1056
        %v4181 = vpop.f32.mrf.mxu0
        %v4182 = vadd.f32 0.0, %v4181
        %v4183 = vpop.f32.mrf.mxu0
        %v4184 = vpop.f32.mrf.mxu0
        %v4185 = vadd.f32 0.0, %v4184
        %v4186 = vpop.f32.mrf.mxu0
        %4187 = vmatprep.mubr.bf16.mxu0 0
        %4188 = vmatmul.mubr.bf16.gmra.mxu0 %v1059
        %v4189 = vpop.f32.mrf.mxu0
        %v4190 = vadd.f32 0.0, %v4189
        %v4191 = vpop.f32.mrf.mxu0
        %v4192 = vpop.f32.mrf.mxu0
        %v4193 = vadd.f32 0.0, %v4192
        %v4194 = vpop.f32.mrf.mxu0
        %4195 = vmatprep.mubr.bf16.mxu0 0
        %4196 = vmatmul.mubr.bf16.gmra.mxu0 %v1062
        %v4197 = vpop.f32.mrf.mxu0
        %v4198 = vadd.f32 0.0, %v4197
        %v4199 = vpop.f32.mrf.mxu0
        %v4200 = vpop.f32.mrf.mxu0
        %v4201 = vadd.f32 0.0, %v4200
        %v4202 = vpop.f32.mrf.mxu0
        %4203 = vmatprep.mubr.bf16.mxu0 0
        %4204 = vmatmul.mubr.bf16.gmra.mxu0 %v1065
        %v4205 = vpop.f32.mrf.mxu0
        %v4206 = vadd.f32 0.0, %v4205
        %v4207 = vpop.f32.mrf.mxu0
        %v4208 = vpop.f32.mrf.mxu0
        %v4209 = vadd.f32 0.0, %v4208
        %v4210 = vpop.f32.mrf.mxu0
        %4211 = vmatprep.mubr.bf16.mxu0 0
        %4212 = vmatmul.mubr.bf16.gmra.mxu0 %v1068
        %v4213 = vpop.f32.mrf.mxu0
        %v4214 = vadd.f32 0.0, %v4213
        %v4215 = vpop.f32.mrf.mxu0
        %v4216 = vpop.f32.mrf.mxu0
        %v4217 = vadd.f32 0.0, %v4216
        %v4218 = vpop.f32.mrf.mxu0
        %4219 = vmatprep.mubr.bf16.mxu0 0
        %4220 = vmatmul.mubr.bf16.gmra.mxu0 %v1071
        %v4221 = vpop.f32.mrf.mxu0
        %v4222 = vadd.f32 0.0, %v4221
        %v4223 = vpop.f32.mrf.mxu0
        %v4224 = vpop.f32.mrf.mxu0
        %v4225 = vadd.f32 0.0, %v4224
        %v4226 = vpop.f32.mrf.mxu0
        %4227 = vmatprep.mubr.bf16.mxu0 0
        %4228 = vmatmul.mubr.bf16.gmra.mxu0 %v1074
        %v4229 = vpop.f32.mrf.mxu0
        %v4230 = vadd.f32 0.0, %v4229
        %v4231 = vpop.f32.mrf.mxu0
        %v4232 = vpop.f32.mrf.mxu0
        %v4233 = vadd.f32 0.0, %v4232
        %v4234 = vpop.f32.mrf.mxu0
        %4235 = vmatprep.mubr.bf16.mxu0 0
        %4236 = vmatmul.mubr.bf16.gmra.mxu0 %v1077
        %v4237 = vpop.f32.mrf.mxu0
        %v4238 = vadd.f32 0.0, %v4237
        %v4239 = vpop.f32.mrf.mxu0
        %v4240 = vpop.f32.mrf.mxu0
        %v4241 = vadd.f32 0.0, %v4240
        %v4242 = vpop.f32.mrf.mxu0
        %4243 = vmatprep.mubr.bf16.mxu0 0
        %4244 = vmatmul.mubr.bf16.gmra.mxu0 %v1080
        %v4245 = vpop.f32.mrf.mxu0
        %v4246 = vadd.f32 0.0, %v4245
        %v4247 = vpop.f32.mrf.mxu0
        %v4248 = vpop.f32.mrf.mxu0
        %v4249 = vadd.f32 0.0, %v4248
        %v4250 = vpop.f32.mrf.mxu0
        %4251 = vmatprep.mubr.bf16.mxu0 0
        %4252 = vmatmul.mubr.bf16.gmra.mxu0 %v1083
        %v4253 = vpop.f32.mrf.mxu0
        %v4254 = vadd.f32 0.0, %v4253
        %v4255 = vpop.f32.mrf.mxu0
        %v4256 = vpop.f32.mrf.mxu0
        %v4257 = vadd.f32 0.0, %v4256
        %v4258 = vpop.f32.mrf.mxu0
        %4259 = vmatprep.mubr.bf16.mxu0 0
        %4260 = vmatmul.mubr.bf16.gmra.mxu0 %v1086
        %v4261 = vpop.f32.mrf.mxu0
        %v4262 = vadd.f32 0.0, %v4261
        %v4263 = vpop.f32.mrf.mxu0
        %v4264 = vpop.f32.mrf.mxu0
        %v4265 = vadd.f32 0.0, %v4264
        %v4266 = vpop.f32.mrf.mxu0
        %4267 = vmatprep.mubr.bf16.mxu0 0
        %4268 = vmatmul.mubr.bf16.gmra.mxu0 %v1089
        %v4269 = vpop.f32.mrf.mxu0
        %v4270 = vadd.f32 0.0, %v4269
        %v4271 = vpop.f32.mrf.mxu0
        %v4272 = vpop.f32.mrf.mxu0
        %v4273 = vadd.f32 0.0, %v4272
        %v4274 = vpop.f32.mrf.mxu0
        %4275 = vmatprep.mubr.bf16.mxu0 0
        %4276 = vmatmul.mubr.bf16.gmra.mxu0 %v1092
        %v4277 = vpop.f32.mrf.mxu0
        %v4278 = vadd.f32 0.0, %v4277
        %v4279 = vpop.f32.mrf.mxu0
        %v4280 = vpop.f32.mrf.mxu0
        %v4281 = vadd.f32 0.0, %v4280
        %v4282 = vpop.f32.mrf.mxu0
        %4283 = vmatprep.mubr.bf16.mxu0 0
        %4284 = vmatmul.mubr.bf16.gmra.mxu0 %v1095
        %v4285 = vpop.f32.mrf.mxu0
        %v4286 = vadd.f32 0.0, %v4285
        %v4287 = vpop.f32.mrf.mxu0
        %v4288 = vpop.f32.mrf.mxu0
        %v4289 = vadd.f32 0.0, %v4288
        %v4290 = vpop.f32.mrf.mxu0
        %4291 = vmatprep.mubr.bf16.mxu0 0
        %4292 = vmatmul.mubr.bf16.gmra.mxu0 %v1098
        %v4293 = vpop.f32.mrf.mxu0
        %v4294 = vadd.f32 0.0, %v4293
        %v4295 = vpop.f32.mrf.mxu0
        %v4296 = vpop.f32.mrf.mxu0
        %v4297 = vadd.f32 0.0, %v4296
        %v4298 = vpop.f32.mrf.mxu0
        %4299 = vmatprep.mubr.bf16.mxu0 0
        %4300 = vmatmul.mubr.bf16.gmra.mxu0 %v1101
        %v4301 = vpop.f32.mrf.mxu0
        %v4302 = vadd.f32 0.0, %v4301
        %v4303 = vpop.f32.mrf.mxu0
        %v4304 = vpop.f32.mrf.mxu0
        %v4305 = vadd.f32 0.0, %v4304
        %v4306 = vpop.f32.mrf.mxu0
        %4307 = vmatprep.mubr.bf16.mxu0 0
        %4308 = vmatmul.mubr.bf16.gmra.mxu0 %v1104
        %v4309 = vpop.f32.mrf.mxu0
        %v4310 = vadd.f32 0.0, %v4309
        %v4311 = vpop.f32.mrf.mxu0
        %v4312 = vpop.f32.mrf.mxu0
        %v4313 = vadd.f32 0.0, %v4312
        %v4314 = vpop.f32.mrf.mxu0
        %4315 = vmatprep.mubr.bf16.mxu0 0
        %4316 = vmatmul.mubr.bf16.gmra.mxu0 %v1107
        %v4317 = vpop.f32.mrf.mxu0
        %v4318 = vadd.f32 0.0, %v4317
        %v4319 = vpop.f32.mrf.mxu0
        %v4320 = vpop.f32.mrf.mxu0
        %v4321 = vadd.f32 0.0, %v4320
        %v4322 = vpop.f32.mrf.mxu0
        %4323 = vmatprep.mubr.bf16.mxu0 0
        %4324 = vmatmul.mubr.bf16.gmra.mxu0 %v1110
        %v4325 = vpop.f32.mrf.mxu0
        %v4326 = vadd.f32 0.0, %v4325
        %v4327 = vpop.f32.mrf.mxu0
        %v4328 = vpop.f32.mrf.mxu0
        %v4329 = vadd.f32 0.0, %v4328
        %v4330 = vpop.f32.mrf.mxu0
        %4331 = vmatprep.mubr.bf16.mxu0 0
        %4332 = vmatmul.mubr.bf16.gmra.mxu0 %v1113
        %v4333 = vpop.f32.mrf.mxu0
        %v4334 = vadd.f32 0.0, %v4333
        %v4335 = vpop.f32.mrf.mxu0
        %v4336 = vpop.f32.mrf.mxu0
        %v4337 = vadd.f32 0.0, %v4336
        %v4338 = vpop.f32.mrf.mxu0
        %4339 = vmatprep.mubr.bf16.mxu0 0
        %4340 = vmatmul.mubr.bf16.gmra.mxu0 %v1116
        %v4341 = vpop.f32.mrf.mxu0
        %v4342 = vadd.f32 0.0, %v4341
        %v4343 = vpop.f32.mrf.mxu0
        %v4344 = vpop.f32.mrf.mxu0
        %v4345 = vadd.f32 0.0, %v4344
        %v4346 = vpop.f32.mrf.mxu0
        %4347 = vmatprep.mubr.bf16.mxu0 0
        %4348 = vmatmul.mubr.bf16.gmra.mxu0 %v1119
        %v4349 = vpop.f32.mrf.mxu0
        %v4350 = vadd.f32 0.0, %v4349
        %v4351 = vpop.f32.mrf.mxu0
        %v4352 = vpop.f32.mrf.mxu0
        %v4353 = vadd.f32 0.0, %v4352
        %v4354 = vpop.f32.mrf.mxu0
        %4355 = vdwg.mxu0
        %v4356 = vrot.slane %v4142, 7
        %v4357 = vrot.slane %v4145, 7
        %v4358 = vrot.slane %v4150, 7
        %v4359 = vrot.slane %v4153, 7
        %v4360 = vrot.slane %v4158, 7
        %v4361 = vrot.slane %v4161, 7
        %v4362 = vrot.slane %v4166, 7
        %v4363 = vrot.slane %v4169, 7
        %v4364 = vrot.slane %v4174, 7
        %v4365 = vrot.slane %v4177, 7
        %v4366 = vrot.slane %v4182, 7
        %v4367 = vrot.slane %v4185, 7
        %v4368 = vrot.slane %v4190, 7
        %v4369 = vrot.slane %v4193, 7
        %v4370 = vrot.slane %v4198, 7
        %v4371 = vrot.slane %v4201, 7
        %v4372 = vrot.slane %v4206, 7
        %v4373 = vrot.slane %v4209, 7
        %v4374 = vrot.slane %v4214, 7
        %v4375 = vrot.slane %v4217, 7
        %v4376 = vrot.slane %v4222, 7
        %v4377 = vrot.slane %v4225, 7
        %v4378 = vrot.slane %v4230, 7
        %v4379 = vrot.slane %v4233, 7
        %v4380 = vrot.slane %v4238, 7
        %v4381 = vrot.slane %v4241, 7
        %v4382 = vrot.slane %v4246, 7
        %v4383 = vrot.slane %v4249, 7
        %v4384 = vrot.slane %v4254, 7
        %v4385 = vrot.slane %v4257, 7
        %v4386 = vrot.slane %v4262, 7
        %v4387 = vrot.slane %v4265, 7
        %v4388 = vrot.slane %v4270, 7
        %v4389 = vrot.slane %v4273, 7
        %v4390 = vrot.slane %v4278, 7
        %v4391 = vrot.slane %v4281, 7
        %v4392 = vrot.slane %v4286, 7
        %v4393 = vrot.slane %v4289, 7
        %v4394 = vrot.slane %v4294, 7
        %v4395 = vrot.slane %v4297, 7
        %v4396 = vrot.slane %v4302, 7
        %v4397 = vrot.slane %v4305, 7
        %v4398 = vrot.slane %v4310, 7
        %v4399 = vrot.slane %v4313, 7
        %v4400 = vrot.slane %v4318, 7
        %v4401 = vrot.slane %v4321, 7
        %v4402 = vrot.slane %v4326, 7
        %v4403 = vrot.slane %v4329, 7
        %v4404 = vrot.slane %v4334, 7
        %v4405 = vrot.slane %v4337, 7
        %v4406 = vrot.slane %v4342, 7
        %v4407 = vrot.slane %v4345, 7
        %v4408 = vrot.slane %v4350, 7
        %v4409 = vrot.slane %v4353, 7
        %v4410 = vsel %vm1426, %v4408, %v4409
        %v4411 = vsel %vm1426, %v4407, %v4408
        %v4412 = vsel %vm1426, %v4406, %v4407
        %v4413 = vsel %vm1426, %v4405, %v4406
        %v4414 = vsel %vm1426, %v4404, %v4405
        %v4415 = vsel %vm1426, %v4403, %v4404
        %v4416 = vsel %vm1426, %v4402, %v4403
        %v4417 = vsel %vm1426, %v4401, %v4402
        %v4418 = vsel %vm1426, %v4400, %v4401
        %v4419 = vsel %vm1426, %v4399, %v4400
        %v4420 = vsel %vm1426, %v4398, %v4399
        %v4421 = vsel %vm1426, %v4397, %v4398
        %v4422 = vsel %vm1426, %v4396, %v4397
        %v4423 = vsel %vm1426, %v4395, %v4396
        %v4424 = vsel %vm1426, %v4394, %v4395
        %v4425 = vsel %vm1426, %v4393, %v4394
        %v4426 = vsel %vm1426, %v4392, %v4393
        %v4427 = vsel %vm1426, %v4391, %v4392
        %v4428 = vsel %vm1426, %v4390, %v4391
        %v4429 = vsel %vm1426, %v4389, %v4390
        %v4430 = vsel %vm1426, %v4388, %v4389
        %v4431 = vsel %vm1426, %v4387, %v4388
        %v4432 = vsel %vm1426, %v4386, %v4387
        %v4433 = vsel %vm1426, %v4385, %v4386
        %v4434 = vsel %vm1426, %v4384, %v4385
        %v4435 = vsel %vm1426, %v4383, %v4384
        %v4436 = vsel %vm1426, %v4382, %v4383
        %v4437 = vsel %vm1426, %v4381, %v4382
        %v4438 = vsel %vm1426, %v4380, %v4381
        %v4439 = vsel %vm1426, %v4379, %v4380
        %v4440 = vsel %vm1426, %v4378, %v4379
        %v4441 = vsel %vm1426, %v4377, %v4378
        %v4442 = vsel %vm1426, %v4376, %v4377
        %v4443 = vsel %vm1426, %v4375, %v4376
        %v4444 = vsel %vm1426, %v4374, %v4375
        %v4445 = vsel %vm1426, %v4373, %v4374
        %v4446 = vsel %vm1426, %v4372, %v4373
        %v4447 = vsel %vm1426, %v4371, %v4372
        %v4448 = vsel %vm1426, %v4370, %v4371
        %v4449 = vsel %vm1426, %v4369, %v4370
        %v4450 = vsel %vm1426, %v4368, %v4369
        %v4451 = vsel %vm1426, %v4367, %v4368
        %v4452 = vsel %vm1426, %v4366, %v4367
        %v4453 = vsel %vm1426, %v4365, %v4366
        %v4454 = vsel %vm1426, %v4364, %v4365
        %v4455 = vsel %vm1426, %v4363, %v4364
        %v4456 = vsel %vm1426, %v4362, %v4363
        %v4457 = vsel %vm1426, %v4361, %v4362
        %v4458 = vsel %vm1426, %v4360, %v4361
        %v4459 = vsel %vm1426, %v4359, %v4360
        %v4460 = vsel %vm1426, %v4358, %v4359
        %v4461 = vsel %vm1426, %v4357, %v4358
        %v4462 = vsel %vm1426, %v4356, %v4357
        %v4463 = vsel %vm1426, %v4409, %v4356
        %v4464 = vld [vmem:[#allocation3] sm:$0xff]
        %v4465 = vld [vmem:[#allocation3 + $0x8] sm:$0xff]
        %v4466 = vld [vmem:[#allocation3 + $0x10] sm:$0xff]
        %v4467 = vld [vmem:[#allocation3 + $0x18] sm:$0xff]
        %v4468 = vld [vmem:[#allocation3 + $0x20] sm:$0xff]
        %v4469 = vld [vmem:[#allocation3 + $0x28] sm:$0xff]
        %v4470 = vld [vmem:[#allocation3 + $0x30] sm:$0xff]
        %v4471 = vld [vmem:[#allocation3 + $0x38] sm:$0xff]
        %v4472 = vld [vmem:[#allocation3 + $0x40] sm:$0xff]
        %v4473 = vld [vmem:[#allocation3 + $0x48] sm:$0xff]
        %v4474 = vld [vmem:[#allocation3 + $0x50] sm:$0xff]
        %v4475 = vld [vmem:[#allocation3 + $0x58] sm:$0xff]
        %v4476 = vld [vmem:[#allocation3 + $0x60] sm:$0xff]
        %v4477 = vld [vmem:[#allocation3 + $0x68] sm:$0xff]
        %v4478 = vld [vmem:[#allocation3 + $0x70] sm:$0xff]
        %v4479 = vld [vmem:[#allocation3 + $0x78] sm:$0xff]
        %v4480 = vld [vmem:[#allocation3 + $0x80] sm:$0xff]
        %v4481 = vld [vmem:[#allocation3 + $0x88] sm:$0xff]
        %v4482 = vld [vmem:[#allocation3 + $0x90] sm:$0xff]
        %v4483 = vld [vmem:[#allocation3 + $0x98] sm:$0xff]
        %v4484 = vld [vmem:[#allocation3 + $0xa0] sm:$0xff]
        %v4485 = vld [vmem:[#allocation3 + $0xa8] sm:$0xff]
        %v4486 = vld [vmem:[#allocation3 + $0xb0] sm:$0xff]
        %v4487 = vld [vmem:[#allocation3 + $0xb8] sm:$0xff]
        %v4488 = vld [vmem:[#allocation3 + $0xc0] sm:$0xff]
        %v4489 = vld [vmem:[#allocation3 + $0xc8] sm:$0xff]
        %v4490 = vld [vmem:[#allocation3 + $0xd0] sm:$0xff]
        %v4491 = vld [vmem:[#allocation3 + $0xd8] sm:$0xff]
        %v4492 = vld [vmem:[#allocation3 + $0xe0] sm:$0xff]
        %v4493 = vld [vmem:[#allocation3 + $0xe8] sm:$0xff]
        %v4494 = vld [vmem:[#allocation3 + $0xf0] sm:$0xff]
        %v4495 = vld [vmem:[#allocation3 + $0xf8] sm:$0xff]
        %v4496 = vld [vmem:[#allocation3 + $0x100] sm:$0xff]
        %v4497 = vld [vmem:[#allocation3 + $0x108] sm:$0xff]
        %v4498 = vld [vmem:[#allocation3 + $0x110] sm:$0xff]
        %v4499 = vld [vmem:[#allocation3 + $0x118] sm:$0xff]
        %v4500 = vld [vmem:[#allocation3 + $0x120] sm:$0xff]
        %v4501 = vld [vmem:[#allocation3 + $0x128] sm:$0xff]
        %v4502 = vld [vmem:[#allocation3 + $0x130] sm:$0xff]
        %v4503 = vld [vmem:[#allocation3 + $0x138] sm:$0xff]
        %v4504 = vld [vmem:[#allocation3 + $0x140] sm:$0xff]
        %v4505 = vld [vmem:[#allocation3 + $0x148] sm:$0xff]
        %v4506 = vld [vmem:[#allocation3 + $0x150] sm:$0xff]
        %v4507 = vld [vmem:[#allocation3 + $0x158] sm:$0xff]
        %v4508 = vld [vmem:[#allocation3 + $0x160] sm:$0xff]
        %v4509 = vld [vmem:[#allocation3 + $0x168] sm:$0xff]
        %v4510 = vld [vmem:[#allocation3 + $0x170] sm:$0xff]
        %v4511 = vld [vmem:[#allocation3 + $0x178] sm:$0xff]
        %v4512 = vld [vmem:[#allocation3 + $0x180] sm:$0xff]
        %v4513 = vld [vmem:[#allocation3 + $0x188] sm:$0xff]
        %v4514 = vld [vmem:[#allocation3 + $0x190] sm:$0xff]
        %v4515 = vld [vmem:[#allocation3 + $0x198] sm:$0xff]
        %v4516 = vld [vmem:[#allocation3 + $0x1a0] sm:$0xff]
        %v4517 = vld [vmem:[#allocation3 + $0x1a8] sm:$0xff]
        %v4518 = vadd.f32 %v4464, %v4457
        %v4519 = vadd.f32 %v4465, %v4456
        %v4520 = vadd.f32 %v4466, %v4455
        %v4521 = vadd.f32 %v4467, %v4454
        %v4522 = vadd.f32 %v4468, %v4453
        %v4523 = vadd.f32 %v4469, %v4452
        %v4524 = vadd.f32 %v4470, %v4451
        %v4525 = vadd.f32 %v4471, %v4450
        %v4526 = vadd.f32 %v4472, %v4449
        %v4527 = vadd.f32 %v4473, %v4448
        %v4528 = vadd.f32 %v4474, %v4447
        %v4529 = vadd.f32 %v4475, %v4446
        %v4530 = vadd.f32 %v4476, %v4445
        %v4531 = vadd.f32 %v4477, %v4444
        %v4532 = vadd.f32 %v4478, %v4443
        %v4533 = vadd.f32 %v4479, %v4442
        %v4534 = vadd.f32 %v4480, %v4441
        %v4535 = vadd.f32 %v4481, %v4440
        %v4536 = vadd.f32 %v4482, %v4439
        %v4537 = vadd.f32 %v4483, %v4438
        %v4538 = vadd.f32 %v4484, %v4437
        %v4539 = vadd.f32 %v4485, %v4436
        %v4540 = vadd.f32 %v4486, %v4435
        %v4541 = vadd.f32 %v4487, %v4434
        %v4542 = vadd.f32 %v4488, %v4433
        %v4543 = vadd.f32 %v4489, %v4432
        %v4544 = vadd.f32 %v4490, %v4431
        %v4545 = vadd.f32 %v4491, %v4430
        %v4546 = vadd.f32 %v4492, %v4429
        %v4547 = vadd.f32 %v4493, %v4428
        %v4548 = vadd.f32 %v4494, %v4427
        %v4549 = vadd.f32 %v4495, %v4426
        %v4550 = vadd.f32 %v4496, %v4425
        %v4551 = vadd.f32 %v4497, %v4424
        %v4552 = vadd.f32 %v4498, %v4423
        %v4553 = vadd.f32 %v4499, %v4422
        %v4554 = vadd.f32 %v4500, %v4421
        %v4555 = vadd.f32 %v4501, %v4420
        %v4556 = vadd.f32 %v4502, %v4419
        %v4557 = vadd.f32 %v4503, %v4418
        %v4558 = vadd.f32 %v4504, %v4417
        %v4559 = vadd.f32 %v4505, %v4416
        %v4560 = vadd.f32 %v4506, %v4415
        %v4561 = vadd.f32 %v4507, %v4414
        %v4562 = vadd.f32 %v4508, %v4413
        %v4563 = vadd.f32 %v4509, %v4412
        %v4564 = vadd.f32 %v4510, %v4411
        %v4565 = vadd.f32 %v4511, %v4410
        %v4566 = vadd.f32 %v4512, %v4463
        %v4567 = vadd.f32 %v4513, %v4462
        %v4568 = vadd.f32 %v4514, %v4461
        %v4569 = vadd.f32 %v4515, %v4460
        %v4570 = vadd.f32 %v4516, %v4459
        %v4571 = vadd.f32 %v4517, %v4458
        %4572 = vst.msk [vmem:[#allocation3] sm:$0xff] %vm520, %v4518
        %4573 = vst.msk [vmem:[#allocation3 + $0x8] sm:$0xff] %vm520, %v4519
        %4574 = vst.msk [vmem:[#allocation3 + $0x10] sm:$0xff] %vm520, %v4520
        %4575 = vst.msk [vmem:[#allocation3 + $0x18] sm:$0xff] %vm520, %v4521
        %4576 = vst.msk [vmem:[#allocation3 + $0x20] sm:$0xff] %vm520, %v4522
        %4577 = vst.msk [vmem:[#allocation3 + $0x28] sm:$0xff] %vm520, %v4523
        %4578 = vst.msk [vmem:[#allocation3 + $0x30] sm:$0xff] %vm520, %v4524
        %4579 = vst.msk [vmem:[#allocation3 + $0x38] sm:$0xff] %vm520, %v4525
        %4580 = vst.msk [vmem:[#allocation3 + $0x40] sm:$0xff] %vm520, %v4526
        %4581 = vst.msk [vmem:[#allocation3 + $0x48] sm:$0xff] %vm520, %v4527
        %4582 = vst.msk [vmem:[#allocation3 + $0x50] sm:$0xff] %vm520, %v4528
        %4583 = vst.msk [vmem:[#allocation3 + $0x58] sm:$0xff] %vm520, %v4529
        %4584 = vst.msk [vmem:[#allocation3 + $0x60] sm:$0xff] %vm520, %v4530
        %4585 = vst.msk [vmem:[#allocation3 + $0x68] sm:$0xff] %vm520, %v4531
        %4586 = vst.msk [vmem:[#allocation3 + $0x70] sm:$0xff] %vm520, %v4532
        %4587 = vst.msk [vmem:[#allocation3 + $0x78] sm:$0xff] %vm520, %v4533
        %4588 = vst.msk [vmem:[#allocation3 + $0x80] sm:$0xff] %vm520, %v4534
        %4589 = vst.msk [vmem:[#allocation3 + $0x88] sm:$0xff] %vm520, %v4535
        %4590 = vst.msk [vmem:[#allocation3 + $0x90] sm:$0xff] %vm520, %v4536
        %4591 = vst.msk [vmem:[#allocation3 + $0x98] sm:$0xff] %vm520, %v4537
        %4592 = vst.msk [vmem:[#allocation3 + $0xa0] sm:$0xff] %vm520, %v4538
        %4593 = vst.msk [vmem:[#allocation3 + $0xa8] sm:$0xff] %vm520, %v4539
        %4594 = vst.msk [vmem:[#allocation3 + $0xb0] sm:$0xff] %vm520, %v4540
        %4595 = vst.msk [vmem:[#allocation3 + $0xb8] sm:$0xff] %vm520, %v4541
        %4596 = vst.msk [vmem:[#allocation3 + $0xc0] sm:$0xff] %vm520, %v4542
        %4597 = vst.msk [vmem:[#allocation3 + $0xc8] sm:$0xff] %vm520, %v4543
        %4598 = vst.msk [vmem:[#allocation3 + $0xd0] sm:$0xff] %vm520, %v4544
        %4599 = vst.msk [vmem:[#allocation3 + $0xd8] sm:$0xff] %vm520, %v4545
        %4600 = vst.msk [vmem:[#allocation3 + $0xe0] sm:$0xff] %vm520, %v4546
        %4601 = vst.msk [vmem:[#allocation3 + $0xe8] sm:$0xff] %vm520, %v4547
        %4602 = vst.msk [vmem:[#allocation3 + $0xf0] sm:$0xff] %vm520, %v4548
        %4603 = vst.msk [vmem:[#allocation3 + $0xf8] sm:$0xff] %vm520, %v4549
        %4604 = vst.msk [vmem:[#allocation3 + $0x100] sm:$0xff] %vm520, %v4550
        %4605 = vst.msk [vmem:[#allocation3 + $0x108] sm:$0xff] %vm520, %v4551
        %4606 = vst.msk [vmem:[#allocation3 + $0x110] sm:$0xff] %vm520, %v4552
        %4607 = vst.msk [vmem:[#allocation3 + $0x118] sm:$0xff] %vm520, %v4553
        %4608 = vst.msk [vmem:[#allocation3 + $0x120] sm:$0xff] %vm520, %v4554
        %4609 = vst.msk [vmem:[#allocation3 + $0x128] sm:$0xff] %vm520, %v4555
        %4610 = vst.msk [vmem:[#allocation3 + $0x130] sm:$0xff] %vm520, %v4556
        %4611 = vst.msk [vmem:[#allocation3 + $0x138] sm:$0xff] %vm520, %v4557
        %4612 = vst.msk [vmem:[#allocation3 + $0x140] sm:$0xff] %vm520, %v4558
        %4613 = vst.msk [vmem:[#allocation3 + $0x148] sm:$0xff] %vm520, %v4559
        %4614 = vst.msk [vmem:[#allocation3 + $0x150] sm:$0xff] %vm520, %v4560
        %4615 = vst.msk [vmem:[#allocation3 + $0x158] sm:$0xff] %vm520, %v4561
        %4616 = vst.msk [vmem:[#allocation3 + $0x160] sm:$0xff] %vm520, %v4562
        %4617 = vst.msk [vmem:[#allocation3 + $0x168] sm:$0xff] %vm520, %v4563
        %4618 = vst.msk [vmem:[#allocation3 + $0x170] sm:$0xff] %vm520, %v4564
        %4619 = vst.msk [vmem:[#allocation3 + $0x178] sm:$0xff] %vm520, %v4565
        %4620 = vst.msk [vmem:[#allocation3 + $0x180] sm:$0xff] %vm520, %v4566
        %4621 = vst.msk [vmem:[#allocation3 + $0x188] sm:$0xff] %vm520, %v4567
        %4622 = vst.msk [vmem:[#allocation3 + $0x190] sm:$0xff] %vm520, %v4568
        %4623 = vst.msk [vmem:[#allocation3 + $0x198] sm:$0xff] %vm520, %v4569
        %4624 = vst.msk [vmem:[#allocation3 + $0x1a0] sm:$0xff] %vm520, %v4570
        %4625 = vst.msk [vmem:[#allocation3 + $0x1a8] sm:$0xff] %vm520, %v4571
        %v4626 = vld [vmem:[%s2 + $0xe0] sm:$0xf]
        %v4627 = vld [vmem:[%s2 + $0xe4] sm:$0xf]
        %v4628 = vld [vmem:[%s2 + $0xe8] sm:$0xf]
        %v4629 = vld [vmem:[%s2 + $0xec] sm:$0xf]
        %v4630 = vld [vmem:[%s2 + $0xf0] sm:$0xf]
        %v4631 = vld [vmem:[%s2 + $0xf4] sm:$0xf]
        %v4632 = vld [vmem:[%s2 + $0xf8] sm:$0xf]
        %v4633 = vld [vmem:[%s2 + $0xfc] sm:$0xf]
        %v4642 = vunpack.c.l.b16 %v4626
        %v4643 = vunpack.c.l.b16 %v4627
        %v4644 = vunpack.c.l.b16 %v4628
        %v4645 = vunpack.c.l.b16 %v4629
        %v4646 = vunpack.c.l.b16 %v4630
        %v4647 = vunpack.c.l.b16 %v4631
        %v4648 = vunpack.c.l.b16 %v4632
        %v4649 = vunpack.c.l.b16 %v4633
        %v4650 = vpack.c.b16 %v4643, %v4642
        %v4651 = vpack.c.b16 %v4645, %v4644
        %v4652 = vpack.c.b16 %v4647, %v4646
        %v4653 = vpack.c.b16 %v4649, %v4648
        %4658 = vmatprep.subr.bf16.mxu0 0
        %4659 = vmatpush1.bf16.msra.mxu0 0
        %4660 = vmatprep.subr.bf16.mxu0 0
        %4661 = vmatpush1.bf16.msra.mxu0 0
        %4662 = vmatprep.subr.bf16.mxu0 0
        %4663 = vmatpush1.bf16.msra.mxu0 0
        %4664 = vmatprep.subr.bf16.mxu0 0
        %4665 = vmatpush1.bf16.msra.mxu0 0
        %4666 = vmatprep.subr.bf16.mxu0 0
        %4667 = vmatpush1.bf16.msra.mxu0 %v4653
        %4668 = vmatprep.subr.bf16.mxu0 0
        %4669 = vmatpush1.bf16.msra.mxu0 %v4652
        %4670 = vmatprep.subr.bf16.mxu0 0
        %4671 = vmatpush1.bf16.msra.mxu0 %v4651
        %4672 = vmatprep.subr.bf16.mxu0 0
        %4673 = vmatpush1.bf16.msra.mxu0 %v4650
        %4674 = vmatprep.subr.bf16.mxu0 0
        %4675 = vmatpush2.bf16.msra.mxu0 0
        %4676 = vmatprep.subr.bf16.mxu0 0
        %4677 = vmatpush2.bf16.msra.mxu0 0
        %4678 = vmatprep.subr.bf16.mxu0 0
        %4679 = vmatpush2.bf16.msra.mxu0 0
        %4680 = vmatprep.subr.bf16.mxu0 0
        %4681 = vmatpush2.bf16.msra.mxu0 0
        %4682 = vmatprep.subr.bf16.mxu0 0
        %4683 = vmatpush2.bf16.msra.mxu0 0
        %4684 = vmatprep.subr.bf16.mxu0 0
        %4685 = vmatpush2.bf16.msra.mxu0 0
        %4686 = vmatprep.subr.bf16.mxu0 0
        %4687 = vmatpush2.bf16.msra.mxu0 0
        %4688 = vmatprep.subr.bf16.mxu0 0
        %4689 = vmatpush2.bf16.msra.mxu0 0
        %4690 = vmatprep.mubr.bf16.mxu0 0
        %4691 = vmatmul.mubr.bf16.gmra.mxu0 %v1041
        %v4692 = vpop.f32.mrf.mxu0
        %v4693 = vadd.f32 0.0, %v4692
        %v4694 = vpop.f32.mrf.mxu0
        %v4695 = vpop.f32.mrf.mxu0
        %v4696 = vadd.f32 0.0, %v4695
        %v4697 = vpop.f32.mrf.mxu0
        %4698 = vmatprep.mubr.bf16.mxu0 0
        %4699 = vmatmul.mubr.bf16.gmra.mxu0 %v1044
        %v4700 = vpop.f32.mrf.mxu0
        %v4701 = vadd.f32 0.0, %v4700
        %v4702 = vpop.f32.mrf.mxu0
        %v4703 = vpop.f32.mrf.mxu0
        %v4704 = vadd.f32 0.0, %v4703
        %v4705 = vpop.f32.mrf.mxu0
        %4706 = vmatprep.mubr.bf16.mxu0 0
        %4707 = vmatmul.mubr.bf16.gmra.mxu0 %v1047
        %v4708 = vpop.f32.mrf.mxu0
        %v4709 = vadd.f32 0.0, %v4708
        %v4710 = vpop.f32.mrf.mxu0
        %v4711 = vpop.f32.mrf.mxu0
        %v4712 = vadd.f32 0.0, %v4711
        %v4713 = vpop.f32.mrf.mxu0
        %4714 = vmatprep.mubr.bf16.mxu0 0
        %4715 = vmatmul.mubr.bf16.gmra.mxu0 %v1050
        %v4716 = vpop.f32.mrf.mxu0
        %v4717 = vadd.f32 0.0, %v4716
        %v4718 = vpop.f32.mrf.mxu0
        %v4719 = vpop.f32.mrf.mxu0
        %v4720 = vadd.f32 0.0, %v4719
        %v4721 = vpop.f32.mrf.mxu0
        %4722 = vmatprep.mubr.bf16.mxu0 0
        %4723 = vmatmul.mubr.bf16.gmra.mxu0 %v1053
        %v4724 = vpop.f32.mrf.mxu0
        %v4725 = vadd.f32 0.0, %v4724
        %v4726 = vpop.f32.mrf.mxu0
        %v4727 = vpop.f32.mrf.mxu0
        %v4728 = vadd.f32 0.0, %v4727
        %v4729 = vpop.f32.mrf.mxu0
        %4730 = vmatprep.mubr.bf16.mxu0 0
        %4731 = vmatmul.mubr.bf16.gmra.mxu0 %v1056
        %v4732 = vpop.f32.mrf.mxu0
        %v4733 = vadd.f32 0.0, %v4732
        %v4734 = vpop.f32.mrf.mxu0
        %v4735 = vpop.f32.mrf.mxu0
        %v4736 = vadd.f32 0.0, %v4735
        %v4737 = vpop.f32.mrf.mxu0
        %4738 = vmatprep.mubr.bf16.mxu0 0
        %4739 = vmatmul.mubr.bf16.gmra.mxu0 %v1059
        %v4740 = vpop.f32.mrf.mxu0
        %v4741 = vadd.f32 0.0, %v4740
        %v4742 = vpop.f32.mrf.mxu0
        %v4743 = vpop.f32.mrf.mxu0
        %v4744 = vadd.f32 0.0, %v4743
        %v4745 = vpop.f32.mrf.mxu0
        %4746 = vmatprep.mubr.bf16.mxu0 0
        %4747 = vmatmul.mubr.bf16.gmra.mxu0 %v1062
        %v4748 = vpop.f32.mrf.mxu0
        %v4749 = vadd.f32 0.0, %v4748
        %v4750 = vpop.f32.mrf.mxu0
        %v4751 = vpop.f32.mrf.mxu0
        %v4752 = vadd.f32 0.0, %v4751
        %v4753 = vpop.f32.mrf.mxu0
        %4754 = vmatprep.mubr.bf16.mxu0 0
        %4755 = vmatmul.mubr.bf16.gmra.mxu0 %v1065
        %v4756 = vpop.f32.mrf.mxu0
        %v4757 = vadd.f32 0.0, %v4756
        %v4758 = vpop.f32.mrf.mxu0
        %v4759 = vpop.f32.mrf.mxu0
        %v4760 = vadd.f32 0.0, %v4759
        %v4761 = vpop.f32.mrf.mxu0
        %4762 = vmatprep.mubr.bf16.mxu0 0
        %4763 = vmatmul.mubr.bf16.gmra.mxu0 %v1068
        %v4764 = vpop.f32.mrf.mxu0
        %v4765 = vadd.f32 0.0, %v4764
        %v4766 = vpop.f32.mrf.mxu0
        %v4767 = vpop.f32.mrf.mxu0
        %v4768 = vadd.f32 0.0, %v4767
        %v4769 = vpop.f32.mrf.mxu0
        %4770 = vmatprep.mubr.bf16.mxu0 0
        %4771 = vmatmul.mubr.bf16.gmra.mxu0 %v1071
        %v4772 = vpop.f32.mrf.mxu0
        %v4773 = vadd.f32 0.0, %v4772
        %v4774 = vpop.f32.mrf.mxu0
        %v4775 = vpop.f32.mrf.mxu0
        %v4776 = vadd.f32 0.0, %v4775
        %v4777 = vpop.f32.mrf.mxu0
        %4778 = vmatprep.mubr.bf16.mxu0 0
        %4779 = vmatmul.mubr.bf16.gmra.mxu0 %v1074
        %v4780 = vpop.f32.mrf.mxu0
        %v4781 = vadd.f32 0.0, %v4780
        %v4782 = vpop.f32.mrf.mxu0
        %v4783 = vpop.f32.mrf.mxu0
        %v4784 = vadd.f32 0.0, %v4783
        %v4785 = vpop.f32.mrf.mxu0
        %4786 = vmatprep.mubr.bf16.mxu0 0
        %4787 = vmatmul.mubr.bf16.gmra.mxu0 %v1077
        %v4788 = vpop.f32.mrf.mxu0
        %v4789 = vadd.f32 0.0, %v4788
        %v4790 = vpop.f32.mrf.mxu0
        %v4791 = vpop.f32.mrf.mxu0
        %v4792 = vadd.f32 0.0, %v4791
        %v4793 = vpop.f32.mrf.mxu0
        %4794 = vmatprep.mubr.bf16.mxu0 0
        %4795 = vmatmul.mubr.bf16.gmra.mxu0 %v1080
        %v4796 = vpop.f32.mrf.mxu0
        %v4797 = vadd.f32 0.0, %v4796
        %v4798 = vpop.f32.mrf.mxu0
        %v4799 = vpop.f32.mrf.mxu0
        %v4800 = vadd.f32 0.0, %v4799
        %v4801 = vpop.f32.mrf.mxu0
        %4802 = vmatprep.mubr.bf16.mxu0 0
        %4803 = vmatmul.mubr.bf16.gmra.mxu0 %v1083
        %v4804 = vpop.f32.mrf.mxu0
        %v4805 = vadd.f32 0.0, %v4804
        %v4806 = vpop.f32.mrf.mxu0
        %v4807 = vpop.f32.mrf.mxu0
        %v4808 = vadd.f32 0.0, %v4807
        %v4809 = vpop.f32.mrf.mxu0
        %4810 = vmatprep.mubr.bf16.mxu0 0
        %4811 = vmatmul.mubr.bf16.gmra.mxu0 %v1086
        %v4812 = vpop.f32.mrf.mxu0
        %v4813 = vadd.f32 0.0, %v4812
        %v4814 = vpop.f32.mrf.mxu0
        %v4815 = vpop.f32.mrf.mxu0
        %v4816 = vadd.f32 0.0, %v4815
        %v4817 = vpop.f32.mrf.mxu0
        %4818 = vmatprep.mubr.bf16.mxu0 0
        %4819 = vmatmul.mubr.bf16.gmra.mxu0 %v1089
        %v4820 = vpop.f32.mrf.mxu0
        %v4821 = vadd.f32 0.0, %v4820
        %v4822 = vpop.f32.mrf.mxu0
        %v4823 = vpop.f32.mrf.mxu0
        %v4824 = vadd.f32 0.0, %v4823
        %v4825 = vpop.f32.mrf.mxu0
        %4826 = vmatprep.mubr.bf16.mxu0 0
        %4827 = vmatmul.mubr.bf16.gmra.mxu0 %v1092
        %v4828 = vpop.f32.mrf.mxu0
        %v4829 = vadd.f32 0.0, %v4828
        %v4830 = vpop.f32.mrf.mxu0
        %v4831 = vpop.f32.mrf.mxu0
        %v4832 = vadd.f32 0.0, %v4831
        %v4833 = vpop.f32.mrf.mxu0
        %4834 = vmatprep.mubr.bf16.mxu0 0
        %4835 = vmatmul.mubr.bf16.gmra.mxu0 %v1095
        %v4836 = vpop.f32.mrf.mxu0
        %v4837 = vadd.f32 0.0, %v4836
        %v4838 = vpop.f32.mrf.mxu0
        %v4839 = vpop.f32.mrf.mxu0
        %v4840 = vadd.f32 0.0, %v4839
        %v4841 = vpop.f32.mrf.mxu0
        %4842 = vmatprep.mubr.bf16.mxu0 0
        %4843 = vmatmul.mubr.bf16.gmra.mxu0 %v1098
        %v4844 = vpop.f32.mrf.mxu0
        %v4845 = vadd.f32 0.0, %v4844
        %v4846 = vpop.f32.mrf.mxu0
        %v4847 = vpop.f32.mrf.mxu0
        %v4848 = vadd.f32 0.0, %v4847
        %v4849 = vpop.f32.mrf.mxu0
        %4850 = vmatprep.mubr.bf16.mxu0 0
        %4851 = vmatmul.mubr.bf16.gmra.mxu0 %v1101
        %v4852 = vpop.f32.mrf.mxu0
        %v4853 = vadd.f32 0.0, %v4852
        %v4854 = vpop.f32.mrf.mxu0
        %v4855 = vpop.f32.mrf.mxu0
        %v4856 = vadd.f32 0.0, %v4855
        %v4857 = vpop.f32.mrf.mxu0
        %4858 = vmatprep.mubr.bf16.mxu0 0
        %4859 = vmatmul.mubr.bf16.gmra.mxu0 %v1104
        %v4860 = vpop.f32.mrf.mxu0
        %v4861 = vadd.f32 0.0, %v4860
        %v4862 = vpop.f32.mrf.mxu0
        %v4863 = vpop.f32.mrf.mxu0
        %v4864 = vadd.f32 0.0, %v4863
        %v4865 = vpop.f32.mrf.mxu0
        %4866 = vmatprep.mubr.bf16.mxu0 0
        %4867 = vmatmul.mubr.bf16.gmra.mxu0 %v1107
        %v4868 = vpop.f32.mrf.mxu0
        %v4869 = vadd.f32 0.0, %v4868
        %v4870 = vpop.f32.mrf.mxu0
        %v4871 = vpop.f32.mrf.mxu0
        %v4872 = vadd.f32 0.0, %v4871
        %v4873 = vpop.f32.mrf.mxu0
        %4874 = vmatprep.mubr.bf16.mxu0 0
        %4875 = vmatmul.mubr.bf16.gmra.mxu0 %v1110
        %v4876 = vpop.f32.mrf.mxu0
        %v4877 = vadd.f32 0.0, %v4876
        %v4878 = vpop.f32.mrf.mxu0
        %v4879 = vpop.f32.mrf.mxu0
        %v4880 = vadd.f32 0.0, %v4879
        %v4881 = vpop.f32.mrf.mxu0
        %4882 = vmatprep.mubr.bf16.mxu0 0
        %4883 = vmatmul.mubr.bf16.gmra.mxu0 %v1113
        %v4884 = vpop.f32.mrf.mxu0
        %v4885 = vadd.f32 0.0, %v4884
        %v4886 = vpop.f32.mrf.mxu0
        %v4887 = vpop.f32.mrf.mxu0
        %v4888 = vadd.f32 0.0, %v4887
        %v4889 = vpop.f32.mrf.mxu0
        %4890 = vmatprep.mubr.bf16.mxu0 0
        %4891 = vmatmul.mubr.bf16.gmra.mxu0 %v1116
        %v4892 = vpop.f32.mrf.mxu0
        %v4893 = vadd.f32 0.0, %v4892
        %v4894 = vpop.f32.mrf.mxu0
        %v4895 = vpop.f32.mrf.mxu0
        %v4896 = vadd.f32 0.0, %v4895
        %v4897 = vpop.f32.mrf.mxu0
        %4898 = vmatprep.mubr.bf16.mxu0 0
        %4899 = vmatmul.mubr.bf16.gmra.mxu0 %v1119
        %v4900 = vpop.f32.mrf.mxu0
        %v4901 = vadd.f32 0.0, %v4900
        %v4902 = vpop.f32.mrf.mxu0
        %v4903 = vpop.f32.mrf.mxu0
        %v4904 = vadd.f32 0.0, %v4903
        %v4905 = vpop.f32.mrf.mxu0
        %4906 = vdwg.mxu0
        %v4907 = vld [vmem:[#allocation3] sm:$0xff]
        %v4908 = vld [vmem:[#allocation3 + $0x8] sm:$0xff]
        %v4909 = vld [vmem:[#allocation3 + $0x10] sm:$0xff]
        %v4910 = vld [vmem:[#allocation3 + $0x18] sm:$0xff]
        %v4911 = vld [vmem:[#allocation3 + $0x20] sm:$0xff]
        %v4912 = vld [vmem:[#allocation3 + $0x28] sm:$0xff]
        %v4913 = vld [vmem:[#allocation3 + $0x30] sm:$0xff]
        %v4914 = vld [vmem:[#allocation3 + $0x38] sm:$0xff]
        %v4915 = vld [vmem:[#allocation3 + $0x40] sm:$0xff]
        %v4916 = vld [vmem:[#allocation3 + $0x48] sm:$0xff]
        %v4917 = vld [vmem:[#allocation3 + $0x50] sm:$0xff]
        %v4918 = vld [vmem:[#allocation3 + $0x58] sm:$0xff]
        %v4919 = vld [vmem:[#allocation3 + $0x60] sm:$0xff]
        %v4920 = vld [vmem:[#allocation3 + $0x68] sm:$0xff]
        %v4921 = vld [vmem:[#allocation3 + $0x70] sm:$0xff]
        %v4922 = vld [vmem:[#allocation3 + $0x78] sm:$0xff]
        %v4923 = vld [vmem:[#allocation3 + $0x80] sm:$0xff]
        %v4924 = vld [vmem:[#allocation3 + $0x88] sm:$0xff]
        %v4925 = vld [vmem:[#allocation3 + $0x90] sm:$0xff]
        %v4926 = vld [vmem:[#allocation3 + $0x98] sm:$0xff]
        %v4927 = vld [vmem:[#allocation3 + $0xa0] sm:$0xff]
        %v4928 = vld [vmem:[#allocation3 + $0xa8] sm:$0xff]
        %v4929 = vld [vmem:[#allocation3 + $0xb0] sm:$0xff]
        %v4930 = vld [vmem:[#allocation3 + $0xb8] sm:$0xff]
        %v4931 = vld [vmem:[#allocation3 + $0xc0] sm:$0xff]
        %v4932 = vld [vmem:[#allocation3 + $0xc8] sm:$0xff]
        %v4933 = vld [vmem:[#allocation3 + $0xd0] sm:$0xff]
        %v4934 = vld [vmem:[#allocation3 + $0xd8] sm:$0xff]
        %v4935 = vld [vmem:[#allocation3 + $0xe0] sm:$0xff]
        %v4936 = vld [vmem:[#allocation3 + $0xe8] sm:$0xff]
        %v4937 = vld [vmem:[#allocation3 + $0xf0] sm:$0xff]
        %v4938 = vld [vmem:[#allocation3 + $0xf8] sm:$0xff]
        %v4939 = vld [vmem:[#allocation3 + $0x100] sm:$0xff]
        %v4940 = vld [vmem:[#allocation3 + $0x108] sm:$0xff]
        %v4941 = vld [vmem:[#allocation3 + $0x110] sm:$0xff]
        %v4942 = vld [vmem:[#allocation3 + $0x118] sm:$0xff]
        %v4943 = vld [vmem:[#allocation3 + $0x120] sm:$0xff]
        %v4944 = vld [vmem:[#allocation3 + $0x128] sm:$0xff]
        %v4945 = vld [vmem:[#allocation3 + $0x130] sm:$0xff]
        %v4946 = vld [vmem:[#allocation3 + $0x138] sm:$0xff]
        %v4947 = vld [vmem:[#allocation3 + $0x140] sm:$0xff]
        %v4948 = vld [vmem:[#allocation3 + $0x148] sm:$0xff]
        %v4949 = vld [vmem:[#allocation3 + $0x150] sm:$0xff]
        %v4950 = vld [vmem:[#allocation3 + $0x158] sm:$0xff]
        %v4951 = vld [vmem:[#allocation3 + $0x160] sm:$0xff]
        %v4952 = vld [vmem:[#allocation3 + $0x168] sm:$0xff]
        %v4953 = vld [vmem:[#allocation3 + $0x170] sm:$0xff]
        %v4954 = vld [vmem:[#allocation3 + $0x178] sm:$0xff]
        %v4955 = vld [vmem:[#allocation3 + $0x180] sm:$0xff]
        %v4956 = vld [vmem:[#allocation3 + $0x188] sm:$0xff]
        %v4957 = vld [vmem:[#allocation3 + $0x190] sm:$0xff]
        %v4958 = vld [vmem:[#allocation3 + $0x198] sm:$0xff]
        %v4959 = vld [vmem:[#allocation3 + $0x1a0] sm:$0xff]
        %v4960 = vld [vmem:[#allocation3 + $0x1a8] sm:$0xff]
        %v4961 = vadd.f32 %v4907, %v4717
        %v4962 = vadd.f32 %v4908, %v4720
        %v4963 = vadd.f32 %v4909, %v4725
        %v4964 = vadd.f32 %v4910, %v4728
        %v4965 = vadd.f32 %v4911, %v4733
        %v4966 = vadd.f32 %v4912, %v4736
        %v4967 = vadd.f32 %v4913, %v4741
        %v4968 = vadd.f32 %v4914, %v4744
        %v4969 = vadd.f32 %v4915, %v4749
        %v4970 = vadd.f32 %v4916, %v4752
        %v4971 = vadd.f32 %v4917, %v4757
        %v4972 = vadd.f32 %v4918, %v4760
        %v4973 = vadd.f32 %v4919, %v4765
        %v4974 = vadd.f32 %v4920, %v4768
        %v4975 = vadd.f32 %v4921, %v4773
        %v4976 = vadd.f32 %v4922, %v4776
        %v4977 = vadd.f32 %v4923, %v4781
        %v4978 = vadd.f32 %v4924, %v4784
        %v4979 = vadd.f32 %v4925, %v4789
        %v4980 = vadd.f32 %v4926, %v4792
        %v4981 = vadd.f32 %v4927, %v4797
        %v4982 = vadd.f32 %v4928, %v4800
        %v4983 = vadd.f32 %v4929, %v4805
        %v4984 = vadd.f32 %v4930, %v4808
        %v4985 = vadd.f32 %v4931, %v4813
        %v4986 = vadd.f32 %v4932, %v4816
        %v4987 = vadd.f32 %v4933, %v4821
        %v4988 = vadd.f32 %v4934, %v4824
        %v4989 = vadd.f32 %v4935, %v4829
        %v4990 = vadd.f32 %v4936, %v4832
        %v4991 = vadd.f32 %v4937, %v4837
        %v4992 = vadd.f32 %v4938, %v4840
        %v4993 = vadd.f32 %v4939, %v4845
        %v4994 = vadd.f32 %v4940, %v4848
        %v4995 = vadd.f32 %v4941, %v4853
        %v4996 = vadd.f32 %v4942, %v4856
        %v4997 = vadd.f32 %v4943, %v4861
        %v4998 = vadd.f32 %v4944, %v4864
        %v4999 = vadd.f32 %v4945, %v4869
        %v5000 = vadd.f32 %v4946, %v4872
        %v5001 = vadd.f32 %v4947, %v4877
        %v5002 = vadd.f32 %v4948, %v4880
        %v5003 = vadd.f32 %v4949, %v4885
        %v5004 = vadd.f32 %v4950, %v4888
        %v5005 = vadd.f32 %v4951, %v4893
        %v5006 = vadd.f32 %v4952, %v4896
        %v5007 = vadd.f32 %v4953, %v4901
        %v5008 = vadd.f32 %v4954, %v4904
        %v5009 = vadd.f32 %v4955, %v4693
        %v5010 = vadd.f32 %v4956, %v4696
        %v5011 = vadd.f32 %v4957, %v4701
        %v5012 = vadd.f32 %v4958, %v4704
        %v5013 = vadd.f32 %v4959, %v4709
        %v5014 = vadd.f32 %v4960, %v4712
        %5015 = vst.msk [vmem:[#allocation3] sm:$0xff] %vm520, %v4961
        %5016 = vst.msk [vmem:[#allocation3 + $0x8] sm:$0xff] %vm520, %v4962
        %5017 = vst.msk [vmem:[#allocation3 + $0x10] sm:$0xff] %vm520, %v4963
        %5018 = vst.msk [vmem:[#allocation3 + $0x18] sm:$0xff] %vm520, %v4964
        %5019 = vst.msk [vmem:[#allocation3 + $0x20] sm:$0xff] %vm520, %v4965
        %5020 = vst.msk [vmem:[#allocation3 + $0x28] sm:$0xff] %vm520, %v4966
        %5021 = vst.msk [vmem:[#allocation3 + $0x30] sm:$0xff] %vm520, %v4967
        %5022 = vst.msk [vmem:[#allocation3 + $0x38] sm:$0xff] %vm520, %v4968
        %5023 = vst.msk [vmem:[#allocation3 + $0x40] sm:$0xff] %vm520, %v4969
        %5024 = vst.msk [vmem:[#allocation3 + $0x48] sm:$0xff] %vm520, %v4970
        %5025 = vst.msk [vmem:[#allocation3 + $0x50] sm:$0xff] %vm520, %v4971
        %5026 = vst.msk [vmem:[#allocation3 + $0x58] sm:$0xff] %vm520, %v4972
        %5027 = vst.msk [vmem:[#allocation3 + $0x60] sm:$0xff] %vm520, %v4973
        %5028 = vst.msk [vmem:[#allocation3 + $0x68] sm:$0xff] %vm520, %v4974
        %5029 = vst.msk [vmem:[#allocation3 + $0x70] sm:$0xff] %vm520, %v4975
        %5030 = vst.msk [vmem:[#allocation3 + $0x78] sm:$0xff] %vm520, %v4976
        %5031 = vst.msk [vmem:[#allocation3 + $0x80] sm:$0xff] %vm520, %v4977
        %5032 = vst.msk [vmem:[#allocation3 + $0x88] sm:$0xff] %vm520, %v4978
        %5033 = vst.msk [vmem:[#allocation3 + $0x90] sm:$0xff] %vm520, %v4979
        %5034 = vst.msk [vmem:[#allocation3 + $0x98] sm:$0xff] %vm520, %v4980
        %5035 = vst.msk [vmem:[#allocation3 + $0xa0] sm:$0xff] %vm520, %v4981
        %5036 = vst.msk [vmem:[#allocation3 + $0xa8] sm:$0xff] %vm520, %v4982
        %5037 = vst.msk [vmem:[#allocation3 + $0xb0] sm:$0xff] %vm520, %v4983
        %5038 = vst.msk [vmem:[#allocation3 + $0xb8] sm:$0xff] %vm520, %v4984
        %5039 = vst.msk [vmem:[#allocation3 + $0xc0] sm:$0xff] %vm520, %v4985
        %5040 = vst.msk [vmem:[#allocation3 + $0xc8] sm:$0xff] %vm520, %v4986
        %5041 = vst.msk [vmem:[#allocation3 + $0xd0] sm:$0xff] %vm520, %v4987
        %5042 = vst.msk [vmem:[#allocation3 + $0xd8] sm:$0xff] %vm520, %v4988
        %5043 = vst.msk [vmem:[#allocation3 + $0xe0] sm:$0xff] %vm520, %v4989
        %5044 = vst.msk [vmem:[#allocation3 + $0xe8] sm:$0xff] %vm520, %v4990
        %5045 = vst.msk [vmem:[#allocation3 + $0xf0] sm:$0xff] %vm520, %v4991
        %5046 = vst.msk [vmem:[#allocation3 + $0xf8] sm:$0xff] %vm520, %v4992
        %5047 = vst.msk [vmem:[#allocation3 + $0x100] sm:$0xff] %vm520, %v4993
        %5048 = vst.msk [vmem:[#allocation3 + $0x108] sm:$0xff] %vm520, %v4994
        %5049 = vst.msk [vmem:[#allocation3 + $0x110] sm:$0xff] %vm520, %v4995
        %5050 = vst.msk [vmem:[#allocation3 + $0x118] sm:$0xff] %vm520, %v4996
        %5051 = vst.msk [vmem:[#allocation3 + $0x120] sm:$0xff] %vm520, %v4997
        %5052 = vst.msk [vmem:[#allocation3 + $0x128] sm:$0xff] %vm520, %v4998
        %5053 = vst.msk [vmem:[#allocation3 + $0x130] sm:$0xff] %vm520, %v4999
        %5054 = vst.msk [vmem:[#allocation3 + $0x138] sm:$0xff] %vm520, %v5000
        %5055 = vst.msk [vmem:[#allocation3 + $0x140] sm:$0xff] %vm520, %v5001
        %5056 = vst.msk [vmem:[#allocation3 + $0x148] sm:$0xff] %vm520, %v5002
        %5057 = vst.msk [vmem:[#allocation3 + $0x150] sm:$0xff] %vm520, %v5003
        %5058 = vst.msk [vmem:[#allocation3 + $0x158] sm:$0xff] %vm520, %v5004
        %5059 = vst.msk [vmem:[#allocation3 + $0x160] sm:$0xff] %vm520, %v5005
        %5060 = vst.msk [vmem:[#allocation3 + $0x168] sm:$0xff] %vm520, %v5006
        %5061 = vst.msk [vmem:[#allocation3 + $0x170] sm:$0xff] %vm520, %v5007
        %5062 = vst.msk [vmem:[#allocation3 + $0x178] sm:$0xff] %vm520, %v5008
        %5063 = vst.msk [vmem:[#allocation3 + $0x180] sm:$0xff] %vm520, %v5009
        %5064 = vst.msk [vmem:[#allocation3 + $0x188] sm:$0xff] %vm520, %v5010
        %5065 = vst.msk [vmem:[#allocation3 + $0x190] sm:$0xff] %vm520, %v5011
        %5066 = vst.msk [vmem:[#allocation3 + $0x198] sm:$0xff] %vm520, %v5012
        %5067 = vst.msk [vmem:[#allocation3 + $0x1a0] sm:$0xff] %vm520, %v5013
        %5068 = vst.msk [vmem:[#allocation3 + $0x1a8] sm:$0xff] %vm520, %v5014
        %v5069 = vld [vmem:[%s2 + $0x100] sm:$0xf]
        %v5070 = vld [vmem:[%s2 + $0x104] sm:$0xf]
        %v5071 = vld [vmem:[%s2 + $0x108] sm:$0xf]
        %v5072 = vld [vmem:[%s2 + $0x10c] sm:$0xf]
        %v5073 = vld [vmem:[%s2 + $0x110] sm:$0xf]
        %v5074 = vld [vmem:[%s2 + $0x114] sm:$0xf]
        %v5075 = vld [vmem:[%s2 + $0x118] sm:$0xf]
        %v5076 = vld [vmem:[%s2 + $0x11c] sm:$0xf]
        %v5085 = vunpack.c.l.b16 %v5069
        %v5086 = vunpack.c.l.b16 %v5070
        %v5087 = vunpack.c.l.b16 %v5071
        %v5088 = vunpack.c.l.b16 %v5072
        %v5089 = vunpack.c.l.b16 %v5073
        %v5090 = vunpack.c.l.b16 %v5074
        %v5091 = vunpack.c.l.b16 %v5075
        %v5092 = vunpack.c.l.b16 %v5076
        %v5093 = vpack.c.b16 %v5086, %v5085
        %v5094 = vpack.c.b16 %v5088, %v5087
        %v5095 = vpack.c.b16 %v5090, %v5089
        %v5096 = vpack.c.b16 %v5092, %v5091
        %5101 = vmatprep.subr.bf16.mxu0 0
        %5102 = vmatpush1.bf16.msra.mxu0 0
        %5103 = vmatprep.subr.bf16.mxu0 0
        %5104 = vmatpush1.bf16.msra.mxu0 0
        %5105 = vmatprep.subr.bf16.mxu0 0
        %5106 = vmatpush1.bf16.msra.mxu0 0
        %5107 = vmatprep.subr.bf16.mxu0 0
        %5108 = vmatpush1.bf16.msra.mxu0 0
        %5109 = vmatprep.subr.bf16.mxu0 0
        %5110 = vmatpush1.bf16.msra.mxu0 %v5096
        %5111 = vmatprep.subr.bf16.mxu0 0
        %5112 = vmatpush1.bf16.msra.mxu0 %v5095
        %5113 = vmatprep.subr.bf16.mxu0 0
        %5114 = vmatpush1.bf16.msra.mxu0 %v5094
        %5115 = vmatprep.subr.bf16.mxu0 0
        %5116 = vmatpush1.bf16.msra.mxu0 %v5093
        %5117 = vmatprep.subr.bf16.mxu0 0
        %5118 = vmatpush2.bf16.msra.mxu0 0
        %5119 = vmatprep.subr.bf16.mxu0 0
        %5120 = vmatpush2.bf16.msra.mxu0 0
        %5121 = vmatprep.subr.bf16.mxu0 0
        %5122 = vmatpush2.bf16.msra.mxu0 0
        %5123 = vmatprep.subr.bf16.mxu0 0
        %5124 = vmatpush2.bf16.msra.mxu0 0
        %5125 = vmatprep.subr.bf16.mxu0 0
        %5126 = vmatpush2.bf16.msra.mxu0 0
        %5127 = vmatprep.subr.bf16.mxu0 0
        %5128 = vmatpush2.bf16.msra.mxu0 0
        %5129 = vmatprep.subr.bf16.mxu0 0
        %5130 = vmatpush2.bf16.msra.mxu0 0
        %5131 = vmatprep.subr.bf16.mxu0 0
        %5132 = vmatpush2.bf16.msra.mxu0 0
        %5133 = vmatprep.mubr.bf16.mxu0 0
        %5134 = vmatmul.mubr.bf16.gmra.mxu0 %v1041
        %v5135 = vpop.f32.mrf.mxu0
        %v5136 = vadd.f32 0.0, %v5135
        %v5137 = vpop.f32.mrf.mxu0
        %v5138 = vpop.f32.mrf.mxu0
        %v5139 = vadd.f32 0.0, %v5138
        %v5140 = vpop.f32.mrf.mxu0
        %5141 = vmatprep.mubr.bf16.mxu0 0
        %5142 = vmatmul.mubr.bf16.gmra.mxu0 %v1044
        %v5143 = vpop.f32.mrf.mxu0
        %v5144 = vadd.f32 0.0, %v5143
        %v5145 = vpop.f32.mrf.mxu0
        %v5146 = vpop.f32.mrf.mxu0
        %v5147 = vadd.f32 0.0, %v5146
        %v5148 = vpop.f32.mrf.mxu0
        %5149 = vmatprep.mubr.bf16.mxu0 0
        %5150 = vmatmul.mubr.bf16.gmra.mxu0 %v1047
        %v5151 = vpop.f32.mrf.mxu0
        %v5152 = vadd.f32 0.0, %v5151
        %v5153 = vpop.f32.mrf.mxu0
        %v5154 = vpop.f32.mrf.mxu0
        %v5155 = vadd.f32 0.0, %v5154
        %v5156 = vpop.f32.mrf.mxu0
        %5157 = vmatprep.mubr.bf16.mxu0 0
        %5158 = vmatmul.mubr.bf16.gmra.mxu0 %v1050
        %v5159 = vpop.f32.mrf.mxu0
        %v5160 = vadd.f32 0.0, %v5159
        %v5161 = vpop.f32.mrf.mxu0
        %v5162 = vpop.f32.mrf.mxu0
        %v5163 = vadd.f32 0.0, %v5162
        %v5164 = vpop.f32.mrf.mxu0
        %5165 = vmatprep.mubr.bf16.mxu0 0
        %5166 = vmatmul.mubr.bf16.gmra.mxu0 %v1053
        %v5167 = vpop.f32.mrf.mxu0
        %v5168 = vadd.f32 0.0, %v5167
        %v5169 = vpop.f32.mrf.mxu0
        %v5170 = vpop.f32.mrf.mxu0
        %v5171 = vadd.f32 0.0, %v5170
        %v5172 = vpop.f32.mrf.mxu0
        %5173 = vmatprep.mubr.bf16.mxu0 0
        %5174 = vmatmul.mubr.bf16.gmra.mxu0 %v1056
        %v5175 = vpop.f32.mrf.mxu0
        %v5176 = vadd.f32 0.0, %v5175
        %v5177 = vpop.f32.mrf.mxu0
        %v5178 = vpop.f32.mrf.mxu0
        %v5179 = vadd.f32 0.0, %v5178
        %v5180 = vpop.f32.mrf.mxu0
        %5181 = vmatprep.mubr.bf16.mxu0 0
        %5182 = vmatmul.mubr.bf16.gmra.mxu0 %v1059
        %v5183 = vpop.f32.mrf.mxu0
        %v5184 = vadd.f32 0.0, %v5183
        %v5185 = vpop.f32.mrf.mxu0
        %v5186 = vpop.f32.mrf.mxu0
        %v5187 = vadd.f32 0.0, %v5186
        %v5188 = vpop.f32.mrf.mxu0
        %5189 = vmatprep.mubr.bf16.mxu0 0
        %5190 = vmatmul.mubr.bf16.gmra.mxu0 %v1062
        %v5191 = vpop.f32.mrf.mxu0
        %v5192 = vadd.f32 0.0, %v5191
        %v5193 = vpop.f32.mrf.mxu0
        %v5194 = vpop.f32.mrf.mxu0
        %v5195 = vadd.f32 0.0, %v5194
        %v5196 = vpop.f32.mrf.mxu0
        %5197 = vmatprep.mubr.bf16.mxu0 0
        %5198 = vmatmul.mubr.bf16.gmra.mxu0 %v1065
        %v5199 = vpop.f32.mrf.mxu0
        %v5200 = vadd.f32 0.0, %v5199
        %v5201 = vpop.f32.mrf.mxu0
        %v5202 = vpop.f32.mrf.mxu0
        %v5203 = vadd.f32 0.0, %v5202
        %v5204 = vpop.f32.mrf.mxu0
        %5205 = vmatprep.mubr.bf16.mxu0 0
        %5206 = vmatmul.mubr.bf16.gmra.mxu0 %v1068
        %v5207 = vpop.f32.mrf.mxu0
        %v5208 = vadd.f32 0.0, %v5207
        %v5209 = vpop.f32.mrf.mxu0
        %v5210 = vpop.f32.mrf.mxu0
        %v5211 = vadd.f32 0.0, %v5210
        %v5212 = vpop.f32.mrf.mxu0
        %5213 = vmatprep.mubr.bf16.mxu0 0
        %5214 = vmatmul.mubr.bf16.gmra.mxu0 %v1071
        %v5215 = vpop.f32.mrf.mxu0
        %v5216 = vadd.f32 0.0, %v5215
        %v5217 = vpop.f32.mrf.mxu0
        %v5218 = vpop.f32.mrf.mxu0
        %v5219 = vadd.f32 0.0, %v5218
        %v5220 = vpop.f32.mrf.mxu0
        %5221 = vmatprep.mubr.bf16.mxu0 0
        %5222 = vmatmul.mubr.bf16.gmra.mxu0 %v1074
        %v5223 = vpop.f32.mrf.mxu0
        %v5224 = vadd.f32 0.0, %v5223
        %v5225 = vpop.f32.mrf.mxu0
        %v5226 = vpop.f32.mrf.mxu0
        %v5227 = vadd.f32 0.0, %v5226
        %v5228 = vpop.f32.mrf.mxu0
        %5229 = vmatprep.mubr.bf16.mxu0 0
        %5230 = vmatmul.mubr.bf16.gmra.mxu0 %v1077
        %v5231 = vpop.f32.mrf.mxu0
        %v5232 = vadd.f32 0.0, %v5231
        %v5233 = vpop.f32.mrf.mxu0
        %v5234 = vpop.f32.mrf.mxu0
        %v5235 = vadd.f32 0.0, %v5234
        %v5236 = vpop.f32.mrf.mxu0
        %5237 = vmatprep.mubr.bf16.mxu0 0
        %5238 = vmatmul.mubr.bf16.gmra.mxu0 %v1080
        %v5239 = vpop.f32.mrf.mxu0
        %v5240 = vadd.f32 0.0, %v5239
        %v5241 = vpop.f32.mrf.mxu0
        %v5242 = vpop.f32.mrf.mxu0
        %v5243 = vadd.f32 0.0, %v5242
        %v5244 = vpop.f32.mrf.mxu0
        %5245 = vmatprep.mubr.bf16.mxu0 0
        %5246 = vmatmul.mubr.bf16.gmra.mxu0 %v1083
        %v5247 = vpop.f32.mrf.mxu0
        %v5248 = vadd.f32 0.0, %v5247
        %v5249 = vpop.f32.mrf.mxu0
        %v5250 = vpop.f32.mrf.mxu0
        %v5251 = vadd.f32 0.0, %v5250
        %v5252 = vpop.f32.mrf.mxu0
        %5253 = vmatprep.mubr.bf16.mxu0 0
        %5254 = vmatmul.mubr.bf16.gmra.mxu0 %v1086
        %v5255 = vpop.f32.mrf.mxu0
        %v5256 = vadd.f32 0.0, %v5255
        %v5257 = vpop.f32.mrf.mxu0
        %v5258 = vpop.f32.mrf.mxu0
        %v5259 = vadd.f32 0.0, %v5258
        %v5260 = vpop.f32.mrf.mxu0
        %5261 = vmatprep.mubr.bf16.mxu0 0
        %5262 = vmatmul.mubr.bf16.gmra.mxu0 %v1089
        %v5263 = vpop.f32.mrf.mxu0
        %v5264 = vadd.f32 0.0, %v5263
        %v5265 = vpop.f32.mrf.mxu0
        %v5266 = vpop.f32.mrf.mxu0
        %v5267 = vadd.f32 0.0, %v5266
        %v5268 = vpop.f32.mrf.mxu0
        %5269 = vmatprep.mubr.bf16.mxu0 0
        %5270 = vmatmul.mubr.bf16.gmra.mxu0 %v1092
        %v5271 = vpop.f32.mrf.mxu0
        %v5272 = vadd.f32 0.0, %v5271
        %v5273 = vpop.f32.mrf.mxu0
        %v5274 = vpop.f32.mrf.mxu0
        %v5275 = vadd.f32 0.0, %v5274
        %v5276 = vpop.f32.mrf.mxu0
        %5277 = vmatprep.mubr.bf16.mxu0 0
        %5278 = vmatmul.mubr.bf16.gmra.mxu0 %v1095
        %v5279 = vpop.f32.mrf.mxu0
        %v5280 = vadd.f32 0.0, %v5279
        %v5281 = vpop.f32.mrf.mxu0
        %v5282 = vpop.f32.mrf.mxu0
        %v5283 = vadd.f32 0.0, %v5282
        %v5284 = vpop.f32.mrf.mxu0
        %5285 = vmatprep.mubr.bf16.mxu0 0
        %5286 = vmatmul.mubr.bf16.gmra.mxu0 %v1098
        %v5287 = vpop.f32.mrf.mxu0
        %v5288 = vadd.f32 0.0, %v5287
        %v5289 = vpop.f32.mrf.mxu0
        %v5290 = vpop.f32.mrf.mxu0
        %v5291 = vadd.f32 0.0, %v5290
        %v5292 = vpop.f32.mrf.mxu0
        %5293 = vmatprep.mubr.bf16.mxu0 0
        %5294 = vmatmul.mubr.bf16.gmra.mxu0 %v1101
        %v5295 = vpop.f32.mrf.mxu0
        %v5296 = vadd.f32 0.0, %v5295
        %v5297 = vpop.f32.mrf.mxu0
        %v5298 = vpop.f32.mrf.mxu0
        %v5299 = vadd.f32 0.0, %v5298
        %v5300 = vpop.f32.mrf.mxu0
        %5301 = vmatprep.mubr.bf16.mxu0 0
        %5302 = vmatmul.mubr.bf16.gmra.mxu0 %v1104
        %v5303 = vpop.f32.mrf.mxu0
        %v5304 = vadd.f32 0.0, %v5303
        %v5305 = vpop.f32.mrf.mxu0
        %v5306 = vpop.f32.mrf.mxu0
        %v5307 = vadd.f32 0.0, %v5306
        %v5308 = vpop.f32.mrf.mxu0
        %5309 = vmatprep.mubr.bf16.mxu0 0
        %5310 = vmatmul.mubr.bf16.gmra.mxu0 %v1107
        %v5311 = vpop.f32.mrf.mxu0
        %v5312 = vadd.f32 0.0, %v5311
        %v5313 = vpop.f32.mrf.mxu0
        %v5314 = vpop.f32.mrf.mxu0
        %v5315 = vadd.f32 0.0, %v5314
        %v5316 = vpop.f32.mrf.mxu0
        %5317 = vmatprep.mubr.bf16.mxu0 0
        %5318 = vmatmul.mubr.bf16.gmra.mxu0 %v1110
        %v5319 = vpop.f32.mrf.mxu0
        %v5320 = vadd.f32 0.0, %v5319
        %v5321 = vpop.f32.mrf.mxu0
        %v5322 = vpop.f32.mrf.mxu0
        %v5323 = vadd.f32 0.0, %v5322
        %v5324 = vpop.f32.mrf.mxu0
        %5325 = vmatprep.mubr.bf16.mxu0 0
        %5326 = vmatmul.mubr.bf16.gmra.mxu0 %v1113
        %v5327 = vpop.f32.mrf.mxu0
        %v5328 = vadd.f32 0.0, %v5327
        %v5329 = vpop.f32.mrf.mxu0
        %v5330 = vpop.f32.mrf.mxu0
        %v5331 = vadd.f32 0.0, %v5330
        %v5332 = vpop.f32.mrf.mxu0
        %5333 = vmatprep.mubr.bf16.mxu0 0
        %5334 = vmatmul.mubr.bf16.gmra.mxu0 %v1116
        %v5335 = vpop.f32.mrf.mxu0
        %v5336 = vadd.f32 0.0, %v5335
        %v5337 = vpop.f32.mrf.mxu0
        %v5338 = vpop.f32.mrf.mxu0
        %v5339 = vadd.f32 0.0, %v5338
        %v5340 = vpop.f32.mrf.mxu0
        %5341 = vmatprep.mubr.bf16.mxu0 0
        %5342 = vmatmul.mubr.bf16.gmra.mxu0 %v1119
        %v5343 = vpop.f32.mrf.mxu0
        %v5344 = vadd.f32 0.0, %v5343
        %v5345 = vpop.f32.mrf.mxu0
        %v5346 = vpop.f32.mrf.mxu0
        %v5347 = vadd.f32 0.0, %v5346
        %v5348 = vpop.f32.mrf.mxu0
        %5349 = vdwg.mxu0
        %v5350 = vrot.slane %v5136, 1
        %v5351 = vrot.slane %v5139, 1
        %v5352 = vrot.slane %v5144, 1
        %v5353 = vrot.slane %v5147, 1
        %v5354 = vrot.slane %v5152, 1
        %v5355 = vrot.slane %v5155, 1
        %v5356 = vrot.slane %v5160, 1
        %v5357 = vrot.slane %v5163, 1
        %v5358 = vrot.slane %v5168, 1
        %v5359 = vrot.slane %v5171, 1
        %v5360 = vrot.slane %v5176, 1
        %v5361 = vrot.slane %v5179, 1
        %v5362 = vrot.slane %v5184, 1
        %v5363 = vrot.slane %v5187, 1
        %v5364 = vrot.slane %v5192, 1
        %v5365 = vrot.slane %v5195, 1
        %v5366 = vrot.slane %v5200, 1
        %v5367 = vrot.slane %v5203, 1
        %v5368 = vrot.slane %v5208, 1
        %v5369 = vrot.slane %v5211, 1
        %v5370 = vrot.slane %v5216, 1
        %v5371 = vrot.slane %v5219, 1
        %v5372 = vrot.slane %v5224, 1
        %v5373 = vrot.slane %v5227, 1
        %v5374 = vrot.slane %v5232, 1
        %v5375 = vrot.slane %v5235, 1
        %v5376 = vrot.slane %v5240, 1
        %v5377 = vrot.slane %v5243, 1
        %v5378 = vrot.slane %v5248, 1
        %v5379 = vrot.slane %v5251, 1
        %v5380 = vrot.slane %v5256, 1
        %v5381 = vrot.slane %v5259, 1
        %v5382 = vrot.slane %v5264, 1
        %v5383 = vrot.slane %v5267, 1
        %v5384 = vrot.slane %v5272, 1
        %v5385 = vrot.slane %v5275, 1
        %v5386 = vrot.slane %v5280, 1
        %v5387 = vrot.slane %v5283, 1
        %v5388 = vrot.slane %v5288, 1
        %v5389 = vrot.slane %v5291, 1
        %v5390 = vrot.slane %v5296, 1
        %v5391 = vrot.slane %v5299, 1
        %v5392 = vrot.slane %v5304, 1
        %v5393 = vrot.slane %v5307, 1
        %v5394 = vrot.slane %v5312, 1
        %v5395 = vrot.slane %v5315, 1
        %v5396 = vrot.slane %v5320, 1
        %v5397 = vrot.slane %v5323, 1
        %v5398 = vrot.slane %v5328, 1
        %v5399 = vrot.slane %v5331, 1
        %v5400 = vrot.slane %v5336, 1
        %v5401 = vrot.slane %v5339, 1
        %v5402 = vrot.slane %v5344, 1
        %v5403 = vrot.slane %v5347, 1
        %v5404 = vsel %vm2313, %v5402, %v5403
        %v5405 = vsel %vm2313, %v5401, %v5402
        %v5406 = vsel %vm2313, %v5400, %v5401
        %v5407 = vsel %vm2313, %v5399, %v5400
        %v5408 = vsel %vm2313, %v5398, %v5399
        %v5409 = vsel %vm2313, %v5397, %v5398
        %v5410 = vsel %vm2313, %v5396, %v5397
        %v5411 = vsel %vm2313, %v5395, %v5396
        %v5412 = vsel %vm2313, %v5394, %v5395
        %v5413 = vsel %vm2313, %v5393, %v5394
        %v5414 = vsel %vm2313, %v5392, %v5393
        %v5415 = vsel %vm2313, %v5391, %v5392
        %v5416 = vsel %vm2313, %v5390, %v5391
        %v5417 = vsel %vm2313, %v5389, %v5390
        %v5418 = vsel %vm2313, %v5388, %v5389
        %v5419 = vsel %vm2313, %v5387, %v5388
        %v5420 = vsel %vm2313, %v5386, %v5387
        %v5421 = vsel %vm2313, %v5385, %v5386
        %v5422 = vsel %vm2313, %v5384, %v5385
        %v5423 = vsel %vm2313, %v5383, %v5384
        %v5424 = vsel %vm2313, %v5382, %v5383
        %v5425 = vsel %vm2313, %v5381, %v5382
        %v5426 = vsel %vm2313, %v5380, %v5381
        %v5427 = vsel %vm2313, %v5379, %v5380
        %v5428 = vsel %vm2313, %v5378, %v5379
        %v5429 = vsel %vm2313, %v5377, %v5378
        %v5430 = vsel %vm2313, %v5376, %v5377
        %v5431 = vsel %vm2313, %v5375, %v5376
        %v5432 = vsel %vm2313, %v5374, %v5375
        %v5433 = vsel %vm2313, %v5373, %v5374
        %v5434 = vsel %vm2313, %v5372, %v5373
        %v5435 = vsel %vm2313, %v5371, %v5372
        %v5436 = vsel %vm2313, %v5370, %v5371
        %v5437 = vsel %vm2313, %v5369, %v5370
        %v5438 = vsel %vm2313, %v5368, %v5369
        %v5439 = vsel %vm2313, %v5367, %v5368
        %v5440 = vsel %vm2313, %v5366, %v5367
        %v5441 = vsel %vm2313, %v5365, %v5366
        %v5442 = vsel %vm2313, %v5364, %v5365
        %v5443 = vsel %vm2313, %v5363, %v5364
        %v5444 = vsel %vm2313, %v5362, %v5363
        %v5445 = vsel %vm2313, %v5361, %v5362
        %v5446 = vsel %vm2313, %v5360, %v5361
        %v5447 = vsel %vm2313, %v5359, %v5360
        %v5448 = vsel %vm2313, %v5358, %v5359
        %v5449 = vsel %vm2313, %v5357, %v5358
        %v5450 = vsel %vm2313, %v5356, %v5357
        %v5451 = vsel %vm2313, %v5355, %v5356
        %v5452 = vsel %vm2313, %v5354, %v5355
        %v5453 = vsel %vm2313, %v5353, %v5354
        %v5454 = vsel %vm2313, %v5352, %v5353
        %v5455 = vsel %vm2313, %v5351, %v5352
        %v5456 = vsel %vm2313, %v5350, %v5351
        %v5457 = vsel %vm2313, %v5403, %v5350
        %v5458 = vld [vmem:[#allocation3] sm:$0xff]
        %v5459 = vld [vmem:[#allocation3 + $0x8] sm:$0xff]
        %v5460 = vld [vmem:[#allocation3 + $0x10] sm:$0xff]
        %v5461 = vld [vmem:[#allocation3 + $0x18] sm:$0xff]
        %v5462 = vld [vmem:[#allocation3 + $0x20] sm:$0xff]
        %v5463 = vld [vmem:[#allocation3 + $0x28] sm:$0xff]
        %v5464 = vld [vmem:[#allocation3 + $0x30] sm:$0xff]
        %v5465 = vld [vmem:[#allocation3 + $0x38] sm:$0xff]
        %v5466 = vld [vmem:[#allocation3 + $0x40] sm:$0xff]
        %v5467 = vld [vmem:[#allocation3 + $0x48] sm:$0xff]
        %v5468 = vld [vmem:[#allocation3 + $0x50] sm:$0xff]
        %v5469 = vld [vmem:[#allocation3 + $0x58] sm:$0xff]
        %v5470 = vld [vmem:[#allocation3 + $0x60] sm:$0xff]
        %v5471 = vld [vmem:[#allocation3 + $0x68] sm:$0xff]
        %v5472 = vld [vmem:[#allocation3 + $0x70] sm:$0xff]
        %v5473 = vld [vmem:[#allocation3 + $0x78] sm:$0xff]
        %v5474 = vld [vmem:[#allocation3 + $0x80] sm:$0xff]
        %v5475 = vld [vmem:[#allocation3 + $0x88] sm:$0xff]
        %v5476 = vld [vmem:[#allocation3 + $0x90] sm:$0xff]
        %v5477 = vld [vmem:[#allocation3 + $0x98] sm:$0xff]
        %v5478 = vld [vmem:[#allocation3 + $0xa0] sm:$0xff]
        %v5479 = vld [vmem:[#allocation3 + $0xa8] sm:$0xff]
        %v5480 = vld [vmem:[#allocation3 + $0xb0] sm:$0xff]
        %v5481 = vld [vmem:[#allocation3 + $0xb8] sm:$0xff]
        %v5482 = vld [vmem:[#allocation3 + $0xc0] sm:$0xff]
        %v5483 = vld [vmem:[#allocation3 + $0xc8] sm:$0xff]
        %v5484 = vld [vmem:[#allocation3 + $0xd0] sm:$0xff]
        %v5485 = vld [vmem:[#allocation3 + $0xd8] sm:$0xff]
        %v5486 = vld [vmem:[#allocation3 + $0xe0] sm:$0xff]
        %v5487 = vld [vmem:[#allocation3 + $0xe8] sm:$0xff]
        %v5488 = vld [vmem:[#allocation3 + $0xf0] sm:$0xff]
        %v5489 = vld [vmem:[#allocation3 + $0xf8] sm:$0xff]
        %v5490 = vld [vmem:[#allocation3 + $0x100] sm:$0xff]
        %v5491 = vld [vmem:[#allocation3 + $0x108] sm:$0xff]
        %v5492 = vld [vmem:[#allocation3 + $0x110] sm:$0xff]
        %v5493 = vld [vmem:[#allocation3 + $0x118] sm:$0xff]
        %v5494 = vld [vmem:[#allocation3 + $0x120] sm:$0xff]
        %v5495 = vld [vmem:[#allocation3 + $0x128] sm:$0xff]
        %v5496 = vld [vmem:[#allocation3 + $0x130] sm:$0xff]
        %v5497 = vld [vmem:[#allocation3 + $0x138] sm:$0xff]
        %v5498 = vld [vmem:[#allocation3 + $0x140] sm:$0xff]
        %v5499 = vld [vmem:[#allocation3 + $0x148] sm:$0xff]
        %v5500 = vld [vmem:[#allocation3 + $0x150] sm:$0xff]
        %v5501 = vld [vmem:[#allocation3 + $0x158] sm:$0xff]
        %v5502 = vld [vmem:[#allocation3 + $0x160] sm:$0xff]
        %v5503 = vld [vmem:[#allocation3 + $0x168] sm:$0xff]
        %v5504 = vld [vmem:[#allocation3 + $0x170] sm:$0xff]
        %v5505 = vld [vmem:[#allocation3 + $0x178] sm:$0xff]
        %v5506 = vld [vmem:[#allocation3 + $0x180] sm:$0xff]
        %v5507 = vld [vmem:[#allocation3 + $0x188] sm:$0xff]
        %v5508 = vld [vmem:[#allocation3 + $0x190] sm:$0xff]
        %v5509 = vld [vmem:[#allocation3 + $0x198] sm:$0xff]
        %v5510 = vld [vmem:[#allocation3 + $0x1a0] sm:$0xff]
        %v5511 = vld [vmem:[#allocation3 + $0x1a8] sm:$0xff]
        %v5512 = vadd.f32 %v5458, %v5450
        %v5513 = vadd.f32 %v5459, %v5449
        %v5514 = vadd.f32 %v5460, %v5448
        %v5515 = vadd.f32 %v5461, %v5447
        %v5516 = vadd.f32 %v5462, %v5446
        %v5517 = vadd.f32 %v5463, %v5445
        %v5518 = vadd.f32 %v5464, %v5444
        %v5519 = vadd.f32 %v5465, %v5443
        %v5520 = vadd.f32 %v5466, %v5442
        %v5521 = vadd.f32 %v5467, %v5441
        %v5522 = vadd.f32 %v5468, %v5440
        %v5523 = vadd.f32 %v5469, %v5439
        %v5524 = vadd.f32 %v5470, %v5438
        %v5525 = vadd.f32 %v5471, %v5437
        %v5526 = vadd.f32 %v5472, %v5436
        %v5527 = vadd.f32 %v5473, %v5435
        %v5528 = vadd.f32 %v5474, %v5434
        %v5529 = vadd.f32 %v5475, %v5433
        %v5530 = vadd.f32 %v5476, %v5432
        %v5531 = vadd.f32 %v5477, %v5431
        %v5532 = vadd.f32 %v5478, %v5430
        %v5533 = vadd.f32 %v5479, %v5429
        %v5534 = vadd.f32 %v5480, %v5428
        %v5535 = vadd.f32 %v5481, %v5427
        %v5536 = vadd.f32 %v5482, %v5426
        %v5537 = vadd.f32 %v5483, %v5425
        %v5538 = vadd.f32 %v5484, %v5424
        %v5539 = vadd.f32 %v5485, %v5423
        %v5540 = vadd.f32 %v5486, %v5422
        %v5541 = vadd.f32 %v5487, %v5421
        %v5542 = vadd.f32 %v5488, %v5420
        %v5543 = vadd.f32 %v5489, %v5419
        %v5544 = vadd.f32 %v5490, %v5418
        %v5545 = vadd.f32 %v5491, %v5417
        %v5546 = vadd.f32 %v5492, %v5416
        %v5547 = vadd.f32 %v5493, %v5415
        %v5548 = vadd.f32 %v5494, %v5414
        %v5549 = vadd.f32 %v5495, %v5413
        %v5550 = vadd.f32 %v5496, %v5412
        %v5551 = vadd.f32 %v5497, %v5411
        %v5552 = vadd.f32 %v5498, %v5410
        %v5553 = vadd.f32 %v5499, %v5409
        %v5554 = vadd.f32 %v5500, %v5408
        %v5555 = vadd.f32 %v5501, %v5407
        %v5556 = vadd.f32 %v5502, %v5406
        %v5557 = vadd.f32 %v5503, %v5405
        %v5558 = vadd.f32 %v5504, %v5404
        %v5559 = vadd.f32 %v5505, %v5457
        %v5560 = vadd.f32 %v5506, %v5456
        %v5561 = vadd.f32 %v5507, %v5455
        %v5562 = vadd.f32 %v5508, %v5454
        %v5563 = vadd.f32 %v5509, %v5453
        %v5564 = vadd.f32 %v5510, %v5452
        %v5565 = vadd.f32 %v5511, %v5451
        %5566 = vst.msk [vmem:[#allocation3] sm:$0xff] %vm520, %v5512
        %5567 = vst.msk [vmem:[#allocation3 + $0x8] sm:$0xff] %vm520, %v5513
        %5568 = vst.msk [vmem:[#allocation3 + $0x10] sm:$0xff] %vm520, %v5514
        %5569 = vst.msk [vmem:[#allocation3 + $0x18] sm:$0xff] %vm520, %v5515
        %5570 = vst.msk [vmem:[#allocation3 + $0x20] sm:$0xff] %vm520, %v5516
        %5571 = vst.msk [vmem:[#allocation3 + $0x28] sm:$0xff] %vm520, %v5517
        %5572 = vst.msk [vmem:[#allocation3 + $0x30] sm:$0xff] %vm520, %v5518
        %5573 = vst.msk [vmem:[#allocation3 + $0x38] sm:$0xff] %vm520, %v5519
        %5574 = vst.msk [vmem:[#allocation3 + $0x40] sm:$0xff] %vm520, %v5520
        %5575 = vst.msk [vmem:[#allocation3 + $0x48] sm:$0xff] %vm520, %v5521
        %5576 = vst.msk [vmem:[#allocation3 + $0x50] sm:$0xff] %vm520, %v5522
        %5577 = vst.msk [vmem:[#allocation3 + $0x58] sm:$0xff] %vm520, %v5523
        %5578 = vst.msk [vmem:[#allocation3 + $0x60] sm:$0xff] %vm520, %v5524
        %5579 = vst.msk [vmem:[#allocation3 + $0x68] sm:$0xff] %vm520, %v5525
        %5580 = vst.msk [vmem:[#allocation3 + $0x70] sm:$0xff] %vm520, %v5526
        %5581 = vst.msk [vmem:[#allocation3 + $0x78] sm:$0xff] %vm520, %v5527
        %5582 = vst.msk [vmem:[#allocation3 + $0x80] sm:$0xff] %vm520, %v5528
        %5583 = vst.msk [vmem:[#allocation3 + $0x88] sm:$0xff] %vm520, %v5529
        %5584 = vst.msk [vmem:[#allocation3 + $0x90] sm:$0xff] %vm520, %v5530
        %5585 = vst.msk [vmem:[#allocation3 + $0x98] sm:$0xff] %vm520, %v5531
        %5586 = vst.msk [vmem:[#allocation3 + $0xa0] sm:$0xff] %vm520, %v5532
        %5587 = vst.msk [vmem:[#allocation3 + $0xa8] sm:$0xff] %vm520, %v5533
        %5588 = vst.msk [vmem:[#allocation3 + $0xb0] sm:$0xff] %vm520, %v5534
        %5589 = vst.msk [vmem:[#allocation3 + $0xb8] sm:$0xff] %vm520, %v5535
        %5590 = vst.msk [vmem:[#allocation3 + $0xc0] sm:$0xff] %vm520, %v5536
        %5591 = vst.msk [vmem:[#allocation3 + $0xc8] sm:$0xff] %vm520, %v5537
        %5592 = vst.msk [vmem:[#allocation3 + $0xd0] sm:$0xff] %vm520, %v5538
        %5593 = vst.msk [vmem:[#allocation3 + $0xd8] sm:$0xff] %vm520, %v5539
        %5594 = vst.msk [vmem:[#allocation3 + $0xe0] sm:$0xff] %vm520, %v5540
        %5595 = vst.msk [vmem:[#allocation3 + $0xe8] sm:$0xff] %vm520, %v5541
        %5596 = vst.msk [vmem:[#allocation3 + $0xf0] sm:$0xff] %vm520, %v5542
        %5597 = vst.msk [vmem:[#allocation3 + $0xf8] sm:$0xff] %vm520, %v5543
        %5598 = vst.msk [vmem:[#allocation3 + $0x100] sm:$0xff] %vm520, %v5544
        %5599 = vst.msk [vmem:[#allocation3 + $0x108] sm:$0xff] %vm520, %v5545
        %5600 = vst.msk [vmem:[#allocation3 + $0x110] sm:$0xff] %vm520, %v5546
        %5601 = vst.msk [vmem:[#allocation3 + $0x118] sm:$0xff] %vm520, %v5547
        %5602 = vst.msk [vmem:[#allocation3 + $0x120] sm:$0xff] %vm520, %v5548
        %5603 = vst.msk [vmem:[#allocation3 + $0x128] sm:$0xff] %vm520, %v5549
        %5604 = vst.msk [vmem:[#allocation3 + $0x130] sm:$0xff] %vm520, %v5550
        %5605 = vst.msk [vmem:[#allocation3 + $0x138] sm:$0xff] %vm520, %v5551
        %5606 = vst.msk [vmem:[#allocation3 + $0x140] sm:$0xff] %vm520, %v5552
        %5607 = vst.msk [vmem:[#allocation3 + $0x148] sm:$0xff] %vm520, %v5553
        %5608 = vst.msk [vmem:[#allocation3 + $0x150] sm:$0xff] %vm520, %v5554
        %5609 = vst.msk [vmem:[#allocation3 + $0x158] sm:$0xff] %vm520, %v5555
        %5610 = vst.msk [vmem:[#allocation3 + $0x160] sm:$0xff] %vm520, %v5556
        %5611 = vst.msk [vmem:[#allocation3 + $0x168] sm:$0xff] %vm520, %v5557
        %5612 = vst.msk [vmem:[#allocation3 + $0x170] sm:$0xff] %vm520, %v5558
        %5613 = vst.msk [vmem:[#allocation3 + $0x178] sm:$0xff] %vm520, %v5559
        %5614 = vst.msk [vmem:[#allocation3 + $0x180] sm:$0xff] %vm520, %v5560
        %5615 = vst.msk [vmem:[#allocation3 + $0x188] sm:$0xff] %vm520, %v5561
        %5616 = vst.msk [vmem:[#allocation3 + $0x190] sm:$0xff] %vm520, %v5562
        %5617 = vst.msk [vmem:[#allocation3 + $0x198] sm:$0xff] %vm520, %v5563
        %5618 = vst.msk [vmem:[#allocation3 + $0x1a0] sm:$0xff] %vm520, %v5564
        %5619 = vst.msk [vmem:[#allocation3 + $0x1a8] sm:$0xff] %vm520, %v5565
        %v5620 = vld [vmem:[#allocation3] sm:$0xff]
        %v5621 = vld [vmem:[#allocation3 + $0x8] sm:$0xff]
        %v5622 = vld [vmem:[#allocation3 + $0x18] sm:$0xff]
        %v5623 = vld [vmem:[#allocation3 + $0x20] sm:$0xff]
        %v5624 = vld [vmem:[#allocation3 + $0x30] sm:$0xff]
        %v5625 = vld [vmem:[#allocation3 + $0x38] sm:$0xff]
        %v5626 = vld [vmem:[#allocation3 + $0x48] sm:$0xff]
        %v5627 = vld [vmem:[#allocation3 + $0x50] sm:$0xff]
        %v5628 = vld [vmem:[#allocation3 + $0x60] sm:$0xff]
        %v5629 = vld [vmem:[#allocation3 + $0x68] sm:$0xff]
        %v5630 = vld [vmem:[#allocation3 + $0x78] sm:$0xff]
        %v5631 = vld [vmem:[#allocation3 + $0x80] sm:$0xff]
        %v5632 = vld [vmem:[#allocation3 + $0x90] sm:$0xff]
        %v5633 = vld [vmem:[#allocation3 + $0x98] sm:$0xff]
        %v5634 = vld [vmem:[#allocation3 + $0xa8] sm:$0xff]
        %v5635 = vld [vmem:[#allocation3 + $0xb0] sm:$0xff]
        %v5636 = vld [vmem:[#allocation3 + $0xc0] sm:$0xff]
        %v5637 = vld [vmem:[#allocation3 + $0xc8] sm:$0xff]
        %v5638 = vld [vmem:[#allocation3 + $0xd8] sm:$0xff]
        %v5639 = vld [vmem:[#allocation3 + $0xe0] sm:$0xff]
        %v5640 = vld [vmem:[#allocation3 + $0xf0] sm:$0xff]
        %v5641 = vld [vmem:[#allocation3 + $0xf8] sm:$0xff]
        %v5642 = vld [vmem:[#allocation3 + $0x108] sm:$0xff]
        %v5643 = vld [vmem:[#allocation3 + $0x110] sm:$0xff]
        %v5644 = vld [vmem:[#allocation3 + $0x120] sm:$0xff]
        %v5645 = vld [vmem:[#allocation3 + $0x128] sm:$0xff]
        %v5646 = vld [vmem:[#allocation3 + $0x138] sm:$0xff]
        %v5647 = vld [vmem:[#allocation3 + $0x140] sm:$0xff]
        %v5648 = vld [vmem:[#allocation3 + $0x150] sm:$0xff]
        %v5649 = vld [vmem:[#allocation3 + $0x158] sm:$0xff]
        %v5650 = vld [vmem:[#allocation3 + $0x168] sm:$0xff]
        %v5651 = vld [vmem:[#allocation3 + $0x170] sm:$0xff]
        %v5652 = vld [vmem:[%s7] sm:$0x1]
        %v5654 = vlaneseq
        %v5655 = vshrl.u32 %v5654, 7
        %v5656 = vsub.s32 0, %v5655
        %v5657 = vrot.slane %v5652, %v5656
        %v5659 = vmul.f32 %v5620, %v5657
        %v5660 = vmul.f32 %v5621, %v5657
        %v5661 = vmul.f32 %v5622, %v5657
        %v5662 = vmul.f32 %v5623, %v5657
        %v5663 = vmul.f32 %v5624, %v5657
        %v5664 = vmul.f32 %v5625, %v5657
        %v5665 = vmul.f32 %v5626, %v5657
        %v5666 = vmul.f32 %v5627, %v5657
        %v5667 = vmul.f32 %v5628, %v5657
        %v5668 = vmul.f32 %v5629, %v5657
        %v5669 = vmul.f32 %v5630, %v5657
        %v5670 = vmul.f32 %v5631, %v5657
        %v5671 = vmul.f32 %v5632, %v5657
        %v5672 = vmul.f32 %v5633, %v5657
        %v5673 = vmul.f32 %v5634, %v5657
        %v5674 = vmul.f32 %v5635, %v5657
        %v5675 = vmul.f32 %v5636, %v5657
        %v5676 = vmul.f32 %v5637, %v5657
        %v5677 = vmul.f32 %v5638, %v5657
        %v5678 = vmul.f32 %v5639, %v5657
        %v5679 = vmul.f32 %v5640, %v5657
        %v5680 = vmul.f32 %v5641, %v5657
        %v5681 = vmul.f32 %v5642, %v5657
        %v5682 = vmul.f32 %v5643, %v5657
        %v5683 = vmul.f32 %v5644, %v5657
        %v5684 = vmul.f32 %v5645, %v5657
        %v5685 = vmul.f32 %v5646, %v5657
        %v5686 = vmul.f32 %v5647, %v5657
        %v5687 = vmul.f32 %v5648, %v5657
        %v5688 = vmul.f32 %v5649, %v5657
        %v5689 = vmul.f32 %v5650, %v5657
        %v5690 = vmul.f32 %v5651, %v5657
        %v5691 = vld [vmem:[%s8] sm:$0x1]
        %v5693 = vlaneseq
        %v5694 = vshrl.u32 %v5693, 7
        %v5695 = vsub.s32 0, %v5694
        %v5696 = vrot.slane %v5691, %v5695
        %v5698 = vadd.f32 %v5659, %v5696
        %v5699 = vadd.f32 %v5660, %v5696
        %v5700 = vadd.f32 %v5661, %v5696
        %v5701 = vadd.f32 %v5662, %v5696
        %v5702 = vadd.f32 %v5663, %v5696
        %v5703 = vadd.f32 %v5664, %v5696
        %v5704 = vadd.f32 %v5665, %v5696
        %v5705 = vadd.f32 %v5666, %v5696
        %v5706 = vadd.f32 %v5667, %v5696
        %v5707 = vadd.f32 %v5668, %v5696
        %v5708 = vadd.f32 %v5669, %v5696
        %v5709 = vadd.f32 %v5670, %v5696
        %v5710 = vadd.f32 %v5671, %v5696
        %v5711 = vadd.f32 %v5672, %v5696
        %v5712 = vadd.f32 %v5673, %v5696
        %v5713 = vadd.f32 %v5674, %v5696
        %v5714 = vadd.f32 %v5675, %v5696
        %v5715 = vadd.f32 %v5676, %v5696
        %v5716 = vadd.f32 %v5677, %v5696
        %v5717 = vadd.f32 %v5678, %v5696
        %v5718 = vadd.f32 %v5679, %v5696
        %v5719 = vadd.f32 %v5680, %v5696
        %v5720 = vadd.f32 %v5681, %v5696
        %v5721 = vadd.f32 %v5682, %v5696
        %v5722 = vadd.f32 %v5683, %v5696
        %v5723 = vadd.f32 %v5684, %v5696
        %v5724 = vadd.f32 %v5685, %v5696
        %v5725 = vadd.f32 %v5686, %v5696
        %v5726 = vadd.f32 %v5687, %v5696
        %v5727 = vadd.f32 %v5688, %v5696
        %v5728 = vadd.f32 %v5689, %v5696
        %v5729 = vadd.f32 %v5690, %v5696
        %v5730 = vmax.f32 %v5698, 0.0
        %v5731 = vmax.f32 %v5699, 0.0
        %v5732 = vmax.f32 %v5700, 0.0
        %v5733 = vmax.f32 %v5701, 0.0
        %v5734 = vmax.f32 %v5702, 0.0
        %v5735 = vmax.f32 %v5703, 0.0
        %v5736 = vmax.f32 %v5704, 0.0
        %v5737 = vmax.f32 %v5705, 0.0
        %v5738 = vmax.f32 %v5706, 0.0
        %v5739 = vmax.f32 %v5707, 0.0
        %v5740 = vmax.f32 %v5708, 0.0
        %v5741 = vmax.f32 %v5709, 0.0
        %v5742 = vmax.f32 %v5710, 0.0
        %v5743 = vmax.f32 %v5711, 0.0
        %v5744 = vmax.f32 %v5712, 0.0
        %v5745 = vmax.f32 %v5713, 0.0
        %v5746 = vmax.f32 %v5714, 0.0
        %v5747 = vmax.f32 %v5715, 0.0
        %v5748 = vmax.f32 %v5716, 0.0
        %v5749 = vmax.f32 %v5717, 0.0
        %v5750 = vmax.f32 %v5718, 0.0
        %v5751 = vmax.f32 %v5719, 0.0
        %v5752 = vmax.f32 %v5720, 0.0
        %v5753 = vmax.f32 %v5721, 0.0
        %v5754 = vmax.f32 %v5722, 0.0
        %v5755 = vmax.f32 %v5723, 0.0
        %v5756 = vmax.f32 %v5724, 0.0
        %v5757 = vmax.f32 %v5725, 0.0
        %v5758 = vmax.f32 %v5726, 0.0
        %v5759 = vmax.f32 %v5727, 0.0
        %v5760 = vmax.f32 %v5728, 0.0
        %v5761 = vmax.f32 %v5729, 0.0
        %v5762 = vpack.c.bf16 %v5731, %v5730
        %v5763 = vpack.c.bf16 %v5733, %v5732
        %v5764 = vpack.c.bf16 %v5735, %v5734
        %v5765 = vpack.c.bf16 %v5737, %v5736
        %v5766 = vpack.c.bf16 %v5739, %v5738
        %v5767 = vpack.c.bf16 %v5741, %v5740
        %v5768 = vpack.c.bf16 %v5743, %v5742
        %v5769 = vpack.c.bf16 %v5745, %v5744
        %v5770 = vpack.c.bf16 %v5747, %v5746
        %v5771 = vpack.c.bf16 %v5749, %v5748
        %v5772 = vpack.c.bf16 %v5751, %v5750
        %v5773 = vpack.c.bf16 %v5753, %v5752
        %v5774 = vpack.c.bf16 %v5755, %v5754
        %v5775 = vpack.c.bf16 %v5757, %v5756
        %v5776 = vpack.c.bf16 %v5759, %v5758
        %v5777 = vpack.c.bf16 %v5761, %v5760
        %v5778 = vld [vmem:[%s3] sm:$0xff]
        %v5779 = vld [vmem:[%s3 + $0x8] sm:$0xff]
        %v5780 = vld [vmem:[%s3 + $0x10] sm:$0xff]
        %v5781 = vld [vmem:[%s3 + $0x18] sm:$0xff]
        %v5782 = vld [vmem:[%s3 + $0x20] sm:$0xff]
        %v5783 = vld [vmem:[%s3 + $0x28] sm:$0xff]
        %v5784 = vld [vmem:[%s3 + $0x30] sm:$0xff]
        %v5785 = vld [vmem:[%s3 + $0x38] sm:$0xff]
        %v5794 = vunpack.c.l.b16 %v5778
        %v5795 = vunpack.c.h.b16 %v5778
        %v5796 = vunpack.c.l.b16 %v5779
        %v5797 = vunpack.c.h.b16 %v5779
        %v5798 = vunpack.c.l.b16 %v5780
        %v5799 = vunpack.c.h.b16 %v5780
        %v5800 = vunpack.c.l.b16 %v5781
        %v5801 = vunpack.c.h.b16 %v5781
        %v5802 = vunpack.c.l.b16 %v5782
        %v5803 = vunpack.c.h.b16 %v5782
        %v5804 = vunpack.c.l.b16 %v5783
        %v5805 = vunpack.c.h.b16 %v5783
        %v5806 = vunpack.c.l.b16 %v5784
        %v5807 = vunpack.c.h.b16 %v5784
        %v5808 = vunpack.c.l.b16 %v5785
        %v5809 = vunpack.c.h.b16 %v5785
        %v5810 = vpack.c.b16 %v5796, %v5794
        %v5811 = vpack.c.b16 %v5797, %v5795
        %v5812 = vpack.c.b16 %v5800, %v5798
        %v5813 = vpack.c.b16 %v5801, %v5799
        %v5814 = vpack.c.b16 %v5804, %v5802
        %v5815 = vpack.c.b16 %v5805, %v5803
        %v5816 = vpack.c.b16 %v5808, %v5806
        %v5817 = vpack.c.b16 %v5809, %v5807
        %v5827 = vsel %vm520, %v5762, 0
        %v5830 = vsel %vm520, %v5763, 0
        %v5833 = vsel %vm520, %v5764, 0
        %v5836 = vsel %vm520, %v5765, 0
        %v5839 = vsel %vm520, %v5766, 0
        %v5842 = vsel %vm520, %v5767, 0
        %v5845 = vsel %vm520, %v5768, 0
        %v5848 = vsel %vm520, %v5769, 0
        %v5851 = vsel %vm520, %v5770, 0
        %v5854 = vsel %vm520, %v5771, 0
        %v5857 = vsel %vm520, %v5772, 0
        %v5860 = vsel %vm520, %v5773, 0
        %v5863 = vsel %vm520, %v5774, 0
        %v5866 = vsel %vm520, %v5775, 0
        %v5869 = vsel %vm520, %v5776, 0
        %v5872 = vsel %vm520, %v5777, 0
        %5874 = vmatprep.subr.bf16.mxu0 0
        %5875 = vmatpush1.bf16.msra.mxu0 0
        %5876 = vmatprep.subr.bf16.mxu0 0
        %5877 = vmatpush1.bf16.msra.mxu0 0
        %5878 = vmatprep.subr.bf16.mxu0 0
        %5879 = vmatpush1.bf16.msra.mxu0 0
        %5880 = vmatprep.subr.bf16.mxu0 0
        %5881 = vmatpush1.bf16.msra.mxu0 0
        %5882 = vmatprep.subr.bf16.mxu0 %v5817
        %5883 = vmatpush1.bf16.msra.mxu0 %v5816
        %5884 = vmatprep.subr.bf16.mxu0 %v5815
        %5885 = vmatpush1.bf16.msra.mxu0 %v5814
        %5886 = vmatprep.subr.bf16.mxu0 %v5813
        %5887 = vmatpush1.bf16.msra.mxu0 %v5812
        %5888 = vmatprep.subr.bf16.mxu0 %v5811
        %5889 = vmatpush1.bf16.msra.mxu0 %v5810
        %5890 = vmatprep.subr.bf16.mxu0 0
        %5891 = vmatpush2.bf16.msra.mxu0 0
        %5892 = vmatprep.subr.bf16.mxu0 0
        %5893 = vmatpush2.bf16.msra.mxu0 0
        %5894 = vmatprep.subr.bf16.mxu0 0
        %5895 = vmatpush2.bf16.msra.mxu0 0
        %5896 = vmatprep.subr.bf16.mxu0 0
        %5897 = vmatpush2.bf16.msra.mxu0 0
        %5898 = vmatprep.subr.bf16.mxu0 0
        %5899 = vmatpush2.bf16.msra.mxu0 0
        %5900 = vmatprep.subr.bf16.mxu0 0
        %5901 = vmatpush2.bf16.msra.mxu0 0
        %5902 = vmatprep.subr.bf16.mxu0 0
        %5903 = vmatpush2.bf16.msra.mxu0 0
        %5904 = vmatprep.subr.bf16.mxu0 0
        %5905 = vmatpush2.bf16.msra.mxu0 0
        %5906 = vmatprep.mubr.bf16.mxu0 0
        %5907 = vmatmul.mubr.bf16.gmra.mxu0 %v5827
        %v5908 = vpop.f32.mrf.mxu0
        %v5909 = vadd.f32 0.0, %v5908
        %v5910 = vpop.f32.mrf.mxu0
        %v5911 = vadd.f32 0.0, %v5910
        %v5912 = vpop.f32.mrf.mxu0
        %v5913 = vadd.f32 0.0, %v5912
        %v5914 = vpop.f32.mrf.mxu0
        %v5915 = vadd.f32 0.0, %v5914
        %5916 = vmatprep.mubr.bf16.mxu0 0
        %5917 = vmatmul.mubr.bf16.gmra.mxu0 %v5830
        %v5918 = vpop.f32.mrf.mxu0
        %v5919 = vadd.f32 0.0, %v5918
        %v5920 = vpop.f32.mrf.mxu0
        %v5921 = vadd.f32 0.0, %v5920
        %v5922 = vpop.f32.mrf.mxu0
        %v5923 = vadd.f32 0.0, %v5922
        %v5924 = vpop.f32.mrf.mxu0
        %v5925 = vadd.f32 0.0, %v5924
        %5926 = vmatprep.mubr.bf16.mxu0 0
        %5927 = vmatmul.mubr.bf16.gmra.mxu0 %v5833
        %v5928 = vpop.f32.mrf.mxu0
        %v5929 = vadd.f32 0.0, %v5928
        %v5930 = vpop.f32.mrf.mxu0
        %v5931 = vadd.f32 0.0, %v5930
        %v5932 = vpop.f32.mrf.mxu0
        %v5933 = vadd.f32 0.0, %v5932
        %v5934 = vpop.f32.mrf.mxu0
        %v5935 = vadd.f32 0.0, %v5934
        %5936 = vmatprep.mubr.bf16.mxu0 0
        %5937 = vmatmul.mubr.bf16.gmra.mxu0 %v5836
        %v5938 = vpop.f32.mrf.mxu0
        %v5939 = vadd.f32 0.0, %v5938
        %v5940 = vpop.f32.mrf.mxu0
        %v5941 = vadd.f32 0.0, %v5940
        %v5942 = vpop.f32.mrf.mxu0
        %v5943 = vadd.f32 0.0, %v5942
        %v5944 = vpop.f32.mrf.mxu0
        %v5945 = vadd.f32 0.0, %v5944
        %5946 = vmatprep.mubr.bf16.mxu0 0
        %5947 = vmatmul.mubr.bf16.gmra.mxu0 %v5839
        %v5948 = vpop.f32.mrf.mxu0
        %v5949 = vadd.f32 0.0, %v5948
        %v5950 = vpop.f32.mrf.mxu0
        %v5951 = vadd.f32 0.0, %v5950
        %v5952 = vpop.f32.mrf.mxu0
        %v5953 = vadd.f32 0.0, %v5952
        %v5954 = vpop.f32.mrf.mxu0
        %v5955 = vadd.f32 0.0, %v5954
        %5956 = vmatprep.mubr.bf16.mxu0 0
        %5957 = vmatmul.mubr.bf16.gmra.mxu0 %v5842
        %v5958 = vpop.f32.mrf.mxu0
        %v5959 = vadd.f32 0.0, %v5958
        %v5960 = vpop.f32.mrf.mxu0
        %v5961 = vadd.f32 0.0, %v5960
        %v5962 = vpop.f32.mrf.mxu0
        %v5963 = vadd.f32 0.0, %v5962
        %v5964 = vpop.f32.mrf.mxu0
        %v5965 = vadd.f32 0.0, %v5964
        %5966 = vmatprep.mubr.bf16.mxu0 0
        %5967 = vmatmul.mubr.bf16.gmra.mxu0 %v5845
        %v5968 = vpop.f32.mrf.mxu0
        %v5969 = vadd.f32 0.0, %v5968
        %v5970 = vpop.f32.mrf.mxu0
        %v5971 = vadd.f32 0.0, %v5970
        %v5972 = vpop.f32.mrf.mxu0
        %v5973 = vadd.f32 0.0, %v5972
        %v5974 = vpop.f32.mrf.mxu0
        %v5975 = vadd.f32 0.0, %v5974
        %5976 = vmatprep.mubr.bf16.mxu0 0
        %5977 = vmatmul.mubr.bf16.gmra.mxu0 %v5848
        %v5978 = vpop.f32.mrf.mxu0
        %v5979 = vadd.f32 0.0, %v5978
        %v5980 = vpop.f32.mrf.mxu0
        %v5981 = vadd.f32 0.0, %v5980
        %v5982 = vpop.f32.mrf.mxu0
        %v5983 = vadd.f32 0.0, %v5982
        %v5984 = vpop.f32.mrf.mxu0
        %v5985 = vadd.f32 0.0, %v5984
        %5986 = vmatprep.mubr.bf16.mxu0 0
        %5987 = vmatmul.mubr.bf16.gmra.mxu0 %v5851
        %v5988 = vpop.f32.mrf.mxu0
        %v5989 = vadd.f32 0.0, %v5988
        %v5990 = vpop.f32.mrf.mxu0
        %v5991 = vadd.f32 0.0, %v5990
        %v5992 = vpop.f32.mrf.mxu0
        %v5993 = vadd.f32 0.0, %v5992
        %v5994 = vpop.f32.mrf.mxu0
        %v5995 = vadd.f32 0.0, %v5994
        %5996 = vmatprep.mubr.bf16.mxu0 0
        %5997 = vmatmul.mubr.bf16.gmra.mxu0 %v5854
        %v5998 = vpop.f32.mrf.mxu0
        %v5999 = vadd.f32 0.0, %v5998
        %v6000 = vpop.f32.mrf.mxu0
        %v6001 = vadd.f32 0.0, %v6000
        %v6002 = vpop.f32.mrf.mxu0
        %v6003 = vadd.f32 0.0, %v6002
        %v6004 = vpop.f32.mrf.mxu0
        %v6005 = vadd.f32 0.0, %v6004
        %6006 = vmatprep.mubr.bf16.mxu0 0
        %6007 = vmatmul.mubr.bf16.gmra.mxu0 %v5857
        %v6008 = vpop.f32.mrf.mxu0
        %v6009 = vadd.f32 0.0, %v6008
        %v6010 = vpop.f32.mrf.mxu0
        %v6011 = vadd.f32 0.0, %v6010
        %v6012 = vpop.f32.mrf.mxu0
        %v6013 = vadd.f32 0.0, %v6012
        %v6014 = vpop.f32.mrf.mxu0
        %v6015 = vadd.f32 0.0, %v6014
        %6016 = vmatprep.mubr.bf16.mxu0 0
        %6017 = vmatmul.mubr.bf16.gmra.mxu0 %v5860
        %v6018 = vpop.f32.mrf.mxu0
        %v6019 = vadd.f32 0.0, %v6018
        %v6020 = vpop.f32.mrf.mxu0
        %v6021 = vadd.f32 0.0, %v6020
        %v6022 = vpop.f32.mrf.mxu0
        %v6023 = vadd.f32 0.0, %v6022
        %v6024 = vpop.f32.mrf.mxu0
        %v6025 = vadd.f32 0.0, %v6024
        %6026 = vmatprep.mubr.bf16.mxu0 0
        %6027 = vmatmul.mubr.bf16.gmra.mxu0 %v5863
        %v6028 = vpop.f32.mrf.mxu0
        %v6029 = vadd.f32 0.0, %v6028
        %v6030 = vpop.f32.mrf.mxu0
        %v6031 = vadd.f32 0.0, %v6030
        %v6032 = vpop.f32.mrf.mxu0
        %v6033 = vadd.f32 0.0, %v6032
        %v6034 = vpop.f32.mrf.mxu0
        %v6035 = vadd.f32 0.0, %v6034
        %6036 = vmatprep.mubr.bf16.mxu0 0
        %6037 = vmatmul.mubr.bf16.gmra.mxu0 %v5866
        %v6038 = vpop.f32.mrf.mxu0
        %v6039 = vadd.f32 0.0, %v6038
        %v6040 = vpop.f32.mrf.mxu0
        %v6041 = vadd.f32 0.0, %v6040
        %v6042 = vpop.f32.mrf.mxu0
        %v6043 = vadd.f32 0.0, %v6042
        %v6044 = vpop.f32.mrf.mxu0
        %v6045 = vadd.f32 0.0, %v6044
        %6046 = vmatprep.mubr.bf16.mxu0 0
        %6047 = vmatmul.mubr.bf16.gmra.mxu0 %v5869
        %v6048 = vpop.f32.mrf.mxu0
        %v6049 = vadd.f32 0.0, %v6048
        %v6050 = vpop.f32.mrf.mxu0
        %v6051 = vadd.f32 0.0, %v6050
        %v6052 = vpop.f32.mrf.mxu0
        %v6053 = vadd.f32 0.0, %v6052
        %v6054 = vpop.f32.mrf.mxu0
        %v6055 = vadd.f32 0.0, %v6054
        %6056 = vmatprep.mubr.bf16.mxu0 0
        %6057 = vmatmul.mubr.bf16.gmra.mxu0 %v5872
        %v6058 = vpop.f32.mrf.mxu0
        %v6059 = vadd.f32 0.0, %v6058
        %v6060 = vpop.f32.mrf.mxu0
        %v6061 = vadd.f32 0.0, %v6060
        %v6062 = vpop.f32.mrf.mxu0
        %v6063 = vadd.f32 0.0, %v6062
        %v6064 = vpop.f32.mrf.mxu0
        %v6065 = vadd.f32 0.0, %v6064
        %6066 = vdwg.mxu0
        %v6067 = vld [vmem:[%s9] sm:$0x3]
        %v6069 = vlaneseq
        %v6070 = vshrl.u32 %v6069, 7
        %v6071 = vsub.s32 0, %v6070
        %v6072 = vrot.slane %v6067, %v6071
        %v6073 = vlaneseq
        %v6074 = vshrl.u32 %v6073, 7
        %v6075 = vsub.s32 1, %v6074
        %v6076 = vrot.slane %v6067, %v6075
        %v6079 = vmul.f32 %v5909, %v6072
        %v6080 = vmul.f32 %v5911, %v6076
        %v6081 = vmul.f32 %v5913, %v6072
        %v6082 = vmul.f32 %v5915, %v6076
        %v6083 = vmul.f32 %v5919, %v6072
        %v6084 = vmul.f32 %v5921, %v6076
        %v6085 = vmul.f32 %v5923, %v6072
        %v6086 = vmul.f32 %v5925, %v6076
        %v6087 = vmul.f32 %v5929, %v6072
        %v6088 = vmul.f32 %v5931, %v6076
        %v6089 = vmul.f32 %v5933, %v6072
        %v6090 = vmul.f32 %v5935, %v6076
        %v6091 = vmul.f32 %v5939, %v6072
        %v6092 = vmul.f32 %v5941, %v6076
        %v6093 = vmul.f32 %v5943, %v6072
        %v6094 = vmul.f32 %v5945, %v6076
        %v6095 = vmul.f32 %v5949, %v6072
        %v6096 = vmul.f32 %v5951, %v6076
        %v6097 = vmul.f32 %v5953, %v6072
        %v6098 = vmul.f32 %v5955, %v6076
        %v6099 = vmul.f32 %v5959, %v6072
        %v6100 = vmul.f32 %v5961, %v6076
        %v6101 = vmul.f32 %v5963, %v6072
        %v6102 = vmul.f32 %v5965, %v6076
        %v6103 = vmul.f32 %v5969, %v6072
        %v6104 = vmul.f32 %v5971, %v6076
        %v6105 = vmul.f32 %v5973, %v6072
        %v6106 = vmul.f32 %v5975, %v6076
        %v6107 = vmul.f32 %v5979, %v6072
        %v6108 = vmul.f32 %v5981, %v6076
        %v6109 = vmul.f32 %v5983, %v6072
        %v6110 = vmul.f32 %v5985, %v6076
        %v6111 = vmul.f32 %v5989, %v6072
        %v6112 = vmul.f32 %v5991, %v6076
        %v6113 = vmul.f32 %v5993, %v6072
        %v6114 = vmul.f32 %v5995, %v6076
        %v6115 = vmul.f32 %v5999, %v6072
        %v6116 = vmul.f32 %v6001, %v6076
        %v6117 = vmul.f32 %v6003, %v6072
        %v6118 = vmul.f32 %v6005, %v6076
        %v6119 = vmul.f32 %v6009, %v6072
        %v6120 = vmul.f32 %v6011, %v6076
        %v6121 = vmul.f32 %v6013, %v6072
        %v6122 = vmul.f32 %v6015, %v6076
        %v6123 = vmul.f32 %v6019, %v6072
        %v6124 = vmul.f32 %v6021, %v6076
        %v6125 = vmul.f32 %v6023, %v6072
        %v6126 = vmul.f32 %v6025, %v6076
        %v6127 = vmul.f32 %v6029, %v6072
        %v6128 = vmul.f32 %v6031, %v6076
        %v6129 = vmul.f32 %v6033, %v6072
        %v6130 = vmul.f32 %v6035, %v6076
        %v6131 = vmul.f32 %v6039, %v6072
        %v6132 = vmul.f32 %v6041, %v6076
        %v6133 = vmul.f32 %v6043, %v6072
        %v6134 = vmul.f32 %v6045, %v6076
        %v6135 = vmul.f32 %v6049, %v6072
        %v6136 = vmul.f32 %v6051, %v6076
        %v6137 = vmul.f32 %v6053, %v6072
        %v6138 = vmul.f32 %v6055, %v6076
        %v6139 = vmul.f32 %v6059, %v6072
        %v6140 = vmul.f32 %v6061, %v6076
        %v6141 = vmul.f32 %v6063, %v6072
        %v6142 = vmul.f32 %v6065, %v6076
        %v6143 = vld [vmem:[%s10] sm:$0x3]
        %v6145 = vlaneseq
        %v6146 = vshrl.u32 %v6145, 7
        %v6147 = vsub.s32 0, %v6146
        %v6148 = vrot.slane %v6143, %v6147
        %v6149 = vlaneseq
        %v6150 = vshrl.u32 %v6149, 7
        %v6151 = vsub.s32 1, %v6150
        %v6152 = vrot.slane %v6143, %v6151
        %v6155 = vadd.f32 %v6079, %v6148
        %v6156 = vadd.f32 %v6080, %v6152
        %v6157 = vadd.f32 %v6081, %v6148
        %v6158 = vadd.f32 %v6082, %v6152
        %v6159 = vadd.f32 %v6083, %v6148
        %v6160 = vadd.f32 %v6084, %v6152
        %v6161 = vadd.f32 %v6085, %v6148
        %v6162 = vadd.f32 %v6086, %v6152
        %v6163 = vadd.f32 %v6087, %v6148
        %v6164 = vadd.f32 %v6088, %v6152
        %v6165 = vadd.f32 %v6089, %v6148
        %v6166 = vadd.f32 %v6090, %v6152
        %v6167 = vadd.f32 %v6091, %v6148
        %v6168 = vadd.f32 %v6092, %v6152
        %v6169 = vadd.f32 %v6093, %v6148
        %v6170 = vadd.f32 %v6094, %v6152
        %v6171 = vadd.f32 %v6095, %v6148
        %v6172 = vadd.f32 %v6096, %v6152
        %v6173 = vadd.f32 %v6097, %v6148
        %v6174 = vadd.f32 %v6098, %v6152
        %v6175 = vadd.f32 %v6099, %v6148
        %v6176 = vadd.f32 %v6100, %v6152
        %v6177 = vadd.f32 %v6101, %v6148
        %v6178 = vadd.f32 %v6102, %v6152
        %v6179 = vadd.f32 %v6103, %v6148
        %v6180 = vadd.f32 %v6104, %v6152
        %v6181 = vadd.f32 %v6105, %v6148
        %v6182 = vadd.f32 %v6106, %v6152
        %v6183 = vadd.f32 %v6107, %v6148
        %v6184 = vadd.f32 %v6108, %v6152
        %v6185 = vadd.f32 %v6109, %v6148
        %v6186 = vadd.f32 %v6110, %v6152
        %v6187 = vadd.f32 %v6111, %v6148
        %v6188 = vadd.f32 %v6112, %v6152
        %v6189 = vadd.f32 %v6113, %v6148
        %v6190 = vadd.f32 %v6114, %v6152
        %v6191 = vadd.f32 %v6115, %v6148
        %v6192 = vadd.f32 %v6116, %v6152
        %v6193 = vadd.f32 %v6117, %v6148
        %v6194 = vadd.f32 %v6118, %v6152
        %v6195 = vadd.f32 %v6119, %v6148
        %v6196 = vadd.f32 %v6120, %v6152
        %v6197 = vadd.f32 %v6121, %v6148
        %v6198 = vadd.f32 %v6122, %v6152
        %v6199 = vadd.f32 %v6123, %v6148
        %v6200 = vadd.f32 %v6124, %v6152
        %v6201 = vadd.f32 %v6125, %v6148
        %v6202 = vadd.f32 %v6126, %v6152
        %v6203 = vadd.f32 %v6127, %v6148
        %v6204 = vadd.f32 %v6128, %v6152
        %v6205 = vadd.f32 %v6129, %v6148
        %v6206 = vadd.f32 %v6130, %v6152
        %v6207 = vadd.f32 %v6131, %v6148
        %v6208 = vadd.f32 %v6132, %v6152
        %v6209 = vadd.f32 %v6133, %v6148
        %v6210 = vadd.f32 %v6134, %v6152
        %v6211 = vadd.f32 %v6135, %v6148
        %v6212 = vadd.f32 %v6136, %v6152
        %v6213 = vadd.f32 %v6137, %v6148
        %v6214 = vadd.f32 %v6138, %v6152
        %v6215 = vadd.f32 %v6139, %v6148
        %v6216 = vadd.f32 %v6140, %v6152
        %v6217 = vadd.f32 %v6141, %v6148
        %v6218 = vadd.f32 %v6142, %v6152
        %v6219 = vld [vmem:[%s438] sm:$0xff]
        %v6220 = vld [vmem:[%s438 + $0x8] sm:$0xff]
        %v6221 = vld [vmem:[%s438 + $0x10] sm:$0xff]
        %v6222 = vld [vmem:[%s438 + $0x18] sm:$0xff]
        %v6223 = vld [vmem:[%s438 + $0x20] sm:$0xff]
        %v6224 = vld [vmem:[%s438 + $0x28] sm:$0xff]
        %v6225 = vld [vmem:[%s438 + $0x30] sm:$0xff]
        %v6226 = vld [vmem:[%s438 + $0x38] sm:$0xff]
        %v6227 = vld [vmem:[%s438 + $0x40] sm:$0xff]
        %v6228 = vld [vmem:[%s438 + $0x48] sm:$0xff]
        %v6229 = vld [vmem:[%s438 + $0x50] sm:$0xff]
        %v6230 = vld [vmem:[%s438 + $0x58] sm:$0xff]
        %v6231 = vld [vmem:[%s438 + $0x60] sm:$0xff]
        %v6232 = vld [vmem:[%s438 + $0x68] sm:$0xff]
        %v6233 = vld [vmem:[%s438 + $0x70] sm:$0xff]
        %v6234 = vld [vmem:[%s438 + $0x78] sm:$0xff]
        %v6235 = vld [vmem:[%s438 + $0x80] sm:$0xff]
        %v6236 = vld [vmem:[%s438 + $0x88] sm:$0xff]
        %v6237 = vld [vmem:[%s438 + $0x90] sm:$0xff]
        %v6238 = vld [vmem:[%s438 + $0x98] sm:$0xff]
        %v6239 = vld [vmem:[%s438 + $0xa0] sm:$0xff]
        %v6240 = vld [vmem:[%s438 + $0xa8] sm:$0xff]
        %v6241 = vld [vmem:[%s438 + $0xb0] sm:$0xff]
        %v6242 = vld [vmem:[%s438 + $0xb8] sm:$0xff]
        %v6243 = vld [vmem:[%s438 + $0xc0] sm:$0xff]
        %v6244 = vld [vmem:[%s438 + $0xc8] sm:$0xff]
        %v6245 = vld [vmem:[%s438 + $0xd0] sm:$0xff]
        %v6246 = vld [vmem:[%s438 + $0xd8] sm:$0xff]
        %v6247 = vld [vmem:[%s438 + $0xe0] sm:$0xff]
        %v6248 = vld [vmem:[%s438 + $0xe8] sm:$0xff]
        %v6249 = vld [vmem:[%s438 + $0xf0] sm:$0xff]
        %v6250 = vld [vmem:[%s438 + $0xf8] sm:$0xff]
        %v6251 = vpack.c.bf16 %v6220, %v6219
        %v6252 = vpack.c.bf16 %v6222, %v6221
        %v6253 = vpack.c.bf16 %v6224, %v6223
        %v6254 = vpack.c.bf16 %v6226, %v6225
        %v6255 = vpack.c.bf16 %v6228, %v6227
        %v6256 = vpack.c.bf16 %v6230, %v6229
        %v6257 = vpack.c.bf16 %v6232, %v6231
        %v6258 = vpack.c.bf16 %v6234, %v6233
        %v6259 = vpack.c.bf16 %v6236, %v6235
        %v6260 = vpack.c.bf16 %v6238, %v6237
        %v6261 = vpack.c.bf16 %v6240, %v6239
        %v6262 = vpack.c.bf16 %v6242, %v6241
        %v6263 = vpack.c.bf16 %v6244, %v6243
        %v6264 = vpack.c.bf16 %v6246, %v6245
        %v6265 = vpack.c.bf16 %v6248, %v6247
        %v6266 = vpack.c.bf16 %v6250, %v6249
        %v6267 = vld [vmem:[%s4] sm:$0xff]
        %v6268 = vld [vmem:[%s4 + $0x8] sm:$0xff]
        %v6269 = vld [vmem:[%s4 + $0x10] sm:$0xff]
        %v6270 = vld [vmem:[%s4 + $0x18] sm:$0xff]
        %v6271 = vld [vmem:[%s4 + $0x20] sm:$0xff]
        %v6272 = vld [vmem:[%s4 + $0x28] sm:$0xff]
        %v6273 = vld [vmem:[%s4 + $0x30] sm:$0xff]
        %v6274 = vld [vmem:[%s4 + $0x38] sm:$0xff]
        %v6283 = vunpack.c.l.b16 %v6267
        %v6284 = vunpack.c.h.b16 %v6267
        %v6285 = vunpack.c.l.b16 %v6268
        %v6286 = vunpack.c.h.b16 %v6268
        %v6287 = vunpack.c.l.b16 %v6269
        %v6288 = vunpack.c.h.b16 %v6269
        %v6289 = vunpack.c.l.b16 %v6270
        %v6290 = vunpack.c.h.b16 %v6270
        %v6291 = vunpack.c.l.b16 %v6271
        %v6292 = vunpack.c.h.b16 %v6271
        %v6293 = vunpack.c.l.b16 %v6272
        %v6294 = vunpack.c.h.b16 %v6272
        %v6295 = vunpack.c.l.b16 %v6273
        %v6296 = vunpack.c.h.b16 %v6273
        %v6297 = vunpack.c.l.b16 %v6274
        %v6298 = vunpack.c.h.b16 %v6274
        %v6299 = vpack.c.b16 %v6285, %v6283
        %v6300 = vpack.c.b16 %v6286, %v6284
        %v6301 = vpack.c.b16 %v6289, %v6287
        %v6302 = vpack.c.b16 %v6290, %v6288
        %v6303 = vpack.c.b16 %v6293, %v6291
        %v6304 = vpack.c.b16 %v6294, %v6292
        %v6305 = vpack.c.b16 %v6297, %v6295
        %v6306 = vpack.c.b16 %v6298, %v6296
        %v6316 = vsel %vm520, %v6251, 0
        %v6319 = vsel %vm520, %v6252, 0
        %v6322 = vsel %vm520, %v6253, 0
        %v6325 = vsel %vm520, %v6254, 0
        %v6328 = vsel %vm520, %v6255, 0
        %v6331 = vsel %vm520, %v6256, 0
        %v6334 = vsel %vm520, %v6257, 0
        %v6337 = vsel %vm520, %v6258, 0
        %v6340 = vsel %vm520, %v6259, 0
        %v6343 = vsel %vm520, %v6260, 0
        %v6346 = vsel %vm520, %v6261, 0
        %v6349 = vsel %vm520, %v6262, 0
        %v6352 = vsel %vm520, %v6263, 0
        %v6355 = vsel %vm520, %v6264, 0
        %v6358 = vsel %vm520, %v6265, 0
        %v6361 = vsel %vm520, %v6266, 0
        %6363 = vmatprep.subr.bf16.mxu0 0
        %6364 = vmatpush1.bf16.msra.mxu0 0
        %6365 = vmatprep.subr.bf16.mxu0 0
        %6366 = vmatpush1.bf16.msra.mxu0 0
        %6367 = vmatprep.subr.bf16.mxu0 0
        %6368 = vmatpush1.bf16.msra.mxu0 0
        %6369 = vmatprep.subr.bf16.mxu0 0
        %6370 = vmatpush1.bf16.msra.mxu0 0
        %6371 = vmatprep.subr.bf16.mxu0 %v6306
        %6372 = vmatpush1.bf16.msra.mxu0 %v6305
        %6373 = vmatprep.subr.bf16.mxu0 %v6304
        %6374 = vmatpush1.bf16.msra.mxu0 %v6303
        %6375 = vmatprep.subr.bf16.mxu0 %v6302
        %6376 = vmatpush1.bf16.msra.mxu0 %v6301
        %6377 = vmatprep.subr.bf16.mxu0 %v6300
        %6378 = vmatpush1.bf16.msra.mxu0 %v6299
        %6379 = vmatprep.subr.bf16.mxu0 0
        %6380 = vmatpush2.bf16.msra.mxu0 0
        %6381 = vmatprep.subr.bf16.mxu0 0
        %6382 = vmatpush2.bf16.msra.mxu0 0
        %6383 = vmatprep.subr.bf16.mxu0 0
        %6384 = vmatpush2.bf16.msra.mxu0 0
        %6385 = vmatprep.subr.bf16.mxu0 0
        %6386 = vmatpush2.bf16.msra.mxu0 0
        %6387 = vmatprep.subr.bf16.mxu0 0
        %6388 = vmatpush2.bf16.msra.mxu0 0
        %6389 = vmatprep.subr.bf16.mxu0 0
        %6390 = vmatpush2.bf16.msra.mxu0 0
        %6391 = vmatprep.subr.bf16.mxu0 0
        %6392 = vmatpush2.bf16.msra.mxu0 0
        %6393 = vmatprep.subr.bf16.mxu0 0
        %6394 = vmatpush2.bf16.msra.mxu0 0
        %6395 = vmatprep.mubr.bf16.mxu0 0
        %6396 = vmatmul.mubr.bf16.gmra.mxu0 %v6316
        %v6397 = vpop.f32.mrf.mxu0
        %v6398 = vadd.f32 0.0, %v6397
        %v6399 = vpop.f32.mrf.mxu0
        %v6400 = vadd.f32 0.0, %v6399
        %v6401 = vpop.f32.mrf.mxu0
        %v6402 = vadd.f32 0.0, %v6401
        %v6403 = vpop.f32.mrf.mxu0
        %v6404 = vadd.f32 0.0, %v6403
        %6405 = vmatprep.mubr.bf16.mxu0 0
        %6406 = vmatmul.mubr.bf16.gmra.mxu0 %v6319
        %v6407 = vpop.f32.mrf.mxu0
        %v6408 = vadd.f32 0.0, %v6407
        %v6409 = vpop.f32.mrf.mxu0
        %v6410 = vadd.f32 0.0, %v6409
        %v6411 = vpop.f32.mrf.mxu0
        %v6412 = vadd.f32 0.0, %v6411
        %v6413 = vpop.f32.mrf.mxu0
        %v6414 = vadd.f32 0.0, %v6413
        %6415 = vmatprep.mubr.bf16.mxu0 0
        %6416 = vmatmul.mubr.bf16.gmra.mxu0 %v6322
        %v6417 = vpop.f32.mrf.mxu0
        %v6418 = vadd.f32 0.0, %v6417
        %v6419 = vpop.f32.mrf.mxu0
        %v6420 = vadd.f32 0.0, %v6419
        %v6421 = vpop.f32.mrf.mxu0
        %v6422 = vadd.f32 0.0, %v6421
        %v6423 = vpop.f32.mrf.mxu0
        %v6424 = vadd.f32 0.0, %v6423
        %6425 = vmatprep.mubr.bf16.mxu0 0
        %6426 = vmatmul.mubr.bf16.gmra.mxu0 %v6325
        %v6427 = vpop.f32.mrf.mxu0
        %v6428 = vadd.f32 0.0, %v6427
        %v6429 = vpop.f32.mrf.mxu0
        %v6430 = vadd.f32 0.0, %v6429
        %v6431 = vpop.f32.mrf.mxu0
        %v6432 = vadd.f32 0.0, %v6431
        %v6433 = vpop.f32.mrf.mxu0
        %v6434 = vadd.f32 0.0, %v6433
        %6435 = vmatprep.mubr.bf16.mxu0 0
        %6436 = vmatmul.mubr.bf16.gmra.mxu0 %v6328
        %v6437 = vpop.f32.mrf.mxu0
        %v6438 = vadd.f32 0.0, %v6437
        %v6439 = vpop.f32.mrf.mxu0
        %v6440 = vadd.f32 0.0, %v6439
        %v6441 = vpop.f32.mrf.mxu0
        %v6442 = vadd.f32 0.0, %v6441
        %v6443 = vpop.f32.mrf.mxu0
        %v6444 = vadd.f32 0.0, %v6443
        %6445 = vmatprep.mubr.bf16.mxu0 0
        %6446 = vmatmul.mubr.bf16.gmra.mxu0 %v6331
        %v6447 = vpop.f32.mrf.mxu0
        %v6448 = vadd.f32 0.0, %v6447
        %v6449 = vpop.f32.mrf.mxu0
        %v6450 = vadd.f32 0.0, %v6449
        %v6451 = vpop.f32.mrf.mxu0
        %v6452 = vadd.f32 0.0, %v6451
        %v6453 = vpop.f32.mrf.mxu0
        %v6454 = vadd.f32 0.0, %v6453
        %6455 = vmatprep.mubr.bf16.mxu0 0
        %6456 = vmatmul.mubr.bf16.gmra.mxu0 %v6334
        %v6457 = vpop.f32.mrf.mxu0
        %v6458 = vadd.f32 0.0, %v6457
        %v6459 = vpop.f32.mrf.mxu0
        %v6460 = vadd.f32 0.0, %v6459
        %v6461 = vpop.f32.mrf.mxu0
        %v6462 = vadd.f32 0.0, %v6461
        %v6463 = vpop.f32.mrf.mxu0
        %v6464 = vadd.f32 0.0, %v6463
        %6465 = vmatprep.mubr.bf16.mxu0 0
        %6466 = vmatmul.mubr.bf16.gmra.mxu0 %v6337
        %v6467 = vpop.f32.mrf.mxu0
        %v6468 = vadd.f32 0.0, %v6467
        %v6469 = vpop.f32.mrf.mxu0
        %v6470 = vadd.f32 0.0, %v6469
        %v6471 = vpop.f32.mrf.mxu0
        %v6472 = vadd.f32 0.0, %v6471
        %v6473 = vpop.f32.mrf.mxu0
        %v6474 = vadd.f32 0.0, %v6473
        %6475 = vmatprep.mubr.bf16.mxu0 0
        %6476 = vmatmul.mubr.bf16.gmra.mxu0 %v6340
        %v6477 = vpop.f32.mrf.mxu0
        %v6478 = vadd.f32 0.0, %v6477
        %v6479 = vpop.f32.mrf.mxu0
        %v6480 = vadd.f32 0.0, %v6479
        %v6481 = vpop.f32.mrf.mxu0
        %v6482 = vadd.f32 0.0, %v6481
        %v6483 = vpop.f32.mrf.mxu0
        %v6484 = vadd.f32 0.0, %v6483
        %6485 = vmatprep.mubr.bf16.mxu0 0
        %6486 = vmatmul.mubr.bf16.gmra.mxu0 %v6343
        %v6487 = vpop.f32.mrf.mxu0
        %v6488 = vadd.f32 0.0, %v6487
        %v6489 = vpop.f32.mrf.mxu0
        %v6490 = vadd.f32 0.0, %v6489
        %v6491 = vpop.f32.mrf.mxu0
        %v6492 = vadd.f32 0.0, %v6491
        %v6493 = vpop.f32.mrf.mxu0
        %v6494 = vadd.f32 0.0, %v6493
        %6495 = vmatprep.mubr.bf16.mxu0 0
        %6496 = vmatmul.mubr.bf16.gmra.mxu0 %v6346
        %v6497 = vpop.f32.mrf.mxu0
        %v6498 = vadd.f32 0.0, %v6497
        %v6499 = vpop.f32.mrf.mxu0
        %v6500 = vadd.f32 0.0, %v6499
        %v6501 = vpop.f32.mrf.mxu0
        %v6502 = vadd.f32 0.0, %v6501
        %v6503 = vpop.f32.mrf.mxu0
        %v6504 = vadd.f32 0.0, %v6503
        %6505 = vmatprep.mubr.bf16.mxu0 0
        %6506 = vmatmul.mubr.bf16.gmra.mxu0 %v6349
        %v6507 = vpop.f32.mrf.mxu0
        %v6508 = vadd.f32 0.0, %v6507
        %v6509 = vpop.f32.mrf.mxu0
        %v6510 = vadd.f32 0.0, %v6509
        %v6511 = vpop.f32.mrf.mxu0
        %v6512 = vadd.f32 0.0, %v6511
        %v6513 = vpop.f32.mrf.mxu0
        %v6514 = vadd.f32 0.0, %v6513
        %6515 = vmatprep.mubr.bf16.mxu0 0
        %6516 = vmatmul.mubr.bf16.gmra.mxu0 %v6352
        %v6517 = vpop.f32.mrf.mxu0
        %v6518 = vadd.f32 0.0, %v6517
        %v6519 = vpop.f32.mrf.mxu0
        %v6520 = vadd.f32 0.0, %v6519
        %v6521 = vpop.f32.mrf.mxu0
        %v6522 = vadd.f32 0.0, %v6521
        %v6523 = vpop.f32.mrf.mxu0
        %v6524 = vadd.f32 0.0, %v6523
        %6525 = vmatprep.mubr.bf16.mxu0 0
        %6526 = vmatmul.mubr.bf16.gmra.mxu0 %v6355
        %v6527 = vpop.f32.mrf.mxu0
        %v6528 = vadd.f32 0.0, %v6527
        %v6529 = vpop.f32.mrf.mxu0
        %v6530 = vadd.f32 0.0, %v6529
        %v6531 = vpop.f32.mrf.mxu0
        %v6532 = vadd.f32 0.0, %v6531
        %v6533 = vpop.f32.mrf.mxu0
        %v6534 = vadd.f32 0.0, %v6533
        %6535 = vmatprep.mubr.bf16.mxu0 0
        %6536 = vmatmul.mubr.bf16.gmra.mxu0 %v6358
        %v6537 = vpop.f32.mrf.mxu0
        %v6538 = vadd.f32 0.0, %v6537
        %v6539 = vpop.f32.mrf.mxu0
        %v6540 = vadd.f32 0.0, %v6539
        %v6541 = vpop.f32.mrf.mxu0
        %v6542 = vadd.f32 0.0, %v6541
        %v6543 = vpop.f32.mrf.mxu0
        %v6544 = vadd.f32 0.0, %v6543
        %6545 = vmatprep.mubr.bf16.mxu0 0
        %6546 = vmatmul.mubr.bf16.gmra.mxu0 %v6361
        %v6547 = vpop.f32.mrf.mxu0
        %v6548 = vadd.f32 0.0, %v6547
        %v6549 = vpop.f32.mrf.mxu0
        %v6550 = vadd.f32 0.0, %v6549
        %v6551 = vpop.f32.mrf.mxu0
        %v6552 = vadd.f32 0.0, %v6551
        %v6553 = vpop.f32.mrf.mxu0
        %v6554 = vadd.f32 0.0, %v6553
        %6555 = vdwg.mxu0
        %v6556 = vld [vmem:[%s11] sm:$0x3]
        %v6558 = vlaneseq
        %v6559 = vshrl.u32 %v6558, 7
        %v6560 = vsub.s32 0, %v6559
        %v6561 = vrot.slane %v6556, %v6560
        %v6562 = vlaneseq
        %v6563 = vshrl.u32 %v6562, 7
        %v6564 = vsub.s32 1, %v6563
        %v6565 = vrot.slane %v6556, %v6564
        %v6568 = vmul.f32 %v6398, %v6561
        %v6569 = vmul.f32 %v6400, %v6565
        %v6570 = vmul.f32 %v6402, %v6561
        %v6571 = vmul.f32 %v6404, %v6565
        %v6572 = vmul.f32 %v6408, %v6561
        %v6573 = vmul.f32 %v6410, %v6565
        %v6574 = vmul.f32 %v6412, %v6561
        %v6575 = vmul.f32 %v6414, %v6565
        %v6576 = vmul.f32 %v6418, %v6561
        %v6577 = vmul.f32 %v6420, %v6565
        %v6578 = vmul.f32 %v6422, %v6561
        %v6579 = vmul.f32 %v6424, %v6565
        %v6580 = vmul.f32 %v6428, %v6561
        %v6581 = vmul.f32 %v6430, %v6565
        %v6582 = vmul.f32 %v6432, %v6561
        %v6583 = vmul.f32 %v6434, %v6565
        %v6584 = vmul.f32 %v6438, %v6561
        %v6585 = vmul.f32 %v6440, %v6565
        %v6586 = vmul.f32 %v6442, %v6561
        %v6587 = vmul.f32 %v6444, %v6565
        %v6588 = vmul.f32 %v6448, %v6561
        %v6589 = vmul.f32 %v6450, %v6565
        %v6590 = vmul.f32 %v6452, %v6561
        %v6591 = vmul.f32 %v6454, %v6565
        %v6592 = vmul.f32 %v6458, %v6561
        %v6593 = vmul.f32 %v6460, %v6565
        %v6594 = vmul.f32 %v6462, %v6561
        %v6595 = vmul.f32 %v6464, %v6565
        %v6596 = vmul.f32 %v6468, %v6561
        %v6597 = vmul.f32 %v6470, %v6565
        %v6598 = vmul.f32 %v6472, %v6561
        %v6599 = vmul.f32 %v6474, %v6565
        %v6600 = vmul.f32 %v6478, %v6561
        %v6601 = vmul.f32 %v6480, %v6565
        %v6602 = vmul.f32 %v6482, %v6561
        %v6603 = vmul.f32 %v6484, %v6565
        %v6604 = vmul.f32 %v6488, %v6561
        %v6605 = vmul.f32 %v6490, %v6565
        %v6606 = vmul.f32 %v6492, %v6561
        %v6607 = vmul.f32 %v6494, %v6565
        %v6608 = vmul.f32 %v6498, %v6561
        %v6609 = vmul.f32 %v6500, %v6565
        %v6610 = vmul.f32 %v6502, %v6561
        %v6611 = vmul.f32 %v6504, %v6565
        %v6612 = vmul.f32 %v6508, %v6561
        %v6613 = vmul.f32 %v6510, %v6565
        %v6614 = vmul.f32 %v6512, %v6561
        %v6615 = vmul.f32 %v6514, %v6565
        %v6616 = vmul.f32 %v6518, %v6561
        %v6617 = vmul.f32 %v6520, %v6565
        %v6618 = vmul.f32 %v6522, %v6561
        %v6619 = vmul.f32 %v6524, %v6565
        %v6620 = vmul.f32 %v6528, %v6561
        %v6621 = vmul.f32 %v6530, %v6565
        %v6622 = vmul.f32 %v6532, %v6561
        %v6623 = vmul.f32 %v6534, %v6565
        %v6624 = vmul.f32 %v6538, %v6561
        %v6625 = vmul.f32 %v6540, %v6565
        %v6626 = vmul.f32 %v6542, %v6561
        %v6627 = vmul.f32 %v6544, %v6565
        %v6628 = vmul.f32 %v6548, %v6561
        %v6629 = vmul.f32 %v6550, %v6565
        %v6630 = vmul.f32 %v6552, %v6561
        %v6631 = vmul.f32 %v6554, %v6565
        %v6632 = vld [vmem:[%s12] sm:$0x3]
        %v6634 = vlaneseq
        %v6635 = vshrl.u32 %v6634, 7
        %v6636 = vsub.s32 0, %v6635
        %v6637 = vrot.slane %v6632, %v6636
        %v6638 = vlaneseq
        %v6639 = vshrl.u32 %v6638, 7
        %v6640 = vsub.s32 1, %v6639
        %v6641 = vrot.slane %v6632, %v6640
        %v6644 = vadd.f32 %v6568, %v6637
        %v6645 = vadd.f32 %v6569, %v6641
        %v6646 = vadd.f32 %v6570, %v6637
        %v6647 = vadd.f32 %v6571, %v6641
        %v6648 = vadd.f32 %v6572, %v6637
        %v6649 = vadd.f32 %v6573, %v6641
        %v6650 = vadd.f32 %v6574, %v6637
        %v6651 = vadd.f32 %v6575, %v6641
        %v6652 = vadd.f32 %v6576, %v6637
        %v6653 = vadd.f32 %v6577, %v6641
        %v6654 = vadd.f32 %v6578, %v6637
        %v6655 = vadd.f32 %v6579, %v6641
        %v6656 = vadd.f32 %v6580, %v6637
        %v6657 = vadd.f32 %v6581, %v6641
        %v6658 = vadd.f32 %v6582, %v6637
        %v6659 = vadd.f32 %v6583, %v6641
        %v6660 = vadd.f32 %v6584, %v6637
        %v6661 = vadd.f32 %v6585, %v6641
        %v6662 = vadd.f32 %v6586, %v6637
        %v6663 = vadd.f32 %v6587, %v6641
        %v6664 = vadd.f32 %v6588, %v6637
        %v6665 = vadd.f32 %v6589, %v6641
        %v6666 = vadd.f32 %v6590, %v6637
        %v6667 = vadd.f32 %v6591, %v6641
        %v6668 = vadd.f32 %v6592, %v6637
        %v6669 = vadd.f32 %v6593, %v6641
        %v6670 = vadd.f32 %v6594, %v6637
        %v6671 = vadd.f32 %v6595, %v6641
        %v6672 = vadd.f32 %v6596, %v6637
        %v6673 = vadd.f32 %v6597, %v6641
        %v6674 = vadd.f32 %v6598, %v6637
        %v6675 = vadd.f32 %v6599, %v6641
        %v6676 = vadd.f32 %v6600, %v6637
        %v6677 = vadd.f32 %v6601, %v6641
        %v6678 = vadd.f32 %v6602, %v6637
        %v6679 = vadd.f32 %v6603, %v6641
        %v6680 = vadd.f32 %v6604, %v6637
        %v6681 = vadd.f32 %v6605, %v6641
        %v6682 = vadd.f32 %v6606, %v6637
        %v6683 = vadd.f32 %v6607, %v6641
        %v6684 = vadd.f32 %v6608, %v6637
        %v6685 = vadd.f32 %v6609, %v6641
        %v6686 = vadd.f32 %v6610, %v6637
        %v6687 = vadd.f32 %v6611, %v6641
        %v6688 = vadd.f32 %v6612, %v6637
        %v6689 = vadd.f32 %v6613, %v6641
        %v6690 = vadd.f32 %v6614, %v6637
        %v6691 = vadd.f32 %v6615, %v6641
        %v6692 = vadd.f32 %v6616, %v6637
        %v6693 = vadd.f32 %v6617, %v6641
        %v6694 = vadd.f32 %v6618, %v6637
        %v6695 = vadd.f32 %v6619, %v6641
        %v6696 = vadd.f32 %v6620, %v6637
        %v6697 = vadd.f32 %v6621, %v6641
        %v6698 = vadd.f32 %v6622, %v6637
        %v6699 = vadd.f32 %v6623, %v6641
        %v6700 = vadd.f32 %v6624, %v6637
        %v6701 = vadd.f32 %v6625, %v6641
        %v6702 = vadd.f32 %v6626, %v6637
        %v6703 = vadd.f32 %v6627, %v6641
        %v6704 = vadd.f32 %v6628, %v6637
        %v6705 = vadd.f32 %v6629, %v6641
        %v6706 = vadd.f32 %v6630, %v6637
        %v6707 = vadd.f32 %v6631, %v6641
        %v6708 = vmax.f32 %v6644, 0.0
        %v6709 = vmax.f32 %v6645, 0.0
        %v6710 = vmax.f32 %v6646, 0.0
        %v6711 = vmax.f32 %v6647, 0.0
        %v6712 = vmax.f32 %v6648, 0.0
        %v6713 = vmax.f32 %v6649, 0.0
        %v6714 = vmax.f32 %v6650, 0.0
        %v6715 = vmax.f32 %v6651, 0.0
        %v6716 = vmax.f32 %v6652, 0.0
        %v6717 = vmax.f32 %v6653, 0.0
        %v6718 = vmax.f32 %v6654, 0.0
        %v6719 = vmax.f32 %v6655, 0.0
        %v6720 = vmax.f32 %v6656, 0.0
        %v6721 = vmax.f32 %v6657, 0.0
        %v6722 = vmax.f32 %v6658, 0.0
        %v6723 = vmax.f32 %v6659, 0.0
        %v6724 = vmax.f32 %v6660, 0.0
        %v6725 = vmax.f32 %v6661, 0.0
        %v6726 = vmax.f32 %v6662, 0.0
        %v6727 = vmax.f32 %v6663, 0.0
        %v6728 = vmax.f32 %v6664, 0.0
        %v6729 = vmax.f32 %v6665, 0.0
        %v6730 = vmax.f32 %v6666, 0.0
        %v6731 = vmax.f32 %v6667, 0.0
        %v6732 = vmax.f32 %v6668, 0.0
        %v6733 = vmax.f32 %v6669, 0.0
        %v6734 = vmax.f32 %v6670, 0.0
        %v6735 = vmax.f32 %v6671, 0.0
        %v6736 = vmax.f32 %v6672, 0.0
        %v6737 = vmax.f32 %v6673, 0.0
        %v6738 = vmax.f32 %v6674, 0.0
        %v6739 = vmax.f32 %v6675, 0.0
        %v6740 = vmax.f32 %v6676, 0.0
        %v6741 = vmax.f32 %v6677, 0.0
        %v6742 = vmax.f32 %v6678, 0.0
        %v6743 = vmax.f32 %v6679, 0.0
        %v6744 = vmax.f32 %v6680, 0.0
        %v6745 = vmax.f32 %v6681, 0.0
        %v6746 = vmax.f32 %v6682, 0.0
        %v6747 = vmax.f32 %v6683, 0.0
        %v6748 = vmax.f32 %v6684, 0.0
        %v6749 = vmax.f32 %v6685, 0.0
        %v6750 = vmax.f32 %v6686, 0.0
        %v6751 = vmax.f32 %v6687, 0.0
        %v6752 = vmax.f32 %v6688, 0.0
        %v6753 = vmax.f32 %v6689, 0.0
        %v6754 = vmax.f32 %v6690, 0.0
        %v6755 = vmax.f32 %v6691, 0.0
        %v6756 = vmax.f32 %v6692, 0.0
        %v6757 = vmax.f32 %v6693, 0.0
        %v6758 = vmax.f32 %v6694, 0.0
        %v6759 = vmax.f32 %v6695, 0.0
        %v6760 = vmax.f32 %v6696, 0.0
        %v6761 = vmax.f32 %v6697, 0.0
        %v6762 = vmax.f32 %v6698, 0.0
        %v6763 = vmax.f32 %v6699, 0.0
        %v6764 = vmax.f32 %v6700, 0.0
        %v6765 = vmax.f32 %v6701, 0.0
        %v6766 = vmax.f32 %v6702, 0.0
        %v6767 = vmax.f32 %v6703, 0.0
        %v6768 = vmax.f32 %v6704, 0.0
        %v6769 = vmax.f32 %v6705, 0.0
        %v6770 = vmax.f32 %v6706, 0.0
        %v6771 = vmax.f32 %v6707, 0.0
        %v6772 = vadd.f32 %v6155, %v6708
        %v6773 = vadd.f32 %v6156, %v6709
        %v6774 = vadd.f32 %v6157, %v6710
        %v6775 = vadd.f32 %v6158, %v6711
        %v6776 = vadd.f32 %v6159, %v6712
        %v6777 = vadd.f32 %v6160, %v6713
        %v6778 = vadd.f32 %v6161, %v6714
        %v6779 = vadd.f32 %v6162, %v6715
        %v6780 = vadd.f32 %v6163, %v6716
        %v6781 = vadd.f32 %v6164, %v6717
        %v6782 = vadd.f32 %v6165, %v6718
        %v6783 = vadd.f32 %v6166, %v6719
        %v6784 = vadd.f32 %v6167, %v6720
        %v6785 = vadd.f32 %v6168, %v6721
        %v6786 = vadd.f32 %v6169, %v6722
        %v6787 = vadd.f32 %v6170, %v6723
        %v6788 = vadd.f32 %v6171, %v6724
        %v6789 = vadd.f32 %v6172, %v6725
        %v6790 = vadd.f32 %v6173, %v6726
        %v6791 = vadd.f32 %v6174, %v6727
        %v6792 = vadd.f32 %v6175, %v6728
        %v6793 = vadd.f32 %v6176, %v6729
        %v6794 = vadd.f32 %v6177, %v6730
        %v6795 = vadd.f32 %v6178, %v6731
        %v6796 = vadd.f32 %v6179, %v6732
        %v6797 = vadd.f32 %v6180, %v6733
        %v6798 = vadd.f32 %v6181, %v6734
        %v6799 = vadd.f32 %v6182, %v6735
        %v6800 = vadd.f32 %v6183, %v6736
        %v6801 = vadd.f32 %v6184, %v6737
        %v6802 = vadd.f32 %v6185, %v6738
        %v6803 = vadd.f32 %v6186, %v6739
        %v6804 = vadd.f32 %v6187, %v6740
        %v6805 = vadd.f32 %v6188, %v6741
        %v6806 = vadd.f32 %v6189, %v6742
        %v6807 = vadd.f32 %v6190, %v6743
        %v6808 = vadd.f32 %v6191, %v6744
        %v6809 = vadd.f32 %v6192, %v6745
        %v6810 = vadd.f32 %v6193, %v6746
        %v6811 = vadd.f32 %v6194, %v6747
        %v6812 = vadd.f32 %v6195, %v6748
        %v6813 = vadd.f32 %v6196, %v6749
        %v6814 = vadd.f32 %v6197, %v6750
        %v6815 = vadd.f32 %v6198, %v6751
        %v6816 = vadd.f32 %v6199, %v6752
        %v6817 = vadd.f32 %v6200, %v6753
        %v6818 = vadd.f32 %v6201, %v6754
        %v6819 = vadd.f32 %v6202, %v6755
        %v6820 = vadd.f32 %v6203, %v6756
        %v6821 = vadd.f32 %v6204, %v6757
        %v6822 = vadd.f32 %v6205, %v6758
        %v6823 = vadd.f32 %v6206, %v6759
        %v6824 = vadd.f32 %v6207, %v6760
        %v6825 = vadd.f32 %v6208, %v6761
        %v6826 = vadd.f32 %v6209, %v6762
        %v6827 = vadd.f32 %v6210, %v6763
        %v6828 = vadd.f32 %v6211, %v6764
        %v6829 = vadd.f32 %v6212, %v6765
        %v6830 = vadd.f32 %v6213, %v6766
        %v6831 = vadd.f32 %v6214, %v6767
        %v6832 = vadd.f32 %v6215, %v6768
        %v6833 = vadd.f32 %v6216, %v6769
        %v6834 = vadd.f32 %v6217, %v6770
        %v6835 = vadd.f32 %v6218, %v6771
        %v6836 = vmax.f32 %v6772, 0.0
        %v6837 = vmax.f32 %v6773, 0.0
        %v6838 = vmax.f32 %v6774, 0.0
        %v6839 = vmax.f32 %v6775, 0.0
        %v6840 = vmax.f32 %v6776, 0.0
        %v6841 = vmax.f32 %v6777, 0.0
        %v6842 = vmax.f32 %v6778, 0.0
        %v6843 = vmax.f32 %v6779, 0.0
        %v6844 = vmax.f32 %v6780, 0.0
        %v6845 = vmax.f32 %v6781, 0.0
        %v6846 = vmax.f32 %v6782, 0.0
        %v6847 = vmax.f32 %v6783, 0.0
        %v6848 = vmax.f32 %v6784, 0.0
        %v6849 = vmax.f32 %v6785, 0.0
        %v6850 = vmax.f32 %v6786, 0.0
        %v6851 = vmax.f32 %v6787, 0.0
        %v6852 = vmax.f32 %v6788, 0.0
        %v6853 = vmax.f32 %v6789, 0.0
        %v6854 = vmax.f32 %v6790, 0.0
        %v6855 = vmax.f32 %v6791, 0.0
        %v6856 = vmax.f32 %v6792, 0.0
        %v6857 = vmax.f32 %v6793, 0.0
        %v6858 = vmax.f32 %v6794, 0.0
        %v6859 = vmax.f32 %v6795, 0.0
        %v6860 = vmax.f32 %v6796, 0.0
        %v6861 = vmax.f32 %v6797, 0.0
        %v6862 = vmax.f32 %v6798, 0.0
        %v6863 = vmax.f32 %v6799, 0.0
        %v6864 = vmax.f32 %v6800, 0.0
        %v6865 = vmax.f32 %v6801, 0.0
        %v6866 = vmax.f32 %v6802, 0.0
        %v6867 = vmax.f32 %v6803, 0.0
        %v6868 = vmax.f32 %v6804, 0.0
        %v6869 = vmax.f32 %v6805, 0.0
        %v6870 = vmax.f32 %v6806, 0.0
        %v6871 = vmax.f32 %v6807, 0.0
        %v6872 = vmax.f32 %v6808, 0.0
        %v6873 = vmax.f32 %v6809, 0.0
        %v6874 = vmax.f32 %v6810, 0.0
        %v6875 = vmax.f32 %v6811, 0.0
        %v6876 = vmax.f32 %v6812, 0.0
        %v6877 = vmax.f32 %v6813, 0.0
        %v6878 = vmax.f32 %v6814, 0.0
        %v6879 = vmax.f32 %v6815, 0.0
        %v6880 = vmax.f32 %v6816, 0.0
        %v6881 = vmax.f32 %v6817, 0.0
        %v6882 = vmax.f32 %v6818, 0.0
        %v6883 = vmax.f32 %v6819, 0.0
        %v6884 = vmax.f32 %v6820, 0.0
        %v6885 = vmax.f32 %v6821, 0.0
        %v6886 = vmax.f32 %v6822, 0.0
        %v6887 = vmax.f32 %v6823, 0.0
        %v6888 = vmax.f32 %v6824, 0.0
        %v6889 = vmax.f32 %v6825, 0.0
        %v6890 = vmax.f32 %v6826, 0.0
        %v6891 = vmax.f32 %v6827, 0.0
        %v6892 = vmax.f32 %v6828, 0.0
        %v6893 = vmax.f32 %v6829, 0.0
        %v6894 = vmax.f32 %v6830, 0.0
        %v6895 = vmax.f32 %v6831, 0.0
        %v6896 = vmax.f32 %v6832, 0.0
        %v6897 = vmax.f32 %v6833, 0.0
        %v6898 = vmax.f32 %v6834, 0.0
        %v6899 = vmax.f32 %v6835, 0.0
        %6900 = vst [vmem:[%s433] sm:$0xff] %v6836
        %6901 = vst [vmem:[%s433 + $0x8] sm:$0xff] %v6837
        %6902 = vst [vmem:[%s433 + $0x10] sm:$0xff] %v6838
        %6903 = vst [vmem:[%s433 + $0x18] sm:$0xff] %v6839
        %6904 = vst [vmem:[%s433 + $0x20] sm:$0xff] %v6840
        %6905 = vst [vmem:[%s433 + $0x28] sm:$0xff] %v6841
        %6906 = vst [vmem:[%s433 + $0x30] sm:$0xff] %v6842
        %6907 = vst [vmem:[%s433 + $0x38] sm:$0xff] %v6843
        %6908 = vst [vmem:[%s433 + $0x40] sm:$0xff] %v6844
        %6909 = vst [vmem:[%s433 + $0x48] sm:$0xff] %v6845
        %6910 = vst [vmem:[%s433 + $0x50] sm:$0xff] %v6846
        %6911 = vst [vmem:[%s433 + $0x58] sm:$0xff] %v6847
        %6912 = vst [vmem:[%s433 + $0x60] sm:$0xff] %v6848
        %6913 = vst [vmem:[%s433 + $0x68] sm:$0xff] %v6849
        %6914 = vst [vmem:[%s433 + $0x70] sm:$0xff] %v6850
        %6915 = vst [vmem:[%s433 + $0x78] sm:$0xff] %v6851
        %6916 = vst [vmem:[%s433 + $0x80] sm:$0xff] %v6852
        %6917 = vst [vmem:[%s433 + $0x88] sm:$0xff] %v6853
        %6918 = vst [vmem:[%s433 + $0x90] sm:$0xff] %v6854
        %6919 = vst [vmem:[%s433 + $0x98] sm:$0xff] %v6855
        %6920 = vst [vmem:[%s433 + $0xa0] sm:$0xff] %v6856
        %6921 = vst [vmem:[%s433 + $0xa8] sm:$0xff] %v6857
        %6922 = vst [vmem:[%s433 + $0xb0] sm:$0xff] %v6858
        %6923 = vst [vmem:[%s433 + $0xb8] sm:$0xff] %v6859
        %6924 = vst [vmem:[%s433 + $0xc0] sm:$0xff] %v6860
        %6925 = vst [vmem:[%s433 + $0xc8] sm:$0xff] %v6861
        %6926 = vst [vmem:[%s433 + $0xd0] sm:$0xff] %v6862
        %6927 = vst [vmem:[%s433 + $0xd8] sm:$0xff] %v6863
        %6928 = vst [vmem:[%s433 + $0xe0] sm:$0xff] %v6864
        %6929 = vst [vmem:[%s433 + $0xe8] sm:$0xff] %v6865
        %6930 = vst [vmem:[%s433 + $0xf0] sm:$0xff] %v6866
        %6931 = vst [vmem:[%s433 + $0xf8] sm:$0xff] %v6867
        %6932 = vst [vmem:[%s433 + $0x100] sm:$0xff] %v6868
        %6933 = vst [vmem:[%s433 + $0x108] sm:$0xff] %v6869
        %6934 = vst [vmem:[%s433 + $0x110] sm:$0xff] %v6870
        %6935 = vst [vmem:[%s433 + $0x118] sm:$0xff] %v6871
        %6936 = vst [vmem:[%s433 + $0x120] sm:$0xff] %v6872
        %6937 = vst [vmem:[%s433 + $0x128] sm:$0xff] %v6873
        %6938 = vst [vmem:[%s433 + $0x130] sm:$0xff] %v6874
        %6939 = vst [vmem:[%s433 + $0x138] sm:$0xff] %v6875
        %6940 = vst [vmem:[%s433 + $0x140] sm:$0xff] %v6876
        %6941 = vst [vmem:[%s433 + $0x148] sm:$0xff] %v6877
        %6942 = vst [vmem:[%s433 + $0x150] sm:$0xff] %v6878
        %6943 = vst [vmem:[%s433 + $0x158] sm:$0xff] %v6879
        %6944 = vst [vmem:[%s433 + $0x160] sm:$0xff] %v6880
        %6945 = vst [vmem:[%s433 + $0x168] sm:$0xff] %v6881
        %6946 = vst [vmem:[%s433 + $0x170] sm:$0xff] %v6882
        %6947 = vst [vmem:[%s433 + $0x178] sm:$0xff] %v6883
        %6948 = vst [vmem:[%s433 + $0x180] sm:$0xff] %v6884
        %6949 = vst [vmem:[%s433 + $0x188] sm:$0xff] %v6885
        %6950 = vst [vmem:[%s433 + $0x190] sm:$0xff] %v6886
        %6951 = vst [vmem:[%s433 + $0x198] sm:$0xff] %v6887
        %6952 = vst [vmem:[%s433 + $0x1a0] sm:$0xff] %v6888
        %6953 = vst [vmem:[%s433 + $0x1a8] sm:$0xff] %v6889
        %6954 = vst [vmem:[%s433 + $0x1b0] sm:$0xff] %v6890
        %6955 = vst [vmem:[%s433 + $0x1b8] sm:$0xff] %v6891
        %6956 = vst [vmem:[%s433 + $0x1c0] sm:$0xff] %v6892
        %6957 = vst [vmem:[%s433 + $0x1c8] sm:$0xff] %v6893
        %6958 = vst [vmem:[%s433 + $0x1d0] sm:$0xff] %v6894
        %6959 = vst [vmem:[%s433 + $0x1d8] sm:$0xff] %v6895
        %6960 = vst [vmem:[%s433 + $0x1e0] sm:$0xff] %v6896
        %6961 = vst [vmem:[%s433 + $0x1e8] sm:$0xff] %v6897
        %6962 = vst [vmem:[%s433 + $0x1f0] sm:$0xff] %v6898
        %6963 = vst [vmem:[%s433 + $0x1f8] sm:$0xff] %v6899
        %s6964 = sand.u32 %s313, 1
        %s6965 = scalar_lea.sflag [#allocation5], %s6964
        %s6966 = sand.u32 %s313, 1
        %s6967 = smul.addr %s6966, 512
        %s6968 = scalar_lea.vmem [#allocation4], %s6967
        // Predicated region
        $region73: #{tpu_custom_call.1} parent=71 // pred_check
          %p6969 = pneg %p323
        $region74: #{tpu_custom_call.1} parent=71 // pred_check_branch
          %6971 = sbr.rel (%p6969) target = $region76
        $region75: #{tpu_custom_call.1} parent=71 // pred_region
          %s6973 = ssub.s32 8192, 8192
          %6974 = vsyncadd %s6965, %s6973
          %s6975 = smul.addr %s27, 64
          %s6976 = smul.addr %s6975, 128
          %s6977 = scalar_lea.hbm %s13, %s6976
          %s6978 = sshll.u32 %s6968, 4
          %s6979 = int_to_ptr.vmem [resolvable:$true] %s6978
          %6984 = dma.vmem_to_hbm [thread:$0]  %s6979, 8192, %s6977, %s6965, 256, 256, 16
        $region76: #{tpu_custom_call.1} parent=71 // pred_fallthru
          _
      $region72: #{tpu_custom_call.1} parent=5 // pred_fallthru
        _
      %p6985 = scmp.le.s32.totalorder 2, %s22
      // Predicated region
      $region77: #{tpu_custom_call.1} parent=5 // pred_check
        %p6986 = pneg %p6985
      $region78: #{tpu_custom_call.1} parent=5 // pred_check_branch
        %6988 = sbr.rel (%p6986) target = $region80
      $region79: #{tpu_custom_call.1} parent=5 // pred_region
        %s6989 = ssub.s32 %s22, 2
        // Predicated region
        $region81: #{tpu_custom_call.1} parent=79 // pred_check
          %p6990 = pneg %p329
        $region82: #{tpu_custom_call.1} parent=79 // pred_check_branch
          %6992 = sbr.rel (%p6990) target = $region84
        $region83: #{tpu_custom_call.1} parent=79 // pred_region
          %s6993 = sand.u32 %s314, 1
          %s6994 = scalar_lea.sflag [#allocation5], %s6993
          %s6995 = sand.u32 %s314, 1
          %s6996 = smul.addr %s6995, 512
          %s6997 = scalar_lea.vmem [#allocation4], %s6996
          %6998 = dma.done %s6994, 8192
        $region84: #{tpu_custom_call.1} parent=79 // pred_fallthru
          _
      $region80: #{tpu_custom_call.1} parent=5 // pred_fallthru
        _
    $region6: #{tpu_custom_call.1} parent=1 // loop_footer
      %s26 = sadd.s32 1, %s22
    $region7: #{tpu_custom_call.1} parent=1 // loop_footer_branch
      %21 = sbr.rel target = $region3
    $region8: #{tpu_custom_call.1} parent=1 // loop_exit
      _
    %6999 = vsyncpa [#allocation5], 1
    %s7000 = scalar_lea.sflag [#allocation5], 1
    %7001 = vsyncpa %s7000, 1

</llo_original>
